<compile_context>
chip_gen: v7x
topology: tpu7x:2x2x1
jax: 0.10.0
libtpu: 0.0.40
codegen_flags: <defaults>
</compile_context>

<pallas_src>
import functools

import jax
import jax.numpy as jnp
from jax import lax
from jax.experimental import pallas as pl
from jax.experimental.pallas import tpu as pltpu


def _round_up(x, m):
    return (x + m - 1) // m * m


# ----------------------------- fused Pallas kernel ---------------------------

def _fused_refine_kernel(x_ref, cmask_ref,
                         w1_ref, b1_ref, w2_ref, b2_ref,
                         w3_ref, b3_ref, w4_ref, b4_ref,
                         o_ref,
                         a1_ref, a2_ref, a3_ref,
                         *, H, W, TR):
    Wp = W + 2
    r0 = pl.program_id(1) * TR          # first output row of this tile

    def conv_patches(src_ref, rows_out):
        # im2col patches (rows_out*Wp, 9*Cin) from the flattened padded grid:
        # tap (dh, dw) is the contiguous slice at offset dh*Wp + dw.
        P = rows_out * Wp
        taps = [src_ref[dh * Wp + dw: dh * Wp + dw + P, :]
                for dh in range(3) for dw in range(3)]
        return jnp.concatenate(taps, axis=1), P

    def store_padded(val, P, halo, dst_ref):
        # Zero the two wrap-around garbage columns (x == W, W+1) and all rows
        # that lie outside the real image (they must act like conv zero
        # padding), then store shifted by one position so the result is again
        # a flattened padded grid with zero W-pad columns.
        p_iota = lax.broadcasted_iota(jnp.int32, (P, 1), 0)
        lo = (halo - r0) * Wp
        hi = (H + halo - r0) * Wp
        row_ok = (p_iota >= lo) & (p_iota < hi)
        val = jnp.where(row_ok, val, 0.0) * cmask_ref[0:P, :]
        nch = val.shape[1]
        dst_ref[0:1, :] = jnp.zeros((1, nch), jnp.float32)
        dst_ref[1:1 + P, :] = val
        dst_ref[1 + P:1 + P + (Wp - 1), :] = jnp.zeros((Wp - 1, nch),
                                                       jnp.float32)

    # --- layer 1: Cin=4 -> 32 (BN scale folded into weights) -----------------
    p1, P1 = conv_patches(x_ref, TR + 6)
    o1 = jnp.maximum(
        jnp.dot(p1, w1_ref[...], preferred_element_type=jnp.float32)
        + b1_ref[...], 0.0)
    store_padded(o1, P1, 3, a1_ref)

    # --- layer 2: 32 -> 32 ----------------------------------------------------
    p2, P2 = conv_patches(a1_ref, TR + 4)
    o2 = jnp.maximum(
        jnp.dot(p2, w2_ref[...], preferred_element_type=jnp.float32)
        + b2_ref[...], 0.0)
    store_padded(o2, P2, 2, a2_ref)

    # --- layer 3: 32 -> 32 ----------------------------------------------------
    p3, P3 = conv_patches(a2_ref, TR + 2)
    o3 = jnp.maximum(
        jnp.dot(p3, w3_ref[...], preferred_element_type=jnp.float32)
        + b3_ref[...], 0.0)
    store_padded(o3, P3, 1, a3_ref)

    # --- layer 4 (res): 32 -> 1 as a VPU dot, + fused residual add ------------
    p4, P4 = conv_patches(a3_ref, TR)
    res = jnp.sum(p4 * w4_ref[...], axis=1, keepdims=True) + b4_ref[...]
    res = jnp.maximum(res, 0.0)
    # depth_init is channel 3 of the input tile: pixel (r, w) of this tile's
    # output lives at flat position p = r*Wp + w, whose depth value sits at
    # input position p + 4*Wp + 1 (4 halo rows + 1 left pad column).
    depth = x_ref[4 * Wp + 1: 4 * Wp + 1 + P4, 3:4]
    o_ref[...] = (res + depth).astype(o_ref.dtype)


# --------------------------------- wrapper ------------------------------------

def _fold_bn(w, gamma, beta, mean, var, eps=1e-5):
    """PyTorch conv weight (Cout, Cin, 3, 3) + eval-mode BN -> folded matmul."""
    cout, cin = w.shape[0], w.shape[1]
    w_mat = jnp.transpose(w, (2, 3, 1, 0)).reshape(9 * cin, cout)
    scale = gamma / jnp.sqrt(var + eps)
    bias = beta - mean * scale
    return w_mat * scale[None, :], bias.reshape(1, cout)


def _pick_row_tile(H, W, budget_bytes=12 * 1024 * 1024):
    """Largest row tile (multiple of 8) whose VMEM footprint fits the budget."""
    Wp = W + 2
    cap = min(512, max(8, _round_up(H, 8)))
    tr = 8
    for cand in range(8, cap + 1, 8):
        est = 4 * Wp * ((cand + 9) * 4 * 2          # double-buffered input
                        + 3 * (cand + 7) * 32       # VMEM activation buffers
                        + (cand + 6) * 9 * 32 * 2   # im2col patches (transient)
                        + (cand + 6) * 32 * 2       # layer outputs (transient)
                        + cand * 2)                 # output block
        if est <= budget_bytes:
            tr = cand
        else:
            break
    return tr


def refinenet_forward(params, img, depth_init, *, row_tile=None):
    """img: (B, 3, H, W) f32, depth_init: (B, 1, H, W) f32 -> (B, 1, H, W)."""
    eps = 1e-5
    x = jnp.concatenate([img, depth_init], axis=1)       # (B, 4, H, W) NCHW
    B, Cin, H, W = x.shape
    x_nhwc = jnp.transpose(x, (0, 2, 3, 1)).astype(jnp.float32)

    Wp = W + 2
    TR = _pick_row_tile(H, W) if row_tile is None else row_tile
    TR = max(8, _round_up(TR, 8))
    H_pad = _round_up(H, TR)
    n_t = H_pad // TR

    # 4 zero halo rows on top, 4 halo + alignment + 1 extra row on the bottom
    # (tap slices read two positions past the last halo row), plus the 1-pixel
    # conv zero padding along W.  Only the small 4-channel input is padded.
    x_padded = jnp.pad(x_nhwc, ((0, 0), (4, (H_pad - H) + 5), (1, 1), (0, 0)))

    # Materialise overlapping row tiles (TR + 9 padded rows each) so the kernel
    # sees plain non-overlapping blocks and the standard Pallas pipeline
    # prefetches the halos.
    L_in = (TR + 9) * Wp
    tiles = [x_padded[:, t * TR: t * TR + TR + 9] for t in range(n_t)]
    x_tiles = jnp.stack(tiles, axis=1).reshape(B, n_t, L_in, Cin)

    # Fold the BN scale into the conv weights (bias-only epilogue in-kernel).
    folded = [_fold_bn(*p, eps=eps) for p in params]
    (w1, b1), (w2, b2), (w3, b3), (w4, b4) = folded
    w4 = w4.reshape(1, -1)                               # final layer: VPU dot

    # Static column-validity mask for the flattened padded-grid layout.
    P1 = (TR + 6) * Wp
    P4 = TR * Wp
    col = jnp.arange(P1, dtype=jnp.int32) % Wp
    cmask = (col < W).astype(jnp.float32).reshape(P1, 1)

    kernel = functools.partial(_fused_refine_kernel, H=H, W=W, TR=TR)

    flops = 2 * B * n_t * Wp * ((TR + 6) * 36 * 32
                                + (TR + 4) * 288 * 32
                                + (TR + 2) * 288 * 32
                                + TR * 288)
    bytes_accessed = 4 * (x_tiles.size + B * n_t * P4
                          + sum(a.size for a in
                                (cmask, w1, b1, w2, b2, w3, b3, w4, b4)))

    out_flat = pl.pallas_call(
        kernel,
        out_shape=jax.ShapeDtypeStruct((B, n_t, P4, 1), jnp.float32),
        grid=(B, n_t),
        in_specs=[
            pl.BlockSpec((None, None, L_in, Cin), lambda b, t: (b, t, 0, 0)),
            pl.BlockSpec((P1, 1), lambda b, t: (0, 0)),
            pl.BlockSpec(w1.shape, lambda b, t: (0, 0)),
            pl.BlockSpec(b1.shape, lambda b, t: (0, 0)),
            pl.BlockSpec(w2.shape, lambda b, t: (0, 0)),
            pl.BlockSpec(b2.shape, lambda b, t: (0, 0)),
            pl.BlockSpec(w3.shape, lambda b, t: (0, 0)),
            pl.BlockSpec(b3.shape, lambda b, t: (0, 0)),
            pl.BlockSpec(w4.shape, lambda b, t: (0, 0)),
            pl.BlockSpec(b4.shape, lambda b, t: (0, 0)),
        ],
        out_specs=pl.BlockSpec((None, None, P4, 1), lambda b, t: (b, t, 0, 0)),
        scratch_shapes=[
            pltpu.VMEM(((TR + 7) * Wp, 32), jnp.float32),
            pltpu.VMEM(((TR + 5) * Wp, 32), jnp.float32),
            pltpu.VMEM(((TR + 3) * Wp, 32), jnp.float32),
        ],
        compiler_params=pltpu.CompilerParams(
            dimension_semantics=("parallel", "parallel"),
            vmem_limit_bytes=48 * 1024 * 1024),
        cost_estimate=pl.CostEstimate(flops=flops, transcendentals=0,
                                      bytes_accessed=bytes_accessed),
    )(x_tiles, cmask, w1, b1, w2, b2, w3, b3, w4, b4)

    depth_refined = out_flat.reshape(B, H_pad, Wp)[:, :H, :W]
    return depth_refined[:, None, :, :]


# ------------------------------ params / reference ----------------------------

def init_refinenet_params(key):
    """Deterministic synthetic params matching RefineNet.__init__ shapes."""
    layer_dims = [(4, 32), (32, 32), (32, 32), (32, 1)]
    params = []
    for (cin, cout) in layer_dims:
        key, wk, gk, bk, mk, vk = jax.random.split(key, 6)
        w = 0.1 * jax.random.normal(wk, (cout, cin, 3, 3), jnp.float32)
        gamma = 1.0 + 0.1 * jax.random.normal(gk, (cout,), jnp.float32)
        beta = 0.1 * jax.random.normal(bk, (cout,), jnp.float32)
        mean = 0.1 * jax.random.normal(mk, (cout,), jnp.float32)
        var = jax.random.uniform(vk, (cout,), jnp.float32, 0.5, 1.5)
        params.append((w, gamma, beta, mean, var))
    return params


def _reference_forward(params, img, depth_init):
    """Pure-JAX reference (lax conv) for correctness checking."""
    eps = 1e-5
    h = jnp.concatenate([img, depth_init], axis=1)
    for (w, gamma, beta, mean, var) in params:
        conv = lax.conv_general_dilated(
            h, w, window_strides=(1, 1), padding=((1, 1), (1, 1)),
            dimension_numbers=("NCHW", "OIHW", "NCHW"))
        scale = (gamma / jnp.sqrt(var + eps)).reshape(1, -1, 1, 1)
        bias = (beta - mean * gamma / jnp.sqrt(var + eps)).reshape(1, -1, 1, 1)
        h = jnp.maximum(conv * scale + bias, 0.0)
    return depth_init + h


# ----------------------------------- main --------------------------------------

if __name__ == "__main__":
    key = jax.random.PRNGKey(0)
    pkey, ikey, dkey = jax.random.split(key, 3)

    B, H, W = 2, 16, 16
    img = jax.random.normal(ikey, (B, 3, H, W), jnp.float32)
    depth_init = jax.random.uniform(dkey, (B, 1, H, W), jnp.float32)
    params = init_refinenet_params(pkey)

    ref = _reference_forward(params, img, depth_init)

    # Multi-tile path (2 row tiles, exercises the halo recompute + masking).
    fwd_tiled = jax.jit(functools.partial(refinenet_forward, params,
                                          row_tile=8))
    out_tiled = fwd_tiled(img, depth_init)
    jax.block_until_ready(out_tiled)
    assert out_tiled.shape == (B, 1, H, W)
    assert jnp.allclose(out_tiled, ref, atol=1e-4, rtol=1e-4), (
        float(jnp.max(jnp.abs(out_tiled - ref))))

    # Auto-tiled path (single row tile covering the whole image).
    fwd_auto = jax.jit(functools.partial(refinenet_forward, params))
    out_auto = fwd_auto(img, depth_init)
    jax.block_until_ready(out_auto)
    assert jnp.allclose(out_auto, ref, atol=1e-4, rtol=1e-4), (
        float(jnp.max(jnp.abs(out_auto - ref))))

    print("KERNEL_OK")
</pallas_src>

<mosaic_0001>
module attributes {stable_mosaic.version = 11 : i64} {
  func.func @_fused_refine_kernel(%arg0: i32, %arg1: i32, %arg2: memref<1x1x306x4xf32, #tpu.memory_space<vmem>>, %arg3: memref<252x1xf32, #tpu.memory_space<vmem>>, %arg4: memref<36x32xf32, #tpu.memory_space<vmem>>, %arg5: memref<1x32xf32, #tpu.memory_space<vmem>>, %arg6: memref<288x32xf32, #tpu.memory_space<vmem>>, %arg7: memref<1x32xf32, #tpu.memory_space<vmem>>, %arg8: memref<288x32xf32, #tpu.memory_space<vmem>>, %arg9: memref<1x32xf32, #tpu.memory_space<vmem>>, %arg10: memref<1x288xf32, #tpu.memory_space<vmem>>, %arg11: memref<1x1xf32, #tpu.memory_space<vmem>>, %arg12: memref<1x1x144x1xf32, #tpu.memory_space<vmem>>, %arg13: memref<270x32xf32, #tpu.memory_space<vmem>>, %arg14: memref<234x32xf32, #tpu.memory_space<vmem>>, %arg15: memref<198x32xf32, #tpu.memory_space<vmem>>) attributes {dimension_semantics = [#tpu.dimension_semantics<parallel>, #tpu.dimension_semantics<parallel>], iteration_bounds = array<i64: 2, 2>, scalar_prefetch = 0 : i64, scratch_operands = 3 : i64, tpu.core_type = #tpu.core_type<tc>, window_params = [{transform_indices = @transform_0, window_bounds = array<i64: 1, 1, 306, 4>}, {pipeline_mode = #tpu.pipeline_mode<synchronous>, transform_indices = @transform_1, window_bounds = array<i64: 252, 1>}, {pipeline_mode = #tpu.pipeline_mode<synchronous>, transform_indices = @transform_2, window_bounds = array<i64: 36, 32>}, {pipeline_mode = #tpu.pipeline_mode<synchronous>, transform_indices = @transform_3, window_bounds = array<i64: 1, 32>}, {pipeline_mode = #tpu.pipeline_mode<synchronous>, transform_indices = @transform_4, window_bounds = array<i64: 288, 32>}, {pipeline_mode = #tpu.pipeline_mode<synchronous>, transform_indices = @transform_5, window_bounds = array<i64: 1, 32>}, {pipeline_mode = #tpu.pipeline_mode<synchronous>, transform_indices = @transform_6, window_bounds = array<i64: 288, 32>}, {pipeline_mode = #tpu.pipeline_mode<synchronous>, transform_indices = @transform_7, window_bounds = array<i64: 1, 32>}, {pipeline_mode = #tpu.pipeline_mode<synchronous>, transform_indices = @transform_8, window_bounds = array<i64: 1, 288>}, {pipeline_mode = #tpu.pipeline_mode<synchronous>, transform_indices = @transform_9, window_bounds = array<i64: 1, 1>}, {transform_indices = @transform_10, window_bounds = array<i64: 1, 1, 144, 1>}]} {
    %c8_i32 = arith.constant 8 : i32
    %0 = arith.muli %arg1, %c8_i32 : i32
    %c0 = arith.constant 0 : index
    %c0_0 = arith.constant 0 : index
    %c0_1 = arith.constant 0 : index
    %c0_2 = arith.constant 0 : index
    %1 = vector.load %arg2[%c0, %c0_0, %c0_1, %c0_2] : memref<1x1x306x4xf32, #tpu.memory_space<vmem>>, vector<1x1x252x4xf32>
    %2 = vector.shape_cast %1 : vector<1x1x252x4xf32> to vector<252x4xf32>
    %c0_3 = arith.constant 0 : index
    %c0_4 = arith.constant 0 : index
    %c1 = arith.constant 1 : index
    %c0_5 = arith.constant 0 : index
    %3 = vector.load %arg2[%c0_3, %c0_4, %c1, %c0_5] : memref<1x1x306x4xf32, #tpu.memory_space<vmem>>, vector<1x1x252x4xf32>
    %4 = vector.shape_cast %3 : vector<1x1x252x4xf32> to vector<252x4xf32>
    %c0_6 = arith.constant 0 : index
    %c0_7 = arith.constant 0 : index
    %c2 = arith.constant 2 : index
    %c0_8 = arith.constant 0 : index
    %5 = vector.load %arg2[%c0_6, %c0_7, %c2, %c0_8] : memref<1x1x306x4xf32, #tpu.memory_space<vmem>>, vector<1x1x252x4xf32>
    %6 = vector.shape_cast %5 : vector<1x1x252x4xf32> to vector<252x4xf32>
    %c0_9 = arith.constant 0 : index
    %c0_10 = arith.constant 0 : index
    %c18 = arith.constant 18 : index
    %c0_11 = arith.constant 0 : index
    %7 = vector.load %arg2[%c0_9, %c0_10, %c18, %c0_11] : memref<1x1x306x4xf32, #tpu.memory_space<vmem>>, vector<1x1x252x4xf32>
    %8 = vector.shape_cast %7 : vector<1x1x252x4xf32> to vector<252x4xf32>
    %c0_12 = arith.constant 0 : index
    %c0_13 = arith.constant 0 : index
    %c19 = arith.constant 19 : index
    %c0_14 = arith.constant 0 : index
    %9 = vector.load %arg2[%c0_12, %c0_13, %c19, %c0_14] : memref<1x1x306x4xf32, #tpu.memory_space<vmem>>, vector<1x1x252x4xf32>
    %10 = vector.shape_cast %9 : vector<1x1x252x4xf32> to vector<252x4xf32>
    %c0_15 = arith.constant 0 : index
    %c0_16 = arith.constant 0 : index
    %c20 = arith.constant 20 : index
    %c0_17 = arith.constant 0 : index
    %11 = vector.load %arg2[%c0_15, %c0_16, %c20, %c0_17] : memref<1x1x306x4xf32, #tpu.memory_space<vmem>>, vector<1x1x252x4xf32>
    %12 = vector.shape_cast %11 : vector<1x1x252x4xf32> to vector<252x4xf32>
    %c0_18 = arith.constant 0 : index
    %c0_19 = arith.constant 0 : index
    %c36 = arith.constant 36 : index
    %c0_20 = arith.constant 0 : index
    %13 = vector.load %arg2[%c0_18, %c0_19, %c36, %c0_20] : memref<1x1x306x4xf32, #tpu.memory_space<vmem>>, vector<1x1x252x4xf32>
    %14 = vector.shape_cast %13 : vector<1x1x252x4xf32> to vector<252x4xf32>
    %c0_21 = arith.constant 0 : index
    %c0_22 = arith.constant 0 : index
    %c37 = arith.constant 37 : index
    %c0_23 = arith.constant 0 : index
    %15 = vector.load %arg2[%c0_21, %c0_22, %c37, %c0_23] : memref<1x1x306x4xf32, #tpu.memory_space<vmem>>, vector<1x1x252x4xf32>
    %16 = vector.shape_cast %15 : vector<1x1x252x4xf32> to vector<252x4xf32>
    %c0_24 = arith.constant 0 : index
    %c0_25 = arith.constant 0 : index
    %c38 = arith.constant 38 : index
    %c0_26 = arith.constant 0 : index
    %17 = vector.load %arg2[%c0_24, %c0_25, %c38, %c0_26] : memref<1x1x306x4xf32, #tpu.memory_space<vmem>>, vector<1x1x252x4xf32>
    %18 = vector.shape_cast %17 : vector<1x1x252x4xf32> to vector<252x4xf32>
    %19 = tpu.concatenate %2, %4, %6, %8, %10, %12, %14, %16, %18 in 1 : vector<252x4xf32>, vector<252x4xf32>, vector<252x4xf32>, vector<252x4xf32>, vector<252x4xf32>, vector<252x4xf32>, vector<252x4xf32>, vector<252x4xf32>, vector<252x4xf32> -> vector<252x36xf32>
    %c0_27 = arith.constant 0 : index
    %c0_28 = arith.constant 0 : index
    %20 = vector.load %arg4[%c0_27, %c0_28] : memref<36x32xf32, #tpu.memory_space<vmem>>, vector<36x32xf32>
    %cst = arith.constant dense<0.000000e+00> : vector<252x32xf32>
    %21 = tpu.matmul %19, %20, %cst {dimension_numbers = #tpu.dot_dimension_numbers<[1], [0], [0], [1], [0, 0, 1, 1], [], []>} : vector<252x36xf32>, vector<36x32xf32>, vector<252x32xf32> -> vector<252x32xf32>
    %c0_29 = arith.constant 0 : index
    %c0_30 = arith.constant 0 : index
    %22 = vector.load %arg5[%c0_29, %c0_30] : memref<1x32xf32, #tpu.memory_space<vmem>>, vector<1x32xf32>
    %23 = vector.broadcast %22 : vector<1x32xf32> to vector<252x32xf32>
    %24 = arith.addf %21, %23 : vector<252x32xf32>
    %cst_31 = arith.constant 0.000000e+00 : f32
    %25 = vector.broadcast %cst_31 : f32 to vector<252x32xf32>
    %26 = arith.maximumf %24, %25 : vector<252x32xf32>
    %27 = tpu.iota {dimensions = array<i32: 0>} : vector<252x1xi32>
    %c3_i32 = arith.constant 3 : i32
    %28 = arith.subi %c3_i32, %0 : i32
    %c18_i32 = arith.constant 18 : i32
    %29 = arith.muli %28, %c18_i32 : i32
    %c19_i32 = arith.constant 19 : i32
    %30 = arith.subi %c19_i32, %0 : i32
    %c18_i32_32 = arith.constant 18 : i32
    %31 = arith.muli %30, %c18_i32_32 : i32
    %32 = vector.broadcast %29 : i32 to vector<252x1xi32>
    %33 = arith.cmpi sge, %27, %32 : vector<252x1xi32>
    %34 = vector.broadcast %31 : i32 to vector<252x1xi32>
    %35 = arith.cmpi slt, %27, %34 : vector<252x1xi32>
    %36 = arith.andi %33, %35 : vector<252x1xi1>
    %cst_33 = arith.constant 0.000000e+00 : f32
    %37 = vector.shape_cast %36 : vector<252x1xi1> to vector<252x1xi1>
    %38 = vector.broadcast %37 : vector<252x1xi1> to vector<252x32xi1>
    %39 = vector.broadcast %cst_33 : f32 to vector<252x32xf32>
    %40 = arith.select %38, %26, %39 : vector<252x32xi1>, vector<252x32xf32>
    %c0_34 = arith.constant 0 : index
    %c0_35 = arith.constant 0 : index
    %41 = vector.load %arg3[%c0_34, %c0_35] : memref<252x1xf32, #tpu.memory_space<vmem>>, vector<252x1xf32>
    %42 = vector.broadcast %41 : vector<252x1xf32> to vector<252x32xf32>
    %43 = arith.mulf %40, %42 : vector<252x32xf32>
    %cst_36 = arith.constant 0.000000e+00 : f32
    %44 = vector.broadcast %cst_36 : f32 to vector<1x32xf32>
    %c0_37 = arith.constant 0 : index
    %c0_38 = arith.constant 0 : index
    %45 = vector.load %arg13[%c0_37, %c0_38] : memref<270x32xf32, #tpu.memory_space<vmem>>, vector<1x32xf32>
    tpu.vector_store %arg13[%c0_37, %c0_38], %44 {strides = array<i32>} : memref<270x32xf32, #tpu.memory_space<vmem>>, vector<1x32xf32>,
    %c1_39 = arith.constant 1 : index
    %c0_40 = arith.constant 0 : index
    %46 = vector.load %arg13[%c1_39, %c0_40] : memref<270x32xf32, #tpu.memory_space<vmem>>, vector<252x32xf32>
    tpu.vector_store %arg13[%c1_39, %c0_40], %43 {strides = array<i32>} : memref<270x32xf32, #tpu.memory_space<vmem>>, vector<252x32xf32>,
    %cst_41 = arith.constant 0.000000e+00 : f32
    %47 = vector.broadcast %cst_41 : f32 to vector<17x32xf32>
    %c253 = arith.constant 253 : index
    %c0_42 = arith.constant 0 : index
    %48 = vector.load %arg13[%c253, %c0_42] : memref<270x32xf32, #tpu.memory_space<vmem>>, vector<17x32xf32>
    tpu.vector_store %arg13[%c253, %c0_42], %47 {strides = array<i32>} : memref<270x32xf32, #tpu.memory_space<vmem>>, vector<17x32xf32>,
    %c0_43 = arith.constant 0 : index
    %c0_44 = arith.constant 0 : index
    %49 = vector.load %arg13[%c0_43, %c0_44] : memref<270x32xf32, #tpu.memory_space<vmem>>, vector<216x32xf32>
    %c1_45 = arith.constant 1 : index
    %c0_46 = arith.constant 0 : index
    %50 = vector.load %arg13[%c1_45, %c0_46] : memref<270x32xf32, #tpu.memory_space<vmem>>, vector<216x32xf32>
    %c2_47 = arith.constant 2 : index
    %c0_48 = arith.constant 0 : index
    %51 = vector.load %arg13[%c2_47, %c0_48] : memref<270x32xf32, #tpu.memory_space<vmem>>, vector<216x32xf32>
    %c18_49 = arith.constant 18 : index
    %c0_50 = arith.constant 0 : index
    %52 = vector.load %arg13[%c18_49, %c0_50] : memref<270x32xf32, #tpu.memory_space<vmem>>, vector<216x32xf32>
    %c19_51 = arith.constant 19 : index
    %c0_52 = arith.constant 0 : index
    %53 = vector.load %arg13[%c19_51, %c0_52] : memref<270x32xf32, #tpu.memory_space<vmem>>, vector<216x32xf32>
    %c20_53 = arith.constant 20 : index
    %c0_54 = arith.constant 0 : index
    %54 = vector.load %arg13[%c20_53, %c0_54] : memref<270x32xf32, #tpu.memory_space<vmem>>, vector<216x32xf32>
    %c36_55 = arith.constant 36 : index
    %c0_56 = arith.constant 0 : index
    %55 = vector.load %arg13[%c36_55, %c0_56] : memref<270x32xf32, #tpu.memory_space<vmem>>, vector<216x32xf32>
    %c37_57 = arith.constant 37 : index
    %c0_58 = arith.constant 0 : index
    %56 = vector.load %arg13[%c37_57, %c0_58] : memref<270x32xf32, #tpu.memory_space<vmem>>, vector<216x32xf32>
    %c38_59 = arith.constant 38 : index
    %c0_60 = arith.constant 0 : index
    %57 = vector.load %arg13[%c38_59, %c0_60] : memref<270x32xf32, #tpu.memory_space<vmem>>, vector<216x32xf32>
    %58 = tpu.concatenate %49, %50, %51, %52, %53, %54, %55, %56, %57 in 1 : vector<216x32xf32>, vector<216x32xf32>, vector<216x32xf32>, vector<216x32xf32>, vector<216x32xf32>, vector<216x32xf32>, vector<216x32xf32>, vector<216x32xf32>, vector<216x32xf32> -> vector<216x288xf32>
    %c0_61 = arith.constant 0 : index
    %c0_62 = arith.constant 0 : index
    %59 = vector.load %arg6[%c0_61, %c0_62] : memref<288x32xf32, #tpu.memory_space<vmem>>, vector<288x32xf32>
    %cst_63 = arith.constant dense<0.000000e+00> : vector<216x32xf32>
    %60 = tpu.matmul %58, %59, %cst_63 {dimension_numbers = #tpu.dot_dimension_numbers<[1], [0], [0], [1], [0, 0, 1, 1], [], []>} : vector<216x288xf32>, vector<288x32xf32>, vector<216x32xf32> -> vector<216x32xf32>
    %c0_64 = arith.constant 0 : index
    %c0_65 = arith.constant 0 : index
    %61 = vector.load %arg7[%c0_64, %c0_65] : memref<1x32xf32, #tpu.memory_space<vmem>>, vector<1x32xf32>
    %62 = vector.broadcast %61 : vector<1x32xf32> to vector<216x32xf32>
    %63 = arith.addf %60, %62 : vector<216x32xf32>
    %cst_66 = arith.constant 0.000000e+00 : f32
    %64 = vector.broadcast %cst_66 : f32 to vector<216x32xf32>
    %65 = arith.maximumf %63, %64 : vector<216x32xf32>
    %66 = tpu.iota {dimensions = array<i32: 0>} : vector<216x1xi32>
    %c2_i32 = arith.constant 2 : i32
    %67 = arith.subi %c2_i32, %0 : i32
    %c18_i32_67 = arith.constant 18 : i32
    %68 = arith.muli %67, %c18_i32_67 : i32
    %c18_i32_68 = arith.constant 18 : i32
    %69 = arith.subi %c18_i32_68, %0 : i32
    %c18_i32_69 = arith.constant 18 : i32
    %70 = arith.muli %69, %c18_i32_69 : i32
    %71 = vector.broadcast %68 : i32 to vector<216x1xi32>
    %72 = arith.cmpi sge, %66, %71 : vector<216x1xi32>
    %73 = vector.broadcast %70 : i32 to vector<216x1xi32>
    %74 = arith.cmpi slt, %66, %73 : vector<216x1xi32>
    %75 = arith.andi %72, %74 : vector<216x1xi1>
    %cst_70 = arith.constant 0.000000e+00 : f32
    %76 = vector.shape_cast %75 : vector<216x1xi1> to vector<216x1xi1>
    %77 = vector.broadcast %76 : vector<216x1xi1> to vector<216x32xi1>
    %78 = vector.broadcast %cst_70 : f32 to vector<216x32xf32>
    %79 = arith.select %77, %65, %78 : vector<216x32xi1>, vector<216x32xf32>
    %c0_71 = arith.constant 0 : index
    %c0_72 = arith.constant 0 : index
    %80 = vector.load %arg3[%c0_71, %c0_72] : memref<252x1xf32, #tpu.memory_space<vmem>>, vector<216x1xf32>
    %81 = vector.broadcast %80 : vector<216x1xf32> to vector<216x32xf32>
    %82 = arith.mulf %79, %81 : vector<216x32xf32>
    %cst_73 = arith.constant 0.000000e+00 : f32
    %83 = vector.broadcast %cst_73 : f32 to vector<1x32xf32>
    %c0_74 = arith.constant 0 : index
    %c0_75 = arith.constant 0 : index
    %84 = vector.load %arg14[%c0_74, %c0_75] : memref<234x32xf32, #tpu.memory_space<vmem>>, vector<1x32xf32>
    tpu.vector_store %arg14[%c0_74, %c0_75], %83 {strides = array<i32>} : memref<234x32xf32, #tpu.memory_space<vmem>>, vector<1x32xf32>,
    %c1_76 = arith.constant 1 : index
    %c0_77 = arith.constant 0 : index
    %85 = vector.load %arg14[%c1_76, %c0_77] : memref<234x32xf32, #tpu.memory_space<vmem>>, vector<216x32xf32>
    tpu.vector_store %arg14[%c1_76, %c0_77], %82 {strides = array<i32>} : memref<234x32xf32, #tpu.memory_space<vmem>>, vector<216x32xf32>,
    %cst_78 = arith.constant 0.000000e+00 : f32
    %86 = vector.broadcast %cst_78 : f32 to vector<17x32xf32>
    %c217 = arith.constant 217 : index
    %c0_79 = arith.constant 0 : index
    %87 = vector.load %arg14[%c217, %c0_79] : memref<234x32xf32, #tpu.memory_space<vmem>>, vector<17x32xf32>
    tpu.vector_store %arg14[%c217, %c0_79], %86 {strides = array<i32>} : memref<234x32xf32, #tpu.memory_space<vmem>>, vector<17x32xf32>,
    %c0_80 = arith.constant 0 : index
    %c0_81 = arith.constant 0 : index
    %88 = vector.load %arg14[%c0_80, %c0_81] : memref<234x32xf32, #tpu.memory_space<vmem>>, vector<180x32xf32>
    %c1_82 = arith.constant 1 : index
    %c0_83 = arith.constant 0 : index
    %89 = vector.load %arg14[%c1_82, %c0_83] : memref<234x32xf32, #tpu.memory_space<vmem>>, vector<180x32xf32>
    %c2_84 = arith.constant 2 : index
    %c0_85 = arith.constant 0 : index
    %90 = vector.load %arg14[%c2_84, %c0_85] : memref<234x32xf32, #tpu.memory_space<vmem>>, vector<180x32xf32>
    %c18_86 = arith.constant 18 : index
    %c0_87 = arith.constant 0 : index
    %91 = vector.load %arg14[%c18_86, %c0_87] : memref<234x32xf32, #tpu.memory_space<vmem>>, vector<180x32xf32>
    %c19_88 = arith.constant 19 : index
    %c0_89 = arith.constant 0 : index
    %92 = vector.load %arg14[%c19_88, %c0_89] : memref<234x32xf32, #tpu.memory_space<vmem>>, vector<180x32xf32>
    %c20_90 = arith.constant 20 : index
    %c0_91 = arith.constant 0 : index
    %93 = vector.load %arg14[%c20_90, %c0_91] : memref<234x32xf32, #tpu.memory_space<vmem>>, vector<180x32xf32>
    %c36_92 = arith.constant 36 : index
    %c0_93 = arith.constant 0 : index
    %94 = vector.load %arg14[%c36_92, %c0_93] : memref<234x32xf32, #tpu.memory_space<vmem>>, vector<180x32xf32>
    %c37_94 = arith.constant 37 : index
    %c0_95 = arith.constant 0 : index
    %95 = vector.load %arg14[%c37_94, %c0_95] : memref<234x32xf32, #tpu.memory_space<vmem>>, vector<180x32xf32>
    %c38_96 = arith.constant 38 : index
    %c0_97 = arith.constant 0 : index
    %96 = vector.load %arg14[%c38_96, %c0_97] : memref<234x32xf32, #tpu.memory_space<vmem>>, vector<180x32xf32>
    %97 = tpu.concatenate %88, %89, %90, %91, %92, %93, %94, %95, %96 in 1 : vector<180x32xf32>, vector<180x32xf32>, vector<180x32xf32>, vector<180x32xf32>, vector<180x32xf32>, vector<180x32xf32>, vector<180x32xf32>, vector<180x32xf32>, vector<180x32xf32> -> vector<180x288xf32>
    %c0_98 = arith.constant 0 : index
    %c0_99 = arith.constant 0 : index
    %98 = vector.load %arg8[%c0_98, %c0_99] : memref<288x32xf32, #tpu.memory_space<vmem>>, vector<288x32xf32>
    %cst_100 = arith.constant dense<0.000000e+00> : vector<180x32xf32>
    %99 = tpu.matmul %97, %98, %cst_100 {dimension_numbers = #tpu.dot_dimension_numbers<[1], [0], [0], [1], [0, 0, 1, 1], [], []>} : vector<180x288xf32>, vector<288x32xf32>, vector<180x32xf32> -> vector<180x32xf32>
    %c0_101 = arith.constant 0 : index
    %c0_102 = arith.constant 0 : index
    %100 = vector.load %arg9[%c0_101, %c0_102] : memref<1x32xf32, #tpu.memory_space<vmem>>, vector<1x32xf32>
    %101 = vector.broadcast %100 : vector<1x32xf32> to vector<180x32xf32>
    %102 = arith.addf %99, %101 : vector<180x32xf32>
    %cst_103 = arith.constant 0.000000e+00 : f32
    %103 = vector.broadcast %cst_103 : f32 to vector<180x32xf32>
    %104 = arith.maximumf %102, %103 : vector<180x32xf32>
    %105 = tpu.iota {dimensions = array<i32: 0>} : vector<180x1xi32>
    %c1_i32 = arith.constant 1 : i32
    %106 = arith.subi %c1_i32, %0 : i32
    %c18_i32_104 = arith.constant 18 : i32
    %107 = arith.muli %106, %c18_i32_104 : i32
    %c17_i32 = arith.constant 17 : i32
    %108 = arith.subi %c17_i32, %0 : i32
    %c18_i32_105 = arith.constant 18 : i32
    %109 = arith.muli %108, %c18_i32_105 : i32
    %110 = vector.broadcast %107 : i32 to vector<180x1xi32>
    %111 = arith.cmpi sge, %105, %110 : vector<180x1xi32>
    %112 = vector.broadcast %109 : i32 to vector<180x1xi32>
    %113 = arith.cmpi slt, %105, %112 : vector<180x1xi32>
    %114 = arith.andi %111, %113 : vector<180x1xi1>
    %cst_106 = arith.constant 0.000000e+00 : f32
    %115 = vector.shape_cast %114 : vector<180x1xi1> to vector<180x1xi1>
    %116 = vector.broadcast %115 : vector<180x1xi1> to vector<180x32xi1>
    %117 = vector.broadcast %cst_106 : f32 to vector<180x32xf32>
    %118 = arith.select %116, %104, %117 : vector<180x32xi1>, vector<180x32xf32>
    %c0_107 = arith.constant 0 : index
    %c0_108 = arith.constant 0 : index
    %119 = vector.load %arg3[%c0_107, %c0_108] : memref<252x1xf32, #tpu.memory_space<vmem>>, vector<180x1xf32>
    %120 = vector.broadcast %119 : vector<180x1xf32> to vector<180x32xf32>
    %121 = arith.mulf %118, %120 : vector<180x32xf32>
    %cst_109 = arith.constant 0.000000e+00 : f32
    %122 = vector.broadcast %cst_109 : f32 to vector<1x32xf32>
    %c0_110 = arith.constant 0 : index
    %c0_111 = arith.constant 0 : index
    %123 = vector.load %arg15[%c0_110, %c0_111] : memref<198x32xf32, #tpu.memory_space<vmem>>, vector<1x32xf32>
    tpu.vector_store %arg15[%c0_110, %c0_111], %122 {strides = array<i32>} : memref<198x32xf32, #tpu.memory_space<vmem>>, vector<1x32xf32>,
    %c1_112 = arith.constant 1 : index
    %c0_113 = arith.constant 0 : index
    %124 = vector.load %arg15[%c1_112, %c0_113] : memref<198x32xf32, #tpu.memory_space<vmem>>, vector<180x32xf32>
    tpu.vector_store %arg15[%c1_112, %c0_113], %121 {strides = array<i32>} : memref<198x32xf32, #tpu.memory_space<vmem>>, vector<180x32xf32>,
    %cst_114 = arith.constant 0.000000e+00 : f32
    %125 = vector.broadcast %cst_114 : f32 to vector<17x32xf32>
    %c181 = arith.constant 181 : index
    %c0_115 = arith.constant 0 : index
    %126 = vector.load %arg15[%c181, %c0_115] : memref<198x32xf32, #tpu.memory_space<vmem>>, vector<17x32xf32>
    tpu.vector_store %arg15[%c181, %c0_115], %125 {strides = array<i32>} : memref<198x32xf32, #tpu.memory_space<vmem>>, vector<17x32xf32>,
    %c0_116 = arith.constant 0 : index
    %c0_117 = arith.constant 0 : index
    %127 = vector.load %arg15[%c0_116, %c0_117] : memref<198x32xf32, #tpu.memory_space<vmem>>, vector<144x32xf32>
    %c1_118 = arith.constant 1 : index
    %c0_119 = arith.constant 0 : index
    %128 = vector.load %arg15[%c1_118, %c0_119] : memref<198x32xf32, #tpu.memory_space<vmem>>, vector<144x32xf32>
    %c2_120 = arith.constant 2 : index
    %c0_121 = arith.constant 0 : index
    %129 = vector.load %arg15[%c2_120, %c0_121] : memref<198x32xf32, #tpu.memory_space<vmem>>, vector<144x32xf32>
    %c18_122 = arith.constant 18 : index
    %c0_123 = arith.constant 0 : index
    %130 = vector.load %arg15[%c18_122, %c0_123] : memref<198x32xf32, #tpu.memory_space<vmem>>, vector<144x32xf32>
    %c19_124 = arith.constant 19 : index
    %c0_125 = arith.constant 0 : index
    %131 = vector.load %arg15[%c19_124, %c0_125] : memref<198x32xf32, #tpu.memory_space<vmem>>, vector<144x32xf32>
    %c20_126 = arith.constant 20 : index
    %c0_127 = arith.constant 0 : index
    %132 = vector.load %arg15[%c20_126, %c0_127] : memref<198x32xf32, #tpu.memory_space<vmem>>, vector<144x32xf32>
    %c36_128 = arith.constant 36 : index
    %c0_129 = arith.constant 0 : index
    %133 = vector.load %arg15[%c36_128, %c0_129] : memref<198x32xf32, #tpu.memory_space<vmem>>, vector<144x32xf32>
    %c37_130 = arith.constant 37 : index
    %c0_131 = arith.constant 0 : index
    %134 = vector.load %arg15[%c37_130, %c0_131] : memref<198x32xf32, #tpu.memory_space<vmem>>, vector<144x32xf32>
    %c38_132 = arith.constant 38 : index
    %c0_133 = arith.constant 0 : index
    %135 = vector.load %arg15[%c38_132, %c0_133] : memref<198x32xf32, #tpu.memory_space<vmem>>, vector<144x32xf32>
    %136 = tpu.concatenate %127, %128, %129, %130, %131, %132, %133, %134, %135 in 1 : vector<144x32xf32>, vector<144x32xf32>, vector<144x32xf32>, vector<144x32xf32>, vector<144x32xf32>, vector<144x32xf32>, vector<144x32xf32>, vector<144x32xf32>, vector<144x32xf32> -> vector<144x288xf32>
    %c0_134 = arith.constant 0 : index
    %c0_135 = arith.constant 0 : index
    %137 = vector.load %arg10[%c0_134, %c0_135] : memref<1x288xf32, #tpu.memory_space<vmem>>, vector<1x288xf32>
    %138 = vector.broadcast %137 : vector<1x288xf32> to vector<144x288xf32>
    %139 = arith.mulf %136, %138 : vector<144x288xf32>
    %cst_136 = arith.constant dense<0.000000e+00> : vector<144xf32>
    %140 = vector.multi_reduction <add>, %139, %cst_136 [1] : vector<144x288xf32> to vector<144xf32>
    %141 = vector.shape_cast %140 : vector<144xf32> to vector<144x1xf32>
    %c0_137 = arith.constant 0 : index
    %c0_138 = arith.constant 0 : index
    %142 = vector.load %arg11[%c0_137, %c0_138] : memref<1x1xf32, #tpu.memory_space<vmem>>, vector<1x1xf32>
    %143 = vector.broadcast %142 : vector<1x1xf32> to vector<144x1xf32>
    %144 = arith.addf %141, %143 : vector<144x1xf32>
    %cst_139 = arith.constant 0.000000e+00 : f32
    %145 = vector.broadcast %cst_139 : f32 to vector<144x1xf32>
    %146 = arith.maximumf %144, %145 : vector<144x1xf32>
    %c0_140 = arith.constant 0 : index
    %c0_141 = arith.constant 0 : index
    %c73 = arith.constant 73 : index
    %c3 = arith.constant 3 : index
    %147 = vector.load %arg2[%c0_140, %c0_141, %c73, %c3] : memref<1x1x306x4xf32, #tpu.memory_space<vmem>>, vector<1x1x144x1xf32>
    %148 = vector.shape_cast %147 : vector<1x1x144x1xf32> to vector<144x1xf32>
    %149 = arith.addf %146, %148 : vector<144x1xf32>
    %c0_142 = arith.constant 0 : index
    %c0_143 = arith.constant 0 : index
    %c0_144 = arith.constant 0 : index
    %c0_145 = arith.constant 0 : index
    %150 = vector.load %arg12[%c0_142, %c0_143, %c0_144, %c0_145] : memref<1x1x144x1xf32, #tpu.memory_space<vmem>>, vector<1x1x144x1xf32>
    %151 = vector.shape_cast %150 : vector<1x1x144x1xf32> to vector<144x1xf32>
    %152 = vector.shape_cast %149 : vector<144x1xf32> to vector<1x1x144x1xf32>
    tpu.vector_store %arg12[%c0_142, %c0_143, %c0_144, %c0_145], %152 {strides = array<i32>} : memref<1x1x144x1xf32, #tpu.memory_space<vmem>>, vector<1x1x144x1xf32>,
    return
  }
  func.func @transform_0(%arg0: i32, %arg1: i32) -> (i32, i32, i32, i32) {
    %c0_i32 = arith.constant 0 : i32
    %c0_i32_0 = arith.constant 0 : i32
    %c0_i32_1 = arith.constant 0 : i32
    return %arg0, %arg1, %c0_i32, %c0_i32_0 : i32, i32, i32, i32
  }
  func.func @transform_1(%arg0: i32, %arg1: i32) -> (i32, i32) {
    %c0_i32 = arith.constant 0 : i32
    %c0_i32_0 = arith.constant 0 : i32
    %c0_i32_1 = arith.constant 0 : i32
    return %c0_i32, %c0_i32_0 : i32, i32
  }
  func.func @transform_2(%arg0: i32, %arg1: i32) -> (i32, i32) {
    %c0_i32 = arith.constant 0 : i32
    %c0_i32_0 = arith.constant 0 : i32
    %c0_i32_1 = arith.constant 0 : i32
    return %c0_i32, %c0_i32_0 : i32, i32
  }
  func.func @transform_3(%arg0: i32, %arg1: i32) -> (i32, i32) {
    %c0_i32 = arith.constant 0 : i32
    %c0_i32_0 = arith.constant 0 : i32
    %c0_i32_1 = arith.constant 0 : i32
    return %c0_i32, %c0_i32_0 : i32, i32
  }
  func.func @transform_4(%arg0: i32, %arg1: i32) -> (i32, i32) {
    %c0_i32 = arith.constant 0 : i32
    %c0_i32_0 = arith.constant 0 : i32
    %c0_i32_1 = arith.constant 0 : i32
    return %c0_i32, %c0_i32_0 : i32, i32
  }
  func.func @transform_5(%arg0: i32, %arg1: i32) -> (i32, i32) {
    %c0_i32 = arith.constant 0 : i32
    %c0_i32_0 = arith.constant 0 : i32
    %c0_i32_1 = arith.constant 0 : i32
    return %c0_i32, %c0_i32_0 : i32, i32
  }
  func.func @transform_6(%arg0: i32, %arg1: i32) -> (i32, i32) {
    %c0_i32 = arith.constant 0 : i32
    %c0_i32_0 = arith.constant 0 : i32
    %c0_i32_1 = arith.constant 0 : i32
    return %c0_i32, %c0_i32_0 : i32, i32
  }
  func.func @transform_7(%arg0: i32, %arg1: i32) -> (i32, i32) {
    %c0_i32 = arith.constant 0 : i32
    %c0_i32_0 = arith.constant 0 : i32
    %c0_i32_1 = arith.constant 0 : i32
    return %c0_i32, %c0_i32_0 : i32, i32
  }
  func.func @transform_8(%arg0: i32, %arg1: i32) -> (i32, i32) {
    %c0_i32 = arith.constant 0 : i32
    %c0_i32_0 = arith.constant 0 : i32
    %c0_i32_1 = arith.constant 0 : i32
    return %c0_i32, %c0_i32_0 : i32, i32
  }
  func.func @transform_9(%arg0: i32, %arg1: i32) -> (i32, i32) {
    %c0_i32 = arith.constant 0 : i32
    %c0_i32_0 = arith.constant 0 : i32
    %c0_i32_1 = arith.constant 0 : i32
    return %c0_i32, %c0_i32_0 : i32, i32
  }
  func.func @transform_10(%arg0: i32, %arg1: i32) -> (i32, i32, i32, i32) {
    %c0_i32 = arith.constant 0 : i32
    %c0_i32_0 = arith.constant 0 : i32
    %c0_i32_1 = arith.constant 0 : i32
    return %arg0, %arg1, %c0_i32, %c0_i32_0 : i32, i32, i32, i32
  }
}

</mosaic_0001>

<llo_original>
// kernel: refinenet_forward.1
$region0: #{refinenet_forward.1}
  #allocation0 [shape = 'u32[]', space=smem, size = 0x4, offset = 0x4, fixed_abs, tag = 'smem constant byte address 0x4 - core index']
  #allocation1 [shape = 'u32[144,128]{1,0:T(1,128)}', space=vmem, size = 0x12000, scoped, tag = 'internal scratch']
  #allocation2 [shape = 'f32[270,32]{1,0:T(8,128)}', space=vmem, size = 0x22000, scoped, tag = 'scratch operand']
  #allocation3 [shape = 'f32[234,32]{1,0:T(8,128)}', space=vmem, size = 0x1e000, scoped, tag = 'scratch operand']
  #allocation4 [shape = 'f32[198,32]{1,0:T(8,128)}', space=vmem, size = 0x19000, scoped, tag = 'scratch operand']
  #allocation5 [shape = 'f32[1,1]{1,0:T(1,128)S(1)}', space=vmem, size = 0x200, scoped, tag = 'scoped memory for refinenet_forward.1']
  %s0 = inlined_call_operand.vmem [shape: f32[2,2,306,4], index: 0, kind: input, shape index: {}]
  %s1 = inlined_call_operand.vmem [shape: f32[252,1], index: 1, kind: input, shape index: {}]
  %s2 = inlined_call_operand.vmem [shape: f32[36,32], index: 2, kind: input, shape index: {}]
  %s3 = inlined_call_operand.vmem [shape: f32[1,32], index: 3, kind: input, shape index: {}]
  %s4 = inlined_call_operand.vmem [shape: f32[288,32], index: 4, kind: input, shape index: {}]
  %s5 = inlined_call_operand.vmem [shape: f32[1,32], index: 5, kind: input, shape index: {}]
  %s6 = inlined_call_operand.vmem [shape: f32[288,32], index: 6, kind: input, shape index: {}]
  %s7 = inlined_call_operand.vmem [shape: f32[1,32], index: 7, kind: input, shape index: {}]
  %s8 = inlined_call_operand.vmem [shape: f32[1,288], index: 8, kind: input, shape index: {}]
  %s9 = inlined_call_operand.<no memory space> [shape: f32[1,1], index: 9, kind: input, shape index: {}]
  %s10 = inlined_call_operand.vmem [shape: f32[2,2,144,1], index: 10, kind: output, shape index: {}]
  %s11 = sld [smem:[#allocation0]]
  $region73: #{refinenet_forward.1} parent=0
    _
  %s13 = ssub.s32 1, %s11
  %s14 = scalar_select 0, %s13, %s11
  %v15 = vstv %s9
  %16 = vst [vmem:[#allocation5] sm:$0x1] %v15
  loop: start=0, step=1, limit=6
  $region2: #{refinenet_forward.1} parent=0 // loop_pre_header
    _
  $region3: #{refinenet_forward.1} parent=0 // loop_header
    %s18 = sphi 0, %s22
    %p19 = scmp.ge.s32.totalorder %s18, 6
    %s25 = sphi 0, %s37
    %s26 = sphi 0, %s33
    %s27 = sphi 0, %s25
    %s28 = sphi 0, %s26
    %s29 = sphi 0, %s27
    %s30 = sphi 0, %s28
    %s42 = sphi 0, %s44
    %s45 = sphi 0, %s42
    %s46 = sphi 0, %s45
    %s62 = sphi 0, %s46
    %s66 = sphi 0, %s66
    %s68 = sphi 0, %s66
    %s69 = sphi 0, %s68
    %s83 = sphi 0, %s69
    %s87 = sphi 0, %s87
    %s89 = sphi 0, %s87
    %s90 = sphi 0, %s89
    %s104 = sphi 0, %s90
    %s108 = sphi 0, %s108
    %s110 = sphi 0, %s108
    %s111 = sphi 0, %s110
    %s125 = sphi 0, %s111
    %s129 = sphi 0, %s129
    %s131 = sphi 0, %s129
    %s132 = sphi 0, %s131
    %s146 = sphi 0, %s132
    %s150 = sphi 0, %s150
    %s152 = sphi 0, %s150
    %s153 = sphi 0, %s152
    %s167 = sphi 0, %s153
    %s171 = sphi 0, %s171
    %s173 = sphi 0, %s171
    %s174 = sphi 0, %s173
    %s188 = sphi 0, %s174
    %s192 = sphi 0, %s192
    %s194 = sphi 0, %s192
    %s195 = sphi 0, %s194
    %s209 = sphi 0, %s195
    %s213 = sphi 0, %s213
    %s215 = sphi 0, %s213
    %s216 = sphi 0, %s215
    %s230 = sphi 0, %s216
    %s234 = sphi 0, %s234
    %s236 = sphi 0, %s234
    %s237 = sphi 0, %s236
    %s251 = sphi 0, %s237
    %s259 = sphi 0, %s261
    %s262 = sphi 0, %s259
    %s263 = sphi 0, %s262
    %s279 = sphi 0, %s263
  $region4: #{refinenet_forward.1} parent=0 // loop_header_branch
    %21 = sbr.rel (%p19) target = $region8
  $region5: #{refinenet_forward.1} parent=0 // loop_body
    %s23 = ssub.s32 %s18, 1
    %s24 = ssub.s32 %s18, 2
    %s31 = sadd.s32 1, %s26
    %p32 = scmp.ge.s32.totalorder %s31, 2
    %s33 = scalar_select %p32, 0, %s31
    %s34 = sadd.s32 1, %s25
    %s35 = scalar_select %p32, %s34, %s25
    %p36 = scmp.ge.s32.totalorder %s35, 2
    %s37 = scalar_select %p36, 0, %s35
    %s38 = ssub.s32 %s25, %s37
    %s39 = ssub.s32 %s26, %s33
    %s40 = sor.u32 %s38, %s39
    %p41 = scmp.eq.s32.totalorder %s40, 0
    %s43 = sadd.s32 %s42, 1
    %s44 = scalar_select %p41, %s42, %s43
    %p47 = pneg %p41
    %p48 = scmp.eq.s32.totalorder %s18, 3
    %p49 = por %p47, %p48
    %p50 = scmp.ne.s32.totalorder %s42, %s45
    %p51 = scmp.eq.s32.totalorder %s18, 0
    %p52 = por %p50, %p51
    %p53 = scmp.ne.s32.totalorder %s42, %s45
    %p54 = scmp.eq.s32.totalorder %s23, 3
    %p55 = por %p53, %p54
    %p56 = scmp.ne.s32.totalorder %s45, %s46
    %p57 = scmp.eq.s32.totalorder %s23, 0
    %p58 = por %p56, %p57
    %p59 = scmp.ne.s32.totalorder %s45, %s46
    %p60 = scmp.eq.s32.totalorder %s24, 3
    %p61 = por %p59, %p60
    %p63 = scmp.ne.s32.totalorder %s46, %s62
    %p64 = scmp.eq.s32.totalorder %s24, 0
    %p65 = por %p63, %p64
    %s67 = sadd.s32 %s66, 1
    %p70 = scmp.eq.s32.totalorder %s18, 3
    %p71 = scmp.ne.s32.totalorder %s66, %s68
    %p72 = scmp.eq.s32.totalorder %s18, 0
    %p73 = por %p71, %p72
    %p74 = scmp.ne.s32.totalorder %s66, %s68
    %p75 = scmp.eq.s32.totalorder %s23, 3
    %p76 = por %p74, %p75
    %p77 = scmp.ne.s32.totalorder %s68, %s69
    %p78 = scmp.eq.s32.totalorder %s23, 0
    %p79 = por %p77, %p78
    %p80 = scmp.ne.s32.totalorder %s68, %s69
    %p81 = scmp.eq.s32.totalorder %s24, 3
    %p82 = por %p80, %p81
    %p84 = scmp.ne.s32.totalorder %s69, %s83
    %p85 = scmp.eq.s32.totalorder %s24, 0
    %p86 = por %p84, %p85
    %s88 = sadd.s32 %s87, 1
    %p91 = scmp.eq.s32.totalorder %s18, 3
    %p92 = scmp.ne.s32.totalorder %s87, %s89
    %p93 = scmp.eq.s32.totalorder %s18, 0
    %p94 = por %p92, %p93
    %p95 = scmp.ne.s32.totalorder %s87, %s89
    %p96 = scmp.eq.s32.totalorder %s23, 3
    %p97 = por %p95, %p96
    %p98 = scmp.ne.s32.totalorder %s89, %s90
    %p99 = scmp.eq.s32.totalorder %s23, 0
    %p100 = por %p98, %p99
    %p101 = scmp.ne.s32.totalorder %s89, %s90
    %p102 = scmp.eq.s32.totalorder %s24, 3
    %p103 = por %p101, %p102
    %p105 = scmp.ne.s32.totalorder %s90, %s104
    %p106 = scmp.eq.s32.totalorder %s24, 0
    %p107 = por %p105, %p106
    %s109 = sadd.s32 %s108, 1
    %p112 = scmp.eq.s32.totalorder %s18, 3
    %p113 = scmp.ne.s32.totalorder %s108, %s110
    %p114 = scmp.eq.s32.totalorder %s18, 0
    %p115 = por %p113, %p114
    %p116 = scmp.ne.s32.totalorder %s108, %s110
    %p117 = scmp.eq.s32.totalorder %s23, 3
    %p118 = por %p116, %p117
    %p119 = scmp.ne.s32.totalorder %s110, %s111
    %p120 = scmp.eq.s32.totalorder %s23, 0
    %p121 = por %p119, %p120
    %p122 = scmp.ne.s32.totalorder %s110, %s111
    %p123 = scmp.eq.s32.totalorder %s24, 3
    %p124 = por %p122, %p123
    %p126 = scmp.ne.s32.totalorder %s111, %s125
    %p127 = scmp.eq.s32.totalorder %s24, 0
    %p128 = por %p126, %p127
    %s130 = sadd.s32 %s129, 1
    %p133 = scmp.eq.s32.totalorder %s18, 3
    %p134 = scmp.ne.s32.totalorder %s129, %s131
    %p135 = scmp.eq.s32.totalorder %s18, 0
    %p136 = por %p134, %p135
    %p137 = scmp.ne.s32.totalorder %s129, %s131
    %p138 = scmp.eq.s32.totalorder %s23, 3
    %p139 = por %p137, %p138
    %p140 = scmp.ne.s32.totalorder %s131, %s132
    %p141 = scmp.eq.s32.totalorder %s23, 0
    %p142 = por %p140, %p141
    %p143 = scmp.ne.s32.totalorder %s131, %s132
    %p144 = scmp.eq.s32.totalorder %s24, 3
    %p145 = por %p143, %p144
    %p147 = scmp.ne.s32.totalorder %s132, %s146
    %p148 = scmp.eq.s32.totalorder %s24, 0
    %p149 = por %p147, %p148
    %s151 = sadd.s32 %s150, 1
    %p154 = scmp.eq.s32.totalorder %s18, 3
    %p155 = scmp.ne.s32.totalorder %s150, %s152
    %p156 = scmp.eq.s32.totalorder %s18, 0
    %p157 = por %p155, %p156
    %p158 = scmp.ne.s32.totalorder %s150, %s152
    %p159 = scmp.eq.s32.totalorder %s23, 3
    %p160 = por %p158, %p159
    %p161 = scmp.ne.s32.totalorder %s152, %s153
    %p162 = scmp.eq.s32.totalorder %s23, 0
    %p163 = por %p161, %p162
    %p164 = scmp.ne.s32.totalorder %s152, %s153
    %p165 = scmp.eq.s32.totalorder %s24, 3
    %p166 = por %p164, %p165
    %p168 = scmp.ne.s32.totalorder %s153, %s167
    %p169 = scmp.eq.s32.totalorder %s24, 0
    %p170 = por %p168, %p169
    %s172 = sadd.s32 %s171, 1
    %p175 = scmp.eq.s32.totalorder %s18, 3
    %p176 = scmp.ne.s32.totalorder %s171, %s173
    %p177 = scmp.eq.s32.totalorder %s18, 0
    %p178 = por %p176, %p177
    %p179 = scmp.ne.s32.totalorder %s171, %s173
    %p180 = scmp.eq.s32.totalorder %s23, 3
    %p181 = por %p179, %p180
    %p182 = scmp.ne.s32.totalorder %s173, %s174
    %p183 = scmp.eq.s32.totalorder %s23, 0
    %p184 = por %p182, %p183
    %p185 = scmp.ne.s32.totalorder %s173, %s174
    %p186 = scmp.eq.s32.totalorder %s24, 3
    %p187 = por %p185, %p186
    %p189 = scmp.ne.s32.totalorder %s174, %s188
    %p190 = scmp.eq.s32.totalorder %s24, 0
    %p191 = por %p189, %p190
    %s193 = sadd.s32 %s192, 1
    %p196 = scmp.eq.s32.totalorder %s18, 3
    %p197 = scmp.ne.s32.totalorder %s192, %s194
    %p198 = scmp.eq.s32.totalorder %s18, 0
    %p199 = por %p197, %p198
    %p200 = scmp.ne.s32.totalorder %s192, %s194
    %p201 = scmp.eq.s32.totalorder %s23, 3
    %p202 = por %p200, %p201
    %p203 = scmp.ne.s32.totalorder %s194, %s195
    %p204 = scmp.eq.s32.totalorder %s23, 0
    %p205 = por %p203, %p204
    %p206 = scmp.ne.s32.totalorder %s194, %s195
    %p207 = scmp.eq.s32.totalorder %s24, 3
    %p208 = por %p206, %p207
    %p210 = scmp.ne.s32.totalorder %s195, %s209
    %p211 = scmp.eq.s32.totalorder %s24, 0
    %p212 = por %p210, %p211
    %s214 = sadd.s32 %s213, 1
    %p217 = scmp.eq.s32.totalorder %s18, 3
    %p218 = scmp.ne.s32.totalorder %s213, %s215
    %p219 = scmp.eq.s32.totalorder %s18, 0
    %p220 = por %p218, %p219
    %p221 = scmp.ne.s32.totalorder %s213, %s215
    %p222 = scmp.eq.s32.totalorder %s23, 3
    %p223 = por %p221, %p222
    %p224 = scmp.ne.s32.totalorder %s215, %s216
    %p225 = scmp.eq.s32.totalorder %s23, 0
    %p226 = por %p224, %p225
    %p227 = scmp.ne.s32.totalorder %s215, %s216
    %p228 = scmp.eq.s32.totalorder %s24, 3
    %p229 = por %p227, %p228
    %p231 = scmp.ne.s32.totalorder %s216, %s230
    %p232 = scmp.eq.s32.totalorder %s24, 0
    %p233 = por %p231, %p232
    %s235 = sadd.s32 %s234, 1
    %p238 = scmp.eq.s32.totalorder %s18, 3
    %p239 = scmp.ne.s32.totalorder %s234, %s236
    %p240 = scmp.eq.s32.totalorder %s18, 0
    %p241 = por %p239, %p240
    %p242 = scmp.ne.s32.totalorder %s234, %s236
    %p243 = scmp.eq.s32.totalorder %s23, 3
    %p244 = por %p242, %p243
    %p245 = scmp.ne.s32.totalorder %s236, %s237
    %p246 = scmp.eq.s32.totalorder %s23, 0
    %p247 = por %p245, %p246
    %p248 = scmp.ne.s32.totalorder %s236, %s237
    %p249 = scmp.eq.s32.totalorder %s24, 3
    %p250 = por %p248, %p249
    %p252 = scmp.ne.s32.totalorder %s237, %s251
    %p253 = scmp.eq.s32.totalorder %s24, 0
    %p254 = por %p252, %p253
    %s255 = ssub.s32 %s25, %s37
    %s256 = ssub.s32 %s26, %s33
    %s257 = sor.u32 %s255, %s256
    %p258 = scmp.eq.s32.totalorder %s257, 0
    %s260 = sadd.s32 %s259, 1
    %s261 = scalar_select %p258, %s259, %s260
    %p264 = pneg %p258
    %p265 = scmp.eq.s32.totalorder %s18, 3
    %p266 = por %p264, %p265
    %p267 = scmp.ne.s32.totalorder %s259, %s262
    %p268 = scmp.eq.s32.totalorder %s18, 0
    %p269 = por %p267, %p268
    %p270 = scmp.ne.s32.totalorder %s259, %s262
    %p271 = scmp.eq.s32.totalorder %s23, 3
    %p272 = por %p270, %p271
    %p273 = scmp.ne.s32.totalorder %s262, %s263
    %p274 = scmp.eq.s32.totalorder %s23, 0
    %p275 = por %p273, %p274
    %p276 = scmp.ne.s32.totalorder %s262, %s263
    %p277 = scmp.eq.s32.totalorder %s24, 3
    %p278 = por %p276, %p277
    %p280 = scmp.ne.s32.totalorder %s263, %s279
    %p281 = scmp.eq.s32.totalorder %s24, 0
    %p282 = por %p280, %p281
    %p283 = scmp.le.s32.totalorder 1, %s18
    %p284 = scmp.lt.s32.totalorder %s18, 5
    %p285 = pnand %p283, %p284
    %p286 = pneg %p285
    // Predicated region
    $region9: #{refinenet_forward.1} parent=5 // pred_check
      _
    $region10: #{refinenet_forward.1} parent=5 // pred_check_branch
      %288 = sbr.rel (%p285) target = $region12
    $region11: #{refinenet_forward.1} parent=5 // pred_region
      %s289 = ssub.s32 %s18, 1
      // Predicated region
      $region13: #{refinenet_forward.1} parent=11 // pred_check
        %p290 = pneg %p79
      $region14: #{refinenet_forward.1} parent=11 // pred_check_branch
        %292 = sbr.rel (%p290) target = $region16
      $region15: #{refinenet_forward.1} parent=11 // pred_region
        _
      $region16: #{refinenet_forward.1} parent=11 // pred_fallthru
        _
      // Predicated region
      $region17: #{refinenet_forward.1} parent=11 // pred_check
        %p293 = pneg %p100
      $region18: #{refinenet_forward.1} parent=11 // pred_check_branch
        %295 = sbr.rel (%p293) target = $region20
      $region19: #{refinenet_forward.1} parent=11 // pred_region
        _
      $region20: #{refinenet_forward.1} parent=11 // pred_fallthru
        _
      // Predicated region
      $region21: #{refinenet_forward.1} parent=11 // pred_check
        %p296 = pneg %p121
      $region22: #{refinenet_forward.1} parent=11 // pred_check_branch
        %298 = sbr.rel (%p296) target = $region24
      $region23: #{refinenet_forward.1} parent=11 // pred_region
        _
      $region24: #{refinenet_forward.1} parent=11 // pred_fallthru
        _
      // Predicated region
      $region25: #{refinenet_forward.1} parent=11 // pred_check
        %p299 = pneg %p142
      $region26: #{refinenet_forward.1} parent=11 // pred_check_branch
        %301 = sbr.rel (%p299) target = $region28
      $region27: #{refinenet_forward.1} parent=11 // pred_region
        _
      $region28: #{refinenet_forward.1} parent=11 // pred_fallthru
        _
      // Predicated region
      $region29: #{refinenet_forward.1} parent=11 // pred_check
        %p302 = pneg %p163
      $region30: #{refinenet_forward.1} parent=11 // pred_check_branch
        %304 = sbr.rel (%p302) target = $region32
      $region31: #{refinenet_forward.1} parent=11 // pred_region
        _
      $region32: #{refinenet_forward.1} parent=11 // pred_fallthru
        _
      // Predicated region
      $region33: #{refinenet_forward.1} parent=11 // pred_check
        %p305 = pneg %p184
      $region34: #{refinenet_forward.1} parent=11 // pred_check_branch
        %307 = sbr.rel (%p305) target = $region36
      $region35: #{refinenet_forward.1} parent=11 // pred_region
        _
      $region36: #{refinenet_forward.1} parent=11 // pred_fallthru
        _
      // Predicated region
      $region37: #{refinenet_forward.1} parent=11 // pred_check
        %p308 = pneg %p205
      $region38: #{refinenet_forward.1} parent=11 // pred_check_branch
        %310 = sbr.rel (%p308) target = $region40
      $region39: #{refinenet_forward.1} parent=11 // pred_region
        _
      $region40: #{refinenet_forward.1} parent=11 // pred_fallthru
        _
      // Predicated region
      $region41: #{refinenet_forward.1} parent=11 // pred_check
        %p311 = pneg %p226
      $region42: #{refinenet_forward.1} parent=11 // pred_check_branch
        %313 = sbr.rel (%p311) target = $region44
      $region43: #{refinenet_forward.1} parent=11 // pred_region
        _
      $region44: #{refinenet_forward.1} parent=11 // pred_fallthru
        _
      // Predicated region
      $region45: #{refinenet_forward.1} parent=11 // pred_check
        %p314 = pneg %p247
      $region46: #{refinenet_forward.1} parent=11 // pred_check_branch
        %316 = sbr.rel (%p314) target = $region48
      $region47: #{refinenet_forward.1} parent=11 // pred_region
        _
      $region48: #{refinenet_forward.1} parent=11 // pred_fallthru
        _
    $region12: #{refinenet_forward.1} parent=5 // pred_fallthru
      _
    %p317 = scmp.lt.s32.totalorder %s18, 4
    // Predicated region
    $region49: #{refinenet_forward.1} parent=5 // pred_check
      %p318 = pneg %p317
    $region50: #{refinenet_forward.1} parent=5 // pred_check_branch
      %320 = sbr.rel (%p318) target = $region52
    $region51: #{refinenet_forward.1} parent=5 // pred_region
      // Predicated region
      $region53: #{refinenet_forward.1} parent=51 // pred_check
        %p321 = pneg %p52
      $region54: #{refinenet_forward.1} parent=51 // pred_check_branch
        %323 = sbr.rel (%p321) target = $region56
      $region55: #{refinenet_forward.1} parent=51 // pred_region
        %p324 = scmp.lt.s32.totalorder %s25, 1
        %s325 = scalar_select %p324, %s25, 1
        %p326 = scmp.lt.s32.totalorder %s26, 1
        %s327 = scalar_select %p326, %s26, 1
        %s328 = smul.addr %s327, 39
        %s329 = smul.addr %s325, 78
        %s330 = sadd.s32 %s328, %s329
        %s331 = smul.addr %s330, 8
        %s332 = scalar_lea.vmem %s0, %s331
      $region56: #{refinenet_forward.1} parent=51 // pred_fallthru
        _
    $region52: #{refinenet_forward.1} parent=5 // pred_fallthru
      _
    %p333 = scmp.le.s32.totalorder 1, %s18
    %p334 = scmp.lt.s32.totalorder %s18, 5
    %p335 = pnand %p333, %p334
    %p336 = pneg %p335
    // Predicated region
    $region57: #{refinenet_forward.1} parent=5 // pred_check
      _
    $region58: #{refinenet_forward.1} parent=5 // pred_check_branch
      %338 = sbr.rel (%p335) target = $region60
    $region59: #{refinenet_forward.1} parent=5 // pred_region
      %s339 = ssub.s32 %s18, 1
      %p340 = scmp.lt.s32.totalorder %s27, 1
      %s341 = scalar_select %p340, %s27, 1
      %p342 = scmp.lt.s32.totalorder %s28, 1
      %s343 = scalar_select %p342, %s28, 1
      %s344 = smul.addr %s343, 39
      %s345 = smul.addr %s341, 78
      %s346 = sadd.s32 %s344, %s345
      %s347 = smul.addr %s346, 8
      %s348 = scalar_lea.vmem %s0, %s347
      %p349 = pneg %p58
      %p350 = pneg %p55
      %p351 = pneg %p79
      %p352 = pneg %p76
      %p353 = pneg %p100
      %p354 = pneg %p97
      %p355 = pneg %p121
      %p356 = pneg %p118
      %p357 = pneg %p142
      %p358 = pneg %p139
      %p359 = pneg %p163
      %p360 = pneg %p160
      %p361 = pneg %p184
      %p362 = pneg %p181
      %p363 = pneg %p205
      %p364 = pneg %p202
      %p365 = pneg %p226
      %p366 = pneg %p223
      %p367 = pneg %p247
      %p368 = pneg %p244
      %p369 = pneg %p275
      %p370 = pneg %p272
      %p371 = scmp.lt.s32.totalorder %s27, 1
      %s372 = scalar_select %p371, %s27, 1
      %p373 = scmp.lt.s32.totalorder %s28, 1
      %s374 = scalar_select %p373, %s28, 1
      %s375 = smul.addr %s374, 18
      %s376 = smul.addr %s372, 36
      %s377 = sadd.s32 %s375, %s376
      %s378 = smul.addr %s377, 8
      %s379 = scalar_lea.vmem %s10, %s378
      %p380 = scmp.lt.s32.totalorder %s27, 1
      %s381 = scalar_select %p380, %s27, 1
      %p382 = scmp.lt.s32.totalorder %s28, 1
      %s383 = scalar_select %p382, %s28, 1
      %s384 = smul.addr %s383, 39
      %s385 = smul.addr %s381, 78
      %s386 = sadd.s32 %s384, %s385
      %s387 = smul.addr %s386, 8
      %s388 = scalar_lea.vmem %s0, %s387
      %p389 = scmp.lt.s32.totalorder %s27, 1
      %s390 = scalar_select %p389, %s27, 1
      %p391 = scmp.lt.s32.totalorder %s28, 1
      %s392 = scalar_select %p391, %s28, 1
      %s393 = smul.addr %s392, 18
      %s394 = smul.addr %s390, 36
      %s395 = sadd.s32 %s393, %s394
      %s396 = smul.addr %s395, 8
      %s397 = scalar_lea.vmem %s10, %s396
      %s398 = smul.u32 %s28, 8
      %v399 = vld [vmem:[%s388] sm:$0xff]
      %v400 = vld [vmem:[%s388 + $0x8] sm:$0xff]
      %v401 = vld [vmem:[%s388 + $0x10] sm:$0xff]
      %v402 = vld [vmem:[%s388 + $0x18] sm:$0xff]
      %v403 = vld [vmem:[%s388 + $0x20] sm:$0xff]
      %v404 = vld [vmem:[%s388 + $0x28] sm:$0xff]
      %v405 = vld [vmem:[%s388 + $0x30] sm:$0xff]
      %v406 = vld [vmem:[%s388 + $0x38] sm:$0xff]
      %v407 = vld [vmem:[%s388 + $0x40] sm:$0xff]
      %v408 = vld [vmem:[%s388 + $0x48] sm:$0xff]
      %v409 = vld [vmem:[%s388 + $0x50] sm:$0xff]
      %v410 = vld [vmem:[%s388 + $0x58] sm:$0xff]
      %v411 = vld [vmem:[%s388 + $0x60] sm:$0xff]
      %v412 = vld [vmem:[%s388 + $0x68] sm:$0xff]
      %v413 = vld [vmem:[%s388 + $0x70] sm:$0xff]
      %v414 = vld [vmem:[%s388 + $0x78] sm:$0xff]
      %v415 = vld [vmem:[%s388 + $0x80] sm:$0xff]
      %v416 = vld [vmem:[%s388 + $0x88] sm:$0xff]
      %v417 = vld [vmem:[%s388 + $0x90] sm:$0xff]
      %v418 = vld [vmem:[%s388 + $0x98] sm:$0xff]
      %v419 = vld [vmem:[%s388 + $0xa0] sm:$0xff]
      %v420 = vld [vmem:[%s388 + $0xa8] sm:$0xff]
      %v421 = vld [vmem:[%s388 + $0xb0] sm:$0xff]
      %v422 = vld [vmem:[%s388 + $0xb8] sm:$0xff]
      %v423 = vld [vmem:[%s388 + $0xc0] sm:$0xff]
      %v424 = vld [vmem:[%s388 + $0xc8] sm:$0xff]
      %v425 = vld [vmem:[%s388 + $0xd0] sm:$0xff]
      %v426 = vld [vmem:[%s388 + $0xd8] sm:$0xff]
      %v427 = vld [vmem:[%s388 + $0xe0] sm:$0xff]
      %v428 = vld [vmem:[%s388 + $0xe8] sm:$0xff]
      %v429 = vld [vmem:[%s388 + $0xf0] sm:$0xff]
      %v430 = vld [vmem:[%s388 + $0xf8] sm:$0xf]
      %v431 = vld [vmem:[%s388 + $0x1] sm:$0xff]
      %v432 = vld [vmem:[%s388 + $0x9] sm:$0xff]
      %v433 = vld [vmem:[%s388 + $0x11] sm:$0xff]
      %v434 = vld [vmem:[%s388 + $0x19] sm:$0xff]
      %v435 = vld [vmem:[%s388 + $0x21] sm:$0xff]
      %v436 = vld [vmem:[%s388 + $0x29] sm:$0xff]
      %v437 = vld [vmem:[%s388 + $0x31] sm:$0xff]
      %v438 = vld [vmem:[%s388 + $0x39] sm:$0xff]
      %v439 = vld [vmem:[%s388 + $0x41] sm:$0xff]
      %v440 = vld [vmem:[%s388 + $0x49] sm:$0xff]
      %v441 = vld [vmem:[%s388 + $0x51] sm:$0xff]
      %v442 = vld [vmem:[%s388 + $0x59] sm:$0xff]
      %v443 = vld [vmem:[%s388 + $0x61] sm:$0xff]
      %v444 = vld [vmem:[%s388 + $0x69] sm:$0xff]
      %v445 = vld [vmem:[%s388 + $0x71] sm:$0xff]
      %v446 = vld [vmem:[%s388 + $0x79] sm:$0xff]
      %v447 = vld [vmem:[%s388 + $0x81] sm:$0xff]
      %v448 = vld [vmem:[%s388 + $0x89] sm:$0xff]
      %v449 = vld [vmem:[%s388 + $0x91] sm:$0xff]
      %v450 = vld [vmem:[%s388 + $0x99] sm:$0xff]
      %v451 = vld [vmem:[%s388 + $0xa1] sm:$0xff]
      %v452 = vld [vmem:[%s388 + $0xa9] sm:$0xff]
      %v453 = vld [vmem:[%s388 + $0xb1] sm:$0xff]
      %v454 = vld [vmem:[%s388 + $0xb9] sm:$0xff]
      %v455 = vld [vmem:[%s388 + $0xc1] sm:$0xff]
      %v456 = vld [vmem:[%s388 + $0xc9] sm:$0xff]
      %v457 = vld [vmem:[%s388 + $0xd1] sm:$0xff]
      %v458 = vld [vmem:[%s388 + $0xd9] sm:$0xff]
      %v459 = vld [vmem:[%s388 + $0xe1] sm:$0xff]
      %v460 = vld [vmem:[%s388 + $0xe9] sm:$0xff]
      %v461 = vld [vmem:[%s388 + $0xf1] sm:$0xff]
      %v462 = vld [vmem:[%s388 + $0xf9] sm:$0xf]
      %v463 = vld [vmem:[%s388 + $0x2] sm:$0xff]
      %v464 = vld [vmem:[%s388 + $0xa] sm:$0xff]
      %v465 = vld [vmem:[%s388 + $0x12] sm:$0xff]
      %v466 = vld [vmem:[%s388 + $0x1a] sm:$0xff]
      %v467 = vld [vmem:[%s388 + $0x22] sm:$0xff]
      %v468 = vld [vmem:[%s388 + $0x2a] sm:$0xff]
      %v469 = vld [vmem:[%s388 + $0x32] sm:$0xff]
      %v470 = vld [vmem:[%s388 + $0x3a] sm:$0xff]
      %v471 = vld [vmem:[%s388 + $0x42] sm:$0xff]
      %v472 = vld [vmem:[%s388 + $0x4a] sm:$0xff]
      %v473 = vld [vmem:[%s388 + $0x52] sm:$0xff]
      %v474 = vld [vmem:[%s388 + $0x5a] sm:$0xff]
      %v475 = vld [vmem:[%s388 + $0x62] sm:$0xff]
      %v476 = vld [vmem:[%s388 + $0x6a] sm:$0xff]
      %v477 = vld [vmem:[%s388 + $0x72] sm:$0xff]
      %v478 = vld [vmem:[%s388 + $0x7a] sm:$0xff]
      %v479 = vld [vmem:[%s388 + $0x82] sm:$0xff]
      %v480 = vld [vmem:[%s388 + $0x8a] sm:$0xff]
      %v481 = vld [vmem:[%s388 + $0x92] sm:$0xff]
      %v482 = vld [vmem:[%s388 + $0x9a] sm:$0xff]
      %v483 = vld [vmem:[%s388 + $0xa2] sm:$0xff]
      %v484 = vld [vmem:[%s388 + $0xaa] sm:$0xff]
      %v485 = vld [vmem:[%s388 + $0xb2] sm:$0xff]
      %v486 = vld [vmem:[%s388 + $0xba] sm:$0xff]
      %v487 = vld [vmem:[%s388 + $0xc2] sm:$0xff]
      %v488 = vld [vmem:[%s388 + $0xca] sm:$0xff]
      %v489 = vld [vmem:[%s388 + $0xd2] sm:$0xff]
      %v490 = vld [vmem:[%s388 + $0xda] sm:$0xff]
      %v491 = vld [vmem:[%s388 + $0xe2] sm:$0xff]
      %v492 = vld [vmem:[%s388 + $0xea] sm:$0xff]
      %v493 = vld [vmem:[%s388 + $0xf2] sm:$0xff]
      %v494 = vld [vmem:[%s388 + $0xfa] sm:$0xf]
      %v495 = vld [vmem:[%s388 + $0xfa] sm:$0xff]
      %v496 = vld [vmem:[%s388 + $0x102] sm:$0xff]
      %v497 = vld [vmem:[%s388 + $0x10a] sm:$0xf]
      %v498 = vld [vmem:[%s388 + $0x13] sm:$0xff]
      %v499 = vld [vmem:[%s388 + $0x1b] sm:$0xff]
      %v500 = vld [vmem:[%s388 + $0x23] sm:$0xff]
      %v501 = vld [vmem:[%s388 + $0x2b] sm:$0xff]
      %v502 = vld [vmem:[%s388 + $0x33] sm:$0xff]
      %v503 = vld [vmem:[%s388 + $0x3b] sm:$0xff]
      %v504 = vld [vmem:[%s388 + $0x43] sm:$0xff]
      %v505 = vld [vmem:[%s388 + $0x4b] sm:$0xff]
      %v506 = vld [vmem:[%s388 + $0x53] sm:$0xff]
      %v507 = vld [vmem:[%s388 + $0x5b] sm:$0xff]
      %v508 = vld [vmem:[%s388 + $0x63] sm:$0xff]
      %v509 = vld [vmem:[%s388 + $0x6b] sm:$0xff]
      %v510 = vld [vmem:[%s388 + $0x73] sm:$0xff]
      %v511 = vld [vmem:[%s388 + $0x7b] sm:$0xff]
      %v512 = vld [vmem:[%s388 + $0x83] sm:$0xff]
      %v513 = vld [vmem:[%s388 + $0x8b] sm:$0xff]
      %v514 = vld [vmem:[%s388 + $0x93] sm:$0xff]
      %v515 = vld [vmem:[%s388 + $0x9b] sm:$0xff]
      %v516 = vld [vmem:[%s388 + $0xa3] sm:$0xff]
      %v517 = vld [vmem:[%s388 + $0xab] sm:$0xff]
      %v518 = vld [vmem:[%s388 + $0xb3] sm:$0xff]
      %v519 = vld [vmem:[%s388 + $0xbb] sm:$0xff]
      %v520 = vld [vmem:[%s388 + $0xc3] sm:$0xff]
      %v521 = vld [vmem:[%s388 + $0xcb] sm:$0xff]
      %v522 = vld [vmem:[%s388 + $0xd3] sm:$0xff]
      %v523 = vld [vmem:[%s388 + $0xdb] sm:$0xff]
      %v524 = vld [vmem:[%s388 + $0xe3] sm:$0xff]
      %v525 = vld [vmem:[%s388 + $0xeb] sm:$0xff]
      %v526 = vld [vmem:[%s388 + $0xf3] sm:$0xff]
      %v527 = vld [vmem:[%s388 + $0xfb] sm:$0xff]
      %v528 = vld [vmem:[%s388 + $0x103] sm:$0xff]
      %v529 = vld [vmem:[%s388 + $0x10b] sm:$0xf]
      %v530 = vld [vmem:[%s388 + $0x14] sm:$0xff]
      %v531 = vld [vmem:[%s388 + $0x1c] sm:$0xff]
      %v532 = vld [vmem:[%s388 + $0x24] sm:$0xff]
      %v533 = vld [vmem:[%s388 + $0x2c] sm:$0xff]
      %v534 = vld [vmem:[%s388 + $0x34] sm:$0xff]
      %v535 = vld [vmem:[%s388 + $0x3c] sm:$0xff]
      %v536 = vld [vmem:[%s388 + $0x44] sm:$0xff]
      %v537 = vld [vmem:[%s388 + $0x4c] sm:$0xff]
      %v538 = vld [vmem:[%s388 + $0x54] sm:$0xff]
      %v539 = vld [vmem:[%s388 + $0x5c] sm:$0xff]
      %v540 = vld [vmem:[%s388 + $0x64] sm:$0xff]
      %v541 = vld [vmem:[%s388 + $0x6c] sm:$0xff]
      %v542 = vld [vmem:[%s388 + $0x74] sm:$0xff]
      %v543 = vld [vmem:[%s388 + $0x7c] sm:$0xff]
      %v544 = vld [vmem:[%s388 + $0x84] sm:$0xff]
      %v545 = vld [vmem:[%s388 + $0x8c] sm:$0xff]
      %v546 = vld [vmem:[%s388 + $0x94] sm:$0xff]
      %v547 = vld [vmem:[%s388 + $0x9c] sm:$0xff]
      %v548 = vld [vmem:[%s388 + $0xa4] sm:$0xff]
      %v549 = vld [vmem:[%s388 + $0xac] sm:$0xff]
      %v550 = vld [vmem:[%s388 + $0xb4] sm:$0xff]
      %v551 = vld [vmem:[%s388 + $0xbc] sm:$0xff]
      %v552 = vld [vmem:[%s388 + $0xc4] sm:$0xff]
      %v553 = vld [vmem:[%s388 + $0xcc] sm:$0xff]
      %v554 = vld [vmem:[%s388 + $0xd4] sm:$0xff]
      %v555 = vld [vmem:[%s388 + $0xdc] sm:$0xff]
      %v556 = vld [vmem:[%s388 + $0xe4] sm:$0xff]
      %v557 = vld [vmem:[%s388 + $0xec] sm:$0xff]
      %v558 = vld [vmem:[%s388 + $0xf4] sm:$0xff]
      %v559 = vld [vmem:[%s388 + $0xfc] sm:$0xff]
      %v560 = vld [vmem:[%s388 + $0x104] sm:$0xff]
      %v561 = vld [vmem:[%s388 + $0x10c] sm:$0xf]
      %v562 = vld [vmem:[%s388 + $0x10c] sm:$0xff]
      %v563 = vld [vmem:[%s388 + $0x114] sm:$0xff]
      %v564 = vld [vmem:[%s388 + $0x11c] sm:$0xf]
      %v565 = vld [vmem:[%s388 + $0x25] sm:$0xff]
      %v566 = vld [vmem:[%s388 + $0x2d] sm:$0xff]
      %v567 = vld [vmem:[%s388 + $0x35] sm:$0xff]
      %v568 = vld [vmem:[%s388 + $0x3d] sm:$0xff]
      %v569 = vld [vmem:[%s388 + $0x45] sm:$0xff]
      %v570 = vld [vmem:[%s388 + $0x4d] sm:$0xff]
      %v571 = vld [vmem:[%s388 + $0x55] sm:$0xff]
      %v572 = vld [vmem:[%s388 + $0x5d] sm:$0xff]
      %v573 = vld [vmem:[%s388 + $0x65] sm:$0xff]
      %v574 = vld [vmem:[%s388 + $0x6d] sm:$0xff]
      %v575 = vld [vmem:[%s388 + $0x75] sm:$0xff]
      %v576 = vld [vmem:[%s388 + $0x7d] sm:$0xff]
      %v577 = vld [vmem:[%s388 + $0x85] sm:$0xff]
      %v578 = vld [vmem:[%s388 + $0x8d] sm:$0xff]
      %v579 = vld [vmem:[%s388 + $0x95] sm:$0xff]
      %v580 = vld [vmem:[%s388 + $0x9d] sm:$0xff]
      %v581 = vld [vmem:[%s388 + $0xa5] sm:$0xff]
      %v582 = vld [vmem:[%s388 + $0xad] sm:$0xff]
      %v583 = vld [vmem:[%s388 + $0xb5] sm:$0xff]
      %v584 = vld [vmem:[%s388 + $0xbd] sm:$0xff]
      %v585 = vld [vmem:[%s388 + $0xc5] sm:$0xff]
      %v586 = vld [vmem:[%s388 + $0xcd] sm:$0xff]
      %v587 = vld [vmem:[%s388 + $0xd5] sm:$0xff]
      %v588 = vld [vmem:[%s388 + $0xdd] sm:$0xff]
      %v589 = vld [vmem:[%s388 + $0xe5] sm:$0xff]
      %v590 = vld [vmem:[%s388 + $0xed] sm:$0xff]
      %v591 = vld [vmem:[%s388 + $0xf5] sm:$0xff]
      %v592 = vld [vmem:[%s388 + $0xfd] sm:$0xff]
      %v593 = vld [vmem:[%s388 + $0x105] sm:$0xff]
      %v594 = vld [vmem:[%s388 + $0x10d] sm:$0xff]
      %v595 = vld [vmem:[%s388 + $0x115] sm:$0xff]
      %v596 = vld [vmem:[%s388 + $0x11d] sm:$0xf]
      %v597 = vld [vmem:[%s388 + $0x26] sm:$0xff]
      %v598 = vld [vmem:[%s388 + $0x2e] sm:$0xff]
      %v599 = vld [vmem:[%s388 + $0x36] sm:$0xff]
      %v600 = vld [vmem:[%s388 + $0x3e] sm:$0xff]
      %v601 = vld [vmem:[%s388 + $0x46] sm:$0xff]
      %v602 = vld [vmem:[%s388 + $0x4e] sm:$0xff]
      %v603 = vld [vmem:[%s388 + $0x56] sm:$0xff]
      %v604 = vld [vmem:[%s388 + $0x5e] sm:$0xff]
      %v605 = vld [vmem:[%s388 + $0x66] sm:$0xff]
      %v606 = vld [vmem:[%s388 + $0x6e] sm:$0xff]
      %v607 = vld [vmem:[%s388 + $0x76] sm:$0xff]
      %v608 = vld [vmem:[%s388 + $0x7e] sm:$0xff]
      %v609 = vld [vmem:[%s388 + $0x86] sm:$0xff]
      %v610 = vld [vmem:[%s388 + $0x8e] sm:$0xff]
      %v611 = vld [vmem:[%s388 + $0x96] sm:$0xff]
      %v612 = vld [vmem:[%s388 + $0x9e] sm:$0xff]
      %v613 = vld [vmem:[%s388 + $0xa6] sm:$0xff]
      %v614 = vld [vmem:[%s388 + $0xae] sm:$0xff]
      %v615 = vld [vmem:[%s388 + $0xb6] sm:$0xff]
      %v616 = vld [vmem:[%s388 + $0xbe] sm:$0xff]
      %v617 = vld [vmem:[%s388 + $0xc6] sm:$0xff]
      %v618 = vld [vmem:[%s388 + $0xce] sm:$0xff]
      %v619 = vld [vmem:[%s388 + $0xd6] sm:$0xff]
      %v620 = vld [vmem:[%s388 + $0xde] sm:$0xff]
      %v621 = vld [vmem:[%s388 + $0xe6] sm:$0xff]
      %v622 = vld [vmem:[%s388 + $0xee] sm:$0xff]
      %v623 = vld [vmem:[%s388 + $0xf6] sm:$0xff]
      %v624 = vld [vmem:[%s388 + $0xfe] sm:$0xff]
      %v625 = vld [vmem:[%s388 + $0x106] sm:$0xff]
      %v626 = vld [vmem:[%s388 + $0x10e] sm:$0xff]
      %v627 = vld [vmem:[%s388 + $0x116] sm:$0xff]
      %v628 = vld [vmem:[%s388 + $0x11e] sm:$0xf]
      %661 = vrot.lane.b32.xlu0 %v431, 4
      %v662 = vpop.permute.xlu0 %661
      %663 = vrot.lane.b32.xlu0 %v432, 4
      %v664 = vpop.permute.xlu0 %663
      %665 = vrot.lane.b32.xlu0 %v433, 4
      %v666 = vpop.permute.xlu0 %665
      %667 = vrot.lane.b32.xlu0 %v434, 4
      %v668 = vpop.permute.xlu0 %667
      %669 = vrot.lane.b32.xlu0 %v435, 4
      %v670 = vpop.permute.xlu0 %669
      %671 = vrot.lane.b32.xlu0 %v436, 4
      %v672 = vpop.permute.xlu0 %671
      %673 = vrot.lane.b32.xlu0 %v437, 4
      %v674 = vpop.permute.xlu0 %673
      %675 = vrot.lane.b32.xlu0 %v438, 4
      %v676 = vpop.permute.xlu0 %675
      %677 = vrot.lane.b32.xlu0 %v439, 4
      %v678 = vpop.permute.xlu0 %677
      %679 = vrot.lane.b32.xlu0 %v440, 4
      %v680 = vpop.permute.xlu0 %679
      %681 = vrot.lane.b32.xlu0 %v441, 4
      %v682 = vpop.permute.xlu0 %681
      %683 = vrot.lane.b32.xlu0 %v442, 4
      %v684 = vpop.permute.xlu0 %683
      %685 = vrot.lane.b32.xlu0 %v443, 4
      %v686 = vpop.permute.xlu0 %685
      %687 = vrot.lane.b32.xlu0 %v444, 4
      %v688 = vpop.permute.xlu0 %687
      %689 = vrot.lane.b32.xlu0 %v445, 4
      %v690 = vpop.permute.xlu0 %689
      %691 = vrot.lane.b32.xlu0 %v446, 4
      %v692 = vpop.permute.xlu0 %691
      %693 = vrot.lane.b32.xlu0 %v447, 4
      %v694 = vpop.permute.xlu0 %693
      %695 = vrot.lane.b32.xlu0 %v448, 4
      %v696 = vpop.permute.xlu0 %695
      %697 = vrot.lane.b32.xlu0 %v449, 4
      %v698 = vpop.permute.xlu0 %697
      %699 = vrot.lane.b32.xlu0 %v450, 4
      %v700 = vpop.permute.xlu0 %699
      %701 = vrot.lane.b32.xlu0 %v451, 4
      %v702 = vpop.permute.xlu0 %701
      %703 = vrot.lane.b32.xlu0 %v452, 4
      %v704 = vpop.permute.xlu0 %703
      %705 = vrot.lane.b32.xlu0 %v453, 4
      %v706 = vpop.permute.xlu0 %705
      %707 = vrot.lane.b32.xlu0 %v454, 4
      %v708 = vpop.permute.xlu0 %707
      %709 = vrot.lane.b32.xlu0 %v455, 4
      %v710 = vpop.permute.xlu0 %709
      %711 = vrot.lane.b32.xlu0 %v456, 4
      %v712 = vpop.permute.xlu0 %711
      %713 = vrot.lane.b32.xlu0 %v457, 4
      %v714 = vpop.permute.xlu0 %713
      %715 = vrot.lane.b32.xlu0 %v458, 4
      %v716 = vpop.permute.xlu0 %715
      %717 = vrot.lane.b32.xlu0 %v459, 4
      %v718 = vpop.permute.xlu0 %717
      %719 = vrot.lane.b32.xlu0 %v460, 4
      %v720 = vpop.permute.xlu0 %719
      %721 = vrot.lane.b32.xlu0 %v461, 4
      %v722 = vpop.permute.xlu0 %721
      %723 = vrot.lane.b32.xlu0 %v462, 4
      %v724 = vpop.permute.xlu0 %723
      %789 = vrot.lane.b32.xlu0 %v463, 8
      %v790 = vpop.permute.xlu0 %789
      %791 = vrot.lane.b32.xlu0 %v464, 8
      %v792 = vpop.permute.xlu0 %791
      %793 = vrot.lane.b32.xlu0 %v465, 8
      %v794 = vpop.permute.xlu0 %793
      %795 = vrot.lane.b32.xlu0 %v466, 8
      %v796 = vpop.permute.xlu0 %795
      %797 = vrot.lane.b32.xlu0 %v467, 8
      %v798 = vpop.permute.xlu0 %797
      %799 = vrot.lane.b32.xlu0 %v468, 8
      %v800 = vpop.permute.xlu0 %799
      %801 = vrot.lane.b32.xlu0 %v469, 8
      %v802 = vpop.permute.xlu0 %801
      %803 = vrot.lane.b32.xlu0 %v470, 8
      %v804 = vpop.permute.xlu0 %803
      %805 = vrot.lane.b32.xlu0 %v471, 8
      %v806 = vpop.permute.xlu0 %805
      %807 = vrot.lane.b32.xlu0 %v472, 8
      %v808 = vpop.permute.xlu0 %807
      %809 = vrot.lane.b32.xlu0 %v473, 8
      %v810 = vpop.permute.xlu0 %809
      %811 = vrot.lane.b32.xlu0 %v474, 8
      %v812 = vpop.permute.xlu0 %811
      %813 = vrot.lane.b32.xlu0 %v475, 8
      %v814 = vpop.permute.xlu0 %813
      %815 = vrot.lane.b32.xlu0 %v476, 8
      %v816 = vpop.permute.xlu0 %815
      %817 = vrot.lane.b32.xlu0 %v477, 8
      %v818 = vpop.permute.xlu0 %817
      %819 = vrot.lane.b32.xlu0 %v478, 8
      %v820 = vpop.permute.xlu0 %819
      %821 = vrot.lane.b32.xlu0 %v479, 8
      %v822 = vpop.permute.xlu0 %821
      %823 = vrot.lane.b32.xlu0 %v480, 8
      %v824 = vpop.permute.xlu0 %823
      %825 = vrot.lane.b32.xlu0 %v481, 8
      %v826 = vpop.permute.xlu0 %825
      %827 = vrot.lane.b32.xlu0 %v482, 8
      %v828 = vpop.permute.xlu0 %827
      %829 = vrot.lane.b32.xlu0 %v483, 8
      %v830 = vpop.permute.xlu0 %829
      %831 = vrot.lane.b32.xlu0 %v484, 8
      %v832 = vpop.permute.xlu0 %831
      %833 = vrot.lane.b32.xlu0 %v485, 8
      %v834 = vpop.permute.xlu0 %833
      %835 = vrot.lane.b32.xlu0 %v486, 8
      %v836 = vpop.permute.xlu0 %835
      %837 = vrot.lane.b32.xlu0 %v487, 8
      %v838 = vpop.permute.xlu0 %837
      %839 = vrot.lane.b32.xlu0 %v488, 8
      %v840 = vpop.permute.xlu0 %839
      %841 = vrot.lane.b32.xlu0 %v489, 8
      %v842 = vpop.permute.xlu0 %841
      %843 = vrot.lane.b32.xlu0 %v490, 8
      %v844 = vpop.permute.xlu0 %843
      %845 = vrot.lane.b32.xlu0 %v491, 8
      %v846 = vpop.permute.xlu0 %845
      %847 = vrot.lane.b32.xlu0 %v492, 8
      %v848 = vpop.permute.xlu0 %847
      %849 = vrot.lane.b32.xlu0 %v493, 8
      %v850 = vpop.permute.xlu0 %849
      %851 = vrot.lane.b32.xlu0 %v494, 8
      %v852 = vpop.permute.xlu0 %851
      %888 = vrot.lane.b32.xlu0 %v465, 12
      %v889 = vpop.permute.xlu0 %888
      %890 = vrot.lane.b32.xlu0 %v466, 12
      %v891 = vpop.permute.xlu0 %890
      %892 = vrot.lane.b32.xlu0 %v467, 12
      %v893 = vpop.permute.xlu0 %892
      %894 = vrot.lane.b32.xlu0 %v468, 12
      %v895 = vpop.permute.xlu0 %894
      %896 = vrot.lane.b32.xlu0 %v469, 12
      %v897 = vpop.permute.xlu0 %896
      %898 = vrot.lane.b32.xlu0 %v470, 12
      %v899 = vpop.permute.xlu0 %898
      %900 = vrot.lane.b32.xlu0 %v471, 12
      %v901 = vpop.permute.xlu0 %900
      %902 = vrot.lane.b32.xlu0 %v472, 12
      %v903 = vpop.permute.xlu0 %902
      %904 = vrot.lane.b32.xlu0 %v473, 12
      %v905 = vpop.permute.xlu0 %904
      %906 = vrot.lane.b32.xlu0 %v474, 12
      %v907 = vpop.permute.xlu0 %906
      %908 = vrot.lane.b32.xlu0 %v475, 12
      %v909 = vpop.permute.xlu0 %908
      %910 = vrot.lane.b32.xlu0 %v476, 12
      %v911 = vpop.permute.xlu0 %910
      %912 = vrot.lane.b32.xlu0 %v477, 12
      %v913 = vpop.permute.xlu0 %912
      %914 = vrot.lane.b32.xlu0 %v478, 12
      %v915 = vpop.permute.xlu0 %914
      %916 = vrot.lane.b32.xlu0 %v479, 12
      %v917 = vpop.permute.xlu0 %916
      %918 = vrot.lane.b32.xlu0 %v480, 12
      %v919 = vpop.permute.xlu0 %918
      %920 = vrot.lane.b32.xlu0 %v481, 12
      %v921 = vpop.permute.xlu0 %920
      %922 = vrot.lane.b32.xlu0 %v482, 12
      %v923 = vpop.permute.xlu0 %922
      %924 = vrot.lane.b32.xlu0 %v483, 12
      %v925 = vpop.permute.xlu0 %924
      %926 = vrot.lane.b32.xlu0 %v484, 12
      %v927 = vpop.permute.xlu0 %926
      %928 = vrot.lane.b32.xlu0 %v485, 12
      %v929 = vpop.permute.xlu0 %928
      %930 = vrot.lane.b32.xlu0 %v486, 12
      %v931 = vpop.permute.xlu0 %930
      %932 = vrot.lane.b32.xlu0 %v487, 12
      %v933 = vpop.permute.xlu0 %932
      %934 = vrot.lane.b32.xlu0 %v488, 12
      %v935 = vpop.permute.xlu0 %934
      %936 = vrot.lane.b32.xlu0 %v489, 12
      %v937 = vpop.permute.xlu0 %936
      %938 = vrot.lane.b32.xlu0 %v490, 12
      %v939 = vpop.permute.xlu0 %938
      %940 = vrot.lane.b32.xlu0 %v491, 12
      %v941 = vpop.permute.xlu0 %940
      %942 = vrot.lane.b32.xlu0 %v492, 12
      %v943 = vpop.permute.xlu0 %942
      %944 = vrot.lane.b32.xlu0 %v493, 12
      %v945 = vpop.permute.xlu0 %944
      %946 = vrot.lane.b32.xlu0 %v495, 12
      %v947 = vpop.permute.xlu0 %946
      %948 = vrot.lane.b32.xlu0 %v496, 12
      %v949 = vpop.permute.xlu0 %948
      %950 = vrot.lane.b32.xlu0 %v497, 12
      %v951 = vpop.permute.xlu0 %950
      %1016 = vrot.lane.b32.xlu0 %v498, 16
      %v1017 = vpop.permute.xlu0 %1016
      %1018 = vrot.lane.b32.xlu0 %v499, 16
      %v1019 = vpop.permute.xlu0 %1018
      %1020 = vrot.lane.b32.xlu0 %v500, 16
      %v1021 = vpop.permute.xlu0 %1020
      %1022 = vrot.lane.b32.xlu0 %v501, 16
      %v1023 = vpop.permute.xlu0 %1022
      %1024 = vrot.lane.b32.xlu0 %v502, 16
      %v1025 = vpop.permute.xlu0 %1024
      %1026 = vrot.lane.b32.xlu0 %v503, 16
      %v1027 = vpop.permute.xlu0 %1026
      %1028 = vrot.lane.b32.xlu0 %v504, 16
      %v1029 = vpop.permute.xlu0 %1028
      %1030 = vrot.lane.b32.xlu0 %v505, 16
      %v1031 = vpop.permute.xlu0 %1030
      %1032 = vrot.lane.b32.xlu0 %v506, 16
      %v1033 = vpop.permute.xlu0 %1032
      %1034 = vrot.lane.b32.xlu0 %v507, 16
      %v1035 = vpop.permute.xlu0 %1034
      %1036 = vrot.lane.b32.xlu0 %v508, 16
      %v1037 = vpop.permute.xlu0 %1036
      %1038 = vrot.lane.b32.xlu0 %v509, 16
      %v1039 = vpop.permute.xlu0 %1038
      %1040 = vrot.lane.b32.xlu0 %v510, 16
      %v1041 = vpop.permute.xlu0 %1040
      %1042 = vrot.lane.b32.xlu0 %v511, 16
      %v1043 = vpop.permute.xlu0 %1042
      %1044 = vrot.lane.b32.xlu0 %v512, 16
      %v1045 = vpop.permute.xlu0 %1044
      %1046 = vrot.lane.b32.xlu0 %v513, 16
      %v1047 = vpop.permute.xlu0 %1046
      %1048 = vrot.lane.b32.xlu0 %v514, 16
      %v1049 = vpop.permute.xlu0 %1048
      %1050 = vrot.lane.b32.xlu0 %v515, 16
      %v1051 = vpop.permute.xlu0 %1050
      %1052 = vrot.lane.b32.xlu0 %v516, 16
      %v1053 = vpop.permute.xlu0 %1052
      %1054 = vrot.lane.b32.xlu0 %v517, 16
      %v1055 = vpop.permute.xlu0 %1054
      %1056 = vrot.lane.b32.xlu0 %v518, 16
      %v1057 = vpop.permute.xlu0 %1056
      %1058 = vrot.lane.b32.xlu0 %v519, 16
      %v1059 = vpop.permute.xlu0 %1058
      %1060 = vrot.lane.b32.xlu0 %v520, 16
      %v1061 = vpop.permute.xlu0 %1060
      %1062 = vrot.lane.b32.xlu0 %v521, 16
      %v1063 = vpop.permute.xlu0 %1062
      %1064 = vrot.lane.b32.xlu0 %v522, 16
      %v1065 = vpop.permute.xlu0 %1064
      %1066 = vrot.lane.b32.xlu0 %v523, 16
      %v1067 = vpop.permute.xlu0 %1066
      %1068 = vrot.lane.b32.xlu0 %v524, 16
      %v1069 = vpop.permute.xlu0 %1068
      %1070 = vrot.lane.b32.xlu0 %v525, 16
      %v1071 = vpop.permute.xlu0 %1070
      %1072 = vrot.lane.b32.xlu0 %v526, 16
      %v1073 = vpop.permute.xlu0 %1072
      %1074 = vrot.lane.b32.xlu0 %v527, 16
      %v1075 = vpop.permute.xlu0 %1074
      %1076 = vrot.lane.b32.xlu0 %v528, 16
      %v1077 = vpop.permute.xlu0 %1076
      %1078 = vrot.lane.b32.xlu0 %v529, 16
      %v1079 = vpop.permute.xlu0 %1078
      %1144 = vrot.lane.b32.xlu0 %v530, 20
      %v1145 = vpop.permute.xlu0 %1144
      %1146 = vrot.lane.b32.xlu0 %v531, 20
      %v1147 = vpop.permute.xlu0 %1146
      %1148 = vrot.lane.b32.xlu0 %v532, 20
      %v1149 = vpop.permute.xlu0 %1148
      %1150 = vrot.lane.b32.xlu0 %v533, 20
      %v1151 = vpop.permute.xlu0 %1150
      %1152 = vrot.lane.b32.xlu0 %v534, 20
      %v1153 = vpop.permute.xlu0 %1152
      %1154 = vrot.lane.b32.xlu0 %v535, 20
      %v1155 = vpop.permute.xlu0 %1154
      %1156 = vrot.lane.b32.xlu0 %v536, 20
      %v1157 = vpop.permute.xlu0 %1156
      %1158 = vrot.lane.b32.xlu0 %v537, 20
      %v1159 = vpop.permute.xlu0 %1158
      %1160 = vrot.lane.b32.xlu0 %v538, 20
      %v1161 = vpop.permute.xlu0 %1160
      %1162 = vrot.lane.b32.xlu0 %v539, 20
      %v1163 = vpop.permute.xlu0 %1162
      %1164 = vrot.lane.b32.xlu0 %v540, 20
      %v1165 = vpop.permute.xlu0 %1164
      %1166 = vrot.lane.b32.xlu0 %v541, 20
      %v1167 = vpop.permute.xlu0 %1166
      %1168 = vrot.lane.b32.xlu0 %v542, 20
      %v1169 = vpop.permute.xlu0 %1168
      %1170 = vrot.lane.b32.xlu0 %v543, 20
      %v1171 = vpop.permute.xlu0 %1170
      %1172 = vrot.lane.b32.xlu0 %v544, 20
      %v1173 = vpop.permute.xlu0 %1172
      %1174 = vrot.lane.b32.xlu0 %v545, 20
      %v1175 = vpop.permute.xlu0 %1174
      %1176 = vrot.lane.b32.xlu0 %v546, 20
      %v1177 = vpop.permute.xlu0 %1176
      %1178 = vrot.lane.b32.xlu0 %v547, 20
      %v1179 = vpop.permute.xlu0 %1178
      %1180 = vrot.lane.b32.xlu0 %v548, 20
      %v1181 = vpop.permute.xlu0 %1180
      %1182 = vrot.lane.b32.xlu0 %v549, 20
      %v1183 = vpop.permute.xlu0 %1182
      %1184 = vrot.lane.b32.xlu0 %v550, 20
      %v1185 = vpop.permute.xlu0 %1184
      %1186 = vrot.lane.b32.xlu0 %v551, 20
      %v1187 = vpop.permute.xlu0 %1186
      %1188 = vrot.lane.b32.xlu0 %v552, 20
      %v1189 = vpop.permute.xlu0 %1188
      %1190 = vrot.lane.b32.xlu0 %v553, 20
      %v1191 = vpop.permute.xlu0 %1190
      %1192 = vrot.lane.b32.xlu0 %v554, 20
      %v1193 = vpop.permute.xlu0 %1192
      %1194 = vrot.lane.b32.xlu0 %v555, 20
      %v1195 = vpop.permute.xlu0 %1194
      %1196 = vrot.lane.b32.xlu0 %v556, 20
      %v1197 = vpop.permute.xlu0 %1196
      %1198 = vrot.lane.b32.xlu0 %v557, 20
      %v1199 = vpop.permute.xlu0 %1198
      %1200 = vrot.lane.b32.xlu0 %v558, 20
      %v1201 = vpop.permute.xlu0 %1200
      %1202 = vrot.lane.b32.xlu0 %v559, 20
      %v1203 = vpop.permute.xlu0 %1202
      %1204 = vrot.lane.b32.xlu0 %v560, 20
      %v1205 = vpop.permute.xlu0 %1204
      %1206 = vrot.lane.b32.xlu0 %v561, 20
      %v1207 = vpop.permute.xlu0 %1206
      %1243 = vrot.lane.b32.xlu0 %v532, 24
      %v1244 = vpop.permute.xlu0 %1243
      %1245 = vrot.lane.b32.xlu0 %v533, 24
      %v1246 = vpop.permute.xlu0 %1245
      %1247 = vrot.lane.b32.xlu0 %v534, 24
      %v1248 = vpop.permute.xlu0 %1247
      %1249 = vrot.lane.b32.xlu0 %v535, 24
      %v1250 = vpop.permute.xlu0 %1249
      %1251 = vrot.lane.b32.xlu0 %v536, 24
      %v1252 = vpop.permute.xlu0 %1251
      %1253 = vrot.lane.b32.xlu0 %v537, 24
      %v1254 = vpop.permute.xlu0 %1253
      %1255 = vrot.lane.b32.xlu0 %v538, 24
      %v1256 = vpop.permute.xlu0 %1255
      %1257 = vrot.lane.b32.xlu0 %v539, 24
      %v1258 = vpop.permute.xlu0 %1257
      %1259 = vrot.lane.b32.xlu0 %v540, 24
      %v1260 = vpop.permute.xlu0 %1259
      %1261 = vrot.lane.b32.xlu0 %v541, 24
      %v1262 = vpop.permute.xlu0 %1261
      %1263 = vrot.lane.b32.xlu0 %v542, 24
      %v1264 = vpop.permute.xlu0 %1263
      %1265 = vrot.lane.b32.xlu0 %v543, 24
      %v1266 = vpop.permute.xlu0 %1265
      %1267 = vrot.lane.b32.xlu0 %v544, 24
      %v1268 = vpop.permute.xlu0 %1267
      %1269 = vrot.lane.b32.xlu0 %v545, 24
      %v1270 = vpop.permute.xlu0 %1269
      %1271 = vrot.lane.b32.xlu0 %v546, 24
      %v1272 = vpop.permute.xlu0 %1271
      %1273 = vrot.lane.b32.xlu0 %v547, 24
      %v1274 = vpop.permute.xlu0 %1273
      %1275 = vrot.lane.b32.xlu0 %v548, 24
      %v1276 = vpop.permute.xlu0 %1275
      %1277 = vrot.lane.b32.xlu0 %v549, 24
      %v1278 = vpop.permute.xlu0 %1277
      %1279 = vrot.lane.b32.xlu0 %v550, 24
      %v1280 = vpop.permute.xlu0 %1279
      %1281 = vrot.lane.b32.xlu0 %v551, 24
      %v1282 = vpop.permute.xlu0 %1281
      %1283 = vrot.lane.b32.xlu0 %v552, 24
      %v1284 = vpop.permute.xlu0 %1283
      %1285 = vrot.lane.b32.xlu0 %v553, 24
      %v1286 = vpop.permute.xlu0 %1285
      %1287 = vrot.lane.b32.xlu0 %v554, 24
      %v1288 = vpop.permute.xlu0 %1287
      %1289 = vrot.lane.b32.xlu0 %v555, 24
      %v1290 = vpop.permute.xlu0 %1289
      %1291 = vrot.lane.b32.xlu0 %v556, 24
      %v1292 = vpop.permute.xlu0 %1291
      %1293 = vrot.lane.b32.xlu0 %v557, 24
      %v1294 = vpop.permute.xlu0 %1293
      %1295 = vrot.lane.b32.xlu0 %v558, 24
      %v1296 = vpop.permute.xlu0 %1295
      %1297 = vrot.lane.b32.xlu0 %v559, 24
      %v1298 = vpop.permute.xlu0 %1297
      %1299 = vrot.lane.b32.xlu0 %v560, 24
      %v1300 = vpop.permute.xlu0 %1299
      %1301 = vrot.lane.b32.xlu0 %v562, 24
      %v1302 = vpop.permute.xlu0 %1301
      %1303 = vrot.lane.b32.xlu0 %v563, 24
      %v1304 = vpop.permute.xlu0 %1303
      %1305 = vrot.lane.b32.xlu0 %v564, 24
      %v1306 = vpop.permute.xlu0 %1305
      %1371 = vrot.lane.b32.xlu0 %v565, 28
      %v1372 = vpop.permute.xlu0 %1371
      %1373 = vrot.lane.b32.xlu0 %v566, 28
      %v1374 = vpop.permute.xlu0 %1373
      %1375 = vrot.lane.b32.xlu0 %v567, 28
      %v1376 = vpop.permute.xlu0 %1375
      %1377 = vrot.lane.b32.xlu0 %v568, 28
      %v1378 = vpop.permute.xlu0 %1377
      %1379 = vrot.lane.b32.xlu0 %v569, 28
      %v1380 = vpop.permute.xlu0 %1379
      %1381 = vrot.lane.b32.xlu0 %v570, 28
      %v1382 = vpop.permute.xlu0 %1381
      %1383 = vrot.lane.b32.xlu0 %v571, 28
      %v1384 = vpop.permute.xlu0 %1383
      %1385 = vrot.lane.b32.xlu0 %v572, 28
      %v1386 = vpop.permute.xlu0 %1385
      %1387 = vrot.lane.b32.xlu0 %v573, 28
      %v1388 = vpop.permute.xlu0 %1387
      %1389 = vrot.lane.b32.xlu0 %v574, 28
      %v1390 = vpop.permute.xlu0 %1389
      %1391 = vrot.lane.b32.xlu0 %v575, 28
      %v1392 = vpop.permute.xlu0 %1391
      %1393 = vrot.lane.b32.xlu0 %v576, 28
      %v1394 = vpop.permute.xlu0 %1393
      %1395 = vrot.lane.b32.xlu0 %v577, 28
      %v1396 = vpop.permute.xlu0 %1395
      %1397 = vrot.lane.b32.xlu0 %v578, 28
      %v1398 = vpop.permute.xlu0 %1397
      %1399 = vrot.lane.b32.xlu0 %v579, 28
      %v1400 = vpop.permute.xlu0 %1399
      %1401 = vrot.lane.b32.xlu0 %v580, 28
      %v1402 = vpop.permute.xlu0 %1401
      %1403 = vrot.lane.b32.xlu0 %v581, 28
      %v1404 = vpop.permute.xlu0 %1403
      %1405 = vrot.lane.b32.xlu0 %v582, 28
      %v1406 = vpop.permute.xlu0 %1405
      %1407 = vrot.lane.b32.xlu0 %v583, 28
      %v1408 = vpop.permute.xlu0 %1407
      %1409 = vrot.lane.b32.xlu0 %v584, 28
      %v1410 = vpop.permute.xlu0 %1409
      %1411 = vrot.lane.b32.xlu0 %v585, 28
      %v1412 = vpop.permute.xlu0 %1411
      %1413 = vrot.lane.b32.xlu0 %v586, 28
      %v1414 = vpop.permute.xlu0 %1413
      %1415 = vrot.lane.b32.xlu0 %v587, 28
      %v1416 = vpop.permute.xlu0 %1415
      %1417 = vrot.lane.b32.xlu0 %v588, 28
      %v1418 = vpop.permute.xlu0 %1417
      %1419 = vrot.lane.b32.xlu0 %v589, 28
      %v1420 = vpop.permute.xlu0 %1419
      %1421 = vrot.lane.b32.xlu0 %v590, 28
      %v1422 = vpop.permute.xlu0 %1421
      %1423 = vrot.lane.b32.xlu0 %v591, 28
      %v1424 = vpop.permute.xlu0 %1423
      %1425 = vrot.lane.b32.xlu0 %v592, 28
      %v1426 = vpop.permute.xlu0 %1425
      %1427 = vrot.lane.b32.xlu0 %v593, 28
      %v1428 = vpop.permute.xlu0 %1427
      %1429 = vrot.lane.b32.xlu0 %v594, 28
      %v1430 = vpop.permute.xlu0 %1429
      %1431 = vrot.lane.b32.xlu0 %v595, 28
      %v1432 = vpop.permute.xlu0 %1431
      %1433 = vrot.lane.b32.xlu0 %v596, 28
      %v1434 = vpop.permute.xlu0 %1433
      %1499 = vrot.lane.b32.xlu0 %v597, 32
      %v1500 = vpop.permute.xlu0 %1499
      %1501 = vrot.lane.b32.xlu0 %v598, 32
      %v1502 = vpop.permute.xlu0 %1501
      %1503 = vrot.lane.b32.xlu0 %v599, 32
      %v1504 = vpop.permute.xlu0 %1503
      %1505 = vrot.lane.b32.xlu0 %v600, 32
      %v1506 = vpop.permute.xlu0 %1505
      %1507 = vrot.lane.b32.xlu0 %v601, 32
      %v1508 = vpop.permute.xlu0 %1507
      %1509 = vrot.lane.b32.xlu0 %v602, 32
      %v1510 = vpop.permute.xlu0 %1509
      %1511 = vrot.lane.b32.xlu0 %v603, 32
      %v1512 = vpop.permute.xlu0 %1511
      %1513 = vrot.lane.b32.xlu0 %v604, 32
      %v1514 = vpop.permute.xlu0 %1513
      %1515 = vrot.lane.b32.xlu0 %v605, 32
      %v1516 = vpop.permute.xlu0 %1515
      %1517 = vrot.lane.b32.xlu0 %v606, 32
      %v1518 = vpop.permute.xlu0 %1517
      %1519 = vrot.lane.b32.xlu0 %v607, 32
      %v1520 = vpop.permute.xlu0 %1519
      %1521 = vrot.lane.b32.xlu0 %v608, 32
      %v1522 = vpop.permute.xlu0 %1521
      %1523 = vrot.lane.b32.xlu0 %v609, 32
      %v1524 = vpop.permute.xlu0 %1523
      %1525 = vrot.lane.b32.xlu0 %v610, 32
      %v1526 = vpop.permute.xlu0 %1525
      %1527 = vrot.lane.b32.xlu0 %v611, 32
      %v1528 = vpop.permute.xlu0 %1527
      %1529 = vrot.lane.b32.xlu0 %v612, 32
      %v1530 = vpop.permute.xlu0 %1529
      %1531 = vrot.lane.b32.xlu0 %v613, 32
      %v1532 = vpop.permute.xlu0 %1531
      %1533 = vrot.lane.b32.xlu0 %v614, 32
      %v1534 = vpop.permute.xlu0 %1533
      %1535 = vrot.lane.b32.xlu0 %v615, 32
      %v1536 = vpop.permute.xlu0 %1535
      %1537 = vrot.lane.b32.xlu0 %v616, 32
      %v1538 = vpop.permute.xlu0 %1537
      %1539 = vrot.lane.b32.xlu0 %v617, 32
      %v1540 = vpop.permute.xlu0 %1539
      %1541 = vrot.lane.b32.xlu0 %v618, 32
      %v1542 = vpop.permute.xlu0 %1541
      %1543 = vrot.lane.b32.xlu0 %v619, 32
      %v1544 = vpop.permute.xlu0 %1543
      %1545 = vrot.lane.b32.xlu0 %v620, 32
      %v1546 = vpop.permute.xlu0 %1545
      %1547 = vrot.lane.b32.xlu0 %v621, 32
      %v1548 = vpop.permute.xlu0 %1547
      %1549 = vrot.lane.b32.xlu0 %v622, 32
      %v1550 = vpop.permute.xlu0 %1549
      %1551 = vrot.lane.b32.xlu0 %v623, 32
      %v1552 = vpop.permute.xlu0 %1551
      %1553 = vrot.lane.b32.xlu0 %v624, 32
      %v1554 = vpop.permute.xlu0 %1553
      %1555 = vrot.lane.b32.xlu0 %v625, 32
      %v1556 = vpop.permute.xlu0 %1555
      %1557 = vrot.lane.b32.xlu0 %v626, 32
      %v1558 = vpop.permute.xlu0 %1557
      %1559 = vrot.lane.b32.xlu0 %v627, 32
      %v1560 = vpop.permute.xlu0 %1559
      %1561 = vrot.lane.b32.xlu0 %v628, 32
      %v1562 = vpop.permute.xlu0 %1561
      %vm1595 = vcmask 31744
      %v1596 = vsel %vm1595, %v399, %v662
      %v1597 = vsel %vm1595, %v400, %v664
      %v1598 = vsel %vm1595, %v401, %v666
      %v1599 = vsel %vm1595, %v402, %v668
      %v1600 = vsel %vm1595, %v403, %v670
      %v1601 = vsel %vm1595, %v404, %v672
      %v1602 = vsel %vm1595, %v405, %v674
      %v1603 = vsel %vm1595, %v406, %v676
      %v1604 = vsel %vm1595, %v407, %v678
      %v1605 = vsel %vm1595, %v408, %v680
      %v1606 = vsel %vm1595, %v409, %v682
      %v1607 = vsel %vm1595, %v410, %v684
      %v1608 = vsel %vm1595, %v411, %v686
      %v1609 = vsel %vm1595, %v412, %v688
      %v1610 = vsel %vm1595, %v413, %v690
      %v1611 = vsel %vm1595, %v414, %v692
      %v1612 = vsel %vm1595, %v415, %v694
      %v1613 = vsel %vm1595, %v416, %v696
      %v1614 = vsel %vm1595, %v417, %v698
      %v1615 = vsel %vm1595, %v418, %v700
      %v1616 = vsel %vm1595, %v419, %v702
      %v1617 = vsel %vm1595, %v420, %v704
      %v1618 = vsel %vm1595, %v421, %v706
      %v1619 = vsel %vm1595, %v422, %v708
      %v1620 = vsel %vm1595, %v423, %v710
      %v1621 = vsel %vm1595, %v424, %v712
      %v1622 = vsel %vm1595, %v425, %v714
      %v1623 = vsel %vm1595, %v426, %v716
      %v1624 = vsel %vm1595, %v427, %v718
      %v1625 = vsel %vm1595, %v428, %v720
      %v1626 = vsel %vm1595, %v429, %v722
      %v1627 = vsel %vm1595, %v430, %v724
      %vm1628 = vcmask 64512
      %v1629 = vsel %vm1628, %v1596, %v790
      %v1630 = vsel %vm1628, %v1597, %v792
      %v1631 = vsel %vm1628, %v1598, %v794
      %v1632 = vsel %vm1628, %v1599, %v796
      %v1633 = vsel %vm1628, %v1600, %v798
      %v1634 = vsel %vm1628, %v1601, %v800
      %v1635 = vsel %vm1628, %v1602, %v802
      %v1636 = vsel %vm1628, %v1603, %v804
      %v1637 = vsel %vm1628, %v1604, %v806
      %v1638 = vsel %vm1628, %v1605, %v808
      %v1639 = vsel %vm1628, %v1606, %v810
      %v1640 = vsel %vm1628, %v1607, %v812
      %v1641 = vsel %vm1628, %v1608, %v814
      %v1642 = vsel %vm1628, %v1609, %v816
      %v1643 = vsel %vm1628, %v1610, %v818
      %v1644 = vsel %vm1628, %v1611, %v820
      %v1645 = vsel %vm1628, %v1612, %v822
      %v1646 = vsel %vm1628, %v1613, %v824
      %v1647 = vsel %vm1628, %v1614, %v826
      %v1648 = vsel %vm1628, %v1615, %v828
      %v1649 = vsel %vm1628, %v1616, %v830
      %v1650 = vsel %vm1628, %v1617, %v832
      %v1651 = vsel %vm1628, %v1618, %v834
      %v1652 = vsel %vm1628, %v1619, %v836
      %v1653 = vsel %vm1628, %v1620, %v838
      %v1654 = vsel %vm1628, %v1621, %v840
      %v1655 = vsel %vm1628, %v1622, %v842
      %v1656 = vsel %vm1628, %v1623, %v844
      %v1657 = vsel %vm1628, %v1624, %v846
      %v1658 = vsel %vm1628, %v1625, %v848
      %v1659 = vsel %vm1628, %v1626, %v850
      %v1660 = vsel %vm1628, %v1627, %v852
      %vm1661 = vcmask 97280
      %v1662 = vsel %vm1661, %v1629, %v889
      %v1663 = vsel %vm1661, %v1630, %v891
      %v1664 = vsel %vm1661, %v1631, %v893
      %v1665 = vsel %vm1661, %v1632, %v895
      %v1666 = vsel %vm1661, %v1633, %v897
      %v1667 = vsel %vm1661, %v1634, %v899
      %v1668 = vsel %vm1661, %v1635, %v901
      %v1669 = vsel %vm1661, %v1636, %v903
      %v1670 = vsel %vm1661, %v1637, %v905
      %v1671 = vsel %vm1661, %v1638, %v907
      %v1672 = vsel %vm1661, %v1639, %v909
      %v1673 = vsel %vm1661, %v1640, %v911
      %v1674 = vsel %vm1661, %v1641, %v913
      %v1675 = vsel %vm1661, %v1642, %v915
      %v1676 = vsel %vm1661, %v1643, %v917
      %v1677 = vsel %vm1661, %v1644, %v919
      %v1678 = vsel %vm1661, %v1645, %v921
      %v1679 = vsel %vm1661, %v1646, %v923
      %v1680 = vsel %vm1661, %v1647, %v925
      %v1681 = vsel %vm1661, %v1648, %v927
      %v1682 = vsel %vm1661, %v1649, %v929
      %v1683 = vsel %vm1661, %v1650, %v931
      %v1684 = vsel %vm1661, %v1651, %v933
      %v1685 = vsel %vm1661, %v1652, %v935
      %v1686 = vsel %vm1661, %v1653, %v937
      %v1687 = vsel %vm1661, %v1654, %v939
      %v1688 = vsel %vm1661, %v1655, %v941
      %v1689 = vsel %vm1661, %v1656, %v943
      %v1690 = vsel %vm1661, %v1657, %v945
      %v1691 = vsel %vm1661, %v1658, %v947
      %v1692 = vsel %vm1661, %v1659, %v949
      %v1693 = vsel %vm1661, %v1660, %v951
      %vm1694 = vcmask 130048
      %v1695 = vsel %vm1694, %v1662, %v1017
      %v1696 = vsel %vm1694, %v1663, %v1019
      %v1697 = vsel %vm1694, %v1664, %v1021
      %v1698 = vsel %vm1694, %v1665, %v1023
      %v1699 = vsel %vm1694, %v1666, %v1025
      %v1700 = vsel %vm1694, %v1667, %v1027
      %v1701 = vsel %vm1694, %v1668, %v1029
      %v1702 = vsel %vm1694, %v1669, %v1031
      %v1703 = vsel %vm1694, %v1670, %v1033
      %v1704 = vsel %vm1694, %v1671, %v1035
      %v1705 = vsel %vm1694, %v1672, %v1037
      %v1706 = vsel %vm1694, %v1673, %v1039
      %v1707 = vsel %vm1694, %v1674, %v1041
      %v1708 = vsel %vm1694, %v1675, %v1043
      %v1709 = vsel %vm1694, %v1676, %v1045
      %v1710 = vsel %vm1694, %v1677, %v1047
      %v1711 = vsel %vm1694, %v1678, %v1049
      %v1712 = vsel %vm1694, %v1679, %v1051
      %v1713 = vsel %vm1694, %v1680, %v1053
      %v1714 = vsel %vm1694, %v1681, %v1055
      %v1715 = vsel %vm1694, %v1682, %v1057
      %v1716 = vsel %vm1694, %v1683, %v1059
      %v1717 = vsel %vm1694, %v1684, %v1061
      %v1718 = vsel %vm1694, %v1685, %v1063
      %v1719 = vsel %vm1694, %v1686, %v1065
      %v1720 = vsel %vm1694, %v1687, %v1067
      %v1721 = vsel %vm1694, %v1688, %v1069
      %v1722 = vsel %vm1694, %v1689, %v1071
      %v1723 = vsel %vm1694, %v1690, %v1073
      %v1724 = vsel %vm1694, %v1691, %v1075
      %v1725 = vsel %vm1694, %v1692, %v1077
      %v1726 = vsel %vm1694, %v1693, %v1079
      %vm1727 = vcmask 162816
      %v1728 = vsel %vm1727, %v1695, %v1145
      %v1729 = vsel %vm1727, %v1696, %v1147
      %v1730 = vsel %vm1727, %v1697, %v1149
      %v1731 = vsel %vm1727, %v1698, %v1151
      %v1732 = vsel %vm1727, %v1699, %v1153
      %v1733 = vsel %vm1727, %v1700, %v1155
      %v1734 = vsel %vm1727, %v1701, %v1157
      %v1735 = vsel %vm1727, %v1702, %v1159
      %v1736 = vsel %vm1727, %v1703, %v1161
      %v1737 = vsel %vm1727, %v1704, %v1163
      %v1738 = vsel %vm1727, %v1705, %v1165
      %v1739 = vsel %vm1727, %v1706, %v1167
      %v1740 = vsel %vm1727, %v1707, %v1169
      %v1741 = vsel %vm1727, %v1708, %v1171
      %v1742 = vsel %vm1727, %v1709, %v1173
      %v1743 = vsel %vm1727, %v1710, %v1175
      %v1744 = vsel %vm1727, %v1711, %v1177
      %v1745 = vsel %vm1727, %v1712, %v1179
      %v1746 = vsel %vm1727, %v1713, %v1181
      %v1747 = vsel %vm1727, %v1714, %v1183
      %v1748 = vsel %vm1727, %v1715, %v1185
      %v1749 = vsel %vm1727, %v1716, %v1187
      %v1750 = vsel %vm1727, %v1717, %v1189
      %v1751 = vsel %vm1727, %v1718, %v1191
      %v1752 = vsel %vm1727, %v1719, %v1193
      %v1753 = vsel %vm1727, %v1720, %v1195
      %v1754 = vsel %vm1727, %v1721, %v1197
      %v1755 = vsel %vm1727, %v1722, %v1199
      %v1756 = vsel %vm1727, %v1723, %v1201
      %v1757 = vsel %vm1727, %v1724, %v1203
      %v1758 = vsel %vm1727, %v1725, %v1205
      %v1759 = vsel %vm1727, %v1726, %v1207
      %vm1760 = vcmask 195584
      %v1761 = vsel %vm1760, %v1728, %v1244
      %v1762 = vsel %vm1760, %v1729, %v1246
      %v1763 = vsel %vm1760, %v1730, %v1248
      %v1764 = vsel %vm1760, %v1731, %v1250
      %v1765 = vsel %vm1760, %v1732, %v1252
      %v1766 = vsel %vm1760, %v1733, %v1254
      %v1767 = vsel %vm1760, %v1734, %v1256
      %v1768 = vsel %vm1760, %v1735, %v1258
      %v1769 = vsel %vm1760, %v1736, %v1260
      %v1770 = vsel %vm1760, %v1737, %v1262
      %v1771 = vsel %vm1760, %v1738, %v1264
      %v1772 = vsel %vm1760, %v1739, %v1266
      %v1773 = vsel %vm1760, %v1740, %v1268
      %v1774 = vsel %vm1760, %v1741, %v1270
      %v1775 = vsel %vm1760, %v1742, %v1272
      %v1776 = vsel %vm1760, %v1743, %v1274
      %v1777 = vsel %vm1760, %v1744, %v1276
      %v1778 = vsel %vm1760, %v1745, %v1278
      %v1779 = vsel %vm1760, %v1746, %v1280
      %v1780 = vsel %vm1760, %v1747, %v1282
      %v1781 = vsel %vm1760, %v1748, %v1284
      %v1782 = vsel %vm1760, %v1749, %v1286
      %v1783 = vsel %vm1760, %v1750, %v1288
      %v1784 = vsel %vm1760, %v1751, %v1290
      %v1785 = vsel %vm1760, %v1752, %v1292
      %v1786 = vsel %vm1760, %v1753, %v1294
      %v1787 = vsel %vm1760, %v1754, %v1296
      %v1788 = vsel %vm1760, %v1755, %v1298
      %v1789 = vsel %vm1760, %v1756, %v1300
      %v1790 = vsel %vm1760, %v1757, %v1302
      %v1791 = vsel %vm1760, %v1758, %v1304
      %v1792 = vsel %vm1760, %v1759, %v1306
      %vm1793 = vcmask 228352
      %v1794 = vsel %vm1793, %v1761, %v1372
      %v1795 = vsel %vm1793, %v1762, %v1374
      %v1796 = vsel %vm1793, %v1763, %v1376
      %v1797 = vsel %vm1793, %v1764, %v1378
      %v1798 = vsel %vm1793, %v1765, %v1380
      %v1799 = vsel %vm1793, %v1766, %v1382
      %v1800 = vsel %vm1793, %v1767, %v1384
      %v1801 = vsel %vm1793, %v1768, %v1386
      %v1802 = vsel %vm1793, %v1769, %v1388
      %v1803 = vsel %vm1793, %v1770, %v1390
      %v1804 = vsel %vm1793, %v1771, %v1392
      %v1805 = vsel %vm1793, %v1772, %v1394
      %v1806 = vsel %vm1793, %v1773, %v1396
      %v1807 = vsel %vm1793, %v1774, %v1398
      %v1808 = vsel %vm1793, %v1775, %v1400
      %v1809 = vsel %vm1793, %v1776, %v1402
      %v1810 = vsel %vm1793, %v1777, %v1404
      %v1811 = vsel %vm1793, %v1778, %v1406
      %v1812 = vsel %vm1793, %v1779, %v1408
      %v1813 = vsel %vm1793, %v1780, %v1410
      %v1814 = vsel %vm1793, %v1781, %v1412
      %v1815 = vsel %vm1793, %v1782, %v1414
      %v1816 = vsel %vm1793, %v1783, %v1416
      %v1817 = vsel %vm1793, %v1784, %v1418
      %v1818 = vsel %vm1793, %v1785, %v1420
      %v1819 = vsel %vm1793, %v1786, %v1422
      %v1820 = vsel %vm1793, %v1787, %v1424
      %v1821 = vsel %vm1793, %v1788, %v1426
      %v1822 = vsel %vm1793, %v1789, %v1428
      %v1823 = vsel %vm1793, %v1790, %v1430
      %v1824 = vsel %vm1793, %v1791, %v1432
      %v1825 = vsel %vm1793, %v1792, %v1434
      %vm1826 = vcmask 261120
      %v1827 = vsel %vm1826, %v1794, %v1500
      %v1828 = vsel %vm1826, %v1795, %v1502
      %v1829 = vsel %vm1826, %v1796, %v1504
      %v1830 = vsel %vm1826, %v1797, %v1506
      %v1831 = vsel %vm1826, %v1798, %v1508
      %v1832 = vsel %vm1826, %v1799, %v1510
      %v1833 = vsel %vm1826, %v1800, %v1512
      %v1834 = vsel %vm1826, %v1801, %v1514
      %v1835 = vsel %vm1826, %v1802, %v1516
      %v1836 = vsel %vm1826, %v1803, %v1518
      %v1837 = vsel %vm1826, %v1804, %v1520
      %v1838 = vsel %vm1826, %v1805, %v1522
      %v1839 = vsel %vm1826, %v1806, %v1524
      %v1840 = vsel %vm1826, %v1807, %v1526
      %v1841 = vsel %vm1826, %v1808, %v1528
      %v1842 = vsel %vm1826, %v1809, %v1530
      %v1843 = vsel %vm1826, %v1810, %v1532
      %v1844 = vsel %vm1826, %v1811, %v1534
      %v1845 = vsel %vm1826, %v1812, %v1536
      %v1846 = vsel %vm1826, %v1813, %v1538
      %v1847 = vsel %vm1826, %v1814, %v1540
      %v1848 = vsel %vm1826, %v1815, %v1542
      %v1849 = vsel %vm1826, %v1816, %v1544
      %v1850 = vsel %vm1826, %v1817, %v1546
      %v1851 = vsel %vm1826, %v1818, %v1548
      %v1852 = vsel %vm1826, %v1819, %v1550
      %v1853 = vsel %vm1826, %v1820, %v1552
      %v1854 = vsel %vm1826, %v1821, %v1554
      %v1855 = vsel %vm1826, %v1822, %v1556
      %v1856 = vsel %vm1826, %v1823, %v1558
      %v1857 = vsel %vm1826, %v1824, %v1560
      %v1858 = vsel %vm1826, %v1825, %v1562
      %v1859 = vld [vmem:[%s2] sm:$0xff]
      %v1860 = vld [vmem:[%s2 + $0x8] sm:$0xff]
      %v1861 = vld [vmem:[%s2 + $0x10] sm:$0xff]
      %v1862 = vld [vmem:[%s2 + $0x18] sm:$0xff]
      %v1863 = vld [vmem:[%s2 + $0x20] sm:$0xf]
      %v1864 = vld [vmem:[%s3] sm:$0x1]
      %v1866 = vlaneseq
      %v1867 = vshrl.u32 %v1866, 7
      %v1868 = vsub.s32 0, %v1867
      %v1869 = vrot.slane %v1864, %v1868
      %vm1871 = vcmask 293888
      %v1873 = vsel %vm1871, %v1827, 0
      %v1876 = vsel %vm1871, %v1828, 0
      %v1879 = vsel %vm1871, %v1829, 0
      %v1882 = vsel %vm1871, %v1830, 0
      %v1885 = vsel %vm1871, %v1831, 0
      %v1888 = vsel %vm1871, %v1832, 0
      %v1891 = vsel %vm1871, %v1833, 0
      %v1894 = vsel %vm1871, %v1834, 0
      %v1897 = vsel %vm1871, %v1835, 0
      %v1900 = vsel %vm1871, %v1836, 0
      %v1903 = vsel %vm1871, %v1837, 0
      %v1906 = vsel %vm1871, %v1838, 0
      %v1909 = vsel %vm1871, %v1839, 0
      %v1912 = vsel %vm1871, %v1840, 0
      %v1915 = vsel %vm1871, %v1841, 0
      %v1918 = vsel %vm1871, %v1842, 0
      %v1921 = vsel %vm1871, %v1843, 0
      %v1924 = vsel %vm1871, %v1844, 0
      %v1927 = vsel %vm1871, %v1845, 0
      %v1930 = vsel %vm1871, %v1846, 0
      %v1933 = vsel %vm1871, %v1847, 0
      %v1936 = vsel %vm1871, %v1848, 0
      %v1939 = vsel %vm1871, %v1849, 0
      %v1942 = vsel %vm1871, %v1850, 0
      %v1945 = vsel %vm1871, %v1851, 0
      %v1948 = vsel %vm1871, %v1852, 0
      %v1951 = vsel %vm1871, %v1853, 0
      %v1954 = vsel %vm1871, %v1854, 0
      %v1957 = vsel %vm1871, %v1855, 0
      %v1960 = vsel %vm1871, %v1856, 0
      %v1963 = vsel %vm1871, %v1857, 0
      %v1966 = vsel %vm1871, %v1858, 0
      %vm1968 = vcmask 1043456
      %v1970 = vsel %vm1968, %v1863, 0
      %1972 = vmatprep.subr.mxu0 0.0
      %1973 = vmatpush1.msra.mxu0 %v1859
      %1974 = vmatprep.subr.mxu0 0.0
      %1975 = vmatpush1.msra.mxu0 %v1860
      %1976 = vmatprep.subr.mxu0 0.0
      %1977 = vmatpush1.msra.mxu0 %v1861
      %1978 = vmatprep.subr.mxu0 0.0
      %1979 = vmatpush1.msra.mxu0 %v1862
      %1980 = vmatprep.subr.mxu0 0.0
      %1981 = vmatpush1.msra.mxu0 %v1970
      %1982 = vmatprep.subr.mxu0 0.0
      %1983 = vmatpush1.msra.mxu0 0.0
      %1984 = vmatprep.subr.mxu0 0.0
      %1985 = vmatpush1.msra.mxu0 0.0
      %1986 = vmatprep.subr.mxu0 0.0
      %1987 = vmatpush1.msra.mxu0 0.0
      %1988 = vmatprep.subr.mxu0 0.0
      %1989 = vmatpush1.msra.mxu0 0.0
      %1990 = vmatprep.subr.mxu0 0.0
      %1991 = vmatpush1.msra.mxu0 0.0
      %1992 = vmatprep.subr.mxu0 0.0
      %1993 = vmatpush1.msra.mxu0 0.0
      %1994 = vmatprep.subr.mxu0 0.0
      %1995 = vmatpush1.msra.mxu0 0.0
      %1996 = vmatprep.subr.mxu0 0.0
      %1997 = vmatpush1.msra.mxu0 0.0
      %1998 = vmatprep.subr.mxu0 0.0
      %1999 = vmatpush1.msra.mxu0 0.0
      %2000 = vmatprep.subr.mxu0 0.0
      %2001 = vmatpush1.msra.mxu0 0.0
      %2002 = vmatprep.subr.mxu0 0.0
      %2003 = vmatpush1.msra.mxu0 0.0
      %2004 = vmatprep.subr.mxu0 0.0
      %2005 = vmatpush1.msra.mxu0 0.0
      %2006 = vmatprep.subr.mxu0 0.0
      %2007 = vmatpush1.msra.mxu0 0.0
      %2008 = vmatprep.subr.mxu0 0.0
      %2009 = vmatpush1.msra.mxu0 0.0
      %2010 = vmatprep.subr.mxu0 0.0
      %2011 = vmatpush1.msra.mxu0 0.0
      %2012 = vmatprep.subr.mxu0 0.0
      %2013 = vmatpush1.msra.mxu0 0.0
      %2014 = vmatprep.subr.mxu0 0.0
      %2015 = vmatpush1.msra.mxu0 0.0
      %2016 = vmatprep.subr.mxu0 0.0
      %2017 = vmatpush1.msra.mxu0 0.0
      %2018 = vmatprep.subr.mxu0 0.0
      %2019 = vmatpush1.msra.mxu0 0.0
      %2020 = vmatprep.subr.mxu0 0.0
      %2021 = vmatpush1.msra.mxu0 0.0
      %2022 = vmatprep.subr.mxu0 0.0
      %2023 = vmatpush1.msra.mxu0 0.0
      %2024 = vmatprep.subr.mxu0 0.0
      %2025 = vmatpush1.msra.mxu0 0.0
      %2026 = vmatprep.subr.mxu0 0.0
      %2027 = vmatpush1.msra.mxu0 0.0
      %2028 = vmatprep.subr.mxu0 0.0
      %2029 = vmatpush1.msra.mxu0 0.0
      %2030 = vmatprep.subr.mxu0 0.0
      %2031 = vmatpush1.msra.mxu0 0.0
      %2032 = vmatprep.subr.mxu0 0.0
      %2033 = vmatpush1.msra.mxu0 0.0
      %2034 = vmatprep.subr.mxu0 0.0
      %2035 = vmatpush1.msra.mxu0 0.0
      %2036 = vmatprep.mubr.f32.mxu0 0.0
      %2037 = vmatmul.mubr.f32.gmra.mrb[0].mxu0 %v1873
      %v2038 = vpop.f32.mrb[0].mxu0
      %v2039 = vadd.f32 %v1869, %v2038
      %v2040 = vpop.f32.mrb[0].mxu0
      %2041 = vmatprep.mubr.f32.mxu0 0.0
      %2042 = vmatmul.mubr.f32.gmra.mrb[0].mxu0 %v1876
      %v2043 = vpop.f32.mrb[0].mxu0
      %v2044 = vadd.f32 %v1869, %v2043
      %v2045 = vpop.f32.mrb[0].mxu0
      %2046 = vmatprep.mubr.f32.mxu0 0.0
      %2047 = vmatmul.mubr.f32.gmra.mrb[0].mxu0 %v1879
      %v2048 = vpop.f32.mrb[0].mxu0
      %v2049 = vadd.f32 %v1869, %v2048
      %v2050 = vpop.f32.mrb[0].mxu0
      %2051 = vmatprep.mubr.f32.mxu0 0.0
      %2052 = vmatmul.mubr.f32.gmra.mrb[0].mxu0 %v1882
      %v2053 = vpop.f32.mrb[0].mxu0
      %v2054 = vadd.f32 %v1869, %v2053
      %v2055 = vpop.f32.mrb[0].mxu0
      %2056 = vmatprep.mubr.f32.mxu0 0.0
      %2057 = vmatmul.mubr.f32.gmra.mrb[0].mxu0 %v1885
      %v2058 = vpop.f32.mrb[0].mxu0
      %v2059 = vadd.f32 %v1869, %v2058
      %v2060 = vpop.f32.mrb[0].mxu0
      %2061 = vmatprep.mubr.f32.mxu0 0.0
      %2062 = vmatmul.mubr.f32.gmra.mrb[0].mxu0 %v1888
      %v2063 = vpop.f32.mrb[0].mxu0
      %v2064 = vadd.f32 %v1869, %v2063
      %v2065 = vpop.f32.mrb[0].mxu0
      %2066 = vmatprep.mubr.f32.mxu0 0.0
      %2067 = vmatmul.mubr.f32.gmra.mrb[0].mxu0 %v1891
      %v2068 = vpop.f32.mrb[0].mxu0
      %v2069 = vadd.f32 %v1869, %v2068
      %v2070 = vpop.f32.mrb[0].mxu0
      %2071 = vmatprep.mubr.f32.mxu0 0.0
      %2072 = vmatmul.mubr.f32.gmra.mrb[0].mxu0 %v1894
      %v2073 = vpop.f32.mrb[0].mxu0
      %v2074 = vadd.f32 %v1869, %v2073
      %v2075 = vpop.f32.mrb[0].mxu0
      %2076 = vmatprep.mubr.f32.mxu0 0.0
      %2077 = vmatmul.mubr.f32.gmra.mrb[0].mxu0 %v1897
      %v2078 = vpop.f32.mrb[0].mxu0
      %v2079 = vadd.f32 %v1869, %v2078
      %v2080 = vpop.f32.mrb[0].mxu0
      %2081 = vmatprep.mubr.f32.mxu0 0.0
      %2082 = vmatmul.mubr.f32.gmra.mrb[0].mxu0 %v1900
      %v2083 = vpop.f32.mrb[0].mxu0
      %v2084 = vadd.f32 %v1869, %v2083
      %v2085 = vpop.f32.mrb[0].mxu0
      %2086 = vmatprep.mubr.f32.mxu0 0.0
      %2087 = vmatmul.mubr.f32.gmra.mrb[0].mxu0 %v1903
      %v2088 = vpop.f32.mrb[0].mxu0
      %v2089 = vadd.f32 %v1869, %v2088
      %v2090 = vpop.f32.mrb[0].mxu0
      %2091 = vmatprep.mubr.f32.mxu0 0.0
      %2092 = vmatmul.mubr.f32.gmra.mrb[0].mxu0 %v1906
      %v2093 = vpop.f32.mrb[0].mxu0
      %v2094 = vadd.f32 %v1869, %v2093
      %v2095 = vpop.f32.mrb[0].mxu0
      %2096 = vmatprep.mubr.f32.mxu0 0.0
      %2097 = vmatmul.mubr.f32.gmra.mrb[0].mxu0 %v1909
      %v2098 = vpop.f32.mrb[0].mxu0
      %v2099 = vadd.f32 %v1869, %v2098
      %v2100 = vpop.f32.mrb[0].mxu0
      %2101 = vmatprep.mubr.f32.mxu0 0.0
      %2102 = vmatmul.mubr.f32.gmra.mrb[0].mxu0 %v1912
      %v2103 = vpop.f32.mrb[0].mxu0
      %v2104 = vadd.f32 %v1869, %v2103
      %v2105 = vpop.f32.mrb[0].mxu0
      %2106 = vmatprep.mubr.f32.mxu0 0.0
      %2107 = vmatmul.mubr.f32.gmra.mrb[0].mxu0 %v1915
      %v2108 = vpop.f32.mrb[0].mxu0
      %v2109 = vadd.f32 %v1869, %v2108
      %v2110 = vpop.f32.mrb[0].mxu0
      %2111 = vmatprep.mubr.f32.mxu0 0.0
      %2112 = vmatmul.mubr.f32.gmra.mrb[0].mxu0 %v1918
      %v2113 = vpop.f32.mrb[0].mxu0
      %v2114 = vadd.f32 %v1869, %v2113
      %v2115 = vpop.f32.mrb[0].mxu0
      %2116 = vmatprep.mubr.f32.mxu0 0.0
      %2117 = vmatmul.mubr.f32.gmra.mrb[0].mxu0 %v1921
      %v2118 = vpop.f32.mrb[0].mxu0
      %v2119 = vadd.f32 %v1869, %v2118
      %v2120 = vpop.f32.mrb[0].mxu0
      %2121 = vmatprep.mubr.f32.mxu0 0.0
      %2122 = vmatmul.mubr.f32.gmra.mrb[0].mxu0 %v1924
      %v2123 = vpop.f32.mrb[0].mxu0
      %v2124 = vadd.f32 %v1869, %v2123
      %v2125 = vpop.f32.mrb[0].mxu0
      %2126 = vmatprep.mubr.f32.mxu0 0.0
      %2127 = vmatmul.mubr.f32.gmra.mrb[0].mxu0 %v1927
      %v2128 = vpop.f32.mrb[0].mxu0
      %v2129 = vadd.f32 %v1869, %v2128
      %v2130 = vpop.f32.mrb[0].mxu0
      %2131 = vmatprep.mubr.f32.mxu0 0.0
      %2132 = vmatmul.mubr.f32.gmra.mrb[0].mxu0 %v1930
      %v2133 = vpop.f32.mrb[0].mxu0
      %v2134 = vadd.f32 %v1869, %v2133
      %v2135 = vpop.f32.mrb[0].mxu0
      %2136 = vmatprep.mubr.f32.mxu0 0.0
      %2137 = vmatmul.mubr.f32.gmra.mrb[0].mxu0 %v1933
      %v2138 = vpop.f32.mrb[0].mxu0
      %v2139 = vadd.f32 %v1869, %v2138
      %v2140 = vpop.f32.mrb[0].mxu0
      %2141 = vmatprep.mubr.f32.mxu0 0.0
      %2142 = vmatmul.mubr.f32.gmra.mrb[0].mxu0 %v1936
      %v2143 = vpop.f32.mrb[0].mxu0
      %v2144 = vadd.f32 %v1869, %v2143
      %v2145 = vpop.f32.mrb[0].mxu0
      %2146 = vmatprep.mubr.f32.mxu0 0.0
      %2147 = vmatmul.mubr.f32.gmra.mrb[0].mxu0 %v1939
      %v2148 = vpop.f32.mrb[0].mxu0
      %v2149 = vadd.f32 %v1869, %v2148
      %v2150 = vpop.f32.mrb[0].mxu0
      %2151 = vmatprep.mubr.f32.mxu0 0.0
      %2152 = vmatmul.mubr.f32.gmra.mrb[0].mxu0 %v1942
      %v2153 = vpop.f32.mrb[0].mxu0
      %v2154 = vadd.f32 %v1869, %v2153
      %v2155 = vpop.f32.mrb[0].mxu0
      %2156 = vmatprep.mubr.f32.mxu0 0.0
      %2157 = vmatmul.mubr.f32.gmra.mrb[0].mxu0 %v1945
      %v2158 = vpop.f32.mrb[0].mxu0
      %v2159 = vadd.f32 %v1869, %v2158
      %v2160 = vpop.f32.mrb[0].mxu0
      %2161 = vmatprep.mubr.f32.mxu0 0.0
      %2162 = vmatmul.mubr.f32.gmra.mrb[0].mxu0 %v1948
      %v2163 = vpop.f32.mrb[0].mxu0
      %v2164 = vadd.f32 %v1869, %v2163
      %v2165 = vpop.f32.mrb[0].mxu0
      %2166 = vmatprep.mubr.f32.mxu0 0.0
      %2167 = vmatmul.mubr.f32.gmra.mrb[0].mxu0 %v1951
      %v2168 = vpop.f32.mrb[0].mxu0
      %v2169 = vadd.f32 %v1869, %v2168
      %v2170 = vpop.f32.mrb[0].mxu0
      %2171 = vmatprep.mubr.f32.mxu0 0.0
      %2172 = vmatmul.mubr.f32.gmra.mrb[0].mxu0 %v1954
      %v2173 = vpop.f32.mrb[0].mxu0
      %v2174 = vadd.f32 %v1869, %v2173
      %v2175 = vpop.f32.mrb[0].mxu0
      %2176 = vmatprep.mubr.f32.mxu0 0.0
      %2177 = vmatmul.mubr.f32.gmra.mrb[0].mxu0 %v1957
      %v2178 = vpop.f32.mrb[0].mxu0
      %v2179 = vadd.f32 %v1869, %v2178
      %v2180 = vpop.f32.mrb[0].mxu0
      %2181 = vmatprep.mubr.f32.mxu0 0.0
      %2182 = vmatmul.mubr.f32.gmra.mrb[0].mxu0 %v1960
      %v2183 = vpop.f32.mrb[0].mxu0
      %v2184 = vadd.f32 %v1869, %v2183
      %v2185 = vpop.f32.mrb[0].mxu0
      %2186 = vmatprep.mubr.f32.mxu0 0.0
      %2187 = vmatmul.mubr.f32.gmra.mrb[0].mxu0 %v1963
      %v2188 = vpop.f32.mrb[0].mxu0
      %v2189 = vadd.f32 %v1869, %v2188
      %v2190 = vpop.f32.mrb[0].mxu0
      %2191 = vmatprep.mubr.f32.mxu0 0.0
      %2192 = vmatmul.mubr.f32.gmra.mrb[0].mxu0 %v1966
      %v2193 = vpop.f32.mrb[0].mxu0
      %v2194 = vadd.f32 %v1869, %v2193
      %v2195 = vpop.f32.mrb[0].mxu0
      %2196 = vdwg.mxu0
      %v2197 = vmax.f32 %v2039, 0.0
      %v2198 = vmax.f32 %v2044, 0.0
      %v2199 = vmax.f32 %v2049, 0.0
      %v2200 = vmax.f32 %v2054, 0.0
      %v2201 = vmax.f32 %v2059, 0.0
      %v2202 = vmax.f32 %v2064, 0.0
      %v2203 = vmax.f32 %v2069, 0.0
      %v2204 = vmax.f32 %v2074, 0.0
      %v2205 = vmax.f32 %v2079, 0.0
      %v2206 = vmax.f32 %v2084, 0.0
      %v2207 = vmax.f32 %v2089, 0.0
      %v2208 = vmax.f32 %v2094, 0.0
      %v2209 = vmax.f32 %v2099, 0.0
      %v2210 = vmax.f32 %v2104, 0.0
      %v2211 = vmax.f32 %v2109, 0.0
      %v2212 = vmax.f32 %v2114, 0.0
      %v2213 = vmax.f32 %v2119, 0.0
      %v2214 = vmax.f32 %v2124, 0.0
      %v2215 = vmax.f32 %v2129, 0.0
      %v2216 = vmax.f32 %v2134, 0.0
      %v2217 = vmax.f32 %v2139, 0.0
      %v2218 = vmax.f32 %v2144, 0.0
      %v2219 = vmax.f32 %v2149, 0.0
      %v2220 = vmax.f32 %v2154, 0.0
      %v2221 = vmax.f32 %v2159, 0.0
      %v2222 = vmax.f32 %v2164, 0.0
      %v2223 = vmax.f32 %v2169, 0.0
      %v2224 = vmax.f32 %v2174, 0.0
      %v2225 = vmax.f32 %v2179, 0.0
      %v2226 = vmax.f32 %v2184, 0.0
      %v2227 = vmax.f32 %v2189, 0.0
      %v2228 = vmax.f32 %v2194, 0.0
      %v2229 = vlaneseq
      %v2230 = vshrl.u32 %v2229, 7
      %v2231 = vadd.s32 %v2230, 8
      %v2232 = vadd.s32 %v2230, 16
      %v2233 = vadd.s32 %v2230, 24
      %v2234 = vadd.s32 %v2230, 32
      %v2235 = vadd.s32 %v2230, 40
      %v2236 = vadd.s32 %v2230, 48
      %v2237 = vadd.s32 %v2230, 56
      %v2238 = vadd.s32 %v2230, 64
      %v2239 = vadd.s32 %v2230, 72
      %v2240 = vadd.s32 %v2230, 80
      %v2241 = vadd.s32 %v2230, 88
      %v2242 = vadd.s32 %v2230, 96
      %v2243 = vadd.s32 %v2230, 104
      %v2244 = vadd.s32 %v2230, 112
      %v2245 = vadd.s32 %v2230, 120
      %v2246 = vadd.s32 %v2230, 128
      %v2247 = vadd.s32 %v2230, 136
      %v2248 = vadd.s32 %v2230, 144
      %v2249 = vadd.s32 %v2230, 152
      %v2250 = vadd.s32 %v2230, 160
      %v2251 = vadd.s32 %v2230, 168
      %v2252 = vadd.s32 %v2230, 176
      %v2253 = vadd.s32 %v2230, 184
      %v2254 = vadd.s32 %v2230, 192
      %v2255 = vadd.s32 %v2230, 200
      %v2256 = vadd.s32 %v2230, 208
      %v2257 = vadd.s32 %v2230, 216
      %v2258 = vadd.s32 %v2230, 224
      %v2259 = vadd.s32 %v2230, 232
      %v2260 = vadd.s32 %v2230, 240
      %v2261 = vadd.s32 %v2230, 248
      %s2262 = ssub.s32 3, %s398
      %s2263 = smul.u32 %s2262, 18
      %s2264 = ssub.s32 19, %s398
      %s2265 = smul.u32 %s2264, 18
      %v2266 = vstv %s2263
      %vm2267 = vcmp.ge.s32.totalorder %v2230, %v2266
      %vm2268 = vcmp.ge.s32.totalorder %v2231, %v2266
      %vm2269 = vcmp.ge.s32.totalorder %v2232, %v2266
      %vm2270 = vcmp.ge.s32.totalorder %v2233, %v2266
      %vm2271 = vcmp.ge.s32.totalorder %v2234, %v2266
      %vm2272 = vcmp.ge.s32.totalorder %v2235, %v2266
      %vm2273 = vcmp.ge.s32.totalorder %v2236, %v2266
      %vm2274 = vcmp.ge.s32.totalorder %v2237, %v2266
      %vm2275 = vcmp.ge.s32.totalorder %v2238, %v2266
      %vm2276 = vcmp.ge.s32.totalorder %v2239, %v2266
      %vm2277 = vcmp.ge.s32.totalorder %v2240, %v2266
      %vm2278 = vcmp.ge.s32.totalorder %v2241, %v2266
      %vm2279 = vcmp.ge.s32.totalorder %v2242, %v2266
      %vm2280 = vcmp.ge.s32.totalorder %v2243, %v2266
      %vm2281 = vcmp.ge.s32.totalorder %v2244, %v2266
      %vm2282 = vcmp.ge.s32.totalorder %v2245, %v2266
      %vm2283 = vcmp.ge.s32.totalorder %v2246, %v2266
      %vm2284 = vcmp.ge.s32.totalorder %v2247, %v2266
      %vm2285 = vcmp.ge.s32.totalorder %v2248, %v2266
      %vm2286 = vcmp.ge.s32.totalorder %v2249, %v2266
      %vm2287 = vcmp.ge.s32.totalorder %v2250, %v2266
      %vm2288 = vcmp.ge.s32.totalorder %v2251, %v2266
      %vm2289 = vcmp.ge.s32.totalorder %v2252, %v2266
      %vm2290 = vcmp.ge.s32.totalorder %v2253, %v2266
      %vm2291 = vcmp.ge.s32.totalorder %v2254, %v2266
      %vm2292 = vcmp.ge.s32.totalorder %v2255, %v2266
      %vm2293 = vcmp.ge.s32.totalorder %v2256, %v2266
      %vm2294 = vcmp.ge.s32.totalorder %v2257, %v2266
      %vm2295 = vcmp.ge.s32.totalorder %v2258, %v2266
      %vm2296 = vcmp.ge.s32.totalorder %v2259, %v2266
      %vm2297 = vcmp.ge.s32.totalorder %v2260, %v2266
      %vm2298 = vcmp.ge.s32.totalorder %v2261, %v2266
      %v2299 = vstv %s2265
      %vm2300 = vcmp.lt.s32.totalorder %v2230, %v2299
      %vm2301 = vcmp.lt.s32.totalorder %v2231, %v2299
      %vm2302 = vcmp.lt.s32.totalorder %v2232, %v2299
      %vm2303 = vcmp.lt.s32.totalorder %v2233, %v2299
      %vm2304 = vcmp.lt.s32.totalorder %v2234, %v2299
      %vm2305 = vcmp.lt.s32.totalorder %v2235, %v2299
      %vm2306 = vcmp.lt.s32.totalorder %v2236, %v2299
      %vm2307 = vcmp.lt.s32.totalorder %v2237, %v2299
      %vm2308 = vcmp.lt.s32.totalorder %v2238, %v2299
      %vm2309 = vcmp.lt.s32.totalorder %v2239, %v2299
      %vm2310 = vcmp.lt.s32.totalorder %v2240, %v2299
      %vm2311 = vcmp.lt.s32.totalorder %v2241, %v2299
      %vm2312 = vcmp.lt.s32.totalorder %v2242, %v2299
      %vm2313 = vcmp.lt.s32.totalorder %v2243, %v2299
      %vm2314 = vcmp.lt.s32.totalorder %v2244, %v2299
      %vm2315 = vcmp.lt.s32.totalorder %v2245, %v2299
      %vm2316 = vcmp.lt.s32.totalorder %v2246, %v2299
      %vm2317 = vcmp.lt.s32.totalorder %v2247, %v2299
      %vm2318 = vcmp.lt.s32.totalorder %v2248, %v2299
      %vm2319 = vcmp.lt.s32.totalorder %v2249, %v2299
      %vm2320 = vcmp.lt.s32.totalorder %v2250, %v2299
      %vm2321 = vcmp.lt.s32.totalorder %v2251, %v2299
      %vm2322 = vcmp.lt.s32.totalorder %v2252, %v2299
      %vm2323 = vcmp.lt.s32.totalorder %v2253, %v2299
      %vm2324 = vcmp.lt.s32.totalorder %v2254, %v2299
      %vm2325 = vcmp.lt.s32.totalorder %v2255, %v2299
      %vm2326 = vcmp.lt.s32.totalorder %v2256, %v2299
      %vm2327 = vcmp.lt.s32.totalorder %v2257, %v2299
      %vm2328 = vcmp.lt.s32.totalorder %v2258, %v2299
      %vm2329 = vcmp.lt.s32.totalorder %v2259, %v2299
      %vm2330 = vcmp.lt.s32.totalorder %v2260, %v2299
      %vm2331 = vcmp.lt.s32.totalorder %v2261, %v2299
      %vm2332 = vmand %vm2267, %vm2300
      %vm2333 = vmand %vm2268, %vm2301
      %vm2334 = vmand %vm2269, %vm2302
      %vm2335 = vmand %vm2270, %vm2303
      %vm2336 = vmand %vm2271, %vm2304
      %vm2337 = vmand %vm2272, %vm2305
      %vm2338 = vmand %vm2273, %vm2306
      %vm2339 = vmand %vm2274, %vm2307
      %vm2340 = vmand %vm2275, %vm2308
      %vm2341 = vmand %vm2276, %vm2309
      %vm2342 = vmand %vm2277, %vm2310
      %vm2343 = vmand %vm2278, %vm2311
      %vm2344 = vmand %vm2279, %vm2312
      %vm2345 = vmand %vm2280, %vm2313
      %vm2346 = vmand %vm2281, %vm2314
      %vm2347 = vmand %vm2282, %vm2315
      %vm2348 = vmand %vm2283, %vm2316
      %vm2349 = vmand %vm2284, %vm2317
      %vm2350 = vmand %vm2285, %vm2318
      %vm2351 = vmand %vm2286, %vm2319
      %vm2352 = vmand %vm2287, %vm2320
      %vm2353 = vmand %vm2288, %vm2321
      %vm2354 = vmand %vm2289, %vm2322
      %vm2355 = vmand %vm2290, %vm2323
      %vm2356 = vmand %vm2291, %vm2324
      %vm2357 = vmand %vm2292, %vm2325
      %vm2358 = vmand %vm2293, %vm2326
      %vm2359 = vmand %vm2294, %vm2327
      %vm2360 = vmand %vm2295, %vm2328
      %vm2361 = vmand %vm2296, %vm2329
      %vm2362 = vmand %vm2297, %vm2330
      %vm2363 = vmand %vm2298, %vm2331
      %v2364 = vsel %vm2332, 1, 0
      %v2365 = vsel %vm2333, 1, 0
      %v2366 = vsel %vm2334, 1, 0
      %v2367 = vsel %vm2335, 1, 0
      %v2368 = vsel %vm2336, 1, 0
      %v2369 = vsel %vm2337, 1, 0
      %v2370 = vsel %vm2338, 1, 0
      %v2371 = vsel %vm2339, 1, 0
      %v2372 = vsel %vm2340, 1, 0
      %v2373 = vsel %vm2341, 1, 0
      %v2374 = vsel %vm2342, 1, 0
      %v2375 = vsel %vm2343, 1, 0
      %v2376 = vsel %vm2344, 1, 0
      %v2377 = vsel %vm2345, 1, 0
      %v2378 = vsel %vm2346, 1, 0
      %v2379 = vsel %vm2347, 1, 0
      %v2380 = vsel %vm2348, 1, 0
      %v2381 = vsel %vm2349, 1, 0
      %v2382 = vsel %vm2350, 1, 0
      %v2383 = vsel %vm2351, 1, 0
      %v2384 = vsel %vm2352, 1, 0
      %v2385 = vsel %vm2353, 1, 0
      %v2386 = vsel %vm2354, 1, 0
      %v2387 = vsel %vm2355, 1, 0
      %v2388 = vsel %vm2356, 1, 0
      %v2389 = vsel %vm2357, 1, 0
      %v2390 = vsel %vm2358, 1, 0
      %v2391 = vsel %vm2359, 1, 0
      %v2392 = vsel %vm2360, 1, 0
      %v2393 = vsel %vm2361, 1, 0
      %v2394 = vsel %vm2362, 1, 0
      %v2395 = vsel %vm2363, 1, 0
      %vm2396 = vcmp.eq.s32.totalorder %v2364, 1
      %vm2397 = vcmp.eq.s32.totalorder %v2365, 1
      %vm2398 = vcmp.eq.s32.totalorder %v2366, 1
      %vm2399 = vcmp.eq.s32.totalorder %v2367, 1
      %vm2400 = vcmp.eq.s32.totalorder %v2368, 1
      %vm2401 = vcmp.eq.s32.totalorder %v2369, 1
      %vm2402 = vcmp.eq.s32.totalorder %v2370, 1
      %vm2403 = vcmp.eq.s32.totalorder %v2371, 1
      %vm2404 = vcmp.eq.s32.totalorder %v2372, 1
      %vm2405 = vcmp.eq.s32.totalorder %v2373, 1
      %vm2406 = vcmp.eq.s32.totalorder %v2374, 1
      %vm2407 = vcmp.eq.s32.totalorder %v2375, 1
      %vm2408 = vcmp.eq.s32.totalorder %v2376, 1
      %vm2409 = vcmp.eq.s32.totalorder %v2377, 1
      %vm2410 = vcmp.eq.s32.totalorder %v2378, 1
      %vm2411 = vcmp.eq.s32.totalorder %v2379, 1
      %vm2412 = vcmp.eq.s32.totalorder %v2380, 1
      %vm2413 = vcmp.eq.s32.totalorder %v2381, 1
      %vm2414 = vcmp.eq.s32.totalorder %v2382, 1
      %vm2415 = vcmp.eq.s32.totalorder %v2383, 1
      %vm2416 = vcmp.eq.s32.totalorder %v2384, 1
      %vm2417 = vcmp.eq.s32.totalorder %v2385, 1
      %vm2418 = vcmp.eq.s32.totalorder %v2386, 1
      %vm2419 = vcmp.eq.s32.totalorder %v2387, 1
      %vm2420 = vcmp.eq.s32.totalorder %v2388, 1
      %vm2421 = vcmp.eq.s32.totalorder %v2389, 1
      %vm2422 = vcmp.eq.s32.totalorder %v2390, 1
      %vm2423 = vcmp.eq.s32.totalorder %v2391, 1
      %vm2424 = vcmp.eq.s32.totalorder %v2392, 1
      %vm2425 = vcmp.eq.s32.totalorder %v2393, 1
      %vm2426 = vcmp.eq.s32.totalorder %v2394, 1
      %vm2427 = vcmp.eq.s32.totalorder %v2395, 1
      %v2428 = vsel %vm2396, %v2197, 0.0
      %v2429 = vsel %vm2397, %v2198, 0.0
      %v2430 = vsel %vm2398, %v2199, 0.0
      %v2431 = vsel %vm2399, %v2200, 0.0
      %v2432 = vsel %vm2400, %v2201, 0.0
      %v2433 = vsel %vm2401, %v2202, 0.0
      %v2434 = vsel %vm2402, %v2203, 0.0
      %v2435 = vsel %vm2403, %v2204, 0.0
      %v2436 = vsel %vm2404, %v2205, 0.0
      %v2437 = vsel %vm2405, %v2206, 0.0
      %v2438 = vsel %vm2406, %v2207, 0.0
      %v2439 = vsel %vm2407, %v2208, 0.0
      %v2440 = vsel %vm2408, %v2209, 0.0
      %v2441 = vsel %vm2409, %v2210, 0.0
      %v2442 = vsel %vm2410, %v2211, 0.0
      %v2443 = vsel %vm2411, %v2212, 0.0
      %v2444 = vsel %vm2412, %v2213, 0.0
      %v2445 = vsel %vm2413, %v2214, 0.0
      %v2446 = vsel %vm2414, %v2215, 0.0
      %v2447 = vsel %vm2415, %v2216, 0.0
      %v2448 = vsel %vm2416, %v2217, 0.0
      %v2449 = vsel %vm2417, %v2218, 0.0
      %v2450 = vsel %vm2418, %v2219, 0.0
      %v2451 = vsel %vm2419, %v2220, 0.0
      %v2452 = vsel %vm2420, %v2221, 0.0
      %v2453 = vsel %vm2421, %v2222, 0.0
      %v2454 = vsel %vm2422, %v2223, 0.0
      %v2455 = vsel %vm2423, %v2224, 0.0
      %v2456 = vsel %vm2424, %v2225, 0.0
      %v2457 = vsel %vm2425, %v2226, 0.0
      %v2458 = vsel %vm2426, %v2227, 0.0
      %v2459 = vsel %vm2427, %v2228, 0.0
      %v2460 = vld [vmem:[%s1] sm:$0xff]
      %v2461 = vld [vmem:[%s1 + $0x8] sm:$0xff]
      %v2462 = vld [vmem:[%s1 + $0x10] sm:$0xff]
      %v2463 = vld [vmem:[%s1 + $0x18] sm:$0xff]
      %v2464 = vld [vmem:[%s1 + $0x20] sm:$0xff]
      %v2465 = vld [vmem:[%s1 + $0x28] sm:$0xff]
      %v2466 = vld [vmem:[%s1 + $0x30] sm:$0xff]
      %v2467 = vld [vmem:[%s1 + $0x38] sm:$0xff]
      %v2468 = vld [vmem:[%s1 + $0x40] sm:$0xff]
      %v2469 = vld [vmem:[%s1 + $0x48] sm:$0xff]
      %v2470 = vld [vmem:[%s1 + $0x50] sm:$0xff]
      %v2471 = vld [vmem:[%s1 + $0x58] sm:$0xff]
      %v2472 = vld [vmem:[%s1 + $0x60] sm:$0xff]
      %v2473 = vld [vmem:[%s1 + $0x68] sm:$0xff]
      %v2474 = vld [vmem:[%s1 + $0x70] sm:$0xff]
      %v2475 = vld [vmem:[%s1 + $0x78] sm:$0xff]
      %v2476 = vld [vmem:[%s1 + $0x80] sm:$0xff]
      %v2477 = vld [vmem:[%s1 + $0x88] sm:$0xff]
      %v2478 = vld [vmem:[%s1 + $0x90] sm:$0xff]
      %v2479 = vld [vmem:[%s1 + $0x98] sm:$0xff]
      %v2480 = vld [vmem:[%s1 + $0xa0] sm:$0xff]
      %v2481 = vld [vmem:[%s1 + $0xa8] sm:$0xff]
      %v2482 = vld [vmem:[%s1 + $0xb0] sm:$0xff]
      %v2483 = vld [vmem:[%s1 + $0xb8] sm:$0xff]
      %v2484 = vld [vmem:[%s1 + $0xc0] sm:$0xff]
      %v2485 = vld [vmem:[%s1 + $0xc8] sm:$0xff]
      %v2486 = vld [vmem:[%s1 + $0xd0] sm:$0xff]
      %v2487 = vld [vmem:[%s1 + $0xd8] sm:$0xff]
      %v2488 = vld [vmem:[%s1 + $0xe0] sm:$0xff]
      %v2489 = vld [vmem:[%s1 + $0xe8] sm:$0xff]
      %v2490 = vld [vmem:[%s1 + $0xf0] sm:$0xff]
      %v2491 = vld [vmem:[%s1 + $0xf8] sm:$0xf]
      %2493 = vset.pattern.permute.xlu0 0
      %2494 = vperm.xlu0 %2493, %v2460
      %v2495 = vpop.permute.xlu0 %2494
      %2498 = vset.pattern.permute.xlu0 0
      %2499 = vperm.xlu0 %2498, %v2461
      %v2500 = vpop.permute.xlu0 %2499
      %2503 = vset.pattern.permute.xlu0 0
      %2504 = vperm.xlu0 %2503, %v2462
      %v2505 = vpop.permute.xlu0 %2504
      %2508 = vset.pattern.permute.xlu0 0
      %2509 = vperm.xlu0 %2508, %v2463
      %v2510 = vpop.permute.xlu0 %2509
      %2513 = vset.pattern.permute.xlu0 0
      %2514 = vperm.xlu0 %2513, %v2464
      %v2515 = vpop.permute.xlu0 %2514
      %2518 = vset.pattern.permute.xlu0 0
      %2519 = vperm.xlu0 %2518, %v2465
      %v2520 = vpop.permute.xlu0 %2519
      %2523 = vset.pattern.permute.xlu0 0
      %2524 = vperm.xlu0 %2523, %v2466
      %v2525 = vpop.permute.xlu0 %2524
      %2528 = vset.pattern.permute.xlu0 0
      %2529 = vperm.xlu0 %2528, %v2467
      %v2530 = vpop.permute.xlu0 %2529
      %2533 = vset.pattern.permute.xlu0 0
      %2534 = vperm.xlu0 %2533, %v2468
      %v2535 = vpop.permute.xlu0 %2534
      %2538 = vset.pattern.permute.xlu0 0
      %2539 = vperm.xlu0 %2538, %v2469
      %v2540 = vpop.permute.xlu0 %2539
      %2543 = vset.pattern.permute.xlu0 0
      %2544 = vperm.xlu0 %2543, %v2470
      %v2545 = vpop.permute.xlu0 %2544
      %2548 = vset.pattern.permute.xlu0 0
      %2549 = vperm.xlu0 %2548, %v2471
      %v2550 = vpop.permute.xlu0 %2549
      %2553 = vset.pattern.permute.xlu0 0
      %2554 = vperm.xlu0 %2553, %v2472
      %v2555 = vpop.permute.xlu0 %2554
      %2558 = vset.pattern.permute.xlu0 0
      %2559 = vperm.xlu0 %2558, %v2473
      %v2560 = vpop.permute.xlu0 %2559
      %2563 = vset.pattern.permute.xlu0 0
      %2564 = vperm.xlu0 %2563, %v2474
      %v2565 = vpop.permute.xlu0 %2564
      %2568 = vset.pattern.permute.xlu0 0
      %2569 = vperm.xlu0 %2568, %v2475
      %v2570 = vpop.permute.xlu0 %2569
      %2573 = vset.pattern.permute.xlu0 0
      %2574 = vperm.xlu0 %2573, %v2476
      %v2575 = vpop.permute.xlu0 %2574
      %2578 = vset.pattern.permute.xlu0 0
      %2579 = vperm.xlu0 %2578, %v2477
      %v2580 = vpop.permute.xlu0 %2579
      %2583 = vset.pattern.permute.xlu0 0
      %2584 = vperm.xlu0 %2583, %v2478
      %v2585 = vpop.permute.xlu0 %2584
      %2588 = vset.pattern.permute.xlu0 0
      %2589 = vperm.xlu0 %2588, %v2479
      %v2590 = vpop.permute.xlu0 %2589
      %2593 = vset.pattern.permute.xlu0 0
      %2594 = vperm.xlu0 %2593, %v2480
      %v2595 = vpop.permute.xlu0 %2594
      %2598 = vset.pattern.permute.xlu0 0
      %2599 = vperm.xlu0 %2598, %v2481
      %v2600 = vpop.permute.xlu0 %2599
      %2603 = vset.pattern.permute.xlu0 0
      %2604 = vperm.xlu0 %2603, %v2482
      %v2605 = vpop.permute.xlu0 %2604
      %2608 = vset.pattern.permute.xlu0 0
      %2609 = vperm.xlu0 %2608, %v2483
      %v2610 = vpop.permute.xlu0 %2609
      %2613 = vset.pattern.permute.xlu0 0
      %2614 = vperm.xlu0 %2613, %v2484
      %v2615 = vpop.permute.xlu0 %2614
      %2618 = vset.pattern.permute.xlu0 0
      %2619 = vperm.xlu0 %2618, %v2485
      %v2620 = vpop.permute.xlu0 %2619
      %2623 = vset.pattern.permute.xlu0 0
      %2624 = vperm.xlu0 %2623, %v2486
      %v2625 = vpop.permute.xlu0 %2624
      %2628 = vset.pattern.permute.xlu0 0
      %2629 = vperm.xlu0 %2628, %v2487
      %v2630 = vpop.permute.xlu0 %2629
      %2633 = vset.pattern.permute.xlu0 0
      %2634 = vperm.xlu0 %2633, %v2488
      %v2635 = vpop.permute.xlu0 %2634
      %2638 = vset.pattern.permute.xlu0 0
      %2639 = vperm.xlu0 %2638, %v2489
      %v2640 = vpop.permute.xlu0 %2639
      %2643 = vset.pattern.permute.xlu0 0
      %2644 = vperm.xlu0 %2643, %v2490
      %v2645 = vpop.permute.xlu0 %2644
      %2648 = vset.pattern.permute.xlu0 0
      %2649 = vperm.xlu0 %2648, %v2491
      %v2650 = vpop.permute.xlu0 %2649
      %v2652 = vmul.f32 %v2428, %v2495
      %v2653 = vmul.f32 %v2429, %v2500
      %v2654 = vmul.f32 %v2430, %v2505
      %v2655 = vmul.f32 %v2431, %v2510
      %v2656 = vmul.f32 %v2432, %v2515
      %v2657 = vmul.f32 %v2433, %v2520
      %v2658 = vmul.f32 %v2434, %v2525
      %v2659 = vmul.f32 %v2435, %v2530
      %v2660 = vmul.f32 %v2436, %v2535
      %v2661 = vmul.f32 %v2437, %v2540
      %v2662 = vmul.f32 %v2438, %v2545
      %v2663 = vmul.f32 %v2439, %v2550
      %v2664 = vmul.f32 %v2440, %v2555
      %v2665 = vmul.f32 %v2441, %v2560
      %v2666 = vmul.f32 %v2442, %v2565
      %v2667 = vmul.f32 %v2443, %v2570
      %v2668 = vmul.f32 %v2444, %v2575
      %v2669 = vmul.f32 %v2445, %v2580
      %v2670 = vmul.f32 %v2446, %v2585
      %v2671 = vmul.f32 %v2447, %v2590
      %v2672 = vmul.f32 %v2448, %v2595
      %v2673 = vmul.f32 %v2449, %v2600
      %v2674 = vmul.f32 %v2450, %v2605
      %v2675 = vmul.f32 %v2451, %v2610
      %v2676 = vmul.f32 %v2452, %v2615
      %v2677 = vmul.f32 %v2453, %v2620
      %v2678 = vmul.f32 %v2454, %v2625
      %v2679 = vmul.f32 %v2455, %v2630
      %v2680 = vmul.f32 %v2456, %v2635
      %v2681 = vmul.f32 %v2457, %v2640
      %v2682 = vmul.f32 %v2458, %v2645
      %v2683 = vmul.f32 %v2459, %v2650
      %vm2684 = vcmask 253952
      %2685 = vst.msk [vmem:[#allocation2] sm:$0x1] %vm2684, 0.0
      %2686 = vst.msk [vmem:[#allocation2 + $0x1] sm:$0xff] %vm1826, %v2652
      %2687 = vst.msk [vmem:[#allocation2 + $0x9] sm:$0xff] %vm1826, %v2653
      %2688 = vst.msk [vmem:[#allocation2 + $0x11] sm:$0xff] %vm1826, %v2654
      %2689 = vst.msk [vmem:[#allocation2 + $0x19] sm:$0xff] %vm1826, %v2655
      %2690 = vst.msk [vmem:[#allocation2 + $0x21] sm:$0xff] %vm1826, %v2656
      %2691 = vst.msk [vmem:[#allocation2 + $0x29] sm:$0xff] %vm1826, %v2657
      %2692 = vst.msk [vmem:[#allocation2 + $0x31] sm:$0xff] %vm1826, %v2658
      %2693 = vst.msk [vmem:[#allocation2 + $0x39] sm:$0xff] %vm1826, %v2659
      %2694 = vst.msk [vmem:[#allocation2 + $0x41] sm:$0xff] %vm1826, %v2660
      %2695 = vst.msk [vmem:[#allocation2 + $0x49] sm:$0xff] %vm1826, %v2661
      %2696 = vst.msk [vmem:[#allocation2 + $0x51] sm:$0xff] %vm1826, %v2662
      %2697 = vst.msk [vmem:[#allocation2 + $0x59] sm:$0xff] %vm1826, %v2663
      %2698 = vst.msk [vmem:[#allocation2 + $0x61] sm:$0xff] %vm1826, %v2664
      %2699 = vst.msk [vmem:[#allocation2 + $0x69] sm:$0xff] %vm1826, %v2665
      %2700 = vst.msk [vmem:[#allocation2 + $0x71] sm:$0xff] %vm1826, %v2666
      %2701 = vst.msk [vmem:[#allocation2 + $0x79] sm:$0xff] %vm1826, %v2667
      %2702 = vst.msk [vmem:[#allocation2 + $0x81] sm:$0xff] %vm1826, %v2668
      %2703 = vst.msk [vmem:[#allocation2 + $0x89] sm:$0xff] %vm1826, %v2669
      %2704 = vst.msk [vmem:[#allocation2 + $0x91] sm:$0xff] %vm1826, %v2670
      %2705 = vst.msk [vmem:[#allocation2 + $0x99] sm:$0xff] %vm1826, %v2671
      %2706 = vst.msk [vmem:[#allocation2 + $0xa1] sm:$0xff] %vm1826, %v2672
      %2707 = vst.msk [vmem:[#allocation2 + $0xa9] sm:$0xff] %vm1826, %v2673
      %2708 = vst.msk [vmem:[#allocation2 + $0xb1] sm:$0xff] %vm1826, %v2674
      %2709 = vst.msk [vmem:[#allocation2 + $0xb9] sm:$0xff] %vm1826, %v2675
      %2710 = vst.msk [vmem:[#allocation2 + $0xc1] sm:$0xff] %vm1826, %v2676
      %2711 = vst.msk [vmem:[#allocation2 + $0xc9] sm:$0xff] %vm1826, %v2677
      %2712 = vst.msk [vmem:[#allocation2 + $0xd1] sm:$0xff] %vm1826, %v2678
      %2713 = vst.msk [vmem:[#allocation2 + $0xd9] sm:$0xff] %vm1826, %v2679
      %2714 = vst.msk [vmem:[#allocation2 + $0xe1] sm:$0xff] %vm1826, %v2680
      %2715 = vst.msk [vmem:[#allocation2 + $0xe9] sm:$0xff] %vm1826, %v2681
      %2716 = vst.msk [vmem:[#allocation2 + $0xf1] sm:$0xff] %vm1826, %v2682
      %vm2717 = vcmask 257024
      %2718 = vst.msk [vmem:[#allocation2 + $0xf9] sm:$0xf] %vm2717, %v2683
      %2719 = vst.msk [vmem:[#allocation2 + $0xfd] sm:$0xff] %vm1826, 0.0
      %2720 = vst.msk [vmem:[#allocation2 + $0x105] sm:$0xff] %vm1826, 0.0
      %2721 = vst.msk [vmem:[#allocation2 + $0x10d] sm:$0x1] %vm2684, 0.0
      %v2722 = vld [vmem:[#allocation2] sm:$0xff]
      %v2723 = vld [vmem:[#allocation2 + $0x8] sm:$0xff]
      %v2724 = vld [vmem:[#allocation2 + $0x10] sm:$0xff]
      %v2725 = vld [vmem:[#allocation2 + $0x18] sm:$0xff]
      %v2726 = vld [vmem:[#allocation2 + $0x20] sm:$0xff]
      %v2727 = vld [vmem:[#allocation2 + $0x28] sm:$0xff]
      %v2728 = vld [vmem:[#allocation2 + $0x30] sm:$0xff]
      %v2729 = vld [vmem:[#allocation2 + $0x38] sm:$0xff]
      %v2730 = vld [vmem:[#allocation2 + $0x40] sm:$0xff]
      %v2731 = vld [vmem:[#allocation2 + $0x48] sm:$0xff]
      %v2732 = vld [vmem:[#allocation2 + $0x50] sm:$0xff]
      %v2733 = vld [vmem:[#allocation2 + $0x58] sm:$0xff]
      %v2734 = vld [vmem:[#allocation2 + $0x60] sm:$0xff]
      %v2735 = vld [vmem:[#allocation2 + $0x68] sm:$0xff]
      %v2736 = vld [vmem:[#allocation2 + $0x70] sm:$0xff]
      %v2737 = vld [vmem:[#allocation2 + $0x78] sm:$0xff]
      %v2738 = vld [vmem:[#allocation2 + $0x80] sm:$0xff]
      %v2739 = vld [vmem:[#allocation2 + $0x88] sm:$0xff]
      %v2740 = vld [vmem:[#allocation2 + $0x90] sm:$0xff]
      %v2741 = vld [vmem:[#allocation2 + $0x98] sm:$0xff]
      %v2742 = vld [vmem:[#allocation2 + $0xa0] sm:$0xff]
      %v2743 = vld [vmem:[#allocation2 + $0xa8] sm:$0xff]
      %v2744 = vld [vmem:[#allocation2 + $0xb0] sm:$0xff]
      %v2745 = vld [vmem:[#allocation2 + $0xb8] sm:$0xff]
      %v2746 = vld [vmem:[#allocation2 + $0xc0] sm:$0xff]
      %v2747 = vld [vmem:[#allocation2 + $0xc8] sm:$0xff]
      %v2748 = vld [vmem:[#allocation2 + $0xd0] sm:$0xff]
      %v2749 = vld [vmem:[#allocation2 + $0x1] sm:$0xff]
      %v2750 = vld [vmem:[#allocation2 + $0x9] sm:$0xff]
      %v2751 = vld [vmem:[#allocation2 + $0x11] sm:$0xff]
      %v2752 = vld [vmem:[#allocation2 + $0x19] sm:$0xff]
      %v2753 = vld [vmem:[#allocation2 + $0x21] sm:$0xff]
      %v2754 = vld [vmem:[#allocation2 + $0x29] sm:$0xff]
      %v2755 = vld [vmem:[#allocation2 + $0x31] sm:$0xff]
      %v2756 = vld [vmem:[#allocation2 + $0x39] sm:$0xff]
      %v2757 = vld [vmem:[#allocation2 + $0x41] sm:$0xff]
      %v2758 = vld [vmem:[#allocation2 + $0x49] sm:$0xff]
      %v2759 = vld [vmem:[#allocation2 + $0x51] sm:$0xff]
      %v2760 = vld [vmem:[#allocation2 + $0x59] sm:$0xff]
      %v2761 = vld [vmem:[#allocation2 + $0x61] sm:$0xff]
      %v2762 = vld [vmem:[#allocation2 + $0x69] sm:$0xff]
      %v2763 = vld [vmem:[#allocation2 + $0x71] sm:$0xff]
      %v2764 = vld [vmem:[#allocation2 + $0x79] sm:$0xff]
      %v2765 = vld [vmem:[#allocation2 + $0x81] sm:$0xff]
      %v2766 = vld [vmem:[#allocation2 + $0x89] sm:$0xff]
      %v2767 = vld [vmem:[#allocation2 + $0x91] sm:$0xff]
      %v2768 = vld [vmem:[#allocation2 + $0x99] sm:$0xff]
      %v2769 = vld [vmem:[#allocation2 + $0xa1] sm:$0xff]
      %v2770 = vld [vmem:[#allocation2 + $0xa9] sm:$0xff]
      %v2771 = vld [vmem:[#allocation2 + $0xb1] sm:$0xff]
      %v2772 = vld [vmem:[#allocation2 + $0xb9] sm:$0xff]
      %v2773 = vld [vmem:[#allocation2 + $0xc1] sm:$0xff]
      %v2774 = vld [vmem:[#allocation2 + $0xc9] sm:$0xff]
      %v2775 = vld [vmem:[#allocation2 + $0xd1] sm:$0xff]
      %v2776 = vld [vmem:[#allocation2 + $0x2] sm:$0xff]
      %v2777 = vld [vmem:[#allocation2 + $0xa] sm:$0xff]
      %v2778 = vld [vmem:[#allocation2 + $0x12] sm:$0xff]
      %v2779 = vld [vmem:[#allocation2 + $0x1a] sm:$0xff]
      %v2780 = vld [vmem:[#allocation2 + $0x22] sm:$0xff]
      %v2781 = vld [vmem:[#allocation2 + $0x2a] sm:$0xff]
      %v2782 = vld [vmem:[#allocation2 + $0x32] sm:$0xff]
      %v2783 = vld [vmem:[#allocation2 + $0x3a] sm:$0xff]
      %v2784 = vld [vmem:[#allocation2 + $0x42] sm:$0xff]
      %v2785 = vld [vmem:[#allocation2 + $0x4a] sm:$0xff]
      %v2786 = vld [vmem:[#allocation2 + $0x52] sm:$0xff]
      %v2787 = vld [vmem:[#allocation2 + $0x5a] sm:$0xff]
      %v2788 = vld [vmem:[#allocation2 + $0x62] sm:$0xff]
      %v2789 = vld [vmem:[#allocation2 + $0x6a] sm:$0xff]
      %v2790 = vld [vmem:[#allocation2 + $0x72] sm:$0xff]
      %v2791 = vld [vmem:[#allocation2 + $0x7a] sm:$0xff]
      %v2792 = vld [vmem:[#allocation2 + $0x82] sm:$0xff]
      %v2793 = vld [vmem:[#allocation2 + $0x8a] sm:$0xff]
      %v2794 = vld [vmem:[#allocation2 + $0x92] sm:$0xff]
      %v2795 = vld [vmem:[#allocation2 + $0x9a] sm:$0xff]
      %v2796 = vld [vmem:[#allocation2 + $0xa2] sm:$0xff]
      %v2797 = vld [vmem:[#allocation2 + $0xaa] sm:$0xff]
      %v2798 = vld [vmem:[#allocation2 + $0xb2] sm:$0xff]
      %v2799 = vld [vmem:[#allocation2 + $0xba] sm:$0xff]
      %v2800 = vld [vmem:[#allocation2 + $0xc2] sm:$0xff]
      %v2801 = vld [vmem:[#allocation2 + $0xca] sm:$0xff]
      %v2802 = vld [vmem:[#allocation2 + $0xd2] sm:$0xff]
      %v2803 = vld [vmem:[#allocation2 + $0xda] sm:$0xff]
      %v2804 = vld [vmem:[#allocation2 + $0xe2] sm:$0xff]
      %v2805 = vld [vmem:[#allocation2 + $0x13] sm:$0xff]
      %v2806 = vld [vmem:[#allocation2 + $0x1b] sm:$0xff]
      %v2807 = vld [vmem:[#allocation2 + $0x23] sm:$0xff]
      %v2808 = vld [vmem:[#allocation2 + $0x2b] sm:$0xff]
      %v2809 = vld [vmem:[#allocation2 + $0x33] sm:$0xff]
      %v2810 = vld [vmem:[#allocation2 + $0x3b] sm:$0xff]
      %v2811 = vld [vmem:[#allocation2 + $0x43] sm:$0xff]
      %v2812 = vld [vmem:[#allocation2 + $0x4b] sm:$0xff]
      %v2813 = vld [vmem:[#allocation2 + $0x53] sm:$0xff]
      %v2814 = vld [vmem:[#allocation2 + $0x5b] sm:$0xff]
      %v2815 = vld [vmem:[#allocation2 + $0x63] sm:$0xff]
      %v2816 = vld [vmem:[#allocation2 + $0x6b] sm:$0xff]
      %v2817 = vld [vmem:[#allocation2 + $0x73] sm:$0xff]
      %v2818 = vld [vmem:[#allocation2 + $0x7b] sm:$0xff]
      %v2819 = vld [vmem:[#allocation2 + $0x83] sm:$0xff]
      %v2820 = vld [vmem:[#allocation2 + $0x8b] sm:$0xff]
      %v2821 = vld [vmem:[#allocation2 + $0x93] sm:$0xff]
      %v2822 = vld [vmem:[#allocation2 + $0x9b] sm:$0xff]
      %v2823 = vld [vmem:[#allocation2 + $0xa3] sm:$0xff]
      %v2824 = vld [vmem:[#allocation2 + $0xab] sm:$0xff]
      %v2825 = vld [vmem:[#allocation2 + $0xb3] sm:$0xff]
      %v2826 = vld [vmem:[#allocation2 + $0xbb] sm:$0xff]
      %v2827 = vld [vmem:[#allocation2 + $0xc3] sm:$0xff]
      %v2828 = vld [vmem:[#allocation2 + $0xcb] sm:$0xff]
      %v2829 = vld [vmem:[#allocation2 + $0xd3] sm:$0xff]
      %v2830 = vld [vmem:[#allocation2 + $0xdb] sm:$0xff]
      %v2831 = vld [vmem:[#allocation2 + $0xe3] sm:$0xff]
      %v2832 = vld [vmem:[#allocation2 + $0x14] sm:$0xff]
      %v2833 = vld [vmem:[#allocation2 + $0x1c] sm:$0xff]
      %v2834 = vld [vmem:[#allocation2 + $0x24] sm:$0xff]
      %v2835 = vld [vmem:[#allocation2 + $0x2c] sm:$0xff]
      %v2836 = vld [vmem:[#allocation2 + $0x34] sm:$0xff]
      %v2837 = vld [vmem:[#allocation2 + $0x3c] sm:$0xff]
      %v2838 = vld [vmem:[#allocation2 + $0x44] sm:$0xff]
      %v2839 = vld [vmem:[#allocation2 + $0x4c] sm:$0xff]
      %v2840 = vld [vmem:[#allocation2 + $0x54] sm:$0xff]
      %v2841 = vld [vmem:[#allocation2 + $0x5c] sm:$0xff]
      %v2842 = vld [vmem:[#allocation2 + $0x64] sm:$0xff]
      %v2843 = vld [vmem:[#allocation2 + $0x6c] sm:$0xff]
      %v2844 = vld [vmem:[#allocation2 + $0x74] sm:$0xff]
      %v2845 = vld [vmem:[#allocation2 + $0x7c] sm:$0xff]
      %v2846 = vld [vmem:[#allocation2 + $0x84] sm:$0xff]
      %v2847 = vld [vmem:[#allocation2 + $0x8c] sm:$0xff]
      %v2848 = vld [vmem:[#allocation2 + $0x94] sm:$0xff]
      %v2849 = vld [vmem:[#allocation2 + $0x9c] sm:$0xff]
      %v2850 = vld [vmem:[#allocation2 + $0xa4] sm:$0xff]
      %v2851 = vld [vmem:[#allocation2 + $0xac] sm:$0xff]
      %v2852 = vld [vmem:[#allocation2 + $0xb4] sm:$0xff]
      %v2853 = vld [vmem:[#allocation2 + $0xbc] sm:$0xff]
      %v2854 = vld [vmem:[#allocation2 + $0xc4] sm:$0xff]
      %v2855 = vld [vmem:[#allocation2 + $0xcc] sm:$0xff]
      %v2856 = vld [vmem:[#allocation2 + $0xd4] sm:$0xff]
      %v2857 = vld [vmem:[#allocation2 + $0xdc] sm:$0xff]
      %v2858 = vld [vmem:[#allocation2 + $0xe4] sm:$0xff]
      %v2859 = vld [vmem:[#allocation2 + $0xec] sm:$0xff]
      %v2860 = vld [vmem:[#allocation2 + $0xf4] sm:$0xff]
      %v2861 = vld [vmem:[#allocation2 + $0x25] sm:$0xff]
      %v2862 = vld [vmem:[#allocation2 + $0x2d] sm:$0xff]
      %v2863 = vld [vmem:[#allocation2 + $0x35] sm:$0xff]
      %v2864 = vld [vmem:[#allocation2 + $0x3d] sm:$0xff]
      %v2865 = vld [vmem:[#allocation2 + $0x45] sm:$0xff]
      %v2866 = vld [vmem:[#allocation2 + $0x4d] sm:$0xff]
      %v2867 = vld [vmem:[#allocation2 + $0x55] sm:$0xff]
      %v2868 = vld [vmem:[#allocation2 + $0x5d] sm:$0xff]
      %v2869 = vld [vmem:[#allocation2 + $0x65] sm:$0xff]
      %v2870 = vld [vmem:[#allocation2 + $0x6d] sm:$0xff]
      %v2871 = vld [vmem:[#allocation2 + $0x75] sm:$0xff]
      %v2872 = vld [vmem:[#allocation2 + $0x7d] sm:$0xff]
      %v2873 = vld [vmem:[#allocation2 + $0x85] sm:$0xff]
      %v2874 = vld [vmem:[#allocation2 + $0x8d] sm:$0xff]
      %v2875 = vld [vmem:[#allocation2 + $0x95] sm:$0xff]
      %v2876 = vld [vmem:[#allocation2 + $0x9d] sm:$0xff]
      %v2877 = vld [vmem:[#allocation2 + $0xa5] sm:$0xff]
      %v2878 = vld [vmem:[#allocation2 + $0xad] sm:$0xff]
      %v2879 = vld [vmem:[#allocation2 + $0xb5] sm:$0xff]
      %v2880 = vld [vmem:[#allocation2 + $0xbd] sm:$0xff]
      %v2881 = vld [vmem:[#allocation2 + $0xc5] sm:$0xff]
      %v2882 = vld [vmem:[#allocation2 + $0xcd] sm:$0xff]
      %v2883 = vld [vmem:[#allocation2 + $0xd5] sm:$0xff]
      %v2884 = vld [vmem:[#allocation2 + $0xdd] sm:$0xff]
      %v2885 = vld [vmem:[#allocation2 + $0xe5] sm:$0xff]
      %v2886 = vld [vmem:[#allocation2 + $0xed] sm:$0xff]
      %v2887 = vld [vmem:[#allocation2 + $0xf5] sm:$0xff]
      %v2888 = vld [vmem:[#allocation2 + $0x26] sm:$0xff]
      %v2889 = vld [vmem:[#allocation2 + $0x2e] sm:$0xff]
      %v2890 = vld [vmem:[#allocation2 + $0x36] sm:$0xff]
      %v2891 = vld [vmem:[#allocation2 + $0x3e] sm:$0xff]
      %v2892 = vld [vmem:[#allocation2 + $0x46] sm:$0xff]
      %v2893 = vld [vmem:[#allocation2 + $0x4e] sm:$0xff]
      %v2894 = vld [vmem:[#allocation2 + $0x56] sm:$0xff]
      %v2895 = vld [vmem:[#allocation2 + $0x5e] sm:$0xff]
      %v2896 = vld [vmem:[#allocation2 + $0x66] sm:$0xff]
      %v2897 = vld [vmem:[#allocation2 + $0x6e] sm:$0xff]
      %v2898 = vld [vmem:[#allocation2 + $0x76] sm:$0xff]
      %v2899 = vld [vmem:[#allocation2 + $0x7e] sm:$0xff]
      %v2900 = vld [vmem:[#allocation2 + $0x86] sm:$0xff]
      %v2901 = vld [vmem:[#allocation2 + $0x8e] sm:$0xff]
      %v2902 = vld [vmem:[#allocation2 + $0x96] sm:$0xff]
      %v2903 = vld [vmem:[#allocation2 + $0x9e] sm:$0xff]
      %v2904 = vld [vmem:[#allocation2 + $0xa6] sm:$0xff]
      %v2905 = vld [vmem:[#allocation2 + $0xae] sm:$0xff]
      %v2906 = vld [vmem:[#allocation2 + $0xb6] sm:$0xff]
      %v2907 = vld [vmem:[#allocation2 + $0xbe] sm:$0xff]
      %v2908 = vld [vmem:[#allocation2 + $0xc6] sm:$0xff]
      %v2909 = vld [vmem:[#allocation2 + $0xce] sm:$0xff]
      %v2910 = vld [vmem:[#allocation2 + $0xd6] sm:$0xff]
      %v2911 = vld [vmem:[#allocation2 + $0xde] sm:$0xff]
      %v2912 = vld [vmem:[#allocation2 + $0xe6] sm:$0xff]
      %v2913 = vld [vmem:[#allocation2 + $0xee] sm:$0xff]
      %v2914 = vld [vmem:[#allocation2 + $0xf6] sm:$0xff]
      %2942 = vrot.lane.b32.xlu0 %v2749, 32
      %v2943 = vpop.permute.xlu0 %2942
      %2944 = vrot.lane.b32.xlu0 %v2750, 32
      %v2945 = vpop.permute.xlu0 %2944
      %2946 = vrot.lane.b32.xlu0 %v2751, 32
      %v2947 = vpop.permute.xlu0 %2946
      %2948 = vrot.lane.b32.xlu0 %v2752, 32
      %v2949 = vpop.permute.xlu0 %2948
      %2950 = vrot.lane.b32.xlu0 %v2753, 32
      %v2951 = vpop.permute.xlu0 %2950
      %2952 = vrot.lane.b32.xlu0 %v2754, 32
      %v2953 = vpop.permute.xlu0 %2952
      %2954 = vrot.lane.b32.xlu0 %v2755, 32
      %v2955 = vpop.permute.xlu0 %2954
      %2956 = vrot.lane.b32.xlu0 %v2756, 32
      %v2957 = vpop.permute.xlu0 %2956
      %2958 = vrot.lane.b32.xlu0 %v2757, 32
      %v2959 = vpop.permute.xlu0 %2958
      %2960 = vrot.lane.b32.xlu0 %v2758, 32
      %v2961 = vpop.permute.xlu0 %2960
      %2962 = vrot.lane.b32.xlu0 %v2759, 32
      %v2963 = vpop.permute.xlu0 %2962
      %2964 = vrot.lane.b32.xlu0 %v2760, 32
      %v2965 = vpop.permute.xlu0 %2964
      %2966 = vrot.lane.b32.xlu0 %v2761, 32
      %v2967 = vpop.permute.xlu0 %2966
      %2968 = vrot.lane.b32.xlu0 %v2762, 32
      %v2969 = vpop.permute.xlu0 %2968
      %2970 = vrot.lane.b32.xlu0 %v2763, 32
      %v2971 = vpop.permute.xlu0 %2970
      %2972 = vrot.lane.b32.xlu0 %v2764, 32
      %v2973 = vpop.permute.xlu0 %2972
      %2974 = vrot.lane.b32.xlu0 %v2765, 32
      %v2975 = vpop.permute.xlu0 %2974
      %2976 = vrot.lane.b32.xlu0 %v2766, 32
      %v2977 = vpop.permute.xlu0 %2976
      %2978 = vrot.lane.b32.xlu0 %v2767, 32
      %v2979 = vpop.permute.xlu0 %2978
      %2980 = vrot.lane.b32.xlu0 %v2768, 32
      %v2981 = vpop.permute.xlu0 %2980
      %2982 = vrot.lane.b32.xlu0 %v2769, 32
      %v2983 = vpop.permute.xlu0 %2982
      %2984 = vrot.lane.b32.xlu0 %v2770, 32
      %v2985 = vpop.permute.xlu0 %2984
      %2986 = vrot.lane.b32.xlu0 %v2771, 32
      %v2987 = vpop.permute.xlu0 %2986
      %2988 = vrot.lane.b32.xlu0 %v2772, 32
      %v2989 = vpop.permute.xlu0 %2988
      %2990 = vrot.lane.b32.xlu0 %v2773, 32
      %v2991 = vpop.permute.xlu0 %2990
      %2992 = vrot.lane.b32.xlu0 %v2774, 32
      %v2993 = vpop.permute.xlu0 %2992
      %2994 = vrot.lane.b32.xlu0 %v2775, 32
      %v2995 = vpop.permute.xlu0 %2994
      %3050 = vrot.lane.b32.xlu0 %v2776, 64
      %v3051 = vpop.permute.xlu0 %3050
      %3052 = vrot.lane.b32.xlu0 %v2777, 64
      %v3053 = vpop.permute.xlu0 %3052
      %3054 = vrot.lane.b32.xlu0 %v2778, 64
      %v3055 = vpop.permute.xlu0 %3054
      %3056 = vrot.lane.b32.xlu0 %v2779, 64
      %v3057 = vpop.permute.xlu0 %3056
      %3058 = vrot.lane.b32.xlu0 %v2780, 64
      %v3059 = vpop.permute.xlu0 %3058
      %3060 = vrot.lane.b32.xlu0 %v2781, 64
      %v3061 = vpop.permute.xlu0 %3060
      %3062 = vrot.lane.b32.xlu0 %v2782, 64
      %v3063 = vpop.permute.xlu0 %3062
      %3064 = vrot.lane.b32.xlu0 %v2783, 64
      %v3065 = vpop.permute.xlu0 %3064
      %3066 = vrot.lane.b32.xlu0 %v2784, 64
      %v3067 = vpop.permute.xlu0 %3066
      %3068 = vrot.lane.b32.xlu0 %v2785, 64
      %v3069 = vpop.permute.xlu0 %3068
      %3070 = vrot.lane.b32.xlu0 %v2786, 64
      %v3071 = vpop.permute.xlu0 %3070
      %3072 = vrot.lane.b32.xlu0 %v2787, 64
      %v3073 = vpop.permute.xlu0 %3072
      %3074 = vrot.lane.b32.xlu0 %v2788, 64
      %v3075 = vpop.permute.xlu0 %3074
      %3076 = vrot.lane.b32.xlu0 %v2789, 64
      %v3077 = vpop.permute.xlu0 %3076
      %3078 = vrot.lane.b32.xlu0 %v2790, 64
      %v3079 = vpop.permute.xlu0 %3078
      %3080 = vrot.lane.b32.xlu0 %v2791, 64
      %v3081 = vpop.permute.xlu0 %3080
      %3082 = vrot.lane.b32.xlu0 %v2792, 64
      %v3083 = vpop.permute.xlu0 %3082
      %3084 = vrot.lane.b32.xlu0 %v2793, 64
      %v3085 = vpop.permute.xlu0 %3084
      %3086 = vrot.lane.b32.xlu0 %v2794, 64
      %v3087 = vpop.permute.xlu0 %3086
      %3088 = vrot.lane.b32.xlu0 %v2795, 64
      %v3089 = vpop.permute.xlu0 %3088
      %3090 = vrot.lane.b32.xlu0 %v2796, 64
      %v3091 = vpop.permute.xlu0 %3090
      %3092 = vrot.lane.b32.xlu0 %v2797, 64
      %v3093 = vpop.permute.xlu0 %3092
      %3094 = vrot.lane.b32.xlu0 %v2798, 64
      %v3095 = vpop.permute.xlu0 %3094
      %3096 = vrot.lane.b32.xlu0 %v2799, 64
      %v3097 = vpop.permute.xlu0 %3096
      %3098 = vrot.lane.b32.xlu0 %v2800, 64
      %v3099 = vpop.permute.xlu0 %3098
      %3100 = vrot.lane.b32.xlu0 %v2801, 64
      %v3101 = vpop.permute.xlu0 %3100
      %3102 = vrot.lane.b32.xlu0 %v2802, 64
      %v3103 = vpop.permute.xlu0 %3102
      %3133 = vrot.lane.b32.xlu0 %v2778, 96
      %v3134 = vpop.permute.xlu0 %3133
      %3135 = vrot.lane.b32.xlu0 %v2779, 96
      %v3136 = vpop.permute.xlu0 %3135
      %3137 = vrot.lane.b32.xlu0 %v2780, 96
      %v3138 = vpop.permute.xlu0 %3137
      %3139 = vrot.lane.b32.xlu0 %v2781, 96
      %v3140 = vpop.permute.xlu0 %3139
      %3141 = vrot.lane.b32.xlu0 %v2782, 96
      %v3142 = vpop.permute.xlu0 %3141
      %3143 = vrot.lane.b32.xlu0 %v2783, 96
      %v3144 = vpop.permute.xlu0 %3143
      %3145 = vrot.lane.b32.xlu0 %v2784, 96
      %v3146 = vpop.permute.xlu0 %3145
      %3147 = vrot.lane.b32.xlu0 %v2785, 96
      %v3148 = vpop.permute.xlu0 %3147
      %3149 = vrot.lane.b32.xlu0 %v2786, 96
      %v3150 = vpop.permute.xlu0 %3149
      %3151 = vrot.lane.b32.xlu0 %v2787, 96
      %v3152 = vpop.permute.xlu0 %3151
      %3153 = vrot.lane.b32.xlu0 %v2788, 96
      %v3154 = vpop.permute.xlu0 %3153
      %3155 = vrot.lane.b32.xlu0 %v2789, 96
      %v3156 = vpop.permute.xlu0 %3155
      %3157 = vrot.lane.b32.xlu0 %v2790, 96
      %v3158 = vpop.permute.xlu0 %3157
      %3159 = vrot.lane.b32.xlu0 %v2791, 96
      %v3160 = vpop.permute.xlu0 %3159
      %3161 = vrot.lane.b32.xlu0 %v2792, 96
      %v3162 = vpop.permute.xlu0 %3161
      %3163 = vrot.lane.b32.xlu0 %v2793, 96
      %v3164 = vpop.permute.xlu0 %3163
      %3165 = vrot.lane.b32.xlu0 %v2794, 96
      %v3166 = vpop.permute.xlu0 %3165
      %3167 = vrot.lane.b32.xlu0 %v2795, 96
      %v3168 = vpop.permute.xlu0 %3167
      %3169 = vrot.lane.b32.xlu0 %v2796, 96
      %v3170 = vpop.permute.xlu0 %3169
      %3171 = vrot.lane.b32.xlu0 %v2797, 96
      %v3172 = vpop.permute.xlu0 %3171
      %3173 = vrot.lane.b32.xlu0 %v2798, 96
      %v3174 = vpop.permute.xlu0 %3173
      %3175 = vrot.lane.b32.xlu0 %v2799, 96
      %v3176 = vpop.permute.xlu0 %3175
      %3177 = vrot.lane.b32.xlu0 %v2800, 96
      %v3178 = vpop.permute.xlu0 %3177
      %3179 = vrot.lane.b32.xlu0 %v2801, 96
      %v3180 = vpop.permute.xlu0 %3179
      %3181 = vrot.lane.b32.xlu0 %v2802, 96
      %v3182 = vpop.permute.xlu0 %3181
      %3183 = vrot.lane.b32.xlu0 %v2803, 96
      %v3184 = vpop.permute.xlu0 %3183
      %3185 = vrot.lane.b32.xlu0 %v2804, 96
      %v3186 = vpop.permute.xlu0 %3185
      %3241 = vrot.lane.b32.xlu0 %v2832, 32
      %v3242 = vpop.permute.xlu0 %3241
      %3243 = vrot.lane.b32.xlu0 %v2833, 32
      %v3244 = vpop.permute.xlu0 %3243
      %3245 = vrot.lane.b32.xlu0 %v2834, 32
      %v3246 = vpop.permute.xlu0 %3245
      %3247 = vrot.lane.b32.xlu0 %v2835, 32
      %v3248 = vpop.permute.xlu0 %3247
      %3249 = vrot.lane.b32.xlu0 %v2836, 32
      %v3250 = vpop.permute.xlu0 %3249
      %3251 = vrot.lane.b32.xlu0 %v2837, 32
      %v3252 = vpop.permute.xlu0 %3251
      %3253 = vrot.lane.b32.xlu0 %v2838, 32
      %v3254 = vpop.permute.xlu0 %3253
      %3255 = vrot.lane.b32.xlu0 %v2839, 32
      %v3256 = vpop.permute.xlu0 %3255
      %3257 = vrot.lane.b32.xlu0 %v2840, 32
      %v3258 = vpop.permute.xlu0 %3257
      %3259 = vrot.lane.b32.xlu0 %v2841, 32
      %v3260 = vpop.permute.xlu0 %3259
      %3261 = vrot.lane.b32.xlu0 %v2842, 32
      %v3262 = vpop.permute.xlu0 %3261
      %3263 = vrot.lane.b32.xlu0 %v2843, 32
      %v3264 = vpop.permute.xlu0 %3263
      %3265 = vrot.lane.b32.xlu0 %v2844, 32
      %v3266 = vpop.permute.xlu0 %3265
      %3267 = vrot.lane.b32.xlu0 %v2845, 32
      %v3268 = vpop.permute.xlu0 %3267
      %3269 = vrot.lane.b32.xlu0 %v2846, 32
      %v3270 = vpop.permute.xlu0 %3269
      %3271 = vrot.lane.b32.xlu0 %v2847, 32
      %v3272 = vpop.permute.xlu0 %3271
      %3273 = vrot.lane.b32.xlu0 %v2848, 32
      %v3274 = vpop.permute.xlu0 %3273
      %3275 = vrot.lane.b32.xlu0 %v2849, 32
      %v3276 = vpop.permute.xlu0 %3275
      %3277 = vrot.lane.b32.xlu0 %v2850, 32
      %v3278 = vpop.permute.xlu0 %3277
      %3279 = vrot.lane.b32.xlu0 %v2851, 32
      %v3280 = vpop.permute.xlu0 %3279
      %3281 = vrot.lane.b32.xlu0 %v2852, 32
      %v3282 = vpop.permute.xlu0 %3281
      %3283 = vrot.lane.b32.xlu0 %v2853, 32
      %v3284 = vpop.permute.xlu0 %3283
      %3285 = vrot.lane.b32.xlu0 %v2854, 32
      %v3286 = vpop.permute.xlu0 %3285
      %3287 = vrot.lane.b32.xlu0 %v2855, 32
      %v3288 = vpop.permute.xlu0 %3287
      %3289 = vrot.lane.b32.xlu0 %v2856, 32
      %v3290 = vpop.permute.xlu0 %3289
      %3291 = vrot.lane.b32.xlu0 %v2857, 32
      %v3292 = vpop.permute.xlu0 %3291
      %3293 = vrot.lane.b32.xlu0 %v2858, 32
      %v3294 = vpop.permute.xlu0 %3293
      %3324 = vrot.lane.b32.xlu0 %v2834, 64
      %v3325 = vpop.permute.xlu0 %3324
      %3326 = vrot.lane.b32.xlu0 %v2835, 64
      %v3327 = vpop.permute.xlu0 %3326
      %3328 = vrot.lane.b32.xlu0 %v2836, 64
      %v3329 = vpop.permute.xlu0 %3328
      %3330 = vrot.lane.b32.xlu0 %v2837, 64
      %v3331 = vpop.permute.xlu0 %3330
      %3332 = vrot.lane.b32.xlu0 %v2838, 64
      %v3333 = vpop.permute.xlu0 %3332
      %3334 = vrot.lane.b32.xlu0 %v2839, 64
      %v3335 = vpop.permute.xlu0 %3334
      %3336 = vrot.lane.b32.xlu0 %v2840, 64
      %v3337 = vpop.permute.xlu0 %3336
      %3338 = vrot.lane.b32.xlu0 %v2841, 64
      %v3339 = vpop.permute.xlu0 %3338
      %3340 = vrot.lane.b32.xlu0 %v2842, 64
      %v3341 = vpop.permute.xlu0 %3340
      %3342 = vrot.lane.b32.xlu0 %v2843, 64
      %v3343 = vpop.permute.xlu0 %3342
      %3344 = vrot.lane.b32.xlu0 %v2844, 64
      %v3345 = vpop.permute.xlu0 %3344
      %3346 = vrot.lane.b32.xlu0 %v2845, 64
      %v3347 = vpop.permute.xlu0 %3346
      %3348 = vrot.lane.b32.xlu0 %v2846, 64
      %v3349 = vpop.permute.xlu0 %3348
      %3350 = vrot.lane.b32.xlu0 %v2847, 64
      %v3351 = vpop.permute.xlu0 %3350
      %3352 = vrot.lane.b32.xlu0 %v2848, 64
      %v3353 = vpop.permute.xlu0 %3352
      %3354 = vrot.lane.b32.xlu0 %v2849, 64
      %v3355 = vpop.permute.xlu0 %3354
      %3356 = vrot.lane.b32.xlu0 %v2850, 64
      %v3357 = vpop.permute.xlu0 %3356
      %3358 = vrot.lane.b32.xlu0 %v2851, 64
      %v3359 = vpop.permute.xlu0 %3358
      %3360 = vrot.lane.b32.xlu0 %v2852, 64
      %v3361 = vpop.permute.xlu0 %3360
      %3362 = vrot.lane.b32.xlu0 %v2853, 64
      %v3363 = vpop.permute.xlu0 %3362
      %3364 = vrot.lane.b32.xlu0 %v2854, 64
      %v3365 = vpop.permute.xlu0 %3364
      %3366 = vrot.lane.b32.xlu0 %v2855, 64
      %v3367 = vpop.permute.xlu0 %3366
      %3368 = vrot.lane.b32.xlu0 %v2856, 64
      %v3369 = vpop.permute.xlu0 %3368
      %3370 = vrot.lane.b32.xlu0 %v2857, 64
      %v3371 = vpop.permute.xlu0 %3370
      %3372 = vrot.lane.b32.xlu0 %v2858, 64
      %v3373 = vpop.permute.xlu0 %3372
      %3374 = vrot.lane.b32.xlu0 %v2859, 64
      %v3375 = vpop.permute.xlu0 %3374
      %3376 = vrot.lane.b32.xlu0 %v2860, 64
      %v3377 = vpop.permute.xlu0 %3376
      %3432 = vrot.lane.b32.xlu0 %v2861, 96
      %v3433 = vpop.permute.xlu0 %3432
      %3434 = vrot.lane.b32.xlu0 %v2862, 96
      %v3435 = vpop.permute.xlu0 %3434
      %3436 = vrot.lane.b32.xlu0 %v2863, 96
      %v3437 = vpop.permute.xlu0 %3436
      %3438 = vrot.lane.b32.xlu0 %v2864, 96
      %v3439 = vpop.permute.xlu0 %3438
      %3440 = vrot.lane.b32.xlu0 %v2865, 96
      %v3441 = vpop.permute.xlu0 %3440
      %3442 = vrot.lane.b32.xlu0 %v2866, 96
      %v3443 = vpop.permute.xlu0 %3442
      %3444 = vrot.lane.b32.xlu0 %v2867, 96
      %v3445 = vpop.permute.xlu0 %3444
      %3446 = vrot.lane.b32.xlu0 %v2868, 96
      %v3447 = vpop.permute.xlu0 %3446
      %3448 = vrot.lane.b32.xlu0 %v2869, 96
      %v3449 = vpop.permute.xlu0 %3448
      %3450 = vrot.lane.b32.xlu0 %v2870, 96
      %v3451 = vpop.permute.xlu0 %3450
      %3452 = vrot.lane.b32.xlu0 %v2871, 96
      %v3453 = vpop.permute.xlu0 %3452
      %3454 = vrot.lane.b32.xlu0 %v2872, 96
      %v3455 = vpop.permute.xlu0 %3454
      %3456 = vrot.lane.b32.xlu0 %v2873, 96
      %v3457 = vpop.permute.xlu0 %3456
      %3458 = vrot.lane.b32.xlu0 %v2874, 96
      %v3459 = vpop.permute.xlu0 %3458
      %3460 = vrot.lane.b32.xlu0 %v2875, 96
      %v3461 = vpop.permute.xlu0 %3460
      %3462 = vrot.lane.b32.xlu0 %v2876, 96
      %v3463 = vpop.permute.xlu0 %3462
      %3464 = vrot.lane.b32.xlu0 %v2877, 96
      %v3465 = vpop.permute.xlu0 %3464
      %3466 = vrot.lane.b32.xlu0 %v2878, 96
      %v3467 = vpop.permute.xlu0 %3466
      %3468 = vrot.lane.b32.xlu0 %v2879, 96
      %v3469 = vpop.permute.xlu0 %3468
      %3470 = vrot.lane.b32.xlu0 %v2880, 96
      %v3471 = vpop.permute.xlu0 %3470
      %3472 = vrot.lane.b32.xlu0 %v2881, 96
      %v3473 = vpop.permute.xlu0 %3472
      %3474 = vrot.lane.b32.xlu0 %v2882, 96
      %v3475 = vpop.permute.xlu0 %3474
      %3476 = vrot.lane.b32.xlu0 %v2883, 96
      %v3477 = vpop.permute.xlu0 %3476
      %3478 = vrot.lane.b32.xlu0 %v2884, 96
      %v3479 = vpop.permute.xlu0 %3478
      %3480 = vrot.lane.b32.xlu0 %v2885, 96
      %v3481 = vpop.permute.xlu0 %3480
      %3482 = vrot.lane.b32.xlu0 %v2886, 96
      %v3483 = vpop.permute.xlu0 %3482
      %3484 = vrot.lane.b32.xlu0 %v2887, 96
      %v3485 = vpop.permute.xlu0 %3484
      %v3513 = vsel %vm1826, %v2722, %v2943
      %v3514 = vsel %vm1826, %v2723, %v2945
      %v3515 = vsel %vm1826, %v2724, %v2947
      %v3516 = vsel %vm1826, %v2725, %v2949
      %v3517 = vsel %vm1826, %v2726, %v2951
      %v3518 = vsel %vm1826, %v2727, %v2953
      %v3519 = vsel %vm1826, %v2728, %v2955
      %v3520 = vsel %vm1826, %v2729, %v2957
      %v3521 = vsel %vm1826, %v2730, %v2959
      %v3522 = vsel %vm1826, %v2731, %v2961
      %v3523 = vsel %vm1826, %v2732, %v2963
      %v3524 = vsel %vm1826, %v2733, %v2965
      %v3525 = vsel %vm1826, %v2734, %v2967
      %v3526 = vsel %vm1826, %v2735, %v2969
      %v3527 = vsel %vm1826, %v2736, %v2971
      %v3528 = vsel %vm1826, %v2737, %v2973
      %v3529 = vsel %vm1826, %v2738, %v2975
      %v3530 = vsel %vm1826, %v2739, %v2977
      %v3531 = vsel %vm1826, %v2740, %v2979
      %v3532 = vsel %vm1826, %v2741, %v2981
      %v3533 = vsel %vm1826, %v2742, %v2983
      %v3534 = vsel %vm1826, %v2743, %v2985
      %v3535 = vsel %vm1826, %v2744, %v2987
      %v3536 = vsel %vm1826, %v2745, %v2989
      %v3537 = vsel %vm1826, %v2746, %v2991
      %v3538 = vsel %vm1826, %v2747, %v2993
      %v3539 = vsel %vm1826, %v2748, %v2995
      %vm3540 = vcmask 523264
      %v3541 = vsel %vm3540, %v3513, %v3051
      %v3542 = vsel %vm3540, %v3514, %v3053
      %v3543 = vsel %vm3540, %v3515, %v3055
      %v3544 = vsel %vm3540, %v3516, %v3057
      %v3545 = vsel %vm3540, %v3517, %v3059
      %v3546 = vsel %vm3540, %v3518, %v3061
      %v3547 = vsel %vm3540, %v3519, %v3063
      %v3548 = vsel %vm3540, %v3520, %v3065
      %v3549 = vsel %vm3540, %v3521, %v3067
      %v3550 = vsel %vm3540, %v3522, %v3069
      %v3551 = vsel %vm3540, %v3523, %v3071
      %v3552 = vsel %vm3540, %v3524, %v3073
      %v3553 = vsel %vm3540, %v3525, %v3075
      %v3554 = vsel %vm3540, %v3526, %v3077
      %v3555 = vsel %vm3540, %v3527, %v3079
      %v3556 = vsel %vm3540, %v3528, %v3081
      %v3557 = vsel %vm3540, %v3529, %v3083
      %v3558 = vsel %vm3540, %v3530, %v3085
      %v3559 = vsel %vm3540, %v3531, %v3087
      %v3560 = vsel %vm3540, %v3532, %v3089
      %v3561 = vsel %vm3540, %v3533, %v3091
      %v3562 = vsel %vm3540, %v3534, %v3093
      %v3563 = vsel %vm3540, %v3535, %v3095
      %v3564 = vsel %vm3540, %v3536, %v3097
      %v3565 = vsel %vm3540, %v3537, %v3099
      %v3566 = vsel %vm3540, %v3538, %v3101
      %v3567 = vsel %vm3540, %v3539, %v3103
      %vm3568 = vcmask 785408
      %v3569 = vsel %vm3568, %v3541, %v3134
      %v3570 = vsel %vm3568, %v3542, %v3136
      %v3571 = vsel %vm3568, %v3543, %v3138
      %v3572 = vsel %vm3568, %v3544, %v3140
      %v3573 = vsel %vm3568, %v3545, %v3142
      %v3574 = vsel %vm3568, %v3546, %v3144
      %v3575 = vsel %vm3568, %v3547, %v3146
      %v3576 = vsel %vm3568, %v3548, %v3148
      %v3577 = vsel %vm3568, %v3549, %v3150
      %v3578 = vsel %vm3568, %v3550, %v3152
      %v3579 = vsel %vm3568, %v3551, %v3154
      %v3580 = vsel %vm3568, %v3552, %v3156
      %v3581 = vsel %vm3568, %v3553, %v3158
      %v3582 = vsel %vm3568, %v3554, %v3160
      %v3583 = vsel %vm3568, %v3555, %v3162
      %v3584 = vsel %vm3568, %v3556, %v3164
      %v3585 = vsel %vm3568, %v3557, %v3166
      %v3586 = vsel %vm3568, %v3558, %v3168
      %v3587 = vsel %vm3568, %v3559, %v3170
      %v3588 = vsel %vm3568, %v3560, %v3172
      %v3589 = vsel %vm3568, %v3561, %v3174
      %v3590 = vsel %vm3568, %v3562, %v3176
      %v3591 = vsel %vm3568, %v3563, %v3178
      %v3592 = vsel %vm3568, %v3564, %v3180
      %v3593 = vsel %vm3568, %v3565, %v3182
      %v3594 = vsel %vm3568, %v3566, %v3184
      %v3595 = vsel %vm3568, %v3567, %v3186
      %v3596 = vsel %vm1826, %v2805, %v3242
      %v3597 = vsel %vm1826, %v2806, %v3244
      %v3598 = vsel %vm1826, %v2807, %v3246
      %v3599 = vsel %vm1826, %v2808, %v3248
      %v3600 = vsel %vm1826, %v2809, %v3250
      %v3601 = vsel %vm1826, %v2810, %v3252
      %v3602 = vsel %vm1826, %v2811, %v3254
      %v3603 = vsel %vm1826, %v2812, %v3256
      %v3604 = vsel %vm1826, %v2813, %v3258
      %v3605 = vsel %vm1826, %v2814, %v3260
      %v3606 = vsel %vm1826, %v2815, %v3262
      %v3607 = vsel %vm1826, %v2816, %v3264
      %v3608 = vsel %vm1826, %v2817, %v3266
      %v3609 = vsel %vm1826, %v2818, %v3268
      %v3610 = vsel %vm1826, %v2819, %v3270
      %v3611 = vsel %vm1826, %v2820, %v3272
      %v3612 = vsel %vm1826, %v2821, %v3274
      %v3613 = vsel %vm1826, %v2822, %v3276
      %v3614 = vsel %vm1826, %v2823, %v3278
      %v3615 = vsel %vm1826, %v2824, %v3280
      %v3616 = vsel %vm1826, %v2825, %v3282
      %v3617 = vsel %vm1826, %v2826, %v3284
      %v3618 = vsel %vm1826, %v2827, %v3286
      %v3619 = vsel %vm1826, %v2828, %v3288
      %v3620 = vsel %vm1826, %v2829, %v3290
      %v3621 = vsel %vm1826, %v2830, %v3292
      %v3622 = vsel %vm1826, %v2831, %v3294
      %v3623 = vsel %vm3540, %v3596, %v3325
      %v3624 = vsel %vm3540, %v3597, %v3327
      %v3625 = vsel %vm3540, %v3598, %v3329
      %v3626 = vsel %vm3540, %v3599, %v3331
      %v3627 = vsel %vm3540, %v3600, %v3333
      %v3628 = vsel %vm3540, %v3601, %v3335
      %v3629 = vsel %vm3540, %v3602, %v3337
      %v3630 = vsel %vm3540, %v3603, %v3339
      %v3631 = vsel %vm3540, %v3604, %v3341
      %v3632 = vsel %vm3540, %v3605, %v3343
      %v3633 = vsel %vm3540, %v3606, %v3345
      %v3634 = vsel %vm3540, %v3607, %v3347
      %v3635 = vsel %vm3540, %v3608, %v3349
      %v3636 = vsel %vm3540, %v3609, %v3351
      %v3637 = vsel %vm3540, %v3610, %v3353
      %v3638 = vsel %vm3540, %v3611, %v3355
      %v3639 = vsel %vm3540, %v3612, %v3357
      %v3640 = vsel %vm3540, %v3613, %v3359
      %v3641 = vsel %vm3540, %v3614, %v3361
      %v3642 = vsel %vm3540, %v3615, %v3363
      %v3643 = vsel %vm3540, %v3616, %v3365
      %v3644 = vsel %vm3540, %v3617, %v3367
      %v3645 = vsel %vm3540, %v3618, %v3369
      %v3646 = vsel %vm3540, %v3619, %v3371
      %v3647 = vsel %vm3540, %v3620, %v3373
      %v3648 = vsel %vm3540, %v3621, %v3375
      %v3649 = vsel %vm3540, %v3622, %v3377
      %v3650 = vsel %vm3568, %v3623, %v3433
      %v3651 = vsel %vm3568, %v3624, %v3435
      %v3652 = vsel %vm3568, %v3625, %v3437
      %v3653 = vsel %vm3568, %v3626, %v3439
      %v3654 = vsel %vm3568, %v3627, %v3441
      %v3655 = vsel %vm3568, %v3628, %v3443
      %v3656 = vsel %vm3568, %v3629, %v3445
      %v3657 = vsel %vm3568, %v3630, %v3447
      %v3658 = vsel %vm3568, %v3631, %v3449
      %v3659 = vsel %vm3568, %v3632, %v3451
      %v3660 = vsel %vm3568, %v3633, %v3453
      %v3661 = vsel %vm3568, %v3634, %v3455
      %v3662 = vsel %vm3568, %v3635, %v3457
      %v3663 = vsel %vm3568, %v3636, %v3459
      %v3664 = vsel %vm3568, %v3637, %v3461
      %v3665 = vsel %vm3568, %v3638, %v3463
      %v3666 = vsel %vm3568, %v3639, %v3465
      %v3667 = vsel %vm3568, %v3640, %v3467
      %v3668 = vsel %vm3568, %v3641, %v3469
      %v3669 = vsel %vm3568, %v3642, %v3471
      %v3670 = vsel %vm3568, %v3643, %v3473
      %v3671 = vsel %vm3568, %v3644, %v3475
      %v3672 = vsel %vm3568, %v3645, %v3477
      %v3673 = vsel %vm3568, %v3646, %v3479
      %v3674 = vsel %vm3568, %v3647, %v3481
      %v3675 = vsel %vm3568, %v3648, %v3483
      %v3676 = vsel %vm3568, %v3649, %v3485
      %v3677 = vld [vmem:[%s4] sm:$0xff]
      %v3678 = vld [vmem:[%s4 + $0x8] sm:$0xff]
      %v3679 = vld [vmem:[%s4 + $0x10] sm:$0xff]
      %v3680 = vld [vmem:[%s4 + $0x18] sm:$0xff]
      %v3681 = vld [vmem:[%s4 + $0x20] sm:$0xff]
      %v3682 = vld [vmem:[%s4 + $0x28] sm:$0xff]
      %v3683 = vld [vmem:[%s4 + $0x30] sm:$0xff]
      %v3684 = vld [vmem:[%s4 + $0x38] sm:$0xff]
      %v3685 = vld [vmem:[%s4 + $0x40] sm:$0xff]
      %v3686 = vld [vmem:[%s4 + $0x48] sm:$0xff]
      %v3687 = vld [vmem:[%s4 + $0x50] sm:$0xff]
      %v3688 = vld [vmem:[%s4 + $0x58] sm:$0xff]
      %v3689 = vld [vmem:[%s4 + $0x60] sm:$0xff]
      %v3690 = vld [vmem:[%s4 + $0x68] sm:$0xff]
      %v3691 = vld [vmem:[%s4 + $0x70] sm:$0xff]
      %v3692 = vld [vmem:[%s4 + $0x78] sm:$0xff]
      %v3693 = vld [vmem:[%s4 + $0x80] sm:$0xff]
      %v3694 = vld [vmem:[%s4 + $0x88] sm:$0xff]
      %v3695 = vld [vmem:[%s4 + $0x90] sm:$0xff]
      %v3696 = vld [vmem:[%s4 + $0x98] sm:$0xff]
      %v3697 = vld [vmem:[%s4 + $0xa0] sm:$0xff]
      %v3698 = vld [vmem:[%s4 + $0xa8] sm:$0xff]
      %v3699 = vld [vmem:[%s4 + $0xb0] sm:$0xff]
      %v3700 = vld [vmem:[%s4 + $0xb8] sm:$0xff]
      %v3701 = vld [vmem:[%s4 + $0xc0] sm:$0xff]
      %v3702 = vld [vmem:[%s4 + $0xc8] sm:$0xff]
      %v3703 = vld [vmem:[%s4 + $0xd0] sm:$0xff]
      %v3704 = vld [vmem:[%s4 + $0xd8] sm:$0xff]
      %v3705 = vld [vmem:[%s4 + $0xe0] sm:$0xff]
      %v3706 = vld [vmem:[%s4 + $0xe8] sm:$0xff]
      %v3707 = vld [vmem:[%s4 + $0xf0] sm:$0xff]
      %v3708 = vld [vmem:[%s4 + $0xf8] sm:$0xff]
      %v3709 = vld [vmem:[%s4 + $0x100] sm:$0xff]
      %v3710 = vld [vmem:[%s4 + $0x108] sm:$0xff]
      %v3711 = vld [vmem:[%s4 + $0x110] sm:$0xff]
      %v3712 = vld [vmem:[%s4 + $0x118] sm:$0xff]
      %v3713 = vld [vmem:[%s5] sm:$0x1]
      %v3715 = vlaneseq
      %v3716 = vshrl.u32 %v3715, 7
      %v3717 = vsub.s32 0, %v3716
      %v3718 = vrot.slane %v3713, %v3717
      %v3721 = vsel %vm1826, %v2888, 0
      %v3724 = vsel %vm1826, %v2889, 0
      %v3727 = vsel %vm1826, %v2890, 0
      %v3730 = vsel %vm1826, %v2891, 0
      %v3733 = vsel %vm1826, %v2892, 0
      %v3736 = vsel %vm1826, %v2893, 0
      %v3739 = vsel %vm1826, %v2894, 0
      %v3742 = vsel %vm1826, %v2895, 0
      %v3745 = vsel %vm1826, %v2896, 0
      %v3748 = vsel %vm1826, %v2897, 0
      %v3751 = vsel %vm1826, %v2898, 0
      %v3754 = vsel %vm1826, %v2899, 0
      %v3757 = vsel %vm1826, %v2900, 0
      %v3760 = vsel %vm1826, %v2901, 0
      %v3763 = vsel %vm1826, %v2902, 0
      %v3766 = vsel %vm1826, %v2903, 0
      %v3769 = vsel %vm1826, %v2904, 0
      %v3772 = vsel %vm1826, %v2905, 0
      %v3775 = vsel %vm1826, %v2906, 0
      %v3778 = vsel %vm1826, %v2907, 0
      %v3781 = vsel %vm1826, %v2908, 0
      %v3784 = vsel %vm1826, %v2909, 0
      %v3787 = vsel %vm1826, %v2910, 0
      %v3790 = vsel %vm1826, %v2911, 0
      %v3793 = vsel %vm1826, %v2912, 0
      %v3796 = vsel %vm1826, %v2913, 0
      %v3799 = vsel %vm1826, %v2914, 0
      %3801 = vmatprep.subr.mxu0 0.0
      %3802 = vmatpush1.msra.mxu0 %v3677
      %3803 = vmatprep.subr.mxu0 0.0
      %3804 = vmatpush1.msra.mxu0 %v3678
      %3805 = vmatprep.subr.mxu0 0.0
      %3806 = vmatpush1.msra.mxu0 %v3679
      %3807 = vmatprep.subr.mxu0 0.0
      %3808 = vmatpush1.msra.mxu0 %v3680
      %3809 = vmatprep.subr.mxu0 0.0
      %3810 = vmatpush1.msra.mxu0 %v3681
      %3811 = vmatprep.subr.mxu0 0.0
      %3812 = vmatpush1.msra.mxu0 %v3682
      %3813 = vmatprep.subr.mxu0 0.0
      %3814 = vmatpush1.msra.mxu0 %v3683
      %3815 = vmatprep.subr.mxu0 0.0
      %3816 = vmatpush1.msra.mxu0 %v3684
      %3817 = vmatprep.subr.mxu0 0.0
      %3818 = vmatpush1.msra.mxu0 %v3685
      %3819 = vmatprep.subr.mxu0 0.0
      %3820 = vmatpush1.msra.mxu0 %v3686
      %3821 = vmatprep.subr.mxu0 0.0
      %3822 = vmatpush1.msra.mxu0 %v3687
      %3823 = vmatprep.subr.mxu0 0.0
      %3824 = vmatpush1.msra.mxu0 %v3688
      %3825 = vmatprep.subr.mxu0 0.0
      %3826 = vmatpush1.msra.mxu0 %v3689
      %3827 = vmatprep.subr.mxu0 0.0
      %3828 = vmatpush1.msra.mxu0 %v3690
      %3829 = vmatprep.subr.mxu0 0.0
      %3830 = vmatpush1.msra.mxu0 %v3691
      %3831 = vmatprep.subr.mxu0 0.0
      %3832 = vmatpush1.msra.mxu0 %v3692
      %3833 = vmatprep.subr.mxu0 0.0
      %3834 = vmatpush1.msra.mxu0 %v3693
      %3835 = vmatprep.subr.mxu0 0.0
      %3836 = vmatpush1.msra.mxu0 %v3694
      %3837 = vmatprep.subr.mxu0 0.0
      %3838 = vmatpush1.msra.mxu0 %v3695
      %3839 = vmatprep.subr.mxu0 0.0
      %3840 = vmatpush1.msra.mxu0 %v3696
      %3841 = vmatprep.subr.mxu0 0.0
      %3842 = vmatpush1.msra.mxu0 %v3697
      %3843 = vmatprep.subr.mxu0 0.0
      %3844 = vmatpush1.msra.mxu0 %v3698
      %3845 = vmatprep.subr.mxu0 0.0
      %3846 = vmatpush1.msra.mxu0 %v3699
      %3847 = vmatprep.subr.mxu0 0.0
      %3848 = vmatpush1.msra.mxu0 %v3700
      %3849 = vmatprep.subr.mxu0 0.0
      %3850 = vmatpush1.msra.mxu0 %v3701
      %3851 = vmatprep.subr.mxu0 0.0
      %3852 = vmatpush1.msra.mxu0 %v3702
      %3853 = vmatprep.subr.mxu0 0.0
      %3854 = vmatpush1.msra.mxu0 %v3703
      %3855 = vmatprep.subr.mxu0 0.0
      %3856 = vmatpush1.msra.mxu0 %v3704
      %3857 = vmatprep.subr.mxu0 0.0
      %3858 = vmatpush1.msra.mxu0 %v3705
      %3859 = vmatprep.subr.mxu0 0.0
      %3860 = vmatpush1.msra.mxu0 %v3706
      %3861 = vmatprep.subr.mxu0 0.0
      %3862 = vmatpush1.msra.mxu0 %v3707
      %3863 = vmatprep.subr.mxu0 0.0
      %3864 = vmatpush1.msra.mxu0 %v3708
      %3865 = vmatprep.mubr.f32.mxu0 %v3650
      %3866 = vmatmul.mubr.f32.gmra.mrb[0].mxu0 %v3569
      %v3867 = vpop.f32.mrb[0].mxu0
      %v3868 = vadd.f32 %v3718, %v3867
      %v3869 = vpop.f32.mrb[0].mxu0
      %3870 = vmatprep.mubr.f32.mxu0 %v3651
      %3871 = vmatmul.mubr.f32.gmra.mrb[0].mxu0 %v3570
      %v3872 = vpop.f32.mrb[0].mxu0
      %v3873 = vadd.f32 %v3718, %v3872
      %v3874 = vpop.f32.mrb[0].mxu0
      %3875 = vmatprep.mubr.f32.mxu0 %v3652
      %3876 = vmatmul.mubr.f32.gmra.mrb[0].mxu0 %v3571
      %v3877 = vpop.f32.mrb[0].mxu0
      %v3878 = vadd.f32 %v3718, %v3877
      %v3879 = vpop.f32.mrb[0].mxu0
      %3880 = vmatprep.mubr.f32.mxu0 %v3653
      %3881 = vmatmul.mubr.f32.gmra.mrb[0].mxu0 %v3572
      %v3882 = vpop.f32.mrb[0].mxu0
      %v3883 = vadd.f32 %v3718, %v3882
      %v3884 = vpop.f32.mrb[0].mxu0
      %3885 = vmatprep.mubr.f32.mxu0 %v3654
      %3886 = vmatmul.mubr.f32.gmra.mrb[0].mxu0 %v3573
      %v3887 = vpop.f32.mrb[0].mxu0
      %v3888 = vadd.f32 %v3718, %v3887
      %v3889 = vpop.f32.mrb[0].mxu0
      %3890 = vmatprep.mubr.f32.mxu0 %v3655
      %3891 = vmatmul.mubr.f32.gmra.mrb[0].mxu0 %v3574
      %v3892 = vpop.f32.mrb[0].mxu0
      %v3893 = vadd.f32 %v3718, %v3892
      %v3894 = vpop.f32.mrb[0].mxu0
      %3895 = vmatprep.mubr.f32.mxu0 %v3656
      %3896 = vmatmul.mubr.f32.gmra.mrb[0].mxu0 %v3575
      %v3897 = vpop.f32.mrb[0].mxu0
      %v3898 = vadd.f32 %v3718, %v3897
      %v3899 = vpop.f32.mrb[0].mxu0
      %3900 = vmatprep.mubr.f32.mxu0 %v3657
      %3901 = vmatmul.mubr.f32.gmra.mrb[0].mxu0 %v3576
      %v3902 = vpop.f32.mrb[0].mxu0
      %v3903 = vadd.f32 %v3718, %v3902
      %v3904 = vpop.f32.mrb[0].mxu0
      %3905 = vmatprep.mubr.f32.mxu0 %v3658
      %3906 = vmatmul.mubr.f32.gmra.mrb[0].mxu0 %v3577
      %v3907 = vpop.f32.mrb[0].mxu0
      %v3908 = vadd.f32 %v3718, %v3907
      %v3909 = vpop.f32.mrb[0].mxu0
      %3910 = vmatprep.mubr.f32.mxu0 %v3659
      %3911 = vmatmul.mubr.f32.gmra.mrb[0].mxu0 %v3578
      %v3912 = vpop.f32.mrb[0].mxu0
      %v3913 = vadd.f32 %v3718, %v3912
      %v3914 = vpop.f32.mrb[0].mxu0
      %3915 = vmatprep.mubr.f32.mxu0 %v3660
      %3916 = vmatmul.mubr.f32.gmra.mrb[0].mxu0 %v3579
      %v3917 = vpop.f32.mrb[0].mxu0
      %v3918 = vadd.f32 %v3718, %v3917
      %v3919 = vpop.f32.mrb[0].mxu0
      %3920 = vmatprep.mubr.f32.mxu0 %v3661
      %3921 = vmatmul.mubr.f32.gmra.mrb[0].mxu0 %v3580
      %v3922 = vpop.f32.mrb[0].mxu0
      %v3923 = vadd.f32 %v3718, %v3922
      %v3924 = vpop.f32.mrb[0].mxu0
      %3925 = vmatprep.mubr.f32.mxu0 %v3662
      %3926 = vmatmul.mubr.f32.gmra.mrb[0].mxu0 %v3581
      %v3927 = vpop.f32.mrb[0].mxu0
      %v3928 = vadd.f32 %v3718, %v3927
      %v3929 = vpop.f32.mrb[0].mxu0
      %3930 = vmatprep.mubr.f32.mxu0 %v3663
      %3931 = vmatmul.mubr.f32.gmra.mrb[0].mxu0 %v3582
      %v3932 = vpop.f32.mrb[0].mxu0
      %v3933 = vadd.f32 %v3718, %v3932
      %v3934 = vpop.f32.mrb[0].mxu0
      %3935 = vmatprep.mubr.f32.mxu0 %v3664
      %3936 = vmatmul.mubr.f32.gmra.mrb[0].mxu0 %v3583
      %v3937 = vpop.f32.mrb[0].mxu0
      %v3938 = vadd.f32 %v3718, %v3937
      %v3939 = vpop.f32.mrb[0].mxu0
      %3940 = vmatprep.mubr.f32.mxu0 %v3665
      %3941 = vmatmul.mubr.f32.gmra.mrb[0].mxu0 %v3584
      %v3942 = vpop.f32.mrb[0].mxu0
      %v3943 = vadd.f32 %v3718, %v3942
      %v3944 = vpop.f32.mrb[0].mxu0
      %3945 = vmatprep.mubr.f32.mxu0 %v3666
      %3946 = vmatmul.mubr.f32.gmra.mrb[0].mxu0 %v3585
      %v3947 = vpop.f32.mrb[0].mxu0
      %v3948 = vadd.f32 %v3718, %v3947
      %v3949 = vpop.f32.mrb[0].mxu0
      %3950 = vmatprep.mubr.f32.mxu0 %v3667
      %3951 = vmatmul.mubr.f32.gmra.mrb[0].mxu0 %v3586
      %v3952 = vpop.f32.mrb[0].mxu0
      %v3953 = vadd.f32 %v3718, %v3952
      %v3954 = vpop.f32.mrb[0].mxu0
      %3955 = vmatprep.mubr.f32.mxu0 %v3668
      %3956 = vmatmul.mubr.f32.gmra.mrb[0].mxu0 %v3587
      %v3957 = vpop.f32.mrb[0].mxu0
      %v3958 = vadd.f32 %v3718, %v3957
      %v3959 = vpop.f32.mrb[0].mxu0
      %3960 = vmatprep.mubr.f32.mxu0 %v3669
      %3961 = vmatmul.mubr.f32.gmra.mrb[0].mxu0 %v3588
      %v3962 = vpop.f32.mrb[0].mxu0
      %v3963 = vadd.f32 %v3718, %v3962
      %v3964 = vpop.f32.mrb[0].mxu0
      %3965 = vmatprep.mubr.f32.mxu0 %v3670
      %3966 = vmatmul.mubr.f32.gmra.mrb[0].mxu0 %v3589
      %v3967 = vpop.f32.mrb[0].mxu0
      %v3968 = vadd.f32 %v3718, %v3967
      %v3969 = vpop.f32.mrb[0].mxu0
      %3970 = vmatprep.mubr.f32.mxu0 %v3671
      %3971 = vmatmul.mubr.f32.gmra.mrb[0].mxu0 %v3590
      %v3972 = vpop.f32.mrb[0].mxu0
      %v3973 = vadd.f32 %v3718, %v3972
      %v3974 = vpop.f32.mrb[0].mxu0
      %3975 = vmatprep.mubr.f32.mxu0 %v3672
      %3976 = vmatmul.mubr.f32.gmra.mrb[0].mxu0 %v3591
      %v3977 = vpop.f32.mrb[0].mxu0
      %v3978 = vadd.f32 %v3718, %v3977
      %v3979 = vpop.f32.mrb[0].mxu0
      %3980 = vmatprep.mubr.f32.mxu0 %v3673
      %3981 = vmatmul.mubr.f32.gmra.mrb[0].mxu0 %v3592
      %v3982 = vpop.f32.mrb[0].mxu0
      %v3983 = vadd.f32 %v3718, %v3982
      %v3984 = vpop.f32.mrb[0].mxu0
      %3985 = vmatprep.mubr.f32.mxu0 %v3674
      %3986 = vmatmul.mubr.f32.gmra.mrb[0].mxu0 %v3593
      %v3987 = vpop.f32.mrb[0].mxu0
      %v3988 = vadd.f32 %v3718, %v3987
      %v3989 = vpop.f32.mrb[0].mxu0
      %3990 = vmatprep.mubr.f32.mxu0 %v3675
      %3991 = vmatmul.mubr.f32.gmra.mrb[0].mxu0 %v3594
      %v3992 = vpop.f32.mrb[0].mxu0
      %v3993 = vadd.f32 %v3718, %v3992
      %v3994 = vpop.f32.mrb[0].mxu0
      %3995 = vmatprep.mubr.f32.mxu0 %v3676
      %3996 = vmatmul.mubr.f32.gmra.mrb[0].mxu0 %v3595
      %v3997 = vpop.f32.mrb[0].mxu0
      %v3998 = vadd.f32 %v3718, %v3997
      %v3999 = vpop.f32.mrb[0].mxu0
      %4000 = vdwg.mxu0
      %4001 = vmatprep.subr.mxu0 0.0
      %4002 = vmatpush1.msra.mxu0 %v3709
      %4003 = vmatprep.subr.mxu0 0.0
      %4004 = vmatpush1.msra.mxu0 %v3710
      %4005 = vmatprep.subr.mxu0 0.0
      %4006 = vmatpush1.msra.mxu0 %v3711
      %4007 = vmatprep.subr.mxu0 0.0
      %4008 = vmatpush1.msra.mxu0 %v3712
      %4009 = vmatprep.subr.mxu0 0.0
      %4010 = vmatpush1.msra.mxu0 0.0
      %4011 = vmatprep.subr.mxu0 0.0
      %4012 = vmatpush1.msra.mxu0 0.0
      %4013 = vmatprep.subr.mxu0 0.0
      %4014 = vmatpush1.msra.mxu0 0.0
      %4015 = vmatprep.subr.mxu0 0.0
      %4016 = vmatpush1.msra.mxu0 0.0
      %4017 = vmatprep.subr.mxu0 0.0
      %4018 = vmatpush1.msra.mxu0 0.0
      %4019 = vmatprep.subr.mxu0 0.0
      %4020 = vmatpush1.msra.mxu0 0.0
      %4021 = vmatprep.subr.mxu0 0.0
      %4022 = vmatpush1.msra.mxu0 0.0
      %4023 = vmatprep.subr.mxu0 0.0
      %4024 = vmatpush1.msra.mxu0 0.0
      %4025 = vmatprep.subr.mxu0 0.0
      %4026 = vmatpush1.msra.mxu0 0.0
      %4027 = vmatprep.subr.mxu0 0.0
      %4028 = vmatpush1.msra.mxu0 0.0
      %4029 = vmatprep.subr.mxu0 0.0
      %4030 = vmatpush1.msra.mxu0 0.0
      %4031 = vmatprep.subr.mxu0 0.0
      %4032 = vmatpush1.msra.mxu0 0.0
      %4033 = vmatprep.subr.mxu0 0.0
      %4034 = vmatpush1.msra.mxu0 0.0
      %4035 = vmatprep.subr.mxu0 0.0
      %4036 = vmatpush1.msra.mxu0 0.0
      %4037 = vmatprep.subr.mxu0 0.0
      %4038 = vmatpush1.msra.mxu0 0.0
      %4039 = vmatprep.subr.mxu0 0.0
      %4040 = vmatpush1.msra.mxu0 0.0
      %4041 = vmatprep.subr.mxu0 0.0
      %4042 = vmatpush1.msra.mxu0 0.0
      %4043 = vmatprep.subr.mxu0 0.0
      %4044 = vmatpush1.msra.mxu0 0.0
      %4045 = vmatprep.subr.mxu0 0.0
      %4046 = vmatpush1.msra.mxu0 0.0
      %4047 = vmatprep.subr.mxu0 0.0
      %4048 = vmatpush1.msra.mxu0 0.0
      %4049 = vmatprep.subr.mxu0 0.0
      %4050 = vmatpush1.msra.mxu0 0.0
      %4051 = vmatprep.subr.mxu0 0.0
      %4052 = vmatpush1.msra.mxu0 0.0
      %4053 = vmatprep.subr.mxu0 0.0
      %4054 = vmatpush1.msra.mxu0 0.0
      %4055 = vmatprep.subr.mxu0 0.0
      %4056 = vmatpush1.msra.mxu0 0.0
      %4057 = vmatprep.subr.mxu0 0.0
      %4058 = vmatpush1.msra.mxu0 0.0
      %4059 = vmatprep.subr.mxu0 0.0
      %4060 = vmatpush1.msra.mxu0 0.0
      %4061 = vmatprep.subr.mxu0 0.0
      %4062 = vmatpush1.msra.mxu0 0.0
      %4063 = vmatprep.subr.mxu0 0.0
      %4064 = vmatpush1.msra.mxu0 0.0
      %4065 = vmatprep.mubr.f32.mxu0 0.0
      %4066 = vmatmul.mubr.f32.gmra.mrb[0].mxu0 %v3721
      %v4067 = vpop.f32.mrb[0].mxu0
      %v4068 = vadd.f32 %v3868, %v4067
      %v4069 = vpop.f32.mrb[0].mxu0
      %4070 = vmatprep.mubr.f32.mxu0 0.0
      %4071 = vmatmul.mubr.f32.gmra.mrb[0].mxu0 %v3724
      %v4072 = vpop.f32.mrb[0].mxu0
      %v4073 = vadd.f32 %v3873, %v4072
      %v4074 = vpop.f32.mrb[0].mxu0
      %4075 = vmatprep.mubr.f32.mxu0 0.0
      %4076 = vmatmul.mubr.f32.gmra.mrb[0].mxu0 %v3727
      %v4077 = vpop.f32.mrb[0].mxu0
      %v4078 = vadd.f32 %v3878, %v4077
      %v4079 = vpop.f32.mrb[0].mxu0
      %4080 = vmatprep.mubr.f32.mxu0 0.0
      %4081 = vmatmul.mubr.f32.gmra.mrb[0].mxu0 %v3730
      %v4082 = vpop.f32.mrb[0].mxu0
      %v4083 = vadd.f32 %v3883, %v4082
      %v4084 = vpop.f32.mrb[0].mxu0
      %4085 = vmatprep.mubr.f32.mxu0 0.0
      %4086 = vmatmul.mubr.f32.gmra.mrb[0].mxu0 %v3733
      %v4087 = vpop.f32.mrb[0].mxu0
      %v4088 = vadd.f32 %v3888, %v4087
      %v4089 = vpop.f32.mrb[0].mxu0
      %4090 = vmatprep.mubr.f32.mxu0 0.0
      %4091 = vmatmul.mubr.f32.gmra.mrb[0].mxu0 %v3736
      %v4092 = vpop.f32.mrb[0].mxu0
      %v4093 = vadd.f32 %v3893, %v4092
      %v4094 = vpop.f32.mrb[0].mxu0
      %4095 = vmatprep.mubr.f32.mxu0 0.0
      %4096 = vmatmul.mubr.f32.gmra.mrb[0].mxu0 %v3739
      %v4097 = vpop.f32.mrb[0].mxu0
      %v4098 = vadd.f32 %v3898, %v4097
      %v4099 = vpop.f32.mrb[0].mxu0
      %4100 = vmatprep.mubr.f32.mxu0 0.0
      %4101 = vmatmul.mubr.f32.gmra.mrb[0].mxu0 %v3742
      %v4102 = vpop.f32.mrb[0].mxu0
      %v4103 = vadd.f32 %v3903, %v4102
      %v4104 = vpop.f32.mrb[0].mxu0
      %4105 = vmatprep.mubr.f32.mxu0 0.0
      %4106 = vmatmul.mubr.f32.gmra.mrb[0].mxu0 %v3745
      %v4107 = vpop.f32.mrb[0].mxu0
      %v4108 = vadd.f32 %v3908, %v4107
      %v4109 = vpop.f32.mrb[0].mxu0
      %4110 = vmatprep.mubr.f32.mxu0 0.0
      %4111 = vmatmul.mubr.f32.gmra.mrb[0].mxu0 %v3748
      %v4112 = vpop.f32.mrb[0].mxu0
      %v4113 = vadd.f32 %v3913, %v4112
      %v4114 = vpop.f32.mrb[0].mxu0
      %4115 = vmatprep.mubr.f32.mxu0 0.0
      %4116 = vmatmul.mubr.f32.gmra.mrb[0].mxu0 %v3751
      %v4117 = vpop.f32.mrb[0].mxu0
      %v4118 = vadd.f32 %v3918, %v4117
      %v4119 = vpop.f32.mrb[0].mxu0
      %4120 = vmatprep.mubr.f32.mxu0 0.0
      %4121 = vmatmul.mubr.f32.gmra.mrb[0].mxu0 %v3754
      %v4122 = vpop.f32.mrb[0].mxu0
      %v4123 = vadd.f32 %v3923, %v4122
      %v4124 = vpop.f32.mrb[0].mxu0
      %4125 = vmatprep.mubr.f32.mxu0 0.0
      %4126 = vmatmul.mubr.f32.gmra.mrb[0].mxu0 %v3757
      %v4127 = vpop.f32.mrb[0].mxu0
      %v4128 = vadd.f32 %v3928, %v4127
      %v4129 = vpop.f32.mrb[0].mxu0
      %4130 = vmatprep.mubr.f32.mxu0 0.0
      %4131 = vmatmul.mubr.f32.gmra.mrb[0].mxu0 %v3760
      %v4132 = vpop.f32.mrb[0].mxu0
      %v4133 = vadd.f32 %v3933, %v4132
      %v4134 = vpop.f32.mrb[0].mxu0
      %4135 = vmatprep.mubr.f32.mxu0 0.0
      %4136 = vmatmul.mubr.f32.gmra.mrb[0].mxu0 %v3763
      %v4137 = vpop.f32.mrb[0].mxu0
      %v4138 = vadd.f32 %v3938, %v4137
      %v4139 = vpop.f32.mrb[0].mxu0
      %4140 = vmatprep.mubr.f32.mxu0 0.0
      %4141 = vmatmul.mubr.f32.gmra.mrb[0].mxu0 %v3766
      %v4142 = vpop.f32.mrb[0].mxu0
      %v4143 = vadd.f32 %v3943, %v4142
      %v4144 = vpop.f32.mrb[0].mxu0
      %4145 = vmatprep.mubr.f32.mxu0 0.0
      %4146 = vmatmul.mubr.f32.gmra.mrb[0].mxu0 %v3769
      %v4147 = vpop.f32.mrb[0].mxu0
      %v4148 = vadd.f32 %v3948, %v4147
      %v4149 = vpop.f32.mrb[0].mxu0
      %4150 = vmatprep.mubr.f32.mxu0 0.0
      %4151 = vmatmul.mubr.f32.gmra.mrb[0].mxu0 %v3772
      %v4152 = vpop.f32.mrb[0].mxu0
      %v4153 = vadd.f32 %v3953, %v4152
      %v4154 = vpop.f32.mrb[0].mxu0
      %4155 = vmatprep.mubr.f32.mxu0 0.0
      %4156 = vmatmul.mubr.f32.gmra.mrb[0].mxu0 %v3775
      %v4157 = vpop.f32.mrb[0].mxu0
      %v4158 = vadd.f32 %v3958, %v4157
      %v4159 = vpop.f32.mrb[0].mxu0
      %4160 = vmatprep.mubr.f32.mxu0 0.0
      %4161 = vmatmul.mubr.f32.gmra.mrb[0].mxu0 %v3778
      %v4162 = vpop.f32.mrb[0].mxu0
      %v4163 = vadd.f32 %v3963, %v4162
      %v4164 = vpop.f32.mrb[0].mxu0
      %4165 = vmatprep.mubr.f32.mxu0 0.0
      %4166 = vmatmul.mubr.f32.gmra.mrb[0].mxu0 %v3781
      %v4167 = vpop.f32.mrb[0].mxu0
      %v4168 = vadd.f32 %v3968, %v4167
      %v4169 = vpop.f32.mrb[0].mxu0
      %4170 = vmatprep.mubr.f32.mxu0 0.0
      %4171 = vmatmul.mubr.f32.gmra.mrb[0].mxu0 %v3784
      %v4172 = vpop.f32.mrb[0].mxu0
      %v4173 = vadd.f32 %v3973, %v4172
      %v4174 = vpop.f32.mrb[0].mxu0
      %4175 = vmatprep.mubr.f32.mxu0 0.0
      %4176 = vmatmul.mubr.f32.gmra.mrb[0].mxu0 %v3787
      %v4177 = vpop.f32.mrb[0].mxu0
      %v4178 = vadd.f32 %v3978, %v4177
      %v4179 = vpop.f32.mrb[0].mxu0
      %4180 = vmatprep.mubr.f32.mxu0 0.0
      %4181 = vmatmul.mubr.f32.gmra.mrb[0].mxu0 %v3790
      %v4182 = vpop.f32.mrb[0].mxu0
      %v4183 = vadd.f32 %v3983, %v4182
      %v4184 = vpop.f32.mrb[0].mxu0
      %4185 = vmatprep.mubr.f32.mxu0 0.0
      %4186 = vmatmul.mubr.f32.gmra.mrb[0].mxu0 %v3793
      %v4187 = vpop.f32.mrb[0].mxu0
      %v4188 = vadd.f32 %v3988, %v4187
      %v4189 = vpop.f32.mrb[0].mxu0
      %4190 = vmatprep.mubr.f32.mxu0 0.0
      %4191 = vmatmul.mubr.f32.gmra.mrb[0].mxu0 %v3796
      %v4192 = vpop.f32.mrb[0].mxu0
      %v4193 = vadd.f32 %v3993, %v4192
      %v4194 = vpop.f32.mrb[0].mxu0
      %4195 = vmatprep.mubr.f32.mxu0 0.0
      %4196 = vmatmul.mubr.f32.gmra.mrb[0].mxu0 %v3799
      %v4197 = vpop.f32.mrb[0].mxu0
      %v4198 = vadd.f32 %v3998, %v4197
      %v4199 = vpop.f32.mrb[0].mxu0
      %4200 = vdwg.mxu0
      %v4201 = vmax.f32 %v4068, 0.0
      %v4202 = vmax.f32 %v4073, 0.0
      %v4203 = vmax.f32 %v4078, 0.0
      %v4204 = vmax.f32 %v4083, 0.0
      %v4205 = vmax.f32 %v4088, 0.0
      %v4206 = vmax.f32 %v4093, 0.0
      %v4207 = vmax.f32 %v4098, 0.0
      %v4208 = vmax.f32 %v4103, 0.0
      %v4209 = vmax.f32 %v4108, 0.0
      %v4210 = vmax.f32 %v4113, 0.0
      %v4211 = vmax.f32 %v4118, 0.0
      %v4212 = vmax.f32 %v4123, 0.0
      %v4213 = vmax.f32 %v4128, 0.0
      %v4214 = vmax.f32 %v4133, 0.0
      %v4215 = vmax.f32 %v4138, 0.0
      %v4216 = vmax.f32 %v4143, 0.0
      %v4217 = vmax.f32 %v4148, 0.0
      %v4218 = vmax.f32 %v4153, 0.0
      %v4219 = vmax.f32 %v4158, 0.0
      %v4220 = vmax.f32 %v4163, 0.0
      %v4221 = vmax.f32 %v4168, 0.0
      %v4222 = vmax.f32 %v4173, 0.0
      %v4223 = vmax.f32 %v4178, 0.0
      %v4224 = vmax.f32 %v4183, 0.0
      %v4225 = vmax.f32 %v4188, 0.0
      %v4226 = vmax.f32 %v4193, 0.0
      %v4227 = vmax.f32 %v4198, 0.0
      %s4228 = ssub.s32 2, %s398
      %s4229 = smul.u32 %s4228, 18
      %s4230 = ssub.s32 18, %s398
      %s4231 = smul.u32 %s4230, 18
      %v4232 = vstv %s4229
      %vm4233 = vcmp.ge.s32.totalorder %v2230, %v4232
      %vm4234 = vcmp.ge.s32.totalorder %v2231, %v4232
      %vm4235 = vcmp.ge.s32.totalorder %v2232, %v4232
      %vm4236 = vcmp.ge.s32.totalorder %v2233, %v4232
      %vm4237 = vcmp.ge.s32.totalorder %v2234, %v4232
      %vm4238 = vcmp.ge.s32.totalorder %v2235, %v4232
      %vm4239 = vcmp.ge.s32.totalorder %v2236, %v4232
      %vm4240 = vcmp.ge.s32.totalorder %v2237, %v4232
      %vm4241 = vcmp.ge.s32.totalorder %v2238, %v4232
      %vm4242 = vcmp.ge.s32.totalorder %v2239, %v4232
      %vm4243 = vcmp.ge.s32.totalorder %v2240, %v4232
      %vm4244 = vcmp.ge.s32.totalorder %v2241, %v4232
      %vm4245 = vcmp.ge.s32.totalorder %v2242, %v4232
      %vm4246 = vcmp.ge.s32.totalorder %v2243, %v4232
      %vm4247 = vcmp.ge.s32.totalorder %v2244, %v4232
      %vm4248 = vcmp.ge.s32.totalorder %v2245, %v4232
      %vm4249 = vcmp.ge.s32.totalorder %v2246, %v4232
      %vm4250 = vcmp.ge.s32.totalorder %v2247, %v4232
      %vm4251 = vcmp.ge.s32.totalorder %v2248, %v4232
      %vm4252 = vcmp.ge.s32.totalorder %v2249, %v4232
      %vm4253 = vcmp.ge.s32.totalorder %v2250, %v4232
      %vm4254 = vcmp.ge.s32.totalorder %v2251, %v4232
      %vm4255 = vcmp.ge.s32.totalorder %v2252, %v4232
      %vm4256 = vcmp.ge.s32.totalorder %v2253, %v4232
      %vm4257 = vcmp.ge.s32.totalorder %v2254, %v4232
      %vm4258 = vcmp.ge.s32.totalorder %v2255, %v4232
      %vm4259 = vcmp.ge.s32.totalorder %v2256, %v4232
      %v4260 = vstv %s4231
      %vm4261 = vcmp.lt.s32.totalorder %v2230, %v4260
      %vm4262 = vcmp.lt.s32.totalorder %v2231, %v4260
      %vm4263 = vcmp.lt.s32.totalorder %v2232, %v4260
      %vm4264 = vcmp.lt.s32.totalorder %v2233, %v4260
      %vm4265 = vcmp.lt.s32.totalorder %v2234, %v4260
      %vm4266 = vcmp.lt.s32.totalorder %v2235, %v4260
      %vm4267 = vcmp.lt.s32.totalorder %v2236, %v4260
      %vm4268 = vcmp.lt.s32.totalorder %v2237, %v4260
      %vm4269 = vcmp.lt.s32.totalorder %v2238, %v4260
      %vm4270 = vcmp.lt.s32.totalorder %v2239, %v4260
      %vm4271 = vcmp.lt.s32.totalorder %v2240, %v4260
      %vm4272 = vcmp.lt.s32.totalorder %v2241, %v4260
      %vm4273 = vcmp.lt.s32.totalorder %v2242, %v4260
      %vm4274 = vcmp.lt.s32.totalorder %v2243, %v4260
      %vm4275 = vcmp.lt.s32.totalorder %v2244, %v4260
      %vm4276 = vcmp.lt.s32.totalorder %v2245, %v4260
      %vm4277 = vcmp.lt.s32.totalorder %v2246, %v4260
      %vm4278 = vcmp.lt.s32.totalorder %v2247, %v4260
      %vm4279 = vcmp.lt.s32.totalorder %v2248, %v4260
      %vm4280 = vcmp.lt.s32.totalorder %v2249, %v4260
      %vm4281 = vcmp.lt.s32.totalorder %v2250, %v4260
      %vm4282 = vcmp.lt.s32.totalorder %v2251, %v4260
      %vm4283 = vcmp.lt.s32.totalorder %v2252, %v4260
      %vm4284 = vcmp.lt.s32.totalorder %v2253, %v4260
      %vm4285 = vcmp.lt.s32.totalorder %v2254, %v4260
      %vm4286 = vcmp.lt.s32.totalorder %v2255, %v4260
      %vm4287 = vcmp.lt.s32.totalorder %v2256, %v4260
      %vm4288 = vmand %vm4233, %vm4261
      %vm4289 = vmand %vm4234, %vm4262
      %vm4290 = vmand %vm4235, %vm4263
      %vm4291 = vmand %vm4236, %vm4264
      %vm4292 = vmand %vm4237, %vm4265
      %vm4293 = vmand %vm4238, %vm4266
      %vm4294 = vmand %vm4239, %vm4267
      %vm4295 = vmand %vm4240, %vm4268
      %vm4296 = vmand %vm4241, %vm4269
      %vm4297 = vmand %vm4242, %vm4270
      %vm4298 = vmand %vm4243, %vm4271
      %vm4299 = vmand %vm4244, %vm4272
      %vm4300 = vmand %vm4245, %vm4273
      %vm4301 = vmand %vm4246, %vm4274
      %vm4302 = vmand %vm4247, %vm4275
      %vm4303 = vmand %vm4248, %vm4276
      %vm4304 = vmand %vm4249, %vm4277
      %vm4305 = vmand %vm4250, %vm4278
      %vm4306 = vmand %vm4251, %vm4279
      %vm4307 = vmand %vm4252, %vm4280
      %vm4308 = vmand %vm4253, %vm4281
      %vm4309 = vmand %vm4254, %vm4282
      %vm4310 = vmand %vm4255, %vm4283
      %vm4311 = vmand %vm4256, %vm4284
      %vm4312 = vmand %vm4257, %vm4285
      %vm4313 = vmand %vm4258, %vm4286
      %vm4314 = vmand %vm4259, %vm4287
      %v4315 = vsel %vm4288, 1, 0
      %v4316 = vsel %vm4289, 1, 0
      %v4317 = vsel %vm4290, 1, 0
      %v4318 = vsel %vm4291, 1, 0
      %v4319 = vsel %vm4292, 1, 0
      %v4320 = vsel %vm4293, 1, 0
      %v4321 = vsel %vm4294, 1, 0
      %v4322 = vsel %vm4295, 1, 0
      %v4323 = vsel %vm4296, 1, 0
      %v4324 = vsel %vm4297, 1, 0
      %v4325 = vsel %vm4298, 1, 0
      %v4326 = vsel %vm4299, 1, 0
      %v4327 = vsel %vm4300, 1, 0
      %v4328 = vsel %vm4301, 1, 0
      %v4329 = vsel %vm4302, 1, 0
      %v4330 = vsel %vm4303, 1, 0
      %v4331 = vsel %vm4304, 1, 0
      %v4332 = vsel %vm4305, 1, 0
      %v4333 = vsel %vm4306, 1, 0
      %v4334 = vsel %vm4307, 1, 0
      %v4335 = vsel %vm4308, 1, 0
      %v4336 = vsel %vm4309, 1, 0
      %v4337 = vsel %vm4310, 1, 0
      %v4338 = vsel %vm4311, 1, 0
      %v4339 = vsel %vm4312, 1, 0
      %v4340 = vsel %vm4313, 1, 0
      %v4341 = vsel %vm4314, 1, 0
      %vm4342 = vcmp.eq.s32.totalorder %v4315, 1
      %vm4343 = vcmp.eq.s32.totalorder %v4316, 1
      %vm4344 = vcmp.eq.s32.totalorder %v4317, 1
      %vm4345 = vcmp.eq.s32.totalorder %v4318, 1
      %vm4346 = vcmp.eq.s32.totalorder %v4319, 1
      %vm4347 = vcmp.eq.s32.totalorder %v4320, 1
      %vm4348 = vcmp.eq.s32.totalorder %v4321, 1
      %vm4349 = vcmp.eq.s32.totalorder %v4322, 1
      %vm4350 = vcmp.eq.s32.totalorder %v4323, 1
      %vm4351 = vcmp.eq.s32.totalorder %v4324, 1
      %vm4352 = vcmp.eq.s32.totalorder %v4325, 1
      %vm4353 = vcmp.eq.s32.totalorder %v4326, 1
      %vm4354 = vcmp.eq.s32.totalorder %v4327, 1
      %vm4355 = vcmp.eq.s32.totalorder %v4328, 1
      %vm4356 = vcmp.eq.s32.totalorder %v4329, 1
      %vm4357 = vcmp.eq.s32.totalorder %v4330, 1
      %vm4358 = vcmp.eq.s32.totalorder %v4331, 1
      %vm4359 = vcmp.eq.s32.totalorder %v4332, 1
      %vm4360 = vcmp.eq.s32.totalorder %v4333, 1
      %vm4361 = vcmp.eq.s32.totalorder %v4334, 1
      %vm4362 = vcmp.eq.s32.totalorder %v4335, 1
      %vm4363 = vcmp.eq.s32.totalorder %v4336, 1
      %vm4364 = vcmp.eq.s32.totalorder %v4337, 1
      %vm4365 = vcmp.eq.s32.totalorder %v4338, 1
      %vm4366 = vcmp.eq.s32.totalorder %v4339, 1
      %vm4367 = vcmp.eq.s32.totalorder %v4340, 1
      %vm4368 = vcmp.eq.s32.totalorder %v4341, 1
      %v4369 = vsel %vm4342, %v4201, 0.0
      %v4370 = vsel %vm4343, %v4202, 0.0
      %v4371 = vsel %vm4344, %v4203, 0.0
      %v4372 = vsel %vm4345, %v4204, 0.0
      %v4373 = vsel %vm4346, %v4205, 0.0
      %v4374 = vsel %vm4347, %v4206, 0.0
      %v4375 = vsel %vm4348, %v4207, 0.0
      %v4376 = vsel %vm4349, %v4208, 0.0
      %v4377 = vsel %vm4350, %v4209, 0.0
      %v4378 = vsel %vm4351, %v4210, 0.0
      %v4379 = vsel %vm4352, %v4211, 0.0
      %v4380 = vsel %vm4353, %v4212, 0.0
      %v4381 = vsel %vm4354, %v4213, 0.0
      %v4382 = vsel %vm4355, %v4214, 0.0
      %v4383 = vsel %vm4356, %v4215, 0.0
      %v4384 = vsel %vm4357, %v4216, 0.0
      %v4385 = vsel %vm4358, %v4217, 0.0
      %v4386 = vsel %vm4359, %v4218, 0.0
      %v4387 = vsel %vm4360, %v4219, 0.0
      %v4388 = vsel %vm4361, %v4220, 0.0
      %v4389 = vsel %vm4362, %v4221, 0.0
      %v4390 = vsel %vm4363, %v4222, 0.0
      %v4391 = vsel %vm4364, %v4223, 0.0
      %v4392 = vsel %vm4365, %v4224, 0.0
      %v4393 = vsel %vm4366, %v4225, 0.0
      %v4394 = vsel %vm4367, %v4226, 0.0
      %v4395 = vsel %vm4368, %v4227, 0.0
      %v4396 = vld [vmem:[%s1] sm:$0xff]
      %v4397 = vld [vmem:[%s1 + $0x8] sm:$0xff]
      %v4398 = vld [vmem:[%s1 + $0x10] sm:$0xff]
      %v4399 = vld [vmem:[%s1 + $0x18] sm:$0xff]
      %v4400 = vld [vmem:[%s1 + $0x20] sm:$0xff]
      %v4401 = vld [vmem:[%s1 + $0x28] sm:$0xff]
      %v4402 = vld [vmem:[%s1 + $0x30] sm:$0xff]
      %v4403 = vld [vmem:[%s1 + $0x38] sm:$0xff]
      %v4404 = vld [vmem:[%s1 + $0x40] sm:$0xff]
      %v4405 = vld [vmem:[%s1 + $0x48] sm:$0xff]
      %v4406 = vld [vmem:[%s1 + $0x50] sm:$0xff]
      %v4407 = vld [vmem:[%s1 + $0x58] sm:$0xff]
      %v4408 = vld [vmem:[%s1 + $0x60] sm:$0xff]
      %v4409 = vld [vmem:[%s1 + $0x68] sm:$0xff]
      %v4410 = vld [vmem:[%s1 + $0x70] sm:$0xff]
      %v4411 = vld [vmem:[%s1 + $0x78] sm:$0xff]
      %v4412 = vld [vmem:[%s1 + $0x80] sm:$0xff]
      %v4413 = vld [vmem:[%s1 + $0x88] sm:$0xff]
      %v4414 = vld [vmem:[%s1 + $0x90] sm:$0xff]
      %v4415 = vld [vmem:[%s1 + $0x98] sm:$0xff]
      %v4416 = vld [vmem:[%s1 + $0xa0] sm:$0xff]
      %v4417 = vld [vmem:[%s1 + $0xa8] sm:$0xff]
      %v4418 = vld [vmem:[%s1 + $0xb0] sm:$0xff]
      %v4419 = vld [vmem:[%s1 + $0xb8] sm:$0xff]
      %v4420 = vld [vmem:[%s1 + $0xc0] sm:$0xff]
      %v4421 = vld [vmem:[%s1 + $0xc8] sm:$0xff]
      %v4422 = vld [vmem:[%s1 + $0xd0] sm:$0xff]
      %4424 = vset.pattern.permute.xlu0 0
      %4425 = vperm.xlu0 %4424, %v4396
      %v4426 = vpop.permute.xlu0 %4425
      %4429 = vset.pattern.permute.xlu0 0
      %4430 = vperm.xlu0 %4429, %v4397
      %v4431 = vpop.permute.xlu0 %4430
      %4434 = vset.pattern.permute.xlu0 0
      %4435 = vperm.xlu0 %4434, %v4398
      %v4436 = vpop.permute.xlu0 %4435
      %4439 = vset.pattern.permute.xlu0 0
      %4440 = vperm.xlu0 %4439, %v4399
      %v4441 = vpop.permute.xlu0 %4440
      %4444 = vset.pattern.permute.xlu0 0
      %4445 = vperm.xlu0 %4444, %v4400
      %v4446 = vpop.permute.xlu0 %4445
      %4449 = vset.pattern.permute.xlu0 0
      %4450 = vperm.xlu0 %4449, %v4401
      %v4451 = vpop.permute.xlu0 %4450
      %4454 = vset.pattern.permute.xlu0 0
      %4455 = vperm.xlu0 %4454, %v4402
      %v4456 = vpop.permute.xlu0 %4455
      %4459 = vset.pattern.permute.xlu0 0
      %4460 = vperm.xlu0 %4459, %v4403
      %v4461 = vpop.permute.xlu0 %4460
      %4464 = vset.pattern.permute.xlu0 0
      %4465 = vperm.xlu0 %4464, %v4404
      %v4466 = vpop.permute.xlu0 %4465
      %4469 = vset.pattern.permute.xlu0 0
      %4470 = vperm.xlu0 %4469, %v4405
      %v4471 = vpop.permute.xlu0 %4470
      %4474 = vset.pattern.permute.xlu0 0
      %4475 = vperm.xlu0 %4474, %v4406
      %v4476 = vpop.permute.xlu0 %4475
      %4479 = vset.pattern.permute.xlu0 0
      %4480 = vperm.xlu0 %4479, %v4407
      %v4481 = vpop.permute.xlu0 %4480
      %4484 = vset.pattern.permute.xlu0 0
      %4485 = vperm.xlu0 %4484, %v4408
      %v4486 = vpop.permute.xlu0 %4485
      %4489 = vset.pattern.permute.xlu0 0
      %4490 = vperm.xlu0 %4489, %v4409
      %v4491 = vpop.permute.xlu0 %4490
      %4494 = vset.pattern.permute.xlu0 0
      %4495 = vperm.xlu0 %4494, %v4410
      %v4496 = vpop.permute.xlu0 %4495
      %4499 = vset.pattern.permute.xlu0 0
      %4500 = vperm.xlu0 %4499, %v4411
      %v4501 = vpop.permute.xlu0 %4500
      %4504 = vset.pattern.permute.xlu0 0
      %4505 = vperm.xlu0 %4504, %v4412
      %v4506 = vpop.permute.xlu0 %4505
      %4509 = vset.pattern.permute.xlu0 0
      %4510 = vperm.xlu0 %4509, %v4413
      %v4511 = vpop.permute.xlu0 %4510
      %4514 = vset.pattern.permute.xlu0 0
      %4515 = vperm.xlu0 %4514, %v4414
      %v4516 = vpop.permute.xlu0 %4515
      %4519 = vset.pattern.permute.xlu0 0
      %4520 = vperm.xlu0 %4519, %v4415
      %v4521 = vpop.permute.xlu0 %4520
      %4524 = vset.pattern.permute.xlu0 0
      %4525 = vperm.xlu0 %4524, %v4416
      %v4526 = vpop.permute.xlu0 %4525
      %4529 = vset.pattern.permute.xlu0 0
      %4530 = vperm.xlu0 %4529, %v4417
      %v4531 = vpop.permute.xlu0 %4530
      %4534 = vset.pattern.permute.xlu0 0
      %4535 = vperm.xlu0 %4534, %v4418
      %v4536 = vpop.permute.xlu0 %4535
      %4539 = vset.pattern.permute.xlu0 0
      %4540 = vperm.xlu0 %4539, %v4419
      %v4541 = vpop.permute.xlu0 %4540
      %4544 = vset.pattern.permute.xlu0 0
      %4545 = vperm.xlu0 %4544, %v4420
      %v4546 = vpop.permute.xlu0 %4545
      %4549 = vset.pattern.permute.xlu0 0
      %4550 = vperm.xlu0 %4549, %v4421
      %v4551 = vpop.permute.xlu0 %4550
      %4554 = vset.pattern.permute.xlu0 0
      %4555 = vperm.xlu0 %4554, %v4422
      %v4556 = vpop.permute.xlu0 %4555
      %v4558 = vmul.f32 %v4369, %v4426
      %v4559 = vmul.f32 %v4370, %v4431
      %v4560 = vmul.f32 %v4371, %v4436
      %v4561 = vmul.f32 %v4372, %v4441
      %v4562 = vmul.f32 %v4373, %v4446
      %v4563 = vmul.f32 %v4374, %v4451
      %v4564 = vmul.f32 %v4375, %v4456
      %v4565 = vmul.f32 %v4376, %v4461
      %v4566 = vmul.f32 %v4377, %v4466
      %v4567 = vmul.f32 %v4378, %v4471
      %v4568 = vmul.f32 %v4379, %v4476
      %v4569 = vmul.f32 %v4380, %v4481
      %v4570 = vmul.f32 %v4381, %v4486
      %v4571 = vmul.f32 %v4382, %v4491
      %v4572 = vmul.f32 %v4383, %v4496
      %v4573 = vmul.f32 %v4384, %v4501
      %v4574 = vmul.f32 %v4385, %v4506
      %v4575 = vmul.f32 %v4386, %v4511
      %v4576 = vmul.f32 %v4387, %v4516
      %v4577 = vmul.f32 %v4388, %v4521
      %v4578 = vmul.f32 %v4389, %v4526
      %v4579 = vmul.f32 %v4390, %v4531
      %v4580 = vmul.f32 %v4391, %v4536
      %v4581 = vmul.f32 %v4392, %v4541
      %v4582 = vmul.f32 %v4393, %v4546
      %v4583 = vmul.f32 %v4394, %v4551
      %v4584 = vmul.f32 %v4395, %v4556
      %4585 = vst.msk [vmem:[#allocation3] sm:$0x1] %vm2684, 0.0
      %4586 = vst.msk [vmem:[#allocation3 + $0x1] sm:$0xff] %vm1826, %v4558
      %4587 = vst.msk [vmem:[#allocation3 + $0x9] sm:$0xff] %vm1826, %v4559
      %4588 = vst.msk [vmem:[#allocation3 + $0x11] sm:$0xff] %vm1826, %v4560
      %4589 = vst.msk [vmem:[#allocation3 + $0x19] sm:$0xff] %vm1826, %v4561
      %4590 = vst.msk [vmem:[#allocation3 + $0x21] sm:$0xff] %vm1826, %v4562
      %4591 = vst.msk [vmem:[#allocation3 + $0x29] sm:$0xff] %vm1826, %v4563
      %4592 = vst.msk [vmem:[#allocation3 + $0x31] sm:$0xff] %vm1826, %v4564
      %4593 = vst.msk [vmem:[#allocation3 + $0x39] sm:$0xff] %vm1826, %v4565
      %4594 = vst.msk [vmem:[#allocation3 + $0x41] sm:$0xff] %vm1826, %v4566
      %4595 = vst.msk [vmem:[#allocation3 + $0x49] sm:$0xff] %vm1826, %v4567
      %4596 = vst.msk [vmem:[#allocation3 + $0x51] sm:$0xff] %vm1826, %v4568
      %4597 = vst.msk [vmem:[#allocation3 + $0x59] sm:$0xff] %vm1826, %v4569
      %4598 = vst.msk [vmem:[#allocation3 + $0x61] sm:$0xff] %vm1826, %v4570
      %4599 = vst.msk [vmem:[#allocation3 + $0x69] sm:$0xff] %vm1826, %v4571
      %4600 = vst.msk [vmem:[#allocation3 + $0x71] sm:$0xff] %vm1826, %v4572
      %4601 = vst.msk [vmem:[#allocation3 + $0x79] sm:$0xff] %vm1826, %v4573
      %4602 = vst.msk [vmem:[#allocation3 + $0x81] sm:$0xff] %vm1826, %v4574
      %4603 = vst.msk [vmem:[#allocation3 + $0x89] sm:$0xff] %vm1826, %v4575
      %4604 = vst.msk [vmem:[#allocation3 + $0x91] sm:$0xff] %vm1826, %v4576
      %4605 = vst.msk [vmem:[#allocation3 + $0x99] sm:$0xff] %vm1826, %v4577
      %4606 = vst.msk [vmem:[#allocation3 + $0xa1] sm:$0xff] %vm1826, %v4578
      %4607 = vst.msk [vmem:[#allocation3 + $0xa9] sm:$0xff] %vm1826, %v4579
      %4608 = vst.msk [vmem:[#allocation3 + $0xb1] sm:$0xff] %vm1826, %v4580
      %4609 = vst.msk [vmem:[#allocation3 + $0xb9] sm:$0xff] %vm1826, %v4581
      %4610 = vst.msk [vmem:[#allocation3 + $0xc1] sm:$0xff] %vm1826, %v4582
      %4611 = vst.msk [vmem:[#allocation3 + $0xc9] sm:$0xff] %vm1826, %v4583
      %4612 = vst.msk [vmem:[#allocation3 + $0xd1] sm:$0xff] %vm1826, %v4584
      %4613 = vst.msk [vmem:[#allocation3 + $0xd9] sm:$0xff] %vm1826, 0.0
      %4614 = vst.msk [vmem:[#allocation3 + $0xe1] sm:$0xff] %vm1826, 0.0
      %4615 = vst.msk [vmem:[#allocation3 + $0xe9] sm:$0x1] %vm2684, 0.0
      %v4616 = vld [vmem:[#allocation3] sm:$0xff]
      %v4617 = vld [vmem:[#allocation3 + $0x8] sm:$0xff]
      %v4618 = vld [vmem:[#allocation3 + $0x10] sm:$0xff]
      %v4619 = vld [vmem:[#allocation3 + $0x18] sm:$0xff]
      %v4620 = vld [vmem:[#allocation3 + $0x20] sm:$0xff]
      %v4621 = vld [vmem:[#allocation3 + $0x28] sm:$0xff]
      %v4622 = vld [vmem:[#allocation3 + $0x30] sm:$0xff]
      %v4623 = vld [vmem:[#allocation3 + $0x38] sm:$0xff]
      %v4624 = vld [vmem:[#allocation3 + $0x40] sm:$0xff]
      %v4625 = vld [vmem:[#allocation3 + $0x48] sm:$0xff]
      %v4626 = vld [vmem:[#allocation3 + $0x50] sm:$0xff]
      %v4627 = vld [vmem:[#allocation3 + $0x58] sm:$0xff]
      %v4628 = vld [vmem:[#allocation3 + $0x60] sm:$0xff]
      %v4629 = vld [vmem:[#allocation3 + $0x68] sm:$0xff]
      %v4630 = vld [vmem:[#allocation3 + $0x70] sm:$0xff]
      %v4631 = vld [vmem:[#allocation3 + $0x78] sm:$0xff]
      %v4632 = vld [vmem:[#allocation3 + $0x80] sm:$0xff]
      %v4633 = vld [vmem:[#allocation3 + $0x88] sm:$0xff]
      %v4634 = vld [vmem:[#allocation3 + $0x90] sm:$0xff]
      %v4635 = vld [vmem:[#allocation3 + $0x98] sm:$0xff]
      %v4636 = vld [vmem:[#allocation3 + $0xa0] sm:$0xff]
      %v4637 = vld [vmem:[#allocation3 + $0xa8] sm:$0xff]
      %v4638 = vld [vmem:[#allocation3 + $0xb0] sm:$0xf]
      %v4639 = vld [vmem:[#allocation3 + $0x1] sm:$0xff]
      %v4640 = vld [vmem:[#allocation3 + $0x9] sm:$0xff]
      %v4641 = vld [vmem:[#allocation3 + $0x11] sm:$0xff]
      %v4642 = vld [vmem:[#allocation3 + $0x19] sm:$0xff]
      %v4643 = vld [vmem:[#allocation3 + $0x21] sm:$0xff]
      %v4644 = vld [vmem:[#allocation3 + $0x29] sm:$0xff]
      %v4645 = vld [vmem:[#allocation3 + $0x31] sm:$0xff]
      %v4646 = vld [vmem:[#allocation3 + $0x39] sm:$0xff]
      %v4647 = vld [vmem:[#allocation3 + $0x41] sm:$0xff]
      %v4648 = vld [vmem:[#allocation3 + $0x49] sm:$0xff]
      %v4649 = vld [vmem:[#allocation3 + $0x51] sm:$0xff]
      %v4650 = vld [vmem:[#allocation3 + $0x59] sm:$0xff]
      %v4651 = vld [vmem:[#allocation3 + $0x61] sm:$0xff]
      %v4652 = vld [vmem:[#allocation3 + $0x69] sm:$0xff]
      %v4653 = vld [vmem:[#allocation3 + $0x71] sm:$0xff]
      %v4654 = vld [vmem:[#allocation3 + $0x79] sm:$0xff]
      %v4655 = vld [vmem:[#allocation3 + $0x81] sm:$0xff]
      %v4656 = vld [vmem:[#allocation3 + $0x89] sm:$0xff]
      %v4657 = vld [vmem:[#allocation3 + $0x91] sm:$0xff]
      %v4658 = vld [vmem:[#allocation3 + $0x99] sm:$0xff]
      %v4659 = vld [vmem:[#allocation3 + $0xa1] sm:$0xff]
      %v4660 = vld [vmem:[#allocation3 + $0xa9] sm:$0xff]
      %v4661 = vld [vmem:[#allocation3 + $0xb1] sm:$0xf]
      %v4662 = vld [vmem:[#allocation3 + $0x2] sm:$0xff]
      %v4663 = vld [vmem:[#allocation3 + $0xa] sm:$0xff]
      %v4664 = vld [vmem:[#allocation3 + $0x12] sm:$0xff]
      %v4665 = vld [vmem:[#allocation3 + $0x1a] sm:$0xff]
      %v4666 = vld [vmem:[#allocation3 + $0x22] sm:$0xff]
      %v4667 = vld [vmem:[#allocation3 + $0x2a] sm:$0xff]
      %v4668 = vld [vmem:[#allocation3 + $0x32] sm:$0xff]
      %v4669 = vld [vmem:[#allocation3 + $0x3a] sm:$0xff]
      %v4670 = vld [vmem:[#allocation3 + $0x42] sm:$0xff]
      %v4671 = vld [vmem:[#allocation3 + $0x4a] sm:$0xff]
      %v4672 = vld [vmem:[#allocation3 + $0x52] sm:$0xff]
      %v4673 = vld [vmem:[#allocation3 + $0x5a] sm:$0xff]
      %v4674 = vld [vmem:[#allocation3 + $0x62] sm:$0xff]
      %v4675 = vld [vmem:[#allocation3 + $0x6a] sm:$0xff]
      %v4676 = vld [vmem:[#allocation3 + $0x72] sm:$0xff]
      %v4677 = vld [vmem:[#allocation3 + $0x7a] sm:$0xff]
      %v4678 = vld [vmem:[#allocation3 + $0x82] sm:$0xff]
      %v4679 = vld [vmem:[#allocation3 + $0x8a] sm:$0xff]
      %v4680 = vld [vmem:[#allocation3 + $0x92] sm:$0xff]
      %v4681 = vld [vmem:[#allocation3 + $0x9a] sm:$0xff]
      %v4682 = vld [vmem:[#allocation3 + $0xa2] sm:$0xff]
      %v4683 = vld [vmem:[#allocation3 + $0xaa] sm:$0xff]
      %v4684 = vld [vmem:[#allocation3 + $0xb2] sm:$0xf]
      %v4685 = vld [vmem:[#allocation3 + $0xb2] sm:$0xff]
      %v4686 = vld [vmem:[#allocation3 + $0xba] sm:$0xff]
      %v4687 = vld [vmem:[#allocation3 + $0xc2] sm:$0xf]
      %v4688 = vld [vmem:[#allocation3 + $0x13] sm:$0xff]
      %v4689 = vld [vmem:[#allocation3 + $0x1b] sm:$0xff]
      %v4690 = vld [vmem:[#allocation3 + $0x23] sm:$0xff]
      %v4691 = vld [vmem:[#allocation3 + $0x2b] sm:$0xff]
      %v4692 = vld [vmem:[#allocation3 + $0x33] sm:$0xff]
      %v4693 = vld [vmem:[#allocation3 + $0x3b] sm:$0xff]
      %v4694 = vld [vmem:[#allocation3 + $0x43] sm:$0xff]
      %v4695 = vld [vmem:[#allocation3 + $0x4b] sm:$0xff]
      %v4696 = vld [vmem:[#allocation3 + $0x53] sm:$0xff]
      %v4697 = vld [vmem:[#allocation3 + $0x5b] sm:$0xff]
      %v4698 = vld [vmem:[#allocation3 + $0x63] sm:$0xff]
      %v4699 = vld [vmem:[#allocation3 + $0x6b] sm:$0xff]
      %v4700 = vld [vmem:[#allocation3 + $0x73] sm:$0xff]
      %v4701 = vld [vmem:[#allocation3 + $0x7b] sm:$0xff]
      %v4702 = vld [vmem:[#allocation3 + $0x83] sm:$0xff]
      %v4703 = vld [vmem:[#allocation3 + $0x8b] sm:$0xff]
      %v4704 = vld [vmem:[#allocation3 + $0x93] sm:$0xff]
      %v4705 = vld [vmem:[#allocation3 + $0x9b] sm:$0xff]
      %v4706 = vld [vmem:[#allocation3 + $0xa3] sm:$0xff]
      %v4707 = vld [vmem:[#allocation3 + $0xab] sm:$0xff]
      %v4708 = vld [vmem:[#allocation3 + $0xb3] sm:$0xff]
      %v4709 = vld [vmem:[#allocation3 + $0xbb] sm:$0xff]
      %v4710 = vld [vmem:[#allocation3 + $0xc3] sm:$0xf]
      %v4711 = vld [vmem:[#allocation3 + $0x14] sm:$0xff]
      %v4712 = vld [vmem:[#allocation3 + $0x1c] sm:$0xff]
      %v4713 = vld [vmem:[#allocation3 + $0x24] sm:$0xff]
      %v4714 = vld [vmem:[#allocation3 + $0x2c] sm:$0xff]
      %v4715 = vld [vmem:[#allocation3 + $0x34] sm:$0xff]
      %v4716 = vld [vmem:[#allocation3 + $0x3c] sm:$0xff]
      %v4717 = vld [vmem:[#allocation3 + $0x44] sm:$0xff]
      %v4718 = vld [vmem:[#allocation3 + $0x4c] sm:$0xff]
      %v4719 = vld [vmem:[#allocation3 + $0x54] sm:$0xff]
      %v4720 = vld [vmem:[#allocation3 + $0x5c] sm:$0xff]
      %v4721 = vld [vmem:[#allocation3 + $0x64] sm:$0xff]
      %v4722 = vld [vmem:[#allocation3 + $0x6c] sm:$0xff]
      %v4723 = vld [vmem:[#allocation3 + $0x74] sm:$0xff]
      %v4724 = vld [vmem:[#allocation3 + $0x7c] sm:$0xff]
      %v4725 = vld [vmem:[#allocation3 + $0x84] sm:$0xff]
      %v4726 = vld [vmem:[#allocation3 + $0x8c] sm:$0xff]
      %v4727 = vld [vmem:[#allocation3 + $0x94] sm:$0xff]
      %v4728 = vld [vmem:[#allocation3 + $0x9c] sm:$0xff]
      %v4729 = vld [vmem:[#allocation3 + $0xa4] sm:$0xff]
      %v4730 = vld [vmem:[#allocation3 + $0xac] sm:$0xff]
      %v4731 = vld [vmem:[#allocation3 + $0xb4] sm:$0xff]
      %v4732 = vld [vmem:[#allocation3 + $0xbc] sm:$0xff]
      %v4733 = vld [vmem:[#allocation3 + $0xc4] sm:$0xf]
      %v4734 = vld [vmem:[#allocation3 + $0xc4] sm:$0xff]
      %v4735 = vld [vmem:[#allocation3 + $0xcc] sm:$0xff]
      %v4736 = vld [vmem:[#allocation3 + $0xd4] sm:$0xf]
      %v4737 = vld [vmem:[#allocation3 + $0x25] sm:$0xff]
      %v4738 = vld [vmem:[#allocation3 + $0x2d] sm:$0xff]
      %v4739 = vld [vmem:[#allocation3 + $0x35] sm:$0xff]
      %v4740 = vld [vmem:[#allocation3 + $0x3d] sm:$0xff]
      %v4741 = vld [vmem:[#allocation3 + $0x45] sm:$0xff]
      %v4742 = vld [vmem:[#allocation3 + $0x4d] sm:$0xff]
      %v4743 = vld [vmem:[#allocation3 + $0x55] sm:$0xff]
      %v4744 = vld [vmem:[#allocation3 + $0x5d] sm:$0xff]
      %v4745 = vld [vmem:[#allocation3 + $0x65] sm:$0xff]
      %v4746 = vld [vmem:[#allocation3 + $0x6d] sm:$0xff]
      %v4747 = vld [vmem:[#allocation3 + $0x75] sm:$0xff]
      %v4748 = vld [vmem:[#allocation3 + $0x7d] sm:$0xff]
      %v4749 = vld [vmem:[#allocation3 + $0x85] sm:$0xff]
      %v4750 = vld [vmem:[#allocation3 + $0x8d] sm:$0xff]
      %v4751 = vld [vmem:[#allocation3 + $0x95] sm:$0xff]
      %v4752 = vld [vmem:[#allocation3 + $0x9d] sm:$0xff]
      %v4753 = vld [vmem:[#allocation3 + $0xa5] sm:$0xff]
      %v4754 = vld [vmem:[#allocation3 + $0xad] sm:$0xff]
      %v4755 = vld [vmem:[#allocation3 + $0xb5] sm:$0xff]
      %v4756 = vld [vmem:[#allocation3 + $0xbd] sm:$0xff]
      %v4757 = vld [vmem:[#allocation3 + $0xc5] sm:$0xff]
      %v4758 = vld [vmem:[#allocation3 + $0xcd] sm:$0xff]
      %v4759 = vld [vmem:[#allocation3 + $0xd5] sm:$0xf]
      %v4760 = vld [vmem:[#allocation3 + $0x26] sm:$0xff]
      %v4761 = vld [vmem:[#allocation3 + $0x2e] sm:$0xff]
      %v4762 = vld [vmem:[#allocation3 + $0x36] sm:$0xff]
      %v4763 = vld [vmem:[#allocation3 + $0x3e] sm:$0xff]
      %v4764 = vld [vmem:[#allocation3 + $0x46] sm:$0xff]
      %v4765 = vld [vmem:[#allocation3 + $0x4e] sm:$0xff]
      %v4766 = vld [vmem:[#allocation3 + $0x56] sm:$0xff]
      %v4767 = vld [vmem:[#allocation3 + $0x5e] sm:$0xff]
      %v4768 = vld [vmem:[#allocation3 + $0x66] sm:$0xff]
      %v4769 = vld [vmem:[#allocation3 + $0x6e] sm:$0xff]
      %v4770 = vld [vmem:[#allocation3 + $0x76] sm:$0xff]
      %v4771 = vld [vmem:[#allocation3 + $0x7e] sm:$0xff]
      %v4772 = vld [vmem:[#allocation3 + $0x86] sm:$0xff]
      %v4773 = vld [vmem:[#allocation3 + $0x8e] sm:$0xff]
      %v4774 = vld [vmem:[#allocation3 + $0x96] sm:$0xff]
      %v4775 = vld [vmem:[#allocation3 + $0x9e] sm:$0xff]
      %v4776 = vld [vmem:[#allocation3 + $0xa6] sm:$0xff]
      %v4777 = vld [vmem:[#allocation3 + $0xae] sm:$0xff]
      %v4778 = vld [vmem:[#allocation3 + $0xb6] sm:$0xff]
      %v4779 = vld [vmem:[#allocation3 + $0xbe] sm:$0xff]
      %v4780 = vld [vmem:[#allocation3 + $0xc6] sm:$0xff]
      %v4781 = vld [vmem:[#allocation3 + $0xce] sm:$0xff]
      %v4782 = vld [vmem:[#allocation3 + $0xd6] sm:$0xf]
      %4806 = vrot.lane.b32.xlu0 %v4639, 32
      %v4807 = vpop.permute.xlu0 %4806
      %4808 = vrot.lane.b32.xlu0 %v4640, 32
      %v4809 = vpop.permute.xlu0 %4808
      %4810 = vrot.lane.b32.xlu0 %v4641, 32
      %v4811 = vpop.permute.xlu0 %4810
      %4812 = vrot.lane.b32.xlu0 %v4642, 32
      %v4813 = vpop.permute.xlu0 %4812
      %4814 = vrot.lane.b32.xlu0 %v4643, 32
      %v4815 = vpop.permute.xlu0 %4814
      %4816 = vrot.lane.b32.xlu0 %v4644, 32
      %v4817 = vpop.permute.xlu0 %4816
      %4818 = vrot.lane.b32.xlu0 %v4645, 32
      %v4819 = vpop.permute.xlu0 %4818
      %4820 = vrot.lane.b32.xlu0 %v4646, 32
      %v4821 = vpop.permute.xlu0 %4820
      %4822 = vrot.lane.b32.xlu0 %v4647, 32
      %v4823 = vpop.permute.xlu0 %4822
      %4824 = vrot.lane.b32.xlu0 %v4648, 32
      %v4825 = vpop.permute.xlu0 %4824
      %4826 = vrot.lane.b32.xlu0 %v4649, 32
      %v4827 = vpop.permute.xlu0 %4826
      %4828 = vrot.lane.b32.xlu0 %v4650, 32
      %v4829 = vpop.permute.xlu0 %4828
      %4830 = vrot.lane.b32.xlu0 %v4651, 32
      %v4831 = vpop.permute.xlu0 %4830
      %4832 = vrot.lane.b32.xlu0 %v4652, 32
      %v4833 = vpop.permute.xlu0 %4832
      %4834 = vrot.lane.b32.xlu0 %v4653, 32
      %v4835 = vpop.permute.xlu0 %4834
      %4836 = vrot.lane.b32.xlu0 %v4654, 32
      %v4837 = vpop.permute.xlu0 %4836
      %4838 = vrot.lane.b32.xlu0 %v4655, 32
      %v4839 = vpop.permute.xlu0 %4838
      %4840 = vrot.lane.b32.xlu0 %v4656, 32
      %v4841 = vpop.permute.xlu0 %4840
      %4842 = vrot.lane.b32.xlu0 %v4657, 32
      %v4843 = vpop.permute.xlu0 %4842
      %4844 = vrot.lane.b32.xlu0 %v4658, 32
      %v4845 = vpop.permute.xlu0 %4844
      %4846 = vrot.lane.b32.xlu0 %v4659, 32
      %v4847 = vpop.permute.xlu0 %4846
      %4848 = vrot.lane.b32.xlu0 %v4660, 32
      %v4849 = vpop.permute.xlu0 %4848
      %4850 = vrot.lane.b32.xlu0 %v4661, 32
      %v4851 = vpop.permute.xlu0 %4850
      %4898 = vrot.lane.b32.xlu0 %v4662, 64
      %v4899 = vpop.permute.xlu0 %4898
      %4900 = vrot.lane.b32.xlu0 %v4663, 64
      %v4901 = vpop.permute.xlu0 %4900
      %4902 = vrot.lane.b32.xlu0 %v4664, 64
      %v4903 = vpop.permute.xlu0 %4902
      %4904 = vrot.lane.b32.xlu0 %v4665, 64
      %v4905 = vpop.permute.xlu0 %4904
      %4906 = vrot.lane.b32.xlu0 %v4666, 64
      %v4907 = vpop.permute.xlu0 %4906
      %4908 = vrot.lane.b32.xlu0 %v4667, 64
      %v4909 = vpop.permute.xlu0 %4908
      %4910 = vrot.lane.b32.xlu0 %v4668, 64
      %v4911 = vpop.permute.xlu0 %4910
      %4912 = vrot.lane.b32.xlu0 %v4669, 64
      %v4913 = vpop.permute.xlu0 %4912
      %4914 = vrot.lane.b32.xlu0 %v4670, 64
      %v4915 = vpop.permute.xlu0 %4914
      %4916 = vrot.lane.b32.xlu0 %v4671, 64
      %v4917 = vpop.permute.xlu0 %4916
      %4918 = vrot.lane.b32.xlu0 %v4672, 64
      %v4919 = vpop.permute.xlu0 %4918
      %4920 = vrot.lane.b32.xlu0 %v4673, 64
      %v4921 = vpop.permute.xlu0 %4920
      %4922 = vrot.lane.b32.xlu0 %v4674, 64
      %v4923 = vpop.permute.xlu0 %4922
      %4924 = vrot.lane.b32.xlu0 %v4675, 64
      %v4925 = vpop.permute.xlu0 %4924
      %4926 = vrot.lane.b32.xlu0 %v4676, 64
      %v4927 = vpop.permute.xlu0 %4926
      %4928 = vrot.lane.b32.xlu0 %v4677, 64
      %v4929 = vpop.permute.xlu0 %4928
      %4930 = vrot.lane.b32.xlu0 %v4678, 64
      %v4931 = vpop.permute.xlu0 %4930
      %4932 = vrot.lane.b32.xlu0 %v4679, 64
      %v4933 = vpop.permute.xlu0 %4932
      %4934 = vrot.lane.b32.xlu0 %v4680, 64
      %v4935 = vpop.permute.xlu0 %4934
      %4936 = vrot.lane.b32.xlu0 %v4681, 64
      %v4937 = vpop.permute.xlu0 %4936
      %4938 = vrot.lane.b32.xlu0 %v4682, 64
      %v4939 = vpop.permute.xlu0 %4938
      %4940 = vrot.lane.b32.xlu0 %v4683, 64
      %v4941 = vpop.permute.xlu0 %4940
      %4942 = vrot.lane.b32.xlu0 %v4684, 64
      %v4943 = vpop.permute.xlu0 %4942
      %4970 = vrot.lane.b32.xlu0 %v4664, 96
      %v4971 = vpop.permute.xlu0 %4970
      %4972 = vrot.lane.b32.xlu0 %v4665, 96
      %v4973 = vpop.permute.xlu0 %4972
      %4974 = vrot.lane.b32.xlu0 %v4666, 96
      %v4975 = vpop.permute.xlu0 %4974
      %4976 = vrot.lane.b32.xlu0 %v4667, 96
      %v4977 = vpop.permute.xlu0 %4976
      %4978 = vrot.lane.b32.xlu0 %v4668, 96
      %v4979 = vpop.permute.xlu0 %4978
      %4980 = vrot.lane.b32.xlu0 %v4669, 96
      %v4981 = vpop.permute.xlu0 %4980
      %4982 = vrot.lane.b32.xlu0 %v4670, 96
      %v4983 = vpop.permute.xlu0 %4982
      %4984 = vrot.lane.b32.xlu0 %v4671, 96
      %v4985 = vpop.permute.xlu0 %4984
      %4986 = vrot.lane.b32.xlu0 %v4672, 96
      %v4987 = vpop.permute.xlu0 %4986
      %4988 = vrot.lane.b32.xlu0 %v4673, 96
      %v4989 = vpop.permute.xlu0 %4988
      %4990 = vrot.lane.b32.xlu0 %v4674, 96
      %v4991 = vpop.permute.xlu0 %4990
      %4992 = vrot.lane.b32.xlu0 %v4675, 96
      %v4993 = vpop.permute.xlu0 %4992
      %4994 = vrot.lane.b32.xlu0 %v4676, 96
      %v4995 = vpop.permute.xlu0 %4994
      %4996 = vrot.lane.b32.xlu0 %v4677, 96
      %v4997 = vpop.permute.xlu0 %4996
      %4998 = vrot.lane.b32.xlu0 %v4678, 96
      %v4999 = vpop.permute.xlu0 %4998
      %5000 = vrot.lane.b32.xlu0 %v4679, 96
      %v5001 = vpop.permute.xlu0 %5000
      %5002 = vrot.lane.b32.xlu0 %v4680, 96
      %v5003 = vpop.permute.xlu0 %5002
      %5004 = vrot.lane.b32.xlu0 %v4681, 96
      %v5005 = vpop.permute.xlu0 %5004
      %5006 = vrot.lane.b32.xlu0 %v4682, 96
      %v5007 = vpop.permute.xlu0 %5006
      %5008 = vrot.lane.b32.xlu0 %v4683, 96
      %v5009 = vpop.permute.xlu0 %5008
      %5010 = vrot.lane.b32.xlu0 %v4685, 96
      %v5011 = vpop.permute.xlu0 %5010
      %5012 = vrot.lane.b32.xlu0 %v4686, 96
      %v5013 = vpop.permute.xlu0 %5012
      %5014 = vrot.lane.b32.xlu0 %v4687, 96
      %v5015 = vpop.permute.xlu0 %5014
      %5062 = vrot.lane.b32.xlu0 %v4711, 32
      %v5063 = vpop.permute.xlu0 %5062
      %5064 = vrot.lane.b32.xlu0 %v4712, 32
      %v5065 = vpop.permute.xlu0 %5064
      %5066 = vrot.lane.b32.xlu0 %v4713, 32
      %v5067 = vpop.permute.xlu0 %5066
      %5068 = vrot.lane.b32.xlu0 %v4714, 32
      %v5069 = vpop.permute.xlu0 %5068
      %5070 = vrot.lane.b32.xlu0 %v4715, 32
      %v5071 = vpop.permute.xlu0 %5070
      %5072 = vrot.lane.b32.xlu0 %v4716, 32
      %v5073 = vpop.permute.xlu0 %5072
      %5074 = vrot.lane.b32.xlu0 %v4717, 32
      %v5075 = vpop.permute.xlu0 %5074
      %5076 = vrot.lane.b32.xlu0 %v4718, 32
      %v5077 = vpop.permute.xlu0 %5076
      %5078 = vrot.lane.b32.xlu0 %v4719, 32
      %v5079 = vpop.permute.xlu0 %5078
      %5080 = vrot.lane.b32.xlu0 %v4720, 32
      %v5081 = vpop.permute.xlu0 %5080
      %5082 = vrot.lane.b32.xlu0 %v4721, 32
      %v5083 = vpop.permute.xlu0 %5082
      %5084 = vrot.lane.b32.xlu0 %v4722, 32
      %v5085 = vpop.permute.xlu0 %5084
      %5086 = vrot.lane.b32.xlu0 %v4723, 32
      %v5087 = vpop.permute.xlu0 %5086
      %5088 = vrot.lane.b32.xlu0 %v4724, 32
      %v5089 = vpop.permute.xlu0 %5088
      %5090 = vrot.lane.b32.xlu0 %v4725, 32
      %v5091 = vpop.permute.xlu0 %5090
      %5092 = vrot.lane.b32.xlu0 %v4726, 32
      %v5093 = vpop.permute.xlu0 %5092
      %5094 = vrot.lane.b32.xlu0 %v4727, 32
      %v5095 = vpop.permute.xlu0 %5094
      %5096 = vrot.lane.b32.xlu0 %v4728, 32
      %v5097 = vpop.permute.xlu0 %5096
      %5098 = vrot.lane.b32.xlu0 %v4729, 32
      %v5099 = vpop.permute.xlu0 %5098
      %5100 = vrot.lane.b32.xlu0 %v4730, 32
      %v5101 = vpop.permute.xlu0 %5100
      %5102 = vrot.lane.b32.xlu0 %v4731, 32
      %v5103 = vpop.permute.xlu0 %5102
      %5104 = vrot.lane.b32.xlu0 %v4732, 32
      %v5105 = vpop.permute.xlu0 %5104
      %5106 = vrot.lane.b32.xlu0 %v4733, 32
      %v5107 = vpop.permute.xlu0 %5106
      %5134 = vrot.lane.b32.xlu0 %v4713, 64
      %v5135 = vpop.permute.xlu0 %5134
      %5136 = vrot.lane.b32.xlu0 %v4714, 64
      %v5137 = vpop.permute.xlu0 %5136
      %5138 = vrot.lane.b32.xlu0 %v4715, 64
      %v5139 = vpop.permute.xlu0 %5138
      %5140 = vrot.lane.b32.xlu0 %v4716, 64
      %v5141 = vpop.permute.xlu0 %5140
      %5142 = vrot.lane.b32.xlu0 %v4717, 64
      %v5143 = vpop.permute.xlu0 %5142
      %5144 = vrot.lane.b32.xlu0 %v4718, 64
      %v5145 = vpop.permute.xlu0 %5144
      %5146 = vrot.lane.b32.xlu0 %v4719, 64
      %v5147 = vpop.permute.xlu0 %5146
      %5148 = vrot.lane.b32.xlu0 %v4720, 64
      %v5149 = vpop.permute.xlu0 %5148
      %5150 = vrot.lane.b32.xlu0 %v4721, 64
      %v5151 = vpop.permute.xlu0 %5150
      %5152 = vrot.lane.b32.xlu0 %v4722, 64
      %v5153 = vpop.permute.xlu0 %5152
      %5154 = vrot.lane.b32.xlu0 %v4723, 64
      %v5155 = vpop.permute.xlu0 %5154
      %5156 = vrot.lane.b32.xlu0 %v4724, 64
      %v5157 = vpop.permute.xlu0 %5156
      %5158 = vrot.lane.b32.xlu0 %v4725, 64
      %v5159 = vpop.permute.xlu0 %5158
      %5160 = vrot.lane.b32.xlu0 %v4726, 64
      %v5161 = vpop.permute.xlu0 %5160
      %5162 = vrot.lane.b32.xlu0 %v4727, 64
      %v5163 = vpop.permute.xlu0 %5162
      %5164 = vrot.lane.b32.xlu0 %v4728, 64
      %v5165 = vpop.permute.xlu0 %5164
      %5166 = vrot.lane.b32.xlu0 %v4729, 64
      %v5167 = vpop.permute.xlu0 %5166
      %5168 = vrot.lane.b32.xlu0 %v4730, 64
      %v5169 = vpop.permute.xlu0 %5168
      %5170 = vrot.lane.b32.xlu0 %v4731, 64
      %v5171 = vpop.permute.xlu0 %5170
      %5172 = vrot.lane.b32.xlu0 %v4732, 64
      %v5173 = vpop.permute.xlu0 %5172
      %5174 = vrot.lane.b32.xlu0 %v4734, 64
      %v5175 = vpop.permute.xlu0 %5174
      %5176 = vrot.lane.b32.xlu0 %v4735, 64
      %v5177 = vpop.permute.xlu0 %5176
      %5178 = vrot.lane.b32.xlu0 %v4736, 64
      %v5179 = vpop.permute.xlu0 %5178
      %5226 = vrot.lane.b32.xlu0 %v4737, 96
      %v5227 = vpop.permute.xlu0 %5226
      %5228 = vrot.lane.b32.xlu0 %v4738, 96
      %v5229 = vpop.permute.xlu0 %5228
      %5230 = vrot.lane.b32.xlu0 %v4739, 96
      %v5231 = vpop.permute.xlu0 %5230
      %5232 = vrot.lane.b32.xlu0 %v4740, 96
      %v5233 = vpop.permute.xlu0 %5232
      %5234 = vrot.lane.b32.xlu0 %v4741, 96
      %v5235 = vpop.permute.xlu0 %5234
      %5236 = vrot.lane.b32.xlu0 %v4742, 96
      %v5237 = vpop.permute.xlu0 %5236
      %5238 = vrot.lane.b32.xlu0 %v4743, 96
      %v5239 = vpop.permute.xlu0 %5238
      %5240 = vrot.lane.b32.xlu0 %v4744, 96
      %v5241 = vpop.permute.xlu0 %5240
      %5242 = vrot.lane.b32.xlu0 %v4745, 96
      %v5243 = vpop.permute.xlu0 %5242
      %5244 = vrot.lane.b32.xlu0 %v4746, 96
      %v5245 = vpop.permute.xlu0 %5244
      %5246 = vrot.lane.b32.xlu0 %v4747, 96
      %v5247 = vpop.permute.xlu0 %5246
      %5248 = vrot.lane.b32.xlu0 %v4748, 96
      %v5249 = vpop.permute.xlu0 %5248
      %5250 = vrot.lane.b32.xlu0 %v4749, 96
      %v5251 = vpop.permute.xlu0 %5250
      %5252 = vrot.lane.b32.xlu0 %v4750, 96
      %v5253 = vpop.permute.xlu0 %5252
      %5254 = vrot.lane.b32.xlu0 %v4751, 96
      %v5255 = vpop.permute.xlu0 %5254
      %5256 = vrot.lane.b32.xlu0 %v4752, 96
      %v5257 = vpop.permute.xlu0 %5256
      %5258 = vrot.lane.b32.xlu0 %v4753, 96
      %v5259 = vpop.permute.xlu0 %5258
      %5260 = vrot.lane.b32.xlu0 %v4754, 96
      %v5261 = vpop.permute.xlu0 %5260
      %5262 = vrot.lane.b32.xlu0 %v4755, 96
      %v5263 = vpop.permute.xlu0 %5262
      %5264 = vrot.lane.b32.xlu0 %v4756, 96
      %v5265 = vpop.permute.xlu0 %5264
      %5266 = vrot.lane.b32.xlu0 %v4757, 96
      %v5267 = vpop.permute.xlu0 %5266
      %5268 = vrot.lane.b32.xlu0 %v4758, 96
      %v5269 = vpop.permute.xlu0 %5268
      %5270 = vrot.lane.b32.xlu0 %v4759, 96
      %v5271 = vpop.permute.xlu0 %5270
      %v5295 = vsel %vm1826, %v4616, %v4807
      %v5296 = vsel %vm1826, %v4617, %v4809
      %v5297 = vsel %vm1826, %v4618, %v4811
      %v5298 = vsel %vm1826, %v4619, %v4813
      %v5299 = vsel %vm1826, %v4620, %v4815
      %v5300 = vsel %vm1826, %v4621, %v4817
      %v5301 = vsel %vm1826, %v4622, %v4819
      %v5302 = vsel %vm1826, %v4623, %v4821
      %v5303 = vsel %vm1826, %v4624, %v4823
      %v5304 = vsel %vm1826, %v4625, %v4825
      %v5305 = vsel %vm1826, %v4626, %v4827
      %v5306 = vsel %vm1826, %v4627, %v4829
      %v5307 = vsel %vm1826, %v4628, %v4831
      %v5308 = vsel %vm1826, %v4629, %v4833
      %v5309 = vsel %vm1826, %v4630, %v4835
      %v5310 = vsel %vm1826, %v4631, %v4837
      %v5311 = vsel %vm1826, %v4632, %v4839
      %v5312 = vsel %vm1826, %v4633, %v4841
      %v5313 = vsel %vm1826, %v4634, %v4843
      %v5314 = vsel %vm1826, %v4635, %v4845
      %v5315 = vsel %vm1826, %v4636, %v4847
      %v5316 = vsel %vm1826, %v4637, %v4849
      %v5317 = vsel %vm1826, %v4638, %v4851
      %v5318 = vsel %vm3540, %v5295, %v4899
      %v5319 = vsel %vm3540, %v5296, %v4901
      %v5320 = vsel %vm3540, %v5297, %v4903
      %v5321 = vsel %vm3540, %v5298, %v4905
      %v5322 = vsel %vm3540, %v5299, %v4907
      %v5323 = vsel %vm3540, %v5300, %v4909
      %v5324 = vsel %vm3540, %v5301, %v4911
      %v5325 = vsel %vm3540, %v5302, %v4913
      %v5326 = vsel %vm3540, %v5303, %v4915
      %v5327 = vsel %vm3540, %v5304, %v4917
      %v5328 = vsel %vm3540, %v5305, %v4919
      %v5329 = vsel %vm3540, %v5306, %v4921
      %v5330 = vsel %vm3540, %v5307, %v4923
      %v5331 = vsel %vm3540, %v5308, %v4925
      %v5332 = vsel %vm3540, %v5309, %v4927
      %v5333 = vsel %vm3540, %v5310, %v4929
      %v5334 = vsel %vm3540, %v5311, %v4931
      %v5335 = vsel %vm3540, %v5312, %v4933
      %v5336 = vsel %vm3540, %v5313, %v4935
      %v5337 = vsel %vm3540, %v5314, %v4937
      %v5338 = vsel %vm3540, %v5315, %v4939
      %v5339 = vsel %vm3540, %v5316, %v4941
      %v5340 = vsel %vm3540, %v5317, %v4943
      %v5341 = vsel %vm3568, %v5318, %v4971
      %v5342 = vsel %vm3568, %v5319, %v4973
      %v5343 = vsel %vm3568, %v5320, %v4975
      %v5344 = vsel %vm3568, %v5321, %v4977
      %v5345 = vsel %vm3568, %v5322, %v4979
      %v5346 = vsel %vm3568, %v5323, %v4981
      %v5347 = vsel %vm3568, %v5324, %v4983
      %v5348 = vsel %vm3568, %v5325, %v4985
      %v5349 = vsel %vm3568, %v5326, %v4987
      %v5350 = vsel %vm3568, %v5327, %v4989
      %v5351 = vsel %vm3568, %v5328, %v4991
      %v5352 = vsel %vm3568, %v5329, %v4993
      %v5353 = vsel %vm3568, %v5330, %v4995
      %v5354 = vsel %vm3568, %v5331, %v4997
      %v5355 = vsel %vm3568, %v5332, %v4999
      %v5356 = vsel %vm3568, %v5333, %v5001
      %v5357 = vsel %vm3568, %v5334, %v5003
      %v5358 = vsel %vm3568, %v5335, %v5005
      %v5359 = vsel %vm3568, %v5336, %v5007
      %v5360 = vsel %vm3568, %v5337, %v5009
      %v5361 = vsel %vm3568, %v5338, %v5011
      %v5362 = vsel %vm3568, %v5339, %v5013
      %v5363 = vsel %vm3568, %v5340, %v5015
      %v5364 = vsel %vm1826, %v4688, %v5063
      %v5365 = vsel %vm1826, %v4689, %v5065
      %v5366 = vsel %vm1826, %v4690, %v5067
      %v5367 = vsel %vm1826, %v4691, %v5069
      %v5368 = vsel %vm1826, %v4692, %v5071
      %v5369 = vsel %vm1826, %v4693, %v5073
      %v5370 = vsel %vm1826, %v4694, %v5075
      %v5371 = vsel %vm1826, %v4695, %v5077
      %v5372 = vsel %vm1826, %v4696, %v5079
      %v5373 = vsel %vm1826, %v4697, %v5081
      %v5374 = vsel %vm1826, %v4698, %v5083
      %v5375 = vsel %vm1826, %v4699, %v5085
      %v5376 = vsel %vm1826, %v4700, %v5087
      %v5377 = vsel %vm1826, %v4701, %v5089
      %v5378 = vsel %vm1826, %v4702, %v5091
      %v5379 = vsel %vm1826, %v4703, %v5093
      %v5380 = vsel %vm1826, %v4704, %v5095
      %v5381 = vsel %vm1826, %v4705, %v5097
      %v5382 = vsel %vm1826, %v4706, %v5099
      %v5383 = vsel %vm1826, %v4707, %v5101
      %v5384 = vsel %vm1826, %v4708, %v5103
      %v5385 = vsel %vm1826, %v4709, %v5105
      %v5386 = vsel %vm1826, %v4710, %v5107
      %v5387 = vsel %vm3540, %v5364, %v5135
      %v5388 = vsel %vm3540, %v5365, %v5137
      %v5389 = vsel %vm3540, %v5366, %v5139
      %v5390 = vsel %vm3540, %v5367, %v5141
      %v5391 = vsel %vm3540, %v5368, %v5143
      %v5392 = vsel %vm3540, %v5369, %v5145
      %v5393 = vsel %vm3540, %v5370, %v5147
      %v5394 = vsel %vm3540, %v5371, %v5149
      %v5395 = vsel %vm3540, %v5372, %v5151
      %v5396 = vsel %vm3540, %v5373, %v5153
      %v5397 = vsel %vm3540, %v5374, %v5155
      %v5398 = vsel %vm3540, %v5375, %v5157
      %v5399 = vsel %vm3540, %v5376, %v5159
      %v5400 = vsel %vm3540, %v5377, %v5161
      %v5401 = vsel %vm3540, %v5378, %v5163
      %v5402 = vsel %vm3540, %v5379, %v5165
      %v5403 = vsel %vm3540, %v5380, %v5167
      %v5404 = vsel %vm3540, %v5381, %v5169
      %v5405 = vsel %vm3540, %v5382, %v5171
      %v5406 = vsel %vm3540, %v5383, %v5173
      %v5407 = vsel %vm3540, %v5384, %v5175
      %v5408 = vsel %vm3540, %v5385, %v5177
      %v5409 = vsel %vm3540, %v5386, %v5179
      %v5410 = vsel %vm3568, %v5387, %v5227
      %v5411 = vsel %vm3568, %v5388, %v5229
      %v5412 = vsel %vm3568, %v5389, %v5231
      %v5413 = vsel %vm3568, %v5390, %v5233
      %v5414 = vsel %vm3568, %v5391, %v5235
      %v5415 = vsel %vm3568, %v5392, %v5237
      %v5416 = vsel %vm3568, %v5393, %v5239
      %v5417 = vsel %vm3568, %v5394, %v5241
      %v5418 = vsel %vm3568, %v5395, %v5243
      %v5419 = vsel %vm3568, %v5396, %v5245
      %v5420 = vsel %vm3568, %v5397, %v5247
      %v5421 = vsel %vm3568, %v5398, %v5249
      %v5422 = vsel %vm3568, %v5399, %v5251
      %v5423 = vsel %vm3568, %v5400, %v5253
      %v5424 = vsel %vm3568, %v5401, %v5255
      %v5425 = vsel %vm3568, %v5402, %v5257
      %v5426 = vsel %vm3568, %v5403, %v5259
      %v5427 = vsel %vm3568, %v5404, %v5261
      %v5428 = vsel %vm3568, %v5405, %v5263
      %v5429 = vsel %vm3568, %v5406, %v5265
      %v5430 = vsel %vm3568, %v5407, %v5267
      %v5431 = vsel %vm3568, %v5408, %v5269
      %v5432 = vsel %vm3568, %v5409, %v5271
      %v5433 = vld [vmem:[%s6] sm:$0xff]
      %v5434 = vld [vmem:[%s6 + $0x8] sm:$0xff]
      %v5435 = vld [vmem:[%s6 + $0x10] sm:$0xff]
      %v5436 = vld [vmem:[%s6 + $0x18] sm:$0xff]
      %v5437 = vld [vmem:[%s6 + $0x20] sm:$0xff]
      %v5438 = vld [vmem:[%s6 + $0x28] sm:$0xff]
      %v5439 = vld [vmem:[%s6 + $0x30] sm:$0xff]
      %v5440 = vld [vmem:[%s6 + $0x38] sm:$0xff]
      %v5441 = vld [vmem:[%s6 + $0x40] sm:$0xff]
      %v5442 = vld [vmem:[%s6 + $0x48] sm:$0xff]
      %v5443 = vld [vmem:[%s6 + $0x50] sm:$0xff]
      %v5444 = vld [vmem:[%s6 + $0x58] sm:$0xff]
      %v5445 = vld [vmem:[%s6 + $0x60] sm:$0xff]
      %v5446 = vld [vmem:[%s6 + $0x68] sm:$0xff]
      %v5447 = vld [vmem:[%s6 + $0x70] sm:$0xff]
      %v5448 = vld [vmem:[%s6 + $0x78] sm:$0xff]
      %v5449 = vld [vmem:[%s6 + $0x80] sm:$0xff]
      %v5450 = vld [vmem:[%s6 + $0x88] sm:$0xff]
      %v5451 = vld [vmem:[%s6 + $0x90] sm:$0xff]
      %v5452 = vld [vmem:[%s6 + $0x98] sm:$0xff]
      %v5453 = vld [vmem:[%s6 + $0xa0] sm:$0xff]
      %v5454 = vld [vmem:[%s6 + $0xa8] sm:$0xff]
      %v5455 = vld [vmem:[%s6 + $0xb0] sm:$0xff]
      %v5456 = vld [vmem:[%s6 + $0xb8] sm:$0xff]
      %v5457 = vld [vmem:[%s6 + $0xc0] sm:$0xff]
      %v5458 = vld [vmem:[%s6 + $0xc8] sm:$0xff]
      %v5459 = vld [vmem:[%s6 + $0xd0] sm:$0xff]
      %v5460 = vld [vmem:[%s6 + $0xd8] sm:$0xff]
      %v5461 = vld [vmem:[%s6 + $0xe0] sm:$0xff]
      %v5462 = vld [vmem:[%s6 + $0xe8] sm:$0xff]
      %v5463 = vld [vmem:[%s6 + $0xf0] sm:$0xff]
      %v5464 = vld [vmem:[%s6 + $0xf8] sm:$0xff]
      %v5465 = vld [vmem:[%s6 + $0x100] sm:$0xff]
      %v5466 = vld [vmem:[%s6 + $0x108] sm:$0xff]
      %v5467 = vld [vmem:[%s6 + $0x110] sm:$0xff]
      %v5468 = vld [vmem:[%s6 + $0x118] sm:$0xff]
      %v5469 = vld [vmem:[%s7] sm:$0x1]
      %v5471 = vlaneseq
      %v5472 = vshrl.u32 %v5471, 7
      %v5473 = vsub.s32 0, %v5472
      %v5474 = vrot.slane %v5469, %v5473
      %v5477 = vsel %vm1826, %v4760, 0
      %v5480 = vsel %vm1826, %v4761, 0
      %v5483 = vsel %vm1826, %v4762, 0
      %v5486 = vsel %vm1826, %v4763, 0
      %v5489 = vsel %vm1826, %v4764, 0
      %v5492 = vsel %vm1826, %v4765, 0
      %v5495 = vsel %vm1826, %v4766, 0
      %v5498 = vsel %vm1826, %v4767, 0
      %v5501 = vsel %vm1826, %v4768, 0
      %v5504 = vsel %vm1826, %v4769, 0
      %v5507 = vsel %vm1826, %v4770, 0
      %v5510 = vsel %vm1826, %v4771, 0
      %v5513 = vsel %vm1826, %v4772, 0
      %v5516 = vsel %vm1826, %v4773, 0
      %v5519 = vsel %vm1826, %v4774, 0
      %v5522 = vsel %vm1826, %v4775, 0
      %v5525 = vsel %vm1826, %v4776, 0
      %v5528 = vsel %vm1826, %v4777, 0
      %v5531 = vsel %vm1826, %v4778, 0
      %v5534 = vsel %vm1826, %v4779, 0
      %v5537 = vsel %vm1826, %v4780, 0
      %v5540 = vsel %vm1826, %v4781, 0
      %v5543 = vsel %vm1826, %v4782, 0
      %5545 = vmatprep.subr.mxu0 0.0
      %5546 = vmatpush1.msra.mxu0 %v5433
      %5547 = vmatprep.subr.mxu0 0.0
      %5548 = vmatpush1.msra.mxu0 %v5434
      %5549 = vmatprep.subr.mxu0 0.0
      %5550 = vmatpush1.msra.mxu0 %v5435
      %5551 = vmatprep.subr.mxu0 0.0
      %5552 = vmatpush1.msra.mxu0 %v5436
      %5553 = vmatprep.subr.mxu0 0.0
      %5554 = vmatpush1.msra.mxu0 %v5437
      %5555 = vmatprep.subr.mxu0 0.0
      %5556 = vmatpush1.msra.mxu0 %v5438
      %5557 = vmatprep.subr.mxu0 0.0
      %5558 = vmatpush1.msra.mxu0 %v5439
      %5559 = vmatprep.subr.mxu0 0.0
      %5560 = vmatpush1.msra.mxu0 %v5440
      %5561 = vmatprep.subr.mxu0 0.0
      %5562 = vmatpush1.msra.mxu0 %v5441
      %5563 = vmatprep.subr.mxu0 0.0
      %5564 = vmatpush1.msra.mxu0 %v5442
      %5565 = vmatprep.subr.mxu0 0.0
      %5566 = vmatpush1.msra.mxu0 %v5443
      %5567 = vmatprep.subr.mxu0 0.0
      %5568 = vmatpush1.msra.mxu0 %v5444
      %5569 = vmatprep.subr.mxu0 0.0
      %5570 = vmatpush1.msra.mxu0 %v5445
      %5571 = vmatprep.subr.mxu0 0.0
      %5572 = vmatpush1.msra.mxu0 %v5446
      %5573 = vmatprep.subr.mxu0 0.0
      %5574 = vmatpush1.msra.mxu0 %v5447
      %5575 = vmatprep.subr.mxu0 0.0
      %5576 = vmatpush1.msra.mxu0 %v5448
      %5577 = vmatprep.subr.mxu0 0.0
      %5578 = vmatpush1.msra.mxu0 %v5449
      %5579 = vmatprep.subr.mxu0 0.0
      %5580 = vmatpush1.msra.mxu0 %v5450
      %5581 = vmatprep.subr.mxu0 0.0
      %5582 = vmatpush1.msra.mxu0 %v5451
      %5583 = vmatprep.subr.mxu0 0.0
      %5584 = vmatpush1.msra.mxu0 %v5452
      %5585 = vmatprep.subr.mxu0 0.0
      %5586 = vmatpush1.msra.mxu0 %v5453
      %5587 = vmatprep.subr.mxu0 0.0
      %5588 = vmatpush1.msra.mxu0 %v5454
      %5589 = vmatprep.subr.mxu0 0.0
      %5590 = vmatpush1.msra.mxu0 %v5455
      %5591 = vmatprep.subr.mxu0 0.0
      %5592 = vmatpush1.msra.mxu0 %v5456
      %5593 = vmatprep.subr.mxu0 0.0
      %5594 = vmatpush1.msra.mxu0 %v5457
      %5595 = vmatprep.subr.mxu0 0.0
      %5596 = vmatpush1.msra.mxu0 %v5458
      %5597 = vmatprep.subr.mxu0 0.0
      %5598 = vmatpush1.msra.mxu0 %v5459
      %5599 = vmatprep.subr.mxu0 0.0
      %5600 = vmatpush1.msra.mxu0 %v5460
      %5601 = vmatprep.subr.mxu0 0.0
      %5602 = vmatpush1.msra.mxu0 %v5461
      %5603 = vmatprep.subr.mxu0 0.0
      %5604 = vmatpush1.msra.mxu0 %v5462
      %5605 = vmatprep.subr.mxu0 0.0
      %5606 = vmatpush1.msra.mxu0 %v5463
      %5607 = vmatprep.subr.mxu0 0.0
      %5608 = vmatpush1.msra.mxu0 %v5464
      %5609 = vmatprep.mubr.f32.mxu0 %v5410
      %5610 = vmatmul.mubr.f32.gmra.mrb[0].mxu0 %v5341
      %v5611 = vpop.f32.mrb[0].mxu0
      %v5612 = vadd.f32 %v5474, %v5611
      %v5613 = vpop.f32.mrb[0].mxu0
      %5614 = vmatprep.mubr.f32.mxu0 %v5411
      %5615 = vmatmul.mubr.f32.gmra.mrb[0].mxu0 %v5342
      %v5616 = vpop.f32.mrb[0].mxu0
      %v5617 = vadd.f32 %v5474, %v5616
      %v5618 = vpop.f32.mrb[0].mxu0
      %5619 = vmatprep.mubr.f32.mxu0 %v5412
      %5620 = vmatmul.mubr.f32.gmra.mrb[0].mxu0 %v5343
      %v5621 = vpop.f32.mrb[0].mxu0
      %v5622 = vadd.f32 %v5474, %v5621
      %v5623 = vpop.f32.mrb[0].mxu0
      %5624 = vmatprep.mubr.f32.mxu0 %v5413
      %5625 = vmatmul.mubr.f32.gmra.mrb[0].mxu0 %v5344
      %v5626 = vpop.f32.mrb[0].mxu0
      %v5627 = vadd.f32 %v5474, %v5626
      %v5628 = vpop.f32.mrb[0].mxu0
      %5629 = vmatprep.mubr.f32.mxu0 %v5414
      %5630 = vmatmul.mubr.f32.gmra.mrb[0].mxu0 %v5345
      %v5631 = vpop.f32.mrb[0].mxu0
      %v5632 = vadd.f32 %v5474, %v5631
      %v5633 = vpop.f32.mrb[0].mxu0
      %5634 = vmatprep.mubr.f32.mxu0 %v5415
      %5635 = vmatmul.mubr.f32.gmra.mrb[0].mxu0 %v5346
      %v5636 = vpop.f32.mrb[0].mxu0
      %v5637 = vadd.f32 %v5474, %v5636
      %v5638 = vpop.f32.mrb[0].mxu0
      %5639 = vmatprep.mubr.f32.mxu0 %v5416
      %5640 = vmatmul.mubr.f32.gmra.mrb[0].mxu0 %v5347
      %v5641 = vpop.f32.mrb[0].mxu0
      %v5642 = vadd.f32 %v5474, %v5641
      %v5643 = vpop.f32.mrb[0].mxu0
      %5644 = vmatprep.mubr.f32.mxu0 %v5417
      %5645 = vmatmul.mubr.f32.gmra.mrb[0].mxu0 %v5348
      %v5646 = vpop.f32.mrb[0].mxu0
      %v5647 = vadd.f32 %v5474, %v5646
      %v5648 = vpop.f32.mrb[0].mxu0
      %5649 = vmatprep.mubr.f32.mxu0 %v5418
      %5650 = vmatmul.mubr.f32.gmra.mrb[0].mxu0 %v5349
      %v5651 = vpop.f32.mrb[0].mxu0
      %v5652 = vadd.f32 %v5474, %v5651
      %v5653 = vpop.f32.mrb[0].mxu0
      %5654 = vmatprep.mubr.f32.mxu0 %v5419
      %5655 = vmatmul.mubr.f32.gmra.mrb[0].mxu0 %v5350
      %v5656 = vpop.f32.mrb[0].mxu0
      %v5657 = vadd.f32 %v5474, %v5656
      %v5658 = vpop.f32.mrb[0].mxu0
      %5659 = vmatprep.mubr.f32.mxu0 %v5420
      %5660 = vmatmul.mubr.f32.gmra.mrb[0].mxu0 %v5351
      %v5661 = vpop.f32.mrb[0].mxu0
      %v5662 = vadd.f32 %v5474, %v5661
      %v5663 = vpop.f32.mrb[0].mxu0
      %5664 = vmatprep.mubr.f32.mxu0 %v5421
      %5665 = vmatmul.mubr.f32.gmra.mrb[0].mxu0 %v5352
      %v5666 = vpop.f32.mrb[0].mxu0
      %v5667 = vadd.f32 %v5474, %v5666
      %v5668 = vpop.f32.mrb[0].mxu0
      %5669 = vmatprep.mubr.f32.mxu0 %v5422
      %5670 = vmatmul.mubr.f32.gmra.mrb[0].mxu0 %v5353
      %v5671 = vpop.f32.mrb[0].mxu0
      %v5672 = vadd.f32 %v5474, %v5671
      %v5673 = vpop.f32.mrb[0].mxu0
      %5674 = vmatprep.mubr.f32.mxu0 %v5423
      %5675 = vmatmul.mubr.f32.gmra.mrb[0].mxu0 %v5354
      %v5676 = vpop.f32.mrb[0].mxu0
      %v5677 = vadd.f32 %v5474, %v5676
      %v5678 = vpop.f32.mrb[0].mxu0
      %5679 = vmatprep.mubr.f32.mxu0 %v5424
      %5680 = vmatmul.mubr.f32.gmra.mrb[0].mxu0 %v5355
      %v5681 = vpop.f32.mrb[0].mxu0
      %v5682 = vadd.f32 %v5474, %v5681
      %v5683 = vpop.f32.mrb[0].mxu0
      %5684 = vmatprep.mubr.f32.mxu0 %v5425
      %5685 = vmatmul.mubr.f32.gmra.mrb[0].mxu0 %v5356
      %v5686 = vpop.f32.mrb[0].mxu0
      %v5687 = vadd.f32 %v5474, %v5686
      %v5688 = vpop.f32.mrb[0].mxu0
      %5689 = vmatprep.mubr.f32.mxu0 %v5426
      %5690 = vmatmul.mubr.f32.gmra.mrb[0].mxu0 %v5357
      %v5691 = vpop.f32.mrb[0].mxu0
      %v5692 = vadd.f32 %v5474, %v5691
      %v5693 = vpop.f32.mrb[0].mxu0
      %5694 = vmatprep.mubr.f32.mxu0 %v5427
      %5695 = vmatmul.mubr.f32.gmra.mrb[0].mxu0 %v5358
      %v5696 = vpop.f32.mrb[0].mxu0
      %v5697 = vadd.f32 %v5474, %v5696
      %v5698 = vpop.f32.mrb[0].mxu0
      %5699 = vmatprep.mubr.f32.mxu0 %v5428
      %5700 = vmatmul.mubr.f32.gmra.mrb[0].mxu0 %v5359
      %v5701 = vpop.f32.mrb[0].mxu0
      %v5702 = vadd.f32 %v5474, %v5701
      %v5703 = vpop.f32.mrb[0].mxu0
      %5704 = vmatprep.mubr.f32.mxu0 %v5429
      %5705 = vmatmul.mubr.f32.gmra.mrb[0].mxu0 %v5360
      %v5706 = vpop.f32.mrb[0].mxu0
      %v5707 = vadd.f32 %v5474, %v5706
      %v5708 = vpop.f32.mrb[0].mxu0
      %5709 = vmatprep.mubr.f32.mxu0 %v5430
      %5710 = vmatmul.mubr.f32.gmra.mrb[0].mxu0 %v5361
      %v5711 = vpop.f32.mrb[0].mxu0
      %v5712 = vadd.f32 %v5474, %v5711
      %v5713 = vpop.f32.mrb[0].mxu0
      %5714 = vmatprep.mubr.f32.mxu0 %v5431
      %5715 = vmatmul.mubr.f32.gmra.mrb[0].mxu0 %v5362
      %v5716 = vpop.f32.mrb[0].mxu0
      %v5717 = vadd.f32 %v5474, %v5716
      %v5718 = vpop.f32.mrb[0].mxu0
      %5719 = vmatprep.mubr.f32.mxu0 %v5432
      %5720 = vmatmul.mubr.f32.gmra.mrb[0].mxu0 %v5363
      %v5721 = vpop.f32.mrb[0].mxu0
      %v5722 = vadd.f32 %v5474, %v5721
      %v5723 = vpop.f32.mrb[0].mxu0
      %5724 = vdwg.mxu0
      %5725 = vmatprep.subr.mxu0 0.0
      %5726 = vmatpush1.msra.mxu0 %v5465
      %5727 = vmatprep.subr.mxu0 0.0
      %5728 = vmatpush1.msra.mxu0 %v5466
      %5729 = vmatprep.subr.mxu0 0.0
      %5730 = vmatpush1.msra.mxu0 %v5467
      %5731 = vmatprep.subr.mxu0 0.0
      %5732 = vmatpush1.msra.mxu0 %v5468
      %5733 = vmatprep.subr.mxu0 0.0
      %5734 = vmatpush1.msra.mxu0 0.0
      %5735 = vmatprep.subr.mxu0 0.0
      %5736 = vmatpush1.msra.mxu0 0.0
      %5737 = vmatprep.subr.mxu0 0.0
      %5738 = vmatpush1.msra.mxu0 0.0
      %5739 = vmatprep.subr.mxu0 0.0
      %5740 = vmatpush1.msra.mxu0 0.0
      %5741 = vmatprep.subr.mxu0 0.0
      %5742 = vmatpush1.msra.mxu0 0.0
      %5743 = vmatprep.subr.mxu0 0.0
      %5744 = vmatpush1.msra.mxu0 0.0
      %5745 = vmatprep.subr.mxu0 0.0
      %5746 = vmatpush1.msra.mxu0 0.0
      %5747 = vmatprep.subr.mxu0 0.0
      %5748 = vmatpush1.msra.mxu0 0.0
      %5749 = vmatprep.subr.mxu0 0.0
      %5750 = vmatpush1.msra.mxu0 0.0
      %5751 = vmatprep.subr.mxu0 0.0
      %5752 = vmatpush1.msra.mxu0 0.0
      %5753 = vmatprep.subr.mxu0 0.0
      %5754 = vmatpush1.msra.mxu0 0.0
      %5755 = vmatprep.subr.mxu0 0.0
      %5756 = vmatpush1.msra.mxu0 0.0
      %5757 = vmatprep.subr.mxu0 0.0
      %5758 = vmatpush1.msra.mxu0 0.0
      %5759 = vmatprep.subr.mxu0 0.0
      %5760 = vmatpush1.msra.mxu0 0.0
      %5761 = vmatprep.subr.mxu0 0.0
      %5762 = vmatpush1.msra.mxu0 0.0
      %5763 = vmatprep.subr.mxu0 0.0
      %5764 = vmatpush1.msra.mxu0 0.0
      %5765 = vmatprep.subr.mxu0 0.0
      %5766 = vmatpush1.msra.mxu0 0.0
      %5767 = vmatprep.subr.mxu0 0.0
      %5768 = vmatpush1.msra.mxu0 0.0
      %5769 = vmatprep.subr.mxu0 0.0
      %5770 = vmatpush1.msra.mxu0 0.0
      %5771 = vmatprep.subr.mxu0 0.0
      %5772 = vmatpush1.msra.mxu0 0.0
      %5773 = vmatprep.subr.mxu0 0.0
      %5774 = vmatpush1.msra.mxu0 0.0
      %5775 = vmatprep.subr.mxu0 0.0
      %5776 = vmatpush1.msra.mxu0 0.0
      %5777 = vmatprep.subr.mxu0 0.0
      %5778 = vmatpush1.msra.mxu0 0.0
      %5779 = vmatprep.subr.mxu0 0.0
      %5780 = vmatpush1.msra.mxu0 0.0
      %5781 = vmatprep.subr.mxu0 0.0
      %5782 = vmatpush1.msra.mxu0 0.0
      %5783 = vmatprep.subr.mxu0 0.0
      %5784 = vmatpush1.msra.mxu0 0.0
      %5785 = vmatprep.subr.mxu0 0.0
      %5786 = vmatpush1.msra.mxu0 0.0
      %5787 = vmatprep.subr.mxu0 0.0
      %5788 = vmatpush1.msra.mxu0 0.0
      %5789 = vmatprep.mubr.f32.mxu0 0.0
      %5790 = vmatmul.mubr.f32.gmra.mrb[0].mxu0 %v5477
      %v5791 = vpop.f32.mrb[0].mxu0
      %v5792 = vadd.f32 %v5612, %v5791
      %v5793 = vpop.f32.mrb[0].mxu0
      %5794 = vmatprep.mubr.f32.mxu0 0.0
      %5795 = vmatmul.mubr.f32.gmra.mrb[0].mxu0 %v5480
      %v5796 = vpop.f32.mrb[0].mxu0
      %v5797 = vadd.f32 %v5617, %v5796
      %v5798 = vpop.f32.mrb[0].mxu0
      %5799 = vmatprep.mubr.f32.mxu0 0.0
      %5800 = vmatmul.mubr.f32.gmra.mrb[0].mxu0 %v5483
      %v5801 = vpop.f32.mrb[0].mxu0
      %v5802 = vadd.f32 %v5622, %v5801
      %v5803 = vpop.f32.mrb[0].mxu0
      %5804 = vmatprep.mubr.f32.mxu0 0.0
      %5805 = vmatmul.mubr.f32.gmra.mrb[0].mxu0 %v5486
      %v5806 = vpop.f32.mrb[0].mxu0
      %v5807 = vadd.f32 %v5627, %v5806
      %v5808 = vpop.f32.mrb[0].mxu0
      %5809 = vmatprep.mubr.f32.mxu0 0.0
      %5810 = vmatmul.mubr.f32.gmra.mrb[0].mxu0 %v5489
      %v5811 = vpop.f32.mrb[0].mxu0
      %v5812 = vadd.f32 %v5632, %v5811
      %v5813 = vpop.f32.mrb[0].mxu0
      %5814 = vmatprep.mubr.f32.mxu0 0.0
      %5815 = vmatmul.mubr.f32.gmra.mrb[0].mxu0 %v5492
      %v5816 = vpop.f32.mrb[0].mxu0
      %v5817 = vadd.f32 %v5637, %v5816
      %v5818 = vpop.f32.mrb[0].mxu0
      %5819 = vmatprep.mubr.f32.mxu0 0.0
      %5820 = vmatmul.mubr.f32.gmra.mrb[0].mxu0 %v5495
      %v5821 = vpop.f32.mrb[0].mxu0
      %v5822 = vadd.f32 %v5642, %v5821
      %v5823 = vpop.f32.mrb[0].mxu0
      %5824 = vmatprep.mubr.f32.mxu0 0.0
      %5825 = vmatmul.mubr.f32.gmra.mrb[0].mxu0 %v5498
      %v5826 = vpop.f32.mrb[0].mxu0
      %v5827 = vadd.f32 %v5647, %v5826
      %v5828 = vpop.f32.mrb[0].mxu0
      %5829 = vmatprep.mubr.f32.mxu0 0.0
      %5830 = vmatmul.mubr.f32.gmra.mrb[0].mxu0 %v5501
      %v5831 = vpop.f32.mrb[0].mxu0
      %v5832 = vadd.f32 %v5652, %v5831
      %v5833 = vpop.f32.mrb[0].mxu0
      %5834 = vmatprep.mubr.f32.mxu0 0.0
      %5835 = vmatmul.mubr.f32.gmra.mrb[0].mxu0 %v5504
      %v5836 = vpop.f32.mrb[0].mxu0
      %v5837 = vadd.f32 %v5657, %v5836
      %v5838 = vpop.f32.mrb[0].mxu0
      %5839 = vmatprep.mubr.f32.mxu0 0.0
      %5840 = vmatmul.mubr.f32.gmra.mrb[0].mxu0 %v5507
      %v5841 = vpop.f32.mrb[0].mxu0
      %v5842 = vadd.f32 %v5662, %v5841
      %v5843 = vpop.f32.mrb[0].mxu0
      %5844 = vmatprep.mubr.f32.mxu0 0.0
      %5845 = vmatmul.mubr.f32.gmra.mrb[0].mxu0 %v5510
      %v5846 = vpop.f32.mrb[0].mxu0
      %v5847 = vadd.f32 %v5667, %v5846
      %v5848 = vpop.f32.mrb[0].mxu0
      %5849 = vmatprep.mubr.f32.mxu0 0.0
      %5850 = vmatmul.mubr.f32.gmra.mrb[0].mxu0 %v5513
      %v5851 = vpop.f32.mrb[0].mxu0
      %v5852 = vadd.f32 %v5672, %v5851
      %v5853 = vpop.f32.mrb[0].mxu0
      %5854 = vmatprep.mubr.f32.mxu0 0.0
      %5855 = vmatmul.mubr.f32.gmra.mrb[0].mxu0 %v5516
      %v5856 = vpop.f32.mrb[0].mxu0
      %v5857 = vadd.f32 %v5677, %v5856
      %v5858 = vpop.f32.mrb[0].mxu0
      %5859 = vmatprep.mubr.f32.mxu0 0.0
      %5860 = vmatmul.mubr.f32.gmra.mrb[0].mxu0 %v5519
      %v5861 = vpop.f32.mrb[0].mxu0
      %v5862 = vadd.f32 %v5682, %v5861
      %v5863 = vpop.f32.mrb[0].mxu0
      %5864 = vmatprep.mubr.f32.mxu0 0.0
      %5865 = vmatmul.mubr.f32.gmra.mrb[0].mxu0 %v5522
      %v5866 = vpop.f32.mrb[0].mxu0
      %v5867 = vadd.f32 %v5687, %v5866
      %v5868 = vpop.f32.mrb[0].mxu0
      %5869 = vmatprep.mubr.f32.mxu0 0.0
      %5870 = vmatmul.mubr.f32.gmra.mrb[0].mxu0 %v5525
      %v5871 = vpop.f32.mrb[0].mxu0
      %v5872 = vadd.f32 %v5692, %v5871
      %v5873 = vpop.f32.mrb[0].mxu0
      %5874 = vmatprep.mubr.f32.mxu0 0.0
      %5875 = vmatmul.mubr.f32.gmra.mrb[0].mxu0 %v5528
      %v5876 = vpop.f32.mrb[0].mxu0
      %v5877 = vadd.f32 %v5697, %v5876
      %v5878 = vpop.f32.mrb[0].mxu0
      %5879 = vmatprep.mubr.f32.mxu0 0.0
      %5880 = vmatmul.mubr.f32.gmra.mrb[0].mxu0 %v5531
      %v5881 = vpop.f32.mrb[0].mxu0
      %v5882 = vadd.f32 %v5702, %v5881
      %v5883 = vpop.f32.mrb[0].mxu0
      %5884 = vmatprep.mubr.f32.mxu0 0.0
      %5885 = vmatmul.mubr.f32.gmra.mrb[0].mxu0 %v5534
      %v5886 = vpop.f32.mrb[0].mxu0
      %v5887 = vadd.f32 %v5707, %v5886
      %v5888 = vpop.f32.mrb[0].mxu0
      %5889 = vmatprep.mubr.f32.mxu0 0.0
      %5890 = vmatmul.mubr.f32.gmra.mrb[0].mxu0 %v5537
      %v5891 = vpop.f32.mrb[0].mxu0
      %v5892 = vadd.f32 %v5712, %v5891
      %v5893 = vpop.f32.mrb[0].mxu0
      %5894 = vmatprep.mubr.f32.mxu0 0.0
      %5895 = vmatmul.mubr.f32.gmra.mrb[0].mxu0 %v5540
      %v5896 = vpop.f32.mrb[0].mxu0
      %v5897 = vadd.f32 %v5717, %v5896
      %v5898 = vpop.f32.mrb[0].mxu0
      %5899 = vmatprep.mubr.f32.mxu0 0.0
      %5900 = vmatmul.mubr.f32.gmra.mrb[0].mxu0 %v5543
      %v5901 = vpop.f32.mrb[0].mxu0
      %v5902 = vadd.f32 %v5722, %v5901
      %v5903 = vpop.f32.mrb[0].mxu0
      %5904 = vdwg.mxu0
      %v5905 = vmax.f32 %v5792, 0.0
      %v5906 = vmax.f32 %v5797, 0.0
      %v5907 = vmax.f32 %v5802, 0.0
      %v5908 = vmax.f32 %v5807, 0.0
      %v5909 = vmax.f32 %v5812, 0.0
      %v5910 = vmax.f32 %v5817, 0.0
      %v5911 = vmax.f32 %v5822, 0.0
      %v5912 = vmax.f32 %v5827, 0.0
      %v5913 = vmax.f32 %v5832, 0.0
      %v5914 = vmax.f32 %v5837, 0.0
      %v5915 = vmax.f32 %v5842, 0.0
      %v5916 = vmax.f32 %v5847, 0.0
      %v5917 = vmax.f32 %v5852, 0.0
      %v5918 = vmax.f32 %v5857, 0.0
      %v5919 = vmax.f32 %v5862, 0.0
      %v5920 = vmax.f32 %v5867, 0.0
      %v5921 = vmax.f32 %v5872, 0.0
      %v5922 = vmax.f32 %v5877, 0.0
      %v5923 = vmax.f32 %v5882, 0.0
      %v5924 = vmax.f32 %v5887, 0.0
      %v5925 = vmax.f32 %v5892, 0.0
      %v5926 = vmax.f32 %v5897, 0.0
      %v5927 = vmax.f32 %v5902, 0.0
      %s5928 = ssub.s32 1, %s398
      %s5929 = smul.u32 %s5928, 18
      %s5930 = ssub.s32 17, %s398
      %s5931 = smul.u32 %s5930, 18
      %v5932 = vstv %s5929
      %vm5933 = vcmp.ge.s32.totalorder %v2230, %v5932
      %vm5934 = vcmp.ge.s32.totalorder %v2231, %v5932
      %vm5935 = vcmp.ge.s32.totalorder %v2232, %v5932
      %vm5936 = vcmp.ge.s32.totalorder %v2233, %v5932
      %vm5937 = vcmp.ge.s32.totalorder %v2234, %v5932
      %vm5938 = vcmp.ge.s32.totalorder %v2235, %v5932
      %vm5939 = vcmp.ge.s32.totalorder %v2236, %v5932
      %vm5940 = vcmp.ge.s32.totalorder %v2237, %v5932
      %vm5941 = vcmp.ge.s32.totalorder %v2238, %v5932
      %vm5942 = vcmp.ge.s32.totalorder %v2239, %v5932
      %vm5943 = vcmp.ge.s32.totalorder %v2240, %v5932
      %vm5944 = vcmp.ge.s32.totalorder %v2241, %v5932
      %vm5945 = vcmp.ge.s32.totalorder %v2242, %v5932
      %vm5946 = vcmp.ge.s32.totalorder %v2243, %v5932
      %vm5947 = vcmp.ge.s32.totalorder %v2244, %v5932
      %vm5948 = vcmp.ge.s32.totalorder %v2245, %v5932
      %vm5949 = vcmp.ge.s32.totalorder %v2246, %v5932
      %vm5950 = vcmp.ge.s32.totalorder %v2247, %v5932
      %vm5951 = vcmp.ge.s32.totalorder %v2248, %v5932
      %vm5952 = vcmp.ge.s32.totalorder %v2249, %v5932
      %vm5953 = vcmp.ge.s32.totalorder %v2250, %v5932
      %vm5954 = vcmp.ge.s32.totalorder %v2251, %v5932
      %vm5955 = vcmp.ge.s32.totalorder %v2252, %v5932
      %v5956 = vstv %s5931
      %vm5957 = vcmp.lt.s32.totalorder %v2230, %v5956
      %vm5958 = vcmp.lt.s32.totalorder %v2231, %v5956
      %vm5959 = vcmp.lt.s32.totalorder %v2232, %v5956
      %vm5960 = vcmp.lt.s32.totalorder %v2233, %v5956
      %vm5961 = vcmp.lt.s32.totalorder %v2234, %v5956
      %vm5962 = vcmp.lt.s32.totalorder %v2235, %v5956
      %vm5963 = vcmp.lt.s32.totalorder %v2236, %v5956
      %vm5964 = vcmp.lt.s32.totalorder %v2237, %v5956
      %vm5965 = vcmp.lt.s32.totalorder %v2238, %v5956
      %vm5966 = vcmp.lt.s32.totalorder %v2239, %v5956
      %vm5967 = vcmp.lt.s32.totalorder %v2240, %v5956
      %vm5968 = vcmp.lt.s32.totalorder %v2241, %v5956
      %vm5969 = vcmp.lt.s32.totalorder %v2242, %v5956
      %vm5970 = vcmp.lt.s32.totalorder %v2243, %v5956
      %vm5971 = vcmp.lt.s32.totalorder %v2244, %v5956
      %vm5972 = vcmp.lt.s32.totalorder %v2245, %v5956
      %vm5973 = vcmp.lt.s32.totalorder %v2246, %v5956
      %vm5974 = vcmp.lt.s32.totalorder %v2247, %v5956
      %vm5975 = vcmp.lt.s32.totalorder %v2248, %v5956
      %vm5976 = vcmp.lt.s32.totalorder %v2249, %v5956
      %vm5977 = vcmp.lt.s32.totalorder %v2250, %v5956
      %vm5978 = vcmp.lt.s32.totalorder %v2251, %v5956
      %vm5979 = vcmp.lt.s32.totalorder %v2252, %v5956
      %vm5980 = vmand %vm5933, %vm5957
      %vm5981 = vmand %vm5934, %vm5958
      %vm5982 = vmand %vm5935, %vm5959
      %vm5983 = vmand %vm5936, %vm5960
      %vm5984 = vmand %vm5937, %vm5961
      %vm5985 = vmand %vm5938, %vm5962
      %vm5986 = vmand %vm5939, %vm5963
      %vm5987 = vmand %vm5940, %vm5964
      %vm5988 = vmand %vm5941, %vm5965
      %vm5989 = vmand %vm5942, %vm5966
      %vm5990 = vmand %vm5943, %vm5967
      %vm5991 = vmand %vm5944, %vm5968
      %vm5992 = vmand %vm5945, %vm5969
      %vm5993 = vmand %vm5946, %vm5970
      %vm5994 = vmand %vm5947, %vm5971
      %vm5995 = vmand %vm5948, %vm5972
      %vm5996 = vmand %vm5949, %vm5973
      %vm5997 = vmand %vm5950, %vm5974
      %vm5998 = vmand %vm5951, %vm5975
      %vm5999 = vmand %vm5952, %vm5976
      %vm6000 = vmand %vm5953, %vm5977
      %vm6001 = vmand %vm5954, %vm5978
      %vm6002 = vmand %vm5955, %vm5979
      %v6003 = vsel %vm5980, 1, 0
      %v6004 = vsel %vm5981, 1, 0
      %v6005 = vsel %vm5982, 1, 0
      %v6006 = vsel %vm5983, 1, 0
      %v6007 = vsel %vm5984, 1, 0
      %v6008 = vsel %vm5985, 1, 0
      %v6009 = vsel %vm5986, 1, 0
      %v6010 = vsel %vm5987, 1, 0
      %v6011 = vsel %vm5988, 1, 0
      %v6012 = vsel %vm5989, 1, 0
      %v6013 = vsel %vm5990, 1, 0
      %v6014 = vsel %vm5991, 1, 0
      %v6015 = vsel %vm5992, 1, 0
      %v6016 = vsel %vm5993, 1, 0
      %v6017 = vsel %vm5994, 1, 0
      %v6018 = vsel %vm5995, 1, 0
      %v6019 = vsel %vm5996, 1, 0
      %v6020 = vsel %vm5997, 1, 0
      %v6021 = vsel %vm5998, 1, 0
      %v6022 = vsel %vm5999, 1, 0
      %v6023 = vsel %vm6000, 1, 0
      %v6024 = vsel %vm6001, 1, 0
      %v6025 = vsel %vm6002, 1, 0
      %vm6026 = vcmp.eq.s32.totalorder %v6003, 1
      %vm6027 = vcmp.eq.s32.totalorder %v6004, 1
      %vm6028 = vcmp.eq.s32.totalorder %v6005, 1
      %vm6029 = vcmp.eq.s32.totalorder %v6006, 1
      %vm6030 = vcmp.eq.s32.totalorder %v6007, 1
      %vm6031 = vcmp.eq.s32.totalorder %v6008, 1
      %vm6032 = vcmp.eq.s32.totalorder %v6009, 1
      %vm6033 = vcmp.eq.s32.totalorder %v6010, 1
      %vm6034 = vcmp.eq.s32.totalorder %v6011, 1
      %vm6035 = vcmp.eq.s32.totalorder %v6012, 1
      %vm6036 = vcmp.eq.s32.totalorder %v6013, 1
      %vm6037 = vcmp.eq.s32.totalorder %v6014, 1
      %vm6038 = vcmp.eq.s32.totalorder %v6015, 1
      %vm6039 = vcmp.eq.s32.totalorder %v6016, 1
      %vm6040 = vcmp.eq.s32.totalorder %v6017, 1
      %vm6041 = vcmp.eq.s32.totalorder %v6018, 1
      %vm6042 = vcmp.eq.s32.totalorder %v6019, 1
      %vm6043 = vcmp.eq.s32.totalorder %v6020, 1
      %vm6044 = vcmp.eq.s32.totalorder %v6021, 1
      %vm6045 = vcmp.eq.s32.totalorder %v6022, 1
      %vm6046 = vcmp.eq.s32.totalorder %v6023, 1
      %vm6047 = vcmp.eq.s32.totalorder %v6024, 1
      %vm6048 = vcmp.eq.s32.totalorder %v6025, 1
      %v6049 = vsel %vm6026, %v5905, 0.0
      %v6050 = vsel %vm6027, %v5906, 0.0
      %v6051 = vsel %vm6028, %v5907, 0.0
      %v6052 = vsel %vm6029, %v5908, 0.0
      %v6053 = vsel %vm6030, %v5909, 0.0
      %v6054 = vsel %vm6031, %v5910, 0.0
      %v6055 = vsel %vm6032, %v5911, 0.0
      %v6056 = vsel %vm6033, %v5912, 0.0
      %v6057 = vsel %vm6034, %v5913, 0.0
      %v6058 = vsel %vm6035, %v5914, 0.0
      %v6059 = vsel %vm6036, %v5915, 0.0
      %v6060 = vsel %vm6037, %v5916, 0.0
      %v6061 = vsel %vm6038, %v5917, 0.0
      %v6062 = vsel %vm6039, %v5918, 0.0
      %v6063 = vsel %vm6040, %v5919, 0.0
      %v6064 = vsel %vm6041, %v5920, 0.0
      %v6065 = vsel %vm6042, %v5921, 0.0
      %v6066 = vsel %vm6043, %v5922, 0.0
      %v6067 = vsel %vm6044, %v5923, 0.0
      %v6068 = vsel %vm6045, %v5924, 0.0
      %v6069 = vsel %vm6046, %v5925, 0.0
      %v6070 = vsel %vm6047, %v5926, 0.0
      %v6071 = vsel %vm6048, %v5927, 0.0
      %v6072 = vld [vmem:[%s1] sm:$0xff]
      %v6073 = vld [vmem:[%s1 + $0x8] sm:$0xff]
      %v6074 = vld [vmem:[%s1 + $0x10] sm:$0xff]
      %v6075 = vld [vmem:[%s1 + $0x18] sm:$0xff]
      %v6076 = vld [vmem:[%s1 + $0x20] sm:$0xff]
      %v6077 = vld [vmem:[%s1 + $0x28] sm:$0xff]
      %v6078 = vld [vmem:[%s1 + $0x30] sm:$0xff]
      %v6079 = vld [vmem:[%s1 + $0x38] sm:$0xff]
      %v6080 = vld [vmem:[%s1 + $0x40] sm:$0xff]
      %v6081 = vld [vmem:[%s1 + $0x48] sm:$0xff]
      %v6082 = vld [vmem:[%s1 + $0x50] sm:$0xff]
      %v6083 = vld [vmem:[%s1 + $0x58] sm:$0xff]
      %v6084 = vld [vmem:[%s1 + $0x60] sm:$0xff]
      %v6085 = vld [vmem:[%s1 + $0x68] sm:$0xff]
      %v6086 = vld [vmem:[%s1 + $0x70] sm:$0xff]
      %v6087 = vld [vmem:[%s1 + $0x78] sm:$0xff]
      %v6088 = vld [vmem:[%s1 + $0x80] sm:$0xff]
      %v6089 = vld [vmem:[%s1 + $0x88] sm:$0xff]
      %v6090 = vld [vmem:[%s1 + $0x90] sm:$0xff]
      %v6091 = vld [vmem:[%s1 + $0x98] sm:$0xff]
      %v6092 = vld [vmem:[%s1 + $0xa0] sm:$0xff]
      %v6093 = vld [vmem:[%s1 + $0xa8] sm:$0xff]
      %v6094 = vld [vmem:[%s1 + $0xb0] sm:$0xf]
      %6096 = vset.pattern.permute.xlu0 0
      %6097 = vperm.xlu0 %6096, %v6072
      %v6098 = vpop.permute.xlu0 %6097
      %6101 = vset.pattern.permute.xlu0 0
      %6102 = vperm.xlu0 %6101, %v6073
      %v6103 = vpop.permute.xlu0 %6102
      %6106 = vset.pattern.permute.xlu0 0
      %6107 = vperm.xlu0 %6106, %v6074
      %v6108 = vpop.permute.xlu0 %6107
      %6111 = vset.pattern.permute.xlu0 0
      %6112 = vperm.xlu0 %6111, %v6075
      %v6113 = vpop.permute.xlu0 %6112
      %6116 = vset.pattern.permute.xlu0 0
      %6117 = vperm.xlu0 %6116, %v6076
      %v6118 = vpop.permute.xlu0 %6117
      %6121 = vset.pattern.permute.xlu0 0
      %6122 = vperm.xlu0 %6121, %v6077
      %v6123 = vpop.permute.xlu0 %6122
      %6126 = vset.pattern.permute.xlu0 0
      %6127 = vperm.xlu0 %6126, %v6078
      %v6128 = vpop.permute.xlu0 %6127
      %6131 = vset.pattern.permute.xlu0 0
      %6132 = vperm.xlu0 %6131, %v6079
      %v6133 = vpop.permute.xlu0 %6132
      %6136 = vset.pattern.permute.xlu0 0
      %6137 = vperm.xlu0 %6136, %v6080
      %v6138 = vpop.permute.xlu0 %6137
      %6141 = vset.pattern.permute.xlu0 0
      %6142 = vperm.xlu0 %6141, %v6081
      %v6143 = vpop.permute.xlu0 %6142
      %6146 = vset.pattern.permute.xlu0 0
      %6147 = vperm.xlu0 %6146, %v6082
      %v6148 = vpop.permute.xlu0 %6147
      %6151 = vset.pattern.permute.xlu0 0
      %6152 = vperm.xlu0 %6151, %v6083
      %v6153 = vpop.permute.xlu0 %6152
      %6156 = vset.pattern.permute.xlu0 0
      %6157 = vperm.xlu0 %6156, %v6084
      %v6158 = vpop.permute.xlu0 %6157
      %6161 = vset.pattern.permute.xlu0 0
      %6162 = vperm.xlu0 %6161, %v6085
      %v6163 = vpop.permute.xlu0 %6162
      %6166 = vset.pattern.permute.xlu0 0
      %6167 = vperm.xlu0 %6166, %v6086
      %v6168 = vpop.permute.xlu0 %6167
      %6171 = vset.pattern.permute.xlu0 0
      %6172 = vperm.xlu0 %6171, %v6087
      %v6173 = vpop.permute.xlu0 %6172
      %6176 = vset.pattern.permute.xlu0 0
      %6177 = vperm.xlu0 %6176, %v6088
      %v6178 = vpop.permute.xlu0 %6177
      %6181 = vset.pattern.permute.xlu0 0
      %6182 = vperm.xlu0 %6181, %v6089
      %v6183 = vpop.permute.xlu0 %6182
      %6186 = vset.pattern.permute.xlu0 0
      %6187 = vperm.xlu0 %6186, %v6090
      %v6188 = vpop.permute.xlu0 %6187
      %6191 = vset.pattern.permute.xlu0 0
      %6192 = vperm.xlu0 %6191, %v6091
      %v6193 = vpop.permute.xlu0 %6192
      %6196 = vset.pattern.permute.xlu0 0
      %6197 = vperm.xlu0 %6196, %v6092
      %v6198 = vpop.permute.xlu0 %6197
      %6201 = vset.pattern.permute.xlu0 0
      %6202 = vperm.xlu0 %6201, %v6093
      %v6203 = vpop.permute.xlu0 %6202
      %6206 = vset.pattern.permute.xlu0 0
      %6207 = vperm.xlu0 %6206, %v6094
      %v6208 = vpop.permute.xlu0 %6207
      %v6210 = vmul.f32 %v6049, %v6098
      %v6211 = vmul.f32 %v6050, %v6103
      %v6212 = vmul.f32 %v6051, %v6108
      %v6213 = vmul.f32 %v6052, %v6113
      %v6214 = vmul.f32 %v6053, %v6118
      %v6215 = vmul.f32 %v6054, %v6123
      %v6216 = vmul.f32 %v6055, %v6128
      %v6217 = vmul.f32 %v6056, %v6133
      %v6218 = vmul.f32 %v6057, %v6138
      %v6219 = vmul.f32 %v6058, %v6143
      %v6220 = vmul.f32 %v6059, %v6148
      %v6221 = vmul.f32 %v6060, %v6153
      %v6222 = vmul.f32 %v6061, %v6158
      %v6223 = vmul.f32 %v6062, %v6163
      %v6224 = vmul.f32 %v6063, %v6168
      %v6225 = vmul.f32 %v6064, %v6173
      %v6226 = vmul.f32 %v6065, %v6178
      %v6227 = vmul.f32 %v6066, %v6183
      %v6228 = vmul.f32 %v6067, %v6188
      %v6229 = vmul.f32 %v6068, %v6193
      %v6230 = vmul.f32 %v6069, %v6198
      %v6231 = vmul.f32 %v6070, %v6203
      %v6232 = vmul.f32 %v6071, %v6208
      %6233 = vst.msk [vmem:[#allocation4] sm:$0x1] %vm2684, 0.0
      %6234 = vst.msk [vmem:[#allocation4 + $0x1] sm:$0xff] %vm1826, %v6210
      %6235 = vst.msk [vmem:[#allocation4 + $0x9] sm:$0xff] %vm1826, %v6211
      %6236 = vst.msk [vmem:[#allocation4 + $0x11] sm:$0xff] %vm1826, %v6212
      %6237 = vst.msk [vmem:[#allocation4 + $0x19] sm:$0xff] %vm1826, %v6213
      %6238 = vst.msk [vmem:[#allocation4 + $0x21] sm:$0xff] %vm1826, %v6214
      %6239 = vst.msk [vmem:[#allocation4 + $0x29] sm:$0xff] %vm1826, %v6215
      %6240 = vst.msk [vmem:[#allocation4 + $0x31] sm:$0xff] %vm1826, %v6216
      %6241 = vst.msk [vmem:[#allocation4 + $0x39] sm:$0xff] %vm1826, %v6217
      %6242 = vst.msk [vmem:[#allocation4 + $0x41] sm:$0xff] %vm1826, %v6218
      %6243 = vst.msk [vmem:[#allocation4 + $0x49] sm:$0xff] %vm1826, %v6219
      %6244 = vst.msk [vmem:[#allocation4 + $0x51] sm:$0xff] %vm1826, %v6220
      %6245 = vst.msk [vmem:[#allocation4 + $0x59] sm:$0xff] %vm1826, %v6221
      %6246 = vst.msk [vmem:[#allocation4 + $0x61] sm:$0xff] %vm1826, %v6222
      %6247 = vst.msk [vmem:[#allocation4 + $0x69] sm:$0xff] %vm1826, %v6223
      %6248 = vst.msk [vmem:[#allocation4 + $0x71] sm:$0xff] %vm1826, %v6224
      %6249 = vst.msk [vmem:[#allocation4 + $0x79] sm:$0xff] %vm1826, %v6225
      %6250 = vst.msk [vmem:[#allocation4 + $0x81] sm:$0xff] %vm1826, %v6226
      %6251 = vst.msk [vmem:[#allocation4 + $0x89] sm:$0xff] %vm1826, %v6227
      %6252 = vst.msk [vmem:[#allocation4 + $0x91] sm:$0xff] %vm1826, %v6228
      %6253 = vst.msk [vmem:[#allocation4 + $0x99] sm:$0xff] %vm1826, %v6229
      %6254 = vst.msk [vmem:[#allocation4 + $0xa1] sm:$0xff] %vm1826, %v6230
      %6255 = vst.msk [vmem:[#allocation4 + $0xa9] sm:$0xff] %vm1826, %v6231
      %6256 = vst.msk [vmem:[#allocation4 + $0xb1] sm:$0xf] %vm2717, %v6232
      %6257 = vst.msk [vmem:[#allocation4 + $0xb5] sm:$0xff] %vm1826, 0.0
      %6258 = vst.msk [vmem:[#allocation4 + $0xbd] sm:$0xff] %vm1826, 0.0
      %6259 = vst.msk [vmem:[#allocation4 + $0xc5] sm:$0x1] %vm2684, 0.0
      %v6260 = vld [vmem:[#allocation4] sm:$0xff]
      %v6261 = vld [vmem:[#allocation4 + $0x8] sm:$0xff]
      %v6262 = vld [vmem:[#allocation4 + $0x10] sm:$0xff]
      %v6263 = vld [vmem:[#allocation4 + $0x18] sm:$0xff]
      %v6264 = vld [vmem:[#allocation4 + $0x20] sm:$0xff]
      %v6265 = vld [vmem:[#allocation4 + $0x28] sm:$0xff]
      %v6266 = vld [vmem:[#allocation4 + $0x30] sm:$0xff]
      %v6267 = vld [vmem:[#allocation4 + $0x38] sm:$0xff]
      %v6268 = vld [vmem:[#allocation4 + $0x40] sm:$0xff]
      %v6269 = vld [vmem:[#allocation4 + $0x48] sm:$0xff]
      %v6270 = vld [vmem:[#allocation4 + $0x50] sm:$0xff]
      %v6271 = vld [vmem:[#allocation4 + $0x58] sm:$0xff]
      %v6272 = vld [vmem:[#allocation4 + $0x60] sm:$0xff]
      %v6273 = vld [vmem:[#allocation4 + $0x68] sm:$0xff]
      %v6274 = vld [vmem:[#allocation4 + $0x70] sm:$0xff]
      %v6275 = vld [vmem:[#allocation4 + $0x78] sm:$0xff]
      %v6276 = vld [vmem:[#allocation4 + $0x80] sm:$0xff]
      %v6277 = vld [vmem:[#allocation4 + $0x88] sm:$0xff]
      %v6278 = vld [vmem:[#allocation4 + $0x1] sm:$0xff]
      %v6279 = vld [vmem:[#allocation4 + $0x9] sm:$0xff]
      %v6280 = vld [vmem:[#allocation4 + $0x11] sm:$0xff]
      %v6281 = vld [vmem:[#allocation4 + $0x19] sm:$0xff]
      %v6282 = vld [vmem:[#allocation4 + $0x21] sm:$0xff]
      %v6283 = vld [vmem:[#allocation4 + $0x29] sm:$0xff]
      %v6284 = vld [vmem:[#allocation4 + $0x31] sm:$0xff]
      %v6285 = vld [vmem:[#allocation4 + $0x39] sm:$0xff]
      %v6286 = vld [vmem:[#allocation4 + $0x41] sm:$0xff]
      %v6287 = vld [vmem:[#allocation4 + $0x49] sm:$0xff]
      %v6288 = vld [vmem:[#allocation4 + $0x51] sm:$0xff]
      %v6289 = vld [vmem:[#allocation4 + $0x59] sm:$0xff]
      %v6290 = vld [vmem:[#allocation4 + $0x61] sm:$0xff]
      %v6291 = vld [vmem:[#allocation4 + $0x69] sm:$0xff]
      %v6292 = vld [vmem:[#allocation4 + $0x71] sm:$0xff]
      %v6293 = vld [vmem:[#allocation4 + $0x79] sm:$0xff]
      %v6294 = vld [vmem:[#allocation4 + $0x81] sm:$0xff]
      %v6295 = vld [vmem:[#allocation4 + $0x89] sm:$0xff]
      %v6296 = vld [vmem:[#allocation4 + $0x2] sm:$0xff]
      %v6297 = vld [vmem:[#allocation4 + $0xa] sm:$0xff]
      %v6298 = vld [vmem:[#allocation4 + $0x12] sm:$0xff]
      %v6299 = vld [vmem:[#allocation4 + $0x1a] sm:$0xff]
      %v6300 = vld [vmem:[#allocation4 + $0x22] sm:$0xff]
      %v6301 = vld [vmem:[#allocation4 + $0x2a] sm:$0xff]
      %v6302 = vld [vmem:[#allocation4 + $0x32] sm:$0xff]
      %v6303 = vld [vmem:[#allocation4 + $0x3a] sm:$0xff]
      %v6304 = vld [vmem:[#allocation4 + $0x42] sm:$0xff]
      %v6305 = vld [vmem:[#allocation4 + $0x4a] sm:$0xff]
      %v6306 = vld [vmem:[#allocation4 + $0x52] sm:$0xff]
      %v6307 = vld [vmem:[#allocation4 + $0x5a] sm:$0xff]
      %v6308 = vld [vmem:[#allocation4 + $0x62] sm:$0xff]
      %v6309 = vld [vmem:[#allocation4 + $0x6a] sm:$0xff]
      %v6310 = vld [vmem:[#allocation4 + $0x72] sm:$0xff]
      %v6311 = vld [vmem:[#allocation4 + $0x7a] sm:$0xff]
      %v6312 = vld [vmem:[#allocation4 + $0x82] sm:$0xff]
      %v6313 = vld [vmem:[#allocation4 + $0x8a] sm:$0xff]
      %v6314 = vld [vmem:[#allocation4 + $0x92] sm:$0xff]
      %v6315 = vld [vmem:[#allocation4 + $0x9a] sm:$0xff]
      %v6316 = vld [vmem:[#allocation4 + $0x13] sm:$0xff]
      %v6317 = vld [vmem:[#allocation4 + $0x1b] sm:$0xff]
      %v6318 = vld [vmem:[#allocation4 + $0x23] sm:$0xff]
      %v6319 = vld [vmem:[#allocation4 + $0x2b] sm:$0xff]
      %v6320 = vld [vmem:[#allocation4 + $0x33] sm:$0xff]
      %v6321 = vld [vmem:[#allocation4 + $0x3b] sm:$0xff]
      %v6322 = vld [vmem:[#allocation4 + $0x43] sm:$0xff]
      %v6323 = vld [vmem:[#allocation4 + $0x4b] sm:$0xff]
      %v6324 = vld [vmem:[#allocation4 + $0x53] sm:$0xff]
      %v6325 = vld [vmem:[#allocation4 + $0x5b] sm:$0xff]
      %v6326 = vld [vmem:[#allocation4 + $0x63] sm:$0xff]
      %v6327 = vld [vmem:[#allocation4 + $0x6b] sm:$0xff]
      %v6328 = vld [vmem:[#allocation4 + $0x73] sm:$0xff]
      %v6329 = vld [vmem:[#allocation4 + $0x7b] sm:$0xff]
      %v6330 = vld [vmem:[#allocation4 + $0x83] sm:$0xff]
      %v6331 = vld [vmem:[#allocation4 + $0x8b] sm:$0xff]
      %v6332 = vld [vmem:[#allocation4 + $0x93] sm:$0xff]
      %v6333 = vld [vmem:[#allocation4 + $0x9b] sm:$0xff]
      %v6334 = vld [vmem:[#allocation4 + $0x14] sm:$0xff]
      %v6335 = vld [vmem:[#allocation4 + $0x1c] sm:$0xff]
      %v6336 = vld [vmem:[#allocation4 + $0x24] sm:$0xff]
      %v6337 = vld [vmem:[#allocation4 + $0x2c] sm:$0xff]
      %v6338 = vld [vmem:[#allocation4 + $0x34] sm:$0xff]
      %v6339 = vld [vmem:[#allocation4 + $0x3c] sm:$0xff]
      %v6340 = vld [vmem:[#allocation4 + $0x44] sm:$0xff]
      %v6341 = vld [vmem:[#allocation4 + $0x4c] sm:$0xff]
      %v6342 = vld [vmem:[#allocation4 + $0x54] sm:$0xff]
      %v6343 = vld [vmem:[#allocation4 + $0x5c] sm:$0xff]
      %v6344 = vld [vmem:[#allocation4 + $0x64] sm:$0xff]
      %v6345 = vld [vmem:[#allocation4 + $0x6c] sm:$0xff]
      %v6346 = vld [vmem:[#allocation4 + $0x74] sm:$0xff]
      %v6347 = vld [vmem:[#allocation4 + $0x7c] sm:$0xff]
      %v6348 = vld [vmem:[#allocation4 + $0x84] sm:$0xff]
      %v6349 = vld [vmem:[#allocation4 + $0x8c] sm:$0xff]
      %v6350 = vld [vmem:[#allocation4 + $0x94] sm:$0xff]
      %v6351 = vld [vmem:[#allocation4 + $0x9c] sm:$0xff]
      %v6352 = vld [vmem:[#allocation4 + $0xa4] sm:$0xff]
      %v6353 = vld [vmem:[#allocation4 + $0xac] sm:$0xff]
      %v6354 = vld [vmem:[#allocation4 + $0x25] sm:$0xff]
      %v6355 = vld [vmem:[#allocation4 + $0x2d] sm:$0xff]
      %v6356 = vld [vmem:[#allocation4 + $0x35] sm:$0xff]
      %v6357 = vld [vmem:[#allocation4 + $0x3d] sm:$0xff]
      %v6358 = vld [vmem:[#allocation4 + $0x45] sm:$0xff]
      %v6359 = vld [vmem:[#allocation4 + $0x4d] sm:$0xff]
      %v6360 = vld [vmem:[#allocation4 + $0x55] sm:$0xff]
      %v6361 = vld [vmem:[#allocation4 + $0x5d] sm:$0xff]
      %v6362 = vld [vmem:[#allocation4 + $0x65] sm:$0xff]
      %v6363 = vld [vmem:[#allocation4 + $0x6d] sm:$0xff]
      %v6364 = vld [vmem:[#allocation4 + $0x75] sm:$0xff]
      %v6365 = vld [vmem:[#allocation4 + $0x7d] sm:$0xff]
      %v6366 = vld [vmem:[#allocation4 + $0x85] sm:$0xff]
      %v6367 = vld [vmem:[#allocation4 + $0x8d] sm:$0xff]
      %v6368 = vld [vmem:[#allocation4 + $0x95] sm:$0xff]
      %v6369 = vld [vmem:[#allocation4 + $0x9d] sm:$0xff]
      %v6370 = vld [vmem:[#allocation4 + $0xa5] sm:$0xff]
      %v6371 = vld [vmem:[#allocation4 + $0xad] sm:$0xff]
      %v6372 = vld [vmem:[#allocation4 + $0x26] sm:$0xff]
      %v6373 = vld [vmem:[#allocation4 + $0x2e] sm:$0xff]
      %v6374 = vld [vmem:[#allocation4 + $0x36] sm:$0xff]
      %v6375 = vld [vmem:[#allocation4 + $0x3e] sm:$0xff]
      %v6376 = vld [vmem:[#allocation4 + $0x46] sm:$0xff]
      %v6377 = vld [vmem:[#allocation4 + $0x4e] sm:$0xff]
      %v6378 = vld [vmem:[#allocation4 + $0x56] sm:$0xff]
      %v6379 = vld [vmem:[#allocation4 + $0x5e] sm:$0xff]
      %v6380 = vld [vmem:[#allocation4 + $0x66] sm:$0xff]
      %v6381 = vld [vmem:[#allocation4 + $0x6e] sm:$0xff]
      %v6382 = vld [vmem:[#allocation4 + $0x76] sm:$0xff]
      %v6383 = vld [vmem:[#allocation4 + $0x7e] sm:$0xff]
      %v6384 = vld [vmem:[#allocation4 + $0x86] sm:$0xff]
      %v6385 = vld [vmem:[#allocation4 + $0x8e] sm:$0xff]
      %v6386 = vld [vmem:[#allocation4 + $0x96] sm:$0xff]
      %v6387 = vld [vmem:[#allocation4 + $0x9e] sm:$0xff]
      %v6388 = vld [vmem:[#allocation4 + $0xa6] sm:$0xff]
      %v6389 = vld [vmem:[#allocation4 + $0xae] sm:$0xff]
      %6408 = vrot.lane.b32.xlu0 %v6278, 32
      %v6409 = vpop.permute.xlu0 %6408
      %6410 = vrot.lane.b32.xlu0 %v6279, 32
      %v6411 = vpop.permute.xlu0 %6410
      %6412 = vrot.lane.b32.xlu0 %v6280, 32
      %v6413 = vpop.permute.xlu0 %6412
      %6414 = vrot.lane.b32.xlu0 %v6281, 32
      %v6415 = vpop.permute.xlu0 %6414
      %6416 = vrot.lane.b32.xlu0 %v6282, 32
      %v6417 = vpop.permute.xlu0 %6416
      %6418 = vrot.lane.b32.xlu0 %v6283, 32
      %v6419 = vpop.permute.xlu0 %6418
      %6420 = vrot.lane.b32.xlu0 %v6284, 32
      %v6421 = vpop.permute.xlu0 %6420
      %6422 = vrot.lane.b32.xlu0 %v6285, 32
      %v6423 = vpop.permute.xlu0 %6422
      %6424 = vrot.lane.b32.xlu0 %v6286, 32
      %v6425 = vpop.permute.xlu0 %6424
      %6426 = vrot.lane.b32.xlu0 %v6287, 32
      %v6427 = vpop.permute.xlu0 %6426
      %6428 = vrot.lane.b32.xlu0 %v6288, 32
      %v6429 = vpop.permute.xlu0 %6428
      %6430 = vrot.lane.b32.xlu0 %v6289, 32
      %v6431 = vpop.permute.xlu0 %6430
      %6432 = vrot.lane.b32.xlu0 %v6290, 32
      %v6433 = vpop.permute.xlu0 %6432
      %6434 = vrot.lane.b32.xlu0 %v6291, 32
      %v6435 = vpop.permute.xlu0 %6434
      %6436 = vrot.lane.b32.xlu0 %v6292, 32
      %v6437 = vpop.permute.xlu0 %6436
      %6438 = vrot.lane.b32.xlu0 %v6293, 32
      %v6439 = vpop.permute.xlu0 %6438
      %6440 = vrot.lane.b32.xlu0 %v6294, 32
      %v6441 = vpop.permute.xlu0 %6440
      %6442 = vrot.lane.b32.xlu0 %v6295, 32
      %v6443 = vpop.permute.xlu0 %6442
      %6480 = vrot.lane.b32.xlu0 %v6296, 64
      %v6481 = vpop.permute.xlu0 %6480
      %6482 = vrot.lane.b32.xlu0 %v6297, 64
      %v6483 = vpop.permute.xlu0 %6482
      %6484 = vrot.lane.b32.xlu0 %v6298, 64
      %v6485 = vpop.permute.xlu0 %6484
      %6486 = vrot.lane.b32.xlu0 %v6299, 64
      %v6487 = vpop.permute.xlu0 %6486
      %6488 = vrot.lane.b32.xlu0 %v6300, 64
      %v6489 = vpop.permute.xlu0 %6488
      %6490 = vrot.lane.b32.xlu0 %v6301, 64
      %v6491 = vpop.permute.xlu0 %6490
      %6492 = vrot.lane.b32.xlu0 %v6302, 64
      %v6493 = vpop.permute.xlu0 %6492
      %6494 = vrot.lane.b32.xlu0 %v6303, 64
      %v6495 = vpop.permute.xlu0 %6494
      %6496 = vrot.lane.b32.xlu0 %v6304, 64
      %v6497 = vpop.permute.xlu0 %6496
      %6498 = vrot.lane.b32.xlu0 %v6305, 64
      %v6499 = vpop.permute.xlu0 %6498
      %6500 = vrot.lane.b32.xlu0 %v6306, 64
      %v6501 = vpop.permute.xlu0 %6500
      %6502 = vrot.lane.b32.xlu0 %v6307, 64
      %v6503 = vpop.permute.xlu0 %6502
      %6504 = vrot.lane.b32.xlu0 %v6308, 64
      %v6505 = vpop.permute.xlu0 %6504
      %6506 = vrot.lane.b32.xlu0 %v6309, 64
      %v6507 = vpop.permute.xlu0 %6506
      %6508 = vrot.lane.b32.xlu0 %v6310, 64
      %v6509 = vpop.permute.xlu0 %6508
      %6510 = vrot.lane.b32.xlu0 %v6311, 64
      %v6511 = vpop.permute.xlu0 %6510
      %6512 = vrot.lane.b32.xlu0 %v6312, 64
      %v6513 = vpop.permute.xlu0 %6512
      %6514 = vrot.lane.b32.xlu0 %v6313, 64
      %v6515 = vpop.permute.xlu0 %6514
      %6536 = vrot.lane.b32.xlu0 %v6298, 96
      %v6537 = vpop.permute.xlu0 %6536
      %6538 = vrot.lane.b32.xlu0 %v6299, 96
      %v6539 = vpop.permute.xlu0 %6538
      %6540 = vrot.lane.b32.xlu0 %v6300, 96
      %v6541 = vpop.permute.xlu0 %6540
      %6542 = vrot.lane.b32.xlu0 %v6301, 96
      %v6543 = vpop.permute.xlu0 %6542
      %6544 = vrot.lane.b32.xlu0 %v6302, 96
      %v6545 = vpop.permute.xlu0 %6544
      %6546 = vrot.lane.b32.xlu0 %v6303, 96
      %v6547 = vpop.permute.xlu0 %6546
      %6548 = vrot.lane.b32.xlu0 %v6304, 96
      %v6549 = vpop.permute.xlu0 %6548
      %6550 = vrot.lane.b32.xlu0 %v6305, 96
      %v6551 = vpop.permute.xlu0 %6550
      %6552 = vrot.lane.b32.xlu0 %v6306, 96
      %v6553 = vpop.permute.xlu0 %6552
      %6554 = vrot.lane.b32.xlu0 %v6307, 96
      %v6555 = vpop.permute.xlu0 %6554
      %6556 = vrot.lane.b32.xlu0 %v6308, 96
      %v6557 = vpop.permute.xlu0 %6556
      %6558 = vrot.lane.b32.xlu0 %v6309, 96
      %v6559 = vpop.permute.xlu0 %6558
      %6560 = vrot.lane.b32.xlu0 %v6310, 96
      %v6561 = vpop.permute.xlu0 %6560
      %6562 = vrot.lane.b32.xlu0 %v6311, 96
      %v6563 = vpop.permute.xlu0 %6562
      %6564 = vrot.lane.b32.xlu0 %v6312, 96
      %v6565 = vpop.permute.xlu0 %6564
      %6566 = vrot.lane.b32.xlu0 %v6313, 96
      %v6567 = vpop.permute.xlu0 %6566
      %6568 = vrot.lane.b32.xlu0 %v6314, 96
      %v6569 = vpop.permute.xlu0 %6568
      %6570 = vrot.lane.b32.xlu0 %v6315, 96
      %v6571 = vpop.permute.xlu0 %6570
      %6608 = vrot.lane.b32.xlu0 %v6334, 32
      %v6609 = vpop.permute.xlu0 %6608
      %6610 = vrot.lane.b32.xlu0 %v6335, 32
      %v6611 = vpop.permute.xlu0 %6610
      %6612 = vrot.lane.b32.xlu0 %v6336, 32
      %v6613 = vpop.permute.xlu0 %6612
      %6614 = vrot.lane.b32.xlu0 %v6337, 32
      %v6615 = vpop.permute.xlu0 %6614
      %6616 = vrot.lane.b32.xlu0 %v6338, 32
      %v6617 = vpop.permute.xlu0 %6616
      %6618 = vrot.lane.b32.xlu0 %v6339, 32
      %v6619 = vpop.permute.xlu0 %6618
      %6620 = vrot.lane.b32.xlu0 %v6340, 32
      %v6621 = vpop.permute.xlu0 %6620
      %6622 = vrot.lane.b32.xlu0 %v6341, 32
      %v6623 = vpop.permute.xlu0 %6622
      %6624 = vrot.lane.b32.xlu0 %v6342, 32
      %v6625 = vpop.permute.xlu0 %6624
      %6626 = vrot.lane.b32.xlu0 %v6343, 32
      %v6627 = vpop.permute.xlu0 %6626
      %6628 = vrot.lane.b32.xlu0 %v6344, 32
      %v6629 = vpop.permute.xlu0 %6628
      %6630 = vrot.lane.b32.xlu0 %v6345, 32
      %v6631 = vpop.permute.xlu0 %6630
      %6632 = vrot.lane.b32.xlu0 %v6346, 32
      %v6633 = vpop.permute.xlu0 %6632
      %6634 = vrot.lane.b32.xlu0 %v6347, 32
      %v6635 = vpop.permute.xlu0 %6634
      %6636 = vrot.lane.b32.xlu0 %v6348, 32
      %v6637 = vpop.permute.xlu0 %6636
      %6638 = vrot.lane.b32.xlu0 %v6349, 32
      %v6639 = vpop.permute.xlu0 %6638
      %6640 = vrot.lane.b32.xlu0 %v6350, 32
      %v6641 = vpop.permute.xlu0 %6640
      %6642 = vrot.lane.b32.xlu0 %v6351, 32
      %v6643 = vpop.permute.xlu0 %6642
      %6664 = vrot.lane.b32.xlu0 %v6336, 64
      %v6665 = vpop.permute.xlu0 %6664
      %6666 = vrot.lane.b32.xlu0 %v6337, 64
      %v6667 = vpop.permute.xlu0 %6666
      %6668 = vrot.lane.b32.xlu0 %v6338, 64
      %v6669 = vpop.permute.xlu0 %6668
      %6670 = vrot.lane.b32.xlu0 %v6339, 64
      %v6671 = vpop.permute.xlu0 %6670
      %6672 = vrot.lane.b32.xlu0 %v6340, 64
      %v6673 = vpop.permute.xlu0 %6672
      %6674 = vrot.lane.b32.xlu0 %v6341, 64
      %v6675 = vpop.permute.xlu0 %6674
      %6676 = vrot.lane.b32.xlu0 %v6342, 64
      %v6677 = vpop.permute.xlu0 %6676
      %6678 = vrot.lane.b32.xlu0 %v6343, 64
      %v6679 = vpop.permute.xlu0 %6678
      %6680 = vrot.lane.b32.xlu0 %v6344, 64
      %v6681 = vpop.permute.xlu0 %6680
      %6682 = vrot.lane.b32.xlu0 %v6345, 64
      %v6683 = vpop.permute.xlu0 %6682
      %6684 = vrot.lane.b32.xlu0 %v6346, 64
      %v6685 = vpop.permute.xlu0 %6684
      %6686 = vrot.lane.b32.xlu0 %v6347, 64
      %v6687 = vpop.permute.xlu0 %6686
      %6688 = vrot.lane.b32.xlu0 %v6348, 64
      %v6689 = vpop.permute.xlu0 %6688
      %6690 = vrot.lane.b32.xlu0 %v6349, 64
      %v6691 = vpop.permute.xlu0 %6690
      %6692 = vrot.lane.b32.xlu0 %v6350, 64
      %v6693 = vpop.permute.xlu0 %6692
      %6694 = vrot.lane.b32.xlu0 %v6351, 64
      %v6695 = vpop.permute.xlu0 %6694
      %6696 = vrot.lane.b32.xlu0 %v6352, 64
      %v6697 = vpop.permute.xlu0 %6696
      %6698 = vrot.lane.b32.xlu0 %v6353, 64
      %v6699 = vpop.permute.xlu0 %6698
      %6736 = vrot.lane.b32.xlu0 %v6354, 96
      %v6737 = vpop.permute.xlu0 %6736
      %6738 = vrot.lane.b32.xlu0 %v6355, 96
      %v6739 = vpop.permute.xlu0 %6738
      %6740 = vrot.lane.b32.xlu0 %v6356, 96
      %v6741 = vpop.permute.xlu0 %6740
      %6742 = vrot.lane.b32.xlu0 %v6357, 96
      %v6743 = vpop.permute.xlu0 %6742
      %6744 = vrot.lane.b32.xlu0 %v6358, 96
      %v6745 = vpop.permute.xlu0 %6744
      %6746 = vrot.lane.b32.xlu0 %v6359, 96
      %v6747 = vpop.permute.xlu0 %6746
      %6748 = vrot.lane.b32.xlu0 %v6360, 96
      %v6749 = vpop.permute.xlu0 %6748
      %6750 = vrot.lane.b32.xlu0 %v6361, 96
      %v6751 = vpop.permute.xlu0 %6750
      %6752 = vrot.lane.b32.xlu0 %v6362, 96
      %v6753 = vpop.permute.xlu0 %6752
      %6754 = vrot.lane.b32.xlu0 %v6363, 96
      %v6755 = vpop.permute.xlu0 %6754
      %6756 = vrot.lane.b32.xlu0 %v6364, 96
      %v6757 = vpop.permute.xlu0 %6756
      %6758 = vrot.lane.b32.xlu0 %v6365, 96
      %v6759 = vpop.permute.xlu0 %6758
      %6760 = vrot.lane.b32.xlu0 %v6366, 96
      %v6761 = vpop.permute.xlu0 %6760
      %6762 = vrot.lane.b32.xlu0 %v6367, 96
      %v6763 = vpop.permute.xlu0 %6762
      %6764 = vrot.lane.b32.xlu0 %v6368, 96
      %v6765 = vpop.permute.xlu0 %6764
      %6766 = vrot.lane.b32.xlu0 %v6369, 96
      %v6767 = vpop.permute.xlu0 %6766
      %6768 = vrot.lane.b32.xlu0 %v6370, 96
      %v6769 = vpop.permute.xlu0 %6768
      %6770 = vrot.lane.b32.xlu0 %v6371, 96
      %v6771 = vpop.permute.xlu0 %6770
      %v6790 = vsel %vm1826, %v6260, %v6409
      %v6791 = vsel %vm1826, %v6261, %v6411
      %v6792 = vsel %vm1826, %v6262, %v6413
      %v6793 = vsel %vm1826, %v6263, %v6415
      %v6794 = vsel %vm1826, %v6264, %v6417
      %v6795 = vsel %vm1826, %v6265, %v6419
      %v6796 = vsel %vm1826, %v6266, %v6421
      %v6797 = vsel %vm1826, %v6267, %v6423
      %v6798 = vsel %vm1826, %v6268, %v6425
      %v6799 = vsel %vm1826, %v6269, %v6427
      %v6800 = vsel %vm1826, %v6270, %v6429
      %v6801 = vsel %vm1826, %v6271, %v6431
      %v6802 = vsel %vm1826, %v6272, %v6433
      %v6803 = vsel %vm1826, %v6273, %v6435
      %v6804 = vsel %vm1826, %v6274, %v6437
      %v6805 = vsel %vm1826, %v6275, %v6439
      %v6806 = vsel %vm1826, %v6276, %v6441
      %v6807 = vsel %vm1826, %v6277, %v6443
      %v6808 = vsel %vm3540, %v6790, %v6481
      %v6809 = vsel %vm3540, %v6791, %v6483
      %v6810 = vsel %vm3540, %v6792, %v6485
      %v6811 = vsel %vm3540, %v6793, %v6487
      %v6812 = vsel %vm3540, %v6794, %v6489
      %v6813 = vsel %vm3540, %v6795, %v6491
      %v6814 = vsel %vm3540, %v6796, %v6493
      %v6815 = vsel %vm3540, %v6797, %v6495
      %v6816 = vsel %vm3540, %v6798, %v6497
      %v6817 = vsel %vm3540, %v6799, %v6499
      %v6818 = vsel %vm3540, %v6800, %v6501
      %v6819 = vsel %vm3540, %v6801, %v6503
      %v6820 = vsel %vm3540, %v6802, %v6505
      %v6821 = vsel %vm3540, %v6803, %v6507
      %v6822 = vsel %vm3540, %v6804, %v6509
      %v6823 = vsel %vm3540, %v6805, %v6511
      %v6824 = vsel %vm3540, %v6806, %v6513
      %v6825 = vsel %vm3540, %v6807, %v6515
      %v6826 = vsel %vm3568, %v6808, %v6537
      %v6827 = vsel %vm3568, %v6809, %v6539
      %v6828 = vsel %vm3568, %v6810, %v6541
      %v6829 = vsel %vm3568, %v6811, %v6543
      %v6830 = vsel %vm3568, %v6812, %v6545
      %v6831 = vsel %vm3568, %v6813, %v6547
      %v6832 = vsel %vm3568, %v6814, %v6549
      %v6833 = vsel %vm3568, %v6815, %v6551
      %v6834 = vsel %vm3568, %v6816, %v6553
      %v6835 = vsel %vm3568, %v6817, %v6555
      %v6836 = vsel %vm3568, %v6818, %v6557
      %v6837 = vsel %vm3568, %v6819, %v6559
      %v6838 = vsel %vm3568, %v6820, %v6561
      %v6839 = vsel %vm3568, %v6821, %v6563
      %v6840 = vsel %vm3568, %v6822, %v6565
      %v6841 = vsel %vm3568, %v6823, %v6567
      %v6842 = vsel %vm3568, %v6824, %v6569
      %v6843 = vsel %vm3568, %v6825, %v6571
      %v6844 = vsel %vm1826, %v6316, %v6609
      %v6845 = vsel %vm1826, %v6317, %v6611
      %v6846 = vsel %vm1826, %v6318, %v6613
      %v6847 = vsel %vm1826, %v6319, %v6615
      %v6848 = vsel %vm1826, %v6320, %v6617
      %v6849 = vsel %vm1826, %v6321, %v6619
      %v6850 = vsel %vm1826, %v6322, %v6621
      %v6851 = vsel %vm1826, %v6323, %v6623
      %v6852 = vsel %vm1826, %v6324, %v6625
      %v6853 = vsel %vm1826, %v6325, %v6627
      %v6854 = vsel %vm1826, %v6326, %v6629
      %v6855 = vsel %vm1826, %v6327, %v6631
      %v6856 = vsel %vm1826, %v6328, %v6633
      %v6857 = vsel %vm1826, %v6329, %v6635
      %v6858 = vsel %vm1826, %v6330, %v6637
      %v6859 = vsel %vm1826, %v6331, %v6639
      %v6860 = vsel %vm1826, %v6332, %v6641
      %v6861 = vsel %vm1826, %v6333, %v6643
      %v6862 = vsel %vm3540, %v6844, %v6665
      %v6863 = vsel %vm3540, %v6845, %v6667
      %v6864 = vsel %vm3540, %v6846, %v6669
      %v6865 = vsel %vm3540, %v6847, %v6671
      %v6866 = vsel %vm3540, %v6848, %v6673
      %v6867 = vsel %vm3540, %v6849, %v6675
      %v6868 = vsel %vm3540, %v6850, %v6677
      %v6869 = vsel %vm3540, %v6851, %v6679
      %v6870 = vsel %vm3540, %v6852, %v6681
      %v6871 = vsel %vm3540, %v6853, %v6683
      %v6872 = vsel %vm3540, %v6854, %v6685
      %v6873 = vsel %vm3540, %v6855, %v6687
      %v6874 = vsel %vm3540, %v6856, %v6689
      %v6875 = vsel %vm3540, %v6857, %v6691
      %v6876 = vsel %vm3540, %v6858, %v6693
      %v6877 = vsel %vm3540, %v6859, %v6695
      %v6878 = vsel %vm3540, %v6860, %v6697
      %v6879 = vsel %vm3540, %v6861, %v6699
      %v6880 = vsel %vm3568, %v6862, %v6737
      %v6881 = vsel %vm3568, %v6863, %v6739
      %v6882 = vsel %vm3568, %v6864, %v6741
      %v6883 = vsel %vm3568, %v6865, %v6743
      %v6884 = vsel %vm3568, %v6866, %v6745
      %v6885 = vsel %vm3568, %v6867, %v6747
      %v6886 = vsel %vm3568, %v6868, %v6749
      %v6887 = vsel %vm3568, %v6869, %v6751
      %v6888 = vsel %vm3568, %v6870, %v6753
      %v6889 = vsel %vm3568, %v6871, %v6755
      %v6890 = vsel %vm3568, %v6872, %v6757
      %v6891 = vsel %vm3568, %v6873, %v6759
      %v6892 = vsel %vm3568, %v6874, %v6761
      %v6893 = vsel %vm3568, %v6875, %v6763
      %v6894 = vsel %vm3568, %v6876, %v6765
      %v6895 = vsel %vm3568, %v6877, %v6767
      %v6896 = vsel %vm3568, %v6878, %v6769
      %v6897 = vsel %vm3568, %v6879, %v6771
      %v6898 = vld [vmem:[%s8] sm:$0x7]
      %v6900 = vlaneseq
      %v6901 = vshrl.u32 %v6900, 7
      %v6902 = vsub.s32 0, %v6901
      %v6903 = vrot.slane %v6898, %v6902
      %v6904 = vlaneseq
      %v6905 = vshrl.u32 %v6904, 7
      %v6906 = vsub.s32 1, %v6905
      %v6907 = vrot.slane %v6898, %v6906
      %v6908 = vlaneseq
      %v6909 = vshrl.u32 %v6908, 7
      %v6910 = vsub.s32 2, %v6909
      %v6911 = vrot.slane %v6898, %v6910
      %v6915 = vmul.f32 %v6826, %v6903
      %v6916 = vmul.f32 %v6880, %v6907
      %v6917 = vmul.f32 %v6372, %v6911
      %v6918 = vmul.f32 %v6827, %v6903
      %v6919 = vmul.f32 %v6881, %v6907
      %v6920 = vmul.f32 %v6373, %v6911
      %v6921 = vmul.f32 %v6828, %v6903
      %v6922 = vmul.f32 %v6882, %v6907
      %v6923 = vmul.f32 %v6374, %v6911
      %v6924 = vmul.f32 %v6829, %v6903
      %v6925 = vmul.f32 %v6883, %v6907
      %v6926 = vmul.f32 %v6375, %v6911
      %v6927 = vmul.f32 %v6830, %v6903
      %v6928 = vmul.f32 %v6884, %v6907
      %v6929 = vmul.f32 %v6376, %v6911
      %v6930 = vmul.f32 %v6831, %v6903
      %v6931 = vmul.f32 %v6885, %v6907
      %v6932 = vmul.f32 %v6377, %v6911
      %v6933 = vmul.f32 %v6832, %v6903
      %v6934 = vmul.f32 %v6886, %v6907
      %v6935 = vmul.f32 %v6378, %v6911
      %v6936 = vmul.f32 %v6833, %v6903
      %v6937 = vmul.f32 %v6887, %v6907
      %v6938 = vmul.f32 %v6379, %v6911
      %v6939 = vmul.f32 %v6834, %v6903
      %v6940 = vmul.f32 %v6888, %v6907
      %v6941 = vmul.f32 %v6380, %v6911
      %v6942 = vmul.f32 %v6835, %v6903
      %v6943 = vmul.f32 %v6889, %v6907
      %v6944 = vmul.f32 %v6381, %v6911
      %v6945 = vmul.f32 %v6836, %v6903
      %v6946 = vmul.f32 %v6890, %v6907
      %v6947 = vmul.f32 %v6382, %v6911
      %v6948 = vmul.f32 %v6837, %v6903
      %v6949 = vmul.f32 %v6891, %v6907
      %v6950 = vmul.f32 %v6383, %v6911
      %v6951 = vmul.f32 %v6838, %v6903
      %v6952 = vmul.f32 %v6892, %v6907
      %v6953 = vmul.f32 %v6384, %v6911
      %v6954 = vmul.f32 %v6839, %v6903
      %v6955 = vmul.f32 %v6893, %v6907
      %v6956 = vmul.f32 %v6385, %v6911
      %v6957 = vmul.f32 %v6840, %v6903
      %v6958 = vmul.f32 %v6894, %v6907
      %v6959 = vmul.f32 %v6386, %v6911
      %v6960 = vmul.f32 %v6841, %v6903
      %v6961 = vmul.f32 %v6895, %v6907
      %v6962 = vmul.f32 %v6387, %v6911
      %v6963 = vmul.f32 %v6842, %v6903
      %v6964 = vmul.f32 %v6896, %v6907
      %v6965 = vmul.f32 %v6388, %v6911
      %v6966 = vmul.f32 %v6843, %v6903
      %v6967 = vmul.f32 %v6897, %v6907
      %v6968 = vmul.f32 %v6389, %v6911
      %v6969 = vadd.f32 %v6915, %v6916
      %v6970 = vsel %vm1826, %v6917, 0.0
      %v6971 = vadd.f32 %v6969, %v6970
      %6972 = vadd.xlane.f32.xlu0 %v6971
      %v6973 = vpop.xlane.xlu0 %6972
      %v6974 = vadd.f32 %v6918, %v6919
      %v6975 = vsel %vm1826, %v6920, 0.0
      %v6976 = vadd.f32 %v6974, %v6975
      %6977 = vadd.xlane.f32.xlu0 %v6976
      %v6978 = vpop.xlane.xlu0 %6977
      %v6979 = vadd.f32 %v6921, %v6922
      %v6980 = vsel %vm1826, %v6923, 0.0
      %v6981 = vadd.f32 %v6979, %v6980
      %6982 = vadd.xlane.f32.xlu0 %v6981
      %v6983 = vpop.xlane.xlu0 %6982
      %v6984 = vadd.f32 %v6924, %v6925
      %v6985 = vsel %vm1826, %v6926, 0.0
      %v6986 = vadd.f32 %v6984, %v6985
      %6987 = vadd.xlane.f32.xlu0 %v6986
      %v6988 = vpop.xlane.xlu0 %6987
      %v6989 = vadd.f32 %v6927, %v6928
      %v6990 = vsel %vm1826, %v6929, 0.0
      %v6991 = vadd.f32 %v6989, %v6990
      %6992 = vadd.xlane.f32.xlu0 %v6991
      %v6993 = vpop.xlane.xlu0 %6992
      %v6994 = vadd.f32 %v6930, %v6931
      %v6995 = vsel %vm1826, %v6932, 0.0
      %v6996 = vadd.f32 %v6994, %v6995
      %6997 = vadd.xlane.f32.xlu0 %v6996
      %v6998 = vpop.xlane.xlu0 %6997
      %v6999 = vadd.f32 %v6933, %v6934
      %v7000 = vsel %vm1826, %v6935, 0.0
      %v7001 = vadd.f32 %v6999, %v7000
      %7002 = vadd.xlane.f32.xlu0 %v7001
      %v7003 = vpop.xlane.xlu0 %7002
      %v7004 = vadd.f32 %v6936, %v6937
      %v7005 = vsel %vm1826, %v6938, 0.0
      %v7006 = vadd.f32 %v7004, %v7005
      %7007 = vadd.xlane.f32.xlu0 %v7006
      %v7008 = vpop.xlane.xlu0 %7007
      %v7009 = vadd.f32 %v6939, %v6940
      %v7010 = vsel %vm1826, %v6941, 0.0
      %v7011 = vadd.f32 %v7009, %v7010
      %7012 = vadd.xlane.f32.xlu0 %v7011
      %v7013 = vpop.xlane.xlu0 %7012
      %v7014 = vadd.f32 %v6942, %v6943
      %v7015 = vsel %vm1826, %v6944, 0.0
      %v7016 = vadd.f32 %v7014, %v7015
      %7017 = vadd.xlane.f32.xlu0 %v7016
      %v7018 = vpop.xlane.xlu0 %7017
      %v7019 = vadd.f32 %v6945, %v6946
      %v7020 = vsel %vm1826, %v6947, 0.0
      %v7021 = vadd.f32 %v7019, %v7020
      %7022 = vadd.xlane.f32.xlu0 %v7021
      %v7023 = vpop.xlane.xlu0 %7022
      %v7024 = vadd.f32 %v6948, %v6949
      %v7025 = vsel %vm1826, %v6950, 0.0
      %v7026 = vadd.f32 %v7024, %v7025
      %7027 = vadd.xlane.f32.xlu0 %v7026
      %v7028 = vpop.xlane.xlu0 %7027
      %v7029 = vadd.f32 %v6951, %v6952
      %v7030 = vsel %vm1826, %v6953, 0.0
      %v7031 = vadd.f32 %v7029, %v7030
      %7032 = vadd.xlane.f32.xlu0 %v7031
      %v7033 = vpop.xlane.xlu0 %7032
      %v7034 = vadd.f32 %v6954, %v6955
      %v7035 = vsel %vm1826, %v6956, 0.0
      %v7036 = vadd.f32 %v7034, %v7035
      %7037 = vadd.xlane.f32.xlu0 %v7036
      %v7038 = vpop.xlane.xlu0 %7037
      %v7039 = vadd.f32 %v6957, %v6958
      %v7040 = vsel %vm1826, %v6959, 0.0
      %v7041 = vadd.f32 %v7039, %v7040
      %7042 = vadd.xlane.f32.xlu0 %v7041
      %v7043 = vpop.xlane.xlu0 %7042
      %v7044 = vadd.f32 %v6960, %v6961
      %v7045 = vsel %vm1826, %v6962, 0.0
      %v7046 = vadd.f32 %v7044, %v7045
      %7047 = vadd.xlane.f32.xlu0 %v7046
      %v7048 = vpop.xlane.xlu0 %7047
      %v7049 = vadd.f32 %v6963, %v6964
      %v7050 = vsel %vm1826, %v6965, 0.0
      %v7051 = vadd.f32 %v7049, %v7050
      %7052 = vadd.xlane.f32.xlu0 %v7051
      %v7053 = vpop.xlane.xlu0 %7052
      %v7054 = vadd.f32 %v6966, %v6967
      %v7055 = vsel %vm1826, %v6968, 0.0
      %v7056 = vadd.f32 %v7054, %v7055
      %7057 = vadd.xlane.f32.xlu0 %v7056
      %v7058 = vpop.xlane.xlu0 %7057
      %v7059 = vld [vmem:[#allocation5] sm:$0x1]
      %v7061 = vlaneseq
      %v7062 = vshrl.u32 %v7061, 7
      %v7063 = vsub.s32 0, %v7062
      %v7064 = vrot.slane %v7059, %v7063
      %v7066 = vadd.f32 %v6973, %v7064
      %v7067 = vadd.f32 %v6978, %v7064
      %v7068 = vadd.f32 %v6983, %v7064
      %v7069 = vadd.f32 %v6988, %v7064
      %v7070 = vadd.f32 %v6993, %v7064
      %v7071 = vadd.f32 %v6998, %v7064
      %v7072 = vadd.f32 %v7003, %v7064
      %v7073 = vadd.f32 %v7008, %v7064
      %v7074 = vadd.f32 %v7013, %v7064
      %v7075 = vadd.f32 %v7018, %v7064
      %v7076 = vadd.f32 %v7023, %v7064
      %v7077 = vadd.f32 %v7028, %v7064
      %v7078 = vadd.f32 %v7033, %v7064
      %v7079 = vadd.f32 %v7038, %v7064
      %v7080 = vadd.f32 %v7043, %v7064
      %v7081 = vadd.f32 %v7048, %v7064
      %v7082 = vadd.f32 %v7053, %v7064
      %v7083 = vadd.f32 %v7058, %v7064
      %v7084 = vmax.f32 %v7066, 0.0
      %v7085 = vmax.f32 %v7067, 0.0
      %v7086 = vmax.f32 %v7068, 0.0
      %v7087 = vmax.f32 %v7069, 0.0
      %v7088 = vmax.f32 %v7070, 0.0
      %v7089 = vmax.f32 %v7071, 0.0
      %v7090 = vmax.f32 %v7072, 0.0
      %v7091 = vmax.f32 %v7073, 0.0
      %v7092 = vmax.f32 %v7074, 0.0
      %v7093 = vmax.f32 %v7075, 0.0
      %v7094 = vmax.f32 %v7076, 0.0
      %v7095 = vmax.f32 %v7077, 0.0
      %v7096 = vmax.f32 %v7078, 0.0
      %v7097 = vmax.f32 %v7079, 0.0
      %v7098 = vmax.f32 %v7080, 0.0
      %v7099 = vmax.f32 %v7081, 0.0
      %v7100 = vmax.f32 %v7082, 0.0
      %v7101 = vmax.f32 %v7083, 0.0
      %v7102 = vld [vmem:[%s388 + $0x49] sm:$0xff]
      %v7103 = vld [vmem:[%s388 + $0x51] sm:$0xff]
      %v7104 = vld [vmem:[%s388 + $0x59] sm:$0xff]
      %v7105 = vld [vmem:[%s388 + $0x61] sm:$0xff]
      %v7106 = vld [vmem:[%s388 + $0x69] sm:$0xff]
      %v7107 = vld [vmem:[%s388 + $0x71] sm:$0xff]
      %v7108 = vld [vmem:[%s388 + $0x79] sm:$0xff]
      %v7109 = vld [vmem:[%s388 + $0x81] sm:$0xff]
      %v7110 = vld [vmem:[%s388 + $0x89] sm:$0xff]
      %v7111 = vld [vmem:[%s388 + $0x91] sm:$0xff]
      %v7112 = vld [vmem:[%s388 + $0x99] sm:$0xff]
      %v7113 = vld [vmem:[%s388 + $0xa1] sm:$0xff]
      %v7114 = vld [vmem:[%s388 + $0xa9] sm:$0xff]
      %v7115 = vld [vmem:[%s388 + $0xb1] sm:$0xff]
      %v7116 = vld [vmem:[%s388 + $0xb9] sm:$0xff]
      %v7117 = vld [vmem:[%s388 + $0xc1] sm:$0xff]
      %v7118 = vld [vmem:[%s388 + $0xc9] sm:$0xff]
      %v7119 = vld [vmem:[%s388 + $0xd1] sm:$0xff]
      %7138 = vrot.lane.b32.xlu0 %v7102, 125
      %v7139 = vpop.permute.xlu0 %7138
      %7140 = vrot.lane.b32.xlu0 %v7103, 125
      %v7141 = vpop.permute.xlu0 %7140
      %7142 = vrot.lane.b32.xlu0 %v7104, 125
      %v7143 = vpop.permute.xlu0 %7142
      %7144 = vrot.lane.b32.xlu0 %v7105, 125
      %v7145 = vpop.permute.xlu0 %7144
      %7146 = vrot.lane.b32.xlu0 %v7106, 125
      %v7147 = vpop.permute.xlu0 %7146
      %7148 = vrot.lane.b32.xlu0 %v7107, 125
      %v7149 = vpop.permute.xlu0 %7148
      %7150 = vrot.lane.b32.xlu0 %v7108, 125
      %v7151 = vpop.permute.xlu0 %7150
      %7152 = vrot.lane.b32.xlu0 %v7109, 125
      %v7153 = vpop.permute.xlu0 %7152
      %7154 = vrot.lane.b32.xlu0 %v7110, 125
      %v7155 = vpop.permute.xlu0 %7154
      %7156 = vrot.lane.b32.xlu0 %v7111, 125
      %v7157 = vpop.permute.xlu0 %7156
      %7158 = vrot.lane.b32.xlu0 %v7112, 125
      %v7159 = vpop.permute.xlu0 %7158
      %7160 = vrot.lane.b32.xlu0 %v7113, 125
      %v7161 = vpop.permute.xlu0 %7160
      %7162 = vrot.lane.b32.xlu0 %v7114, 125
      %v7163 = vpop.permute.xlu0 %7162
      %7164 = vrot.lane.b32.xlu0 %v7115, 125
      %v7165 = vpop.permute.xlu0 %7164
      %7166 = vrot.lane.b32.xlu0 %v7116, 125
      %v7167 = vpop.permute.xlu0 %7166
      %7168 = vrot.lane.b32.xlu0 %v7117, 125
      %v7169 = vpop.permute.xlu0 %7168
      %7170 = vrot.lane.b32.xlu0 %v7118, 125
      %v7171 = vpop.permute.xlu0 %7170
      %7172 = vrot.lane.b32.xlu0 %v7119, 125
      %v7173 = vpop.permute.xlu0 %7172
      %v7192 = vadd.f32 %v7084, %v7139
      %v7193 = vadd.f32 %v7085, %v7141
      %v7194 = vadd.f32 %v7086, %v7143
      %v7195 = vadd.f32 %v7087, %v7145
      %v7196 = vadd.f32 %v7088, %v7147
      %v7197 = vadd.f32 %v7089, %v7149
      %v7198 = vadd.f32 %v7090, %v7151
      %v7199 = vadd.f32 %v7091, %v7153
      %v7200 = vadd.f32 %v7092, %v7155
      %v7201 = vadd.f32 %v7093, %v7157
      %v7202 = vadd.f32 %v7094, %v7159
      %v7203 = vadd.f32 %v7095, %v7161
      %v7204 = vadd.f32 %v7096, %v7163
      %v7205 = vadd.f32 %v7097, %v7165
      %v7206 = vadd.f32 %v7098, %v7167
      %v7207 = vadd.f32 %v7099, %v7169
      %v7208 = vadd.f32 %v7100, %v7171
      %v7209 = vadd.f32 %v7101, %v7173
      %vm7210 = vcmask 7168
      %7211 = vst.msk [vmem:[%s397] sm:$0xff] %vm7210, %v7192
      %7212 = vst.msk [vmem:[%s397 + $0x8] sm:$0xff] %vm7210, %v7193
      %7213 = vst.msk [vmem:[%s397 + $0x10] sm:$0xff] %vm7210, %v7194
      %7214 = vst.msk [vmem:[%s397 + $0x18] sm:$0xff] %vm7210, %v7195
      %7215 = vst.msk [vmem:[%s397 + $0x20] sm:$0xff] %vm7210, %v7196
      %7216 = vst.msk [vmem:[%s397 + $0x28] sm:$0xff] %vm7210, %v7197
      %7217 = vst.msk [vmem:[%s397 + $0x30] sm:$0xff] %vm7210, %v7198
      %7218 = vst.msk [vmem:[%s397 + $0x38] sm:$0xff] %vm7210, %v7199
      %7219 = vst.msk [vmem:[%s397 + $0x40] sm:$0xff] %vm7210, %v7200
      %7220 = vst.msk [vmem:[%s397 + $0x48] sm:$0xff] %vm7210, %v7201
      %7221 = vst.msk [vmem:[%s397 + $0x50] sm:$0xff] %vm7210, %v7202
      %7222 = vst.msk [vmem:[%s397 + $0x58] sm:$0xff] %vm7210, %v7203
      %7223 = vst.msk [vmem:[%s397 + $0x60] sm:$0xff] %vm7210, %v7204
      %7224 = vst.msk [vmem:[%s397 + $0x68] sm:$0xff] %vm7210, %v7205
      %7225 = vst.msk [vmem:[%s397 + $0x70] sm:$0xff] %vm7210, %v7206
      %7226 = vst.msk [vmem:[%s397 + $0x78] sm:$0xff] %vm7210, %v7207
      %7227 = vst.msk [vmem:[%s397 + $0x80] sm:$0xff] %vm7210, %v7208
      %7228 = vst.msk [vmem:[%s397 + $0x88] sm:$0xff] %vm7210, %v7209
      %p7229 = scmp.lt.s32.totalorder %s27, 1
      %s7230 = scalar_select %p7229, %s27, 1
      %p7231 = scmp.lt.s32.totalorder %s28, 1
      %s7232 = scalar_select %p7231, %s28, 1
      %s7233 = smul.addr %s7232, 18
      %s7234 = smul.addr %s7230, 36
      %s7235 = sadd.s32 %s7233, %s7234
      %s7236 = smul.addr %s7235, 8
      %s7237 = scalar_lea.vmem %s10, %s7236
      // Predicated region
      $region61: #{refinenet_forward.1} parent=59 // pred_check
        %p7238 = pneg %p272
      $region62: #{refinenet_forward.1} parent=59 // pred_check_branch
        %7240 = sbr.rel (%p7238) target = $region64
      $region63: #{refinenet_forward.1} parent=59 // pred_region
        _
      $region64: #{refinenet_forward.1} parent=59 // pred_fallthru
        _
    $region60: #{refinenet_forward.1} parent=5 // pred_fallthru
      _
    %p7241 = scmp.le.s32.totalorder 2, %s18
    // Predicated region
    $region65: #{refinenet_forward.1} parent=5 // pred_check
      %p7242 = pneg %p7241
    $region66: #{refinenet_forward.1} parent=5 // pred_check_branch
      %7244 = sbr.rel (%p7242) target = $region68
    $region67: #{refinenet_forward.1} parent=5 // pred_region
      %s7245 = ssub.s32 %s18, 2
      // Predicated region
      $region69: #{refinenet_forward.1} parent=67 // pred_check
        %p7246 = pneg %p278
      $region70: #{refinenet_forward.1} parent=67 // pred_check_branch
        %7248 = sbr.rel (%p7246) target = $region72
      $region71: #{refinenet_forward.1} parent=67 // pred_region
        %p7249 = scmp.lt.s32.totalorder %s29, 1
        %s7250 = scalar_select %p7249, %s29, 1
        %p7251 = scmp.lt.s32.totalorder %s30, 1
        %s7252 = scalar_select %p7251, %s30, 1
        %s7253 = smul.addr %s7252, 18
        %s7254 = smul.addr %s7250, 36
        %s7255 = sadd.s32 %s7253, %s7254
        %s7256 = smul.addr %s7255, 8
        %s7257 = scalar_lea.vmem %s10, %s7256
      $region72: #{refinenet_forward.1} parent=67 // pred_fallthru
        _
    $region68: #{refinenet_forward.1} parent=5 // pred_fallthru
      _
  $region6: #{refinenet_forward.1} parent=0 // loop_footer
    %s22 = sadd.s32 1, %s18
  $region7: #{refinenet_forward.1} parent=0 // loop_footer_branch
    %17 = sbr.rel target = $region3
  $region8: #{refinenet_forward.1} parent=0 // loop_exit
    _

</llo_original>
